<compile_context>
chip_gen: v7x
topology: tpu7x:2x2x1
jax: 0.10.0
libtpu: 0.0.40
codegen_flags: <defaults>
</compile_context>

<pallas_src>
import functools

import numpy as np

import jax
import jax.numpy as jnp
from jax.experimental import pallas as pl
from jax.experimental.pallas import tpu as pltpu

# ---- model hyper-parameters (small, consistent with the module) -------------
D, H, W = 4, 16, 16       # input (d, h, w)
ZDIM, HDIM = 8, 32        # latent / hidden sizes
C1, C2 = 16, 32           # encoder channel widths


def _vmem():
    return pl.BlockSpec(memory_space=pltpu.MemorySpace.VMEM)


# =============================================================================
# Single fused kernel: encoder -> recurrent SBP core -> decoder -> stick-break
# =============================================================================
def _sbp_forward_kernel(x_ref,
                        w1_ref, b1_ref, w2_ref, b2_ref, w3_ref, b3_ref,
                        wq_ref, bq_ref, wql_ref, bql_ref, wp_ref, bp_ref,
                        dw1_ref, db1_ref, dw2_ref, db2_ref,
                        eps_ref,
                        logms_ref, kl_ref, *, K, hdim, zdim):
    f32 = jnp.float32
    B = x_ref.shape[0]

    def mm(a, b):
        return jnp.dot(a, b, preferred_element_type=jnp.float32)

    # ---- gated conv encoder (each layer = one matmul producing h|g gates) ---
    a1 = mm(x_ref[...], w1_ref[...]) + b1_ref[...]
    n1 = a1.shape[1] // 2
    h1 = a1[:, :n1] * jax.nn.sigmoid(a1[:, n1:])          # (B, 8*8*C1)

    a2 = mm(h1, w2_ref[...]) + b2_ref[...]
    n2 = a2.shape[1] // 2
    h2 = a2[:, :n2] * jax.nn.sigmoid(a2[:, n2:])          # (B, 4*4*C2)

    a3 = mm(h2, w3_ref[...]) + b3_ref[...]
    h = a3[:, :hdim] * jax.nn.sigmoid(a3[:, hdim:])       # (B, hdim)

    # ---- recurrent SBP core -------------------------------------------------
    def lstm_update(gates, c_prev):
        i = jax.nn.sigmoid(gates[:, 0 * hdim:1 * hdim])
        f = jax.nn.sigmoid(gates[:, 1 * hdim:2 * hdim])
        g = jnp.tanh(gates[:, 2 * hdim:3 * hdim])
        o = jax.nn.sigmoid(gates[:, 3 * hdim:4 * hdim])
        c_new = f * c_prev + i * g
        return o * jnp.tanh(c_new), c_new

    qh = jnp.zeros((B, hdim), f32)
    qc = jnp.zeros((B, hdim), f32)
    ph = jnp.zeros((B, hdim), f32)
    pc = jnp.zeros((B, hdim), f32)

    zs = []
    kls = []
    for k in range(K):                       # small static K: unrolled on purpose
        # fused push: posterior-LSTM gates (from [h, ph] input + qh hidden)
        # and prior-linear p_enc (from ph), in one (B, 4*hdim + 2*zdim) result.
        fused = mm(jnp.concatenate([h, ph, qh], axis=1), wq_ref[...]) + bq_ref[...]
        gates_q = fused[:, :4 * hdim]
        p_enc = fused[:, 4 * hdim:]
        p_mu = p_enc[:, :zdim]
        p_std = jax.nn.sigmoid(p_enc[:, zdim:]) * 0.99 + 0.01

        qh, qc = lstm_update(gates_q, qc)

        q_enc = mm(qh, wql_ref[...]) + bql_ref[...]
        q_mu = q_enc[:, :zdim]
        q_std = jax.nn.sigmoid(q_enc[:, zdim:]) * 0.99 + 0.01

        # reparameterized posterior sample
        z_q = q_mu + q_std * eps_ref[k]
        zs.append(z_q)

        # prior LSTM step driven by the posterior sample (fused ih|hh matmul)
        gates_p = mm(jnp.concatenate([z_q, ph], axis=1), wp_ref[...]) + bp_ref[...]
        ph, pc = lstm_update(gates_p, pc)

        # KL( N(q_mu, q_std) || N(p_mu, p_std) ): one log + reciprocals
        inv_q = pl.reciprocal(q_std, approx=False)
        inv_p = pl.reciprocal(p_std, approx=False)
        dmu = q_mu - p_mu
        kls.append(jnp.log(p_std * inv_q)
                   + 0.5 * (q_std * q_std + dmu * dmu) * (inv_p * inv_p)
                   - 0.5)

    # KL written directly in (B, K*zdim) order -> free reshape in wrapper.
    kl_ref[...] = jnp.concatenate(kls, axis=1)

    # ---- decoder (core.decode) over step-major cat of z samples -------------
    z_all = jnp.concatenate(zs, axis=0)                    # (K*B, zdim)
    hid = jnp.maximum(mm(z_all, dw1_ref[...]) + db1_ref[...], 0.0)
    dec = mm(hid, dw2_ref[...]) + db2_ref[...]             # (K*B, H*W)

    # ---- stick breaking (shared exp/log between logsig(z) and logsig(-z)) ---
    log_s = jnp.zeros((B, dec.shape[1]), f32)
    for k in range(K - 1):
        z = dec[k * B:(k + 1) * B, :]
        t = jnp.log(1.0 + jnp.exp(-jnp.abs(z)))            # shared transcendental
        logms_ref[k] = log_s + jnp.minimum(z, 0.0) - t     # log_s + logsig(z)
        log_s = log_s + jnp.minimum(-z, 0.0) - t           # log_s + logsig(-z)
    logms_ref[K - 1] = log_s


# =============================================================================
# One-time parameter packing (hoisted out of the hot path)
# =============================================================================
def _conv_dense(w, ih, iw, stride, pad, in_order):
    """Dense (Toeplitz) matrix of a conv: (Cin*ih*iw, OH*OW*Cout).

    Input rows are ordered NCHW-flat or NHWC-flat; output columns are ordered
    (oh, ow, cout).  Zero rows implement zero padding.
    """
    w = np.asarray(w, np.float32)
    cout, cin, kh, kw = w.shape
    oh = (ih + 2 * pad - kh) // stride + 1
    ow = (iw + 2 * pad - kw) // stride + 1
    m = np.zeros((cin * ih * iw, oh * ow * cout), np.float32)
    for oy in range(oh):
        for ox in range(ow):
            cols = (oy * ow + ox) * cout + np.arange(cout)
            for ky in range(kh):
                iy = oy * stride + ky - pad
                if iy < 0 or iy >= ih:
                    continue
                for kx in range(kw):
                    ix = ox * stride + kx - pad
                    if ix < 0 or ix >= iw:
                        continue
                    if in_order == "NCHW":
                        rows = np.arange(cin) * ih * iw + iy * iw + ix
                    else:  # NHWC
                        rows = (iy * iw + ix) * cin + np.arange(cin)
                    m[np.ix_(rows, cols)] = w[:, :, ky, kx].T
    return m


def pack_params(p):
    """Fold conv weights into dense matrices and fuse paired matmul weights."""
    pn = {k: np.asarray(v, np.float32) for k, v in p.items()}
    oh1, oh2 = H // 2, H // 4                       # 8, 4

    w1 = np.concatenate([_conv_dense(pn['wh1'], H, W, 2, 1, 'NCHW'),
                         _conv_dense(pn['wg1'], H, W, 2, 1, 'NCHW')], axis=1)
    b1 = np.concatenate([np.tile(pn['bh1'], oh1 * oh1),
                         np.tile(pn['bg1'], oh1 * oh1)])
    w2 = np.concatenate([_conv_dense(pn['wh2'], oh1, oh1, 2, 1, 'NHWC'),
                         _conv_dense(pn['wg2'], oh1, oh1, 2, 1, 'NHWC')], axis=1)
    b2 = np.concatenate([np.tile(pn['bh2'], oh2 * oh2),
                         np.tile(pn['bg2'], oh2 * oh2)])
    w3 = np.concatenate([_conv_dense(pn['wh3'], oh2, oh2, 1, 0, 'NHWC'),
                         _conv_dense(pn['wg3'], oh2, oh2, 1, 0, 'NHWC')], axis=1)
    b3 = np.concatenate([pn['bh3'], pn['bg3']])

    # fused [posterior-LSTM ih|hh  |  prior linear]: input rows = [h, ph, qh]
    wq = np.zeros((3 * HDIM, 4 * HDIM + 2 * ZDIM), np.float32)
    wq[:2 * HDIM, :4 * HDIM] = pn['wih_q']          # input = [h, ph]
    wq[2 * HDIM:, :4 * HDIM] = pn['whh_q']          # hidden = qh
    wq[HDIM:2 * HDIM, 4 * HDIM:] = pn['wpl']        # prior linear sees ph only
    bq = np.concatenate([pn['b_q'], pn['bpl']])

    # fused prior-LSTM ih|hh: input rows = [z_q, ph]
    wp = np.concatenate([pn['wih_p'], pn['whh_p']], axis=0)

    packed = {
        'w1': w1, 'b1': b1[None, :], 'w2': w2, 'b2': b2[None, :],
        'w3': w3, 'b3': b3[None, :],
        'wq': wq, 'bq': bq[None, :],
        'wql': pn['wql'], 'bql': pn['bql'][None, :],
        'wp': wp, 'bp': pn['b_p'][None, :],
        'dw1': pn['dw1'], 'db1': pn['db1'][None, :],
        'dw2': pn['dw2'], 'db2': pn['db2'][None, :],
    }
    return {k: jnp.asarray(v, dtype=jnp.float32) for k, v in packed.items()}


# =============================================================================
# Wrapper: full GatedRecurrentSBP forward (single pallas_call)
# =============================================================================
@functools.partial(jax.jit, static_argnames=("K",))
def gated_recurrent_sbp_forward(packed, x, K, eps):
    """x: (B, D, H, W) NCHW float32; eps: (K, B, ZDIM) posterior noise.

    Returns:
      log_ms: (K, B, 1, H, W) — log_ms[k] equals the k-th list element of the
              PyTorch reference.
      kl:     (B, K, ZDIM, 1, 1)
    """
    b = x.shape[0]
    x_flat = x.reshape(b, D * H * W)     # NCHW-flat, matches dense W1 rows (free)

    kernel = functools.partial(_sbp_forward_kernel, K=K, hdim=HDIM, zdim=ZDIM)
    log_ms_flat, kl = pl.pallas_call(
        kernel,
        out_shape=(jax.ShapeDtypeStruct((K, b, H * W), jnp.float32),
                   jax.ShapeDtypeStruct((b, K * ZDIM), jnp.float32)),
        in_specs=[_vmem() for _ in range(18)],
        out_specs=(_vmem(), _vmem()),
        compiler_params=pltpu.CompilerParams(
            vmem_limit_bytes=40 * 1024 * 1024),
        # NOTE: no grid at B=2; if batch grows, add a leading batch-tile grid
        # axis with dimension_semantics=("parallel",...) to use both v7x cores.
    )(x_flat,
      packed['w1'], packed['b1'], packed['w2'], packed['b2'],
      packed['w3'], packed['b3'],
      packed['wq'], packed['bq'], packed['wql'], packed['bql'],
      packed['wp'], packed['bp'],
      packed['dw1'], packed['db1'], packed['dw2'], packed['db2'],
      eps)

    log_ms = log_ms_flat.reshape(K, b, 1, H, W)     # free reshape
    kl_out = kl.reshape(b, K, ZDIM, 1, 1)           # free reshape
    return log_ms, kl_out


# =============================================================================
# Deterministic parameter construction (raw, module-like layouts)
# =============================================================================
def init_params(key):
    ks = jax.random.split(key, 26)

    def n(k, shape, scale=0.1):
        return (scale * jax.random.normal(k, shape)).astype(jnp.float32)

    return {
        # gated conv encoder (PyTorch OIHW conv layout)
        'wh1': n(ks[0], (C1, D, 3, 3)),    'bh1': n(ks[1], (C1,)),
        'wg1': n(ks[2], (C1, D, 3, 3)),    'bg1': n(ks[3], (C1,)),
        'wh2': n(ks[4], (C2, C1, 3, 3)),   'bh2': n(ks[5], (C2,)),
        'wg2': n(ks[6], (C2, C1, 3, 3)),   'bg2': n(ks[7], (C2,)),
        'wh3': n(ks[8], (HDIM, C2, 4, 4)), 'bh3': n(ks[9], (HDIM,)),
        'wg3': n(ks[10], (HDIM, C2, 4, 4)), 'bg3': n(ks[11], (HDIM,)),
        # posterior LSTM (input = hdim + hdim), weights stored pre-transposed
        'wih_q': n(ks[12], (2 * HDIM, 4 * HDIM)),
        'whh_q': n(ks[13], (HDIM, 4 * HDIM)),
        'b_q':   n(ks[14], (4 * HDIM,)),
        # prior LSTM (input = zdim)
        'wih_p': n(ks[15], (ZDIM, 4 * HDIM)),
        'whh_p': n(ks[16], (HDIM, 4 * HDIM)),
        'b_p':   n(ks[17], (4 * HDIM,)),
        # posterior / prior output linears (hdim -> 2*zdim), pre-transposed
        'wql': n(ks[18], (HDIM, 2 * ZDIM)), 'bql': n(ks[19], (2 * ZDIM,)),
        'wpl': n(ks[20], (HDIM, 2 * ZDIM)), 'bpl': n(ks[21], (2 * ZDIM,)),
        # decoder MLP (zdim -> hdim -> H*W), pre-transposed
        'dw1': n(ks[22], (ZDIM, HDIM)), 'db1': n(ks[23], (HDIM,)),
        'dw2': n(ks[24], (HDIM, H * W)), 'db2': n(ks[25], (H * W,)),
    }


if __name__ == "__main__":
    key = jax.random.PRNGKey(0)
    k_x, k_eps, k_params = jax.random.split(key, 3)

    B, K = 2, 3
    x = jax.random.normal(k_x, (B, D, H, W), dtype=jnp.float32)
    eps = jax.random.normal(k_eps, (K, B, ZDIM), dtype=jnp.float32)

    params = init_params(k_params)
    packed = pack_params(params)    # one-time preprocessing, out of the hot path

    log_ms, kl = gated_recurrent_sbp_forward(packed, x, K, eps)
    log_ms = jax.block_until_ready(log_ms)
    kl = jax.block_until_ready(kl)

    assert log_ms.shape == (K, B, 1, H, W)
    assert kl.shape == (B, K, ZDIM, 1, 1)
    assert bool(jnp.all(jnp.isfinite(log_ms)))
    assert bool(jnp.all(jnp.isfinite(kl)))
    # stick-breaking identity: per-pixel masses sum to 1 across the K slots
    mass = jnp.exp(log_ms).sum(axis=0)
    assert bool(jnp.all(jnp.abs(mass - 1.0) < 1e-4))

    print("KERNEL_OK")
</pallas_src>

<mosaic_0001>
module attributes {stable_mosaic.version = 11 : i64} {
  func.func @_sbp_forward_kernel(%arg0: memref<2x1024xf32, #tpu.memory_space<vmem>>, %arg1: memref<1024x2048xf32, #tpu.memory_space<vmem>>, %arg2: memref<1x2048xf32, #tpu.memory_space<vmem>>, %arg3: memref<1024x1024xf32, #tpu.memory_space<vmem>>, %arg4: memref<1x1024xf32, #tpu.memory_space<vmem>>, %arg5: memref<512x64xf32, #tpu.memory_space<vmem>>, %arg6: memref<1x64xf32, #tpu.memory_space<vmem>>, %arg7: memref<96x144xf32, #tpu.memory_space<vmem>>, %arg8: memref<1x144xf32, #tpu.memory_space<vmem>>, %arg9: memref<32x16xf32, #tpu.memory_space<vmem>>, %arg10: memref<1x16xf32, #tpu.memory_space<vmem>>, %arg11: memref<40x128xf32, #tpu.memory_space<vmem>>, %arg12: memref<1x128xf32, #tpu.memory_space<vmem>>, %arg13: memref<8x32xf32, #tpu.memory_space<vmem>>, %arg14: memref<1x32xf32, #tpu.memory_space<vmem>>, %arg15: memref<32x256xf32, #tpu.memory_space<vmem>>, %arg16: memref<1x256xf32, #tpu.memory_space<vmem>>, %arg17: memref<3x2x8xf32, #tpu.memory_space<vmem>>, %arg18: memref<3x2x256xf32, #tpu.memory_space<vmem>>, %arg19: memref<2x24xf32, #tpu.memory_space<vmem>>) attributes {dimension_semantics = [], scalar_prefetch = 0 : i64, scratch_operands = 0 : i64, tpu.core_type = #tpu.core_type<tc>} {
    %c0 = arith.constant 0 : index
    %c0_0 = arith.constant 0 : index
    %0 = vector.load %arg0[%c0, %c0_0] : memref<2x1024xf32, #tpu.memory_space<vmem>>, vector<2x1024xf32>
    %c0_1 = arith.constant 0 : index
    %c0_2 = arith.constant 0 : index
    %1 = vector.load %arg1[%c0_1, %c0_2] : memref<1024x2048xf32, #tpu.memory_space<vmem>>, vector<1024x2048xf32>
    %cst = arith.constant dense<0.000000e+00> : vector<2x2048xf32>
    %2 = tpu.matmul %0, %1, %cst {dimension_numbers = #tpu.dot_dimension_numbers<[1], [0], [0], [1], [0, 0, 1, 1], [], []>} : vector<2x1024xf32>, vector<1024x2048xf32>, vector<2x2048xf32> -> vector<2x2048xf32>
    %c0_3 = arith.constant 0 : index
    %c0_4 = arith.constant 0 : index
    %3 = vector.load %arg2[%c0_3, %c0_4] : memref<1x2048xf32, #tpu.memory_space<vmem>>, vector<1x2048xf32>
    %4 = vector.broadcast %3 : vector<1x2048xf32> to vector<2x2048xf32>
    %5 = arith.addf %2, %4 : vector<2x2048xf32>
    %6 = vector.extract_strided_slice %5 {offsets = [0, 0], sizes = [2, 1024], strides = [1, 1]} : vector<2x2048xf32> to vector<2x1024xf32>
    %7 = vector.extract_strided_slice %5 {offsets = [0, 1024], sizes = [2, 1024], strides = [1, 1]} : vector<2x2048xf32> to vector<2x1024xf32>
    %8 = arith.negf %7 : vector<2x1024xf32>
    %9 = math.exp %8 : vector<2x1024xf32>
    %cst_5 = arith.constant 1.000000e+00 : f32
    %10 = vector.broadcast %cst_5 : f32 to vector<2x1024xf32>
    %11 = arith.addf %10, %9 : vector<2x1024xf32>
    %12 = arith.divf %10, %11 : vector<2x1024xf32>
    %13 = arith.mulf %6, %12 : vector<2x1024xf32>
    %c0_6 = arith.constant 0 : index
    %c0_7 = arith.constant 0 : index
    %14 = vector.load %arg3[%c0_6, %c0_7] : memref<1024x1024xf32, #tpu.memory_space<vmem>>, vector<1024x1024xf32>
    %cst_8 = arith.constant dense<0.000000e+00> : vector<2x1024xf32>
    %15 = tpu.matmul %13, %14, %cst_8 {dimension_numbers = #tpu.dot_dimension_numbers<[1], [0], [0], [1], [0, 0, 1, 1], [], []>} : vector<2x1024xf32>, vector<1024x1024xf32>, vector<2x1024xf32> -> vector<2x1024xf32>
    %c0_9 = arith.constant 0 : index
    %c0_10 = arith.constant 0 : index
    %16 = vector.load %arg4[%c0_9, %c0_10] : memref<1x1024xf32, #tpu.memory_space<vmem>>, vector<1x1024xf32>
    %17 = vector.broadcast %16 : vector<1x1024xf32> to vector<2x1024xf32>
    %18 = arith.addf %15, %17 : vector<2x1024xf32>
    %19 = vector.extract_strided_slice %18 {offsets = [0, 0], sizes = [2, 512], strides = [1, 1]} : vector<2x1024xf32> to vector<2x512xf32>
    %20 = vector.extract_strided_slice %18 {offsets = [0, 512], sizes = [2, 512], strides = [1, 1]} : vector<2x1024xf32> to vector<2x512xf32>
    %21 = arith.negf %20 : vector<2x512xf32>
    %22 = math.exp %21 : vector<2x512xf32>
    %cst_11 = arith.constant 1.000000e+00 : f32
    %23 = vector.broadcast %cst_11 : f32 to vector<2x512xf32>
    %24 = arith.addf %23, %22 : vector<2x512xf32>
    %25 = arith.divf %23, %24 : vector<2x512xf32>
    %26 = arith.mulf %19, %25 : vector<2x512xf32>
    %c0_12 = arith.constant 0 : index
    %c0_13 = arith.constant 0 : index
    %27 = vector.load %arg5[%c0_12, %c0_13] : memref<512x64xf32, #tpu.memory_space<vmem>>, vector<512x64xf32>
    %cst_14 = arith.constant dense<0.000000e+00> : vector<2x64xf32>
    %28 = tpu.matmul %26, %27, %cst_14 {dimension_numbers = #tpu.dot_dimension_numbers<[1], [0], [0], [1], [0, 0, 1, 1], [], []>} : vector<2x512xf32>, vector<512x64xf32>, vector<2x64xf32> -> vector<2x64xf32>
    %c0_15 = arith.constant 0 : index
    %c0_16 = arith.constant 0 : index
    %29 = vector.load %arg6[%c0_15, %c0_16] : memref<1x64xf32, #tpu.memory_space<vmem>>, vector<1x64xf32>
    %30 = vector.broadcast %29 : vector<1x64xf32> to vector<2x64xf32>
    %31 = arith.addf %28, %30 : vector<2x64xf32>
    %32 = vector.extract_strided_slice %31 {offsets = [0, 0], sizes = [2, 32], strides = [1, 1]} : vector<2x64xf32> to vector<2x32xf32>
    %33 = vector.extract_strided_slice %31 {offsets = [0, 32], sizes = [2, 32], strides = [1, 1]} : vector<2x64xf32> to vector<2x32xf32>
    %34 = arith.negf %33 : vector<2x32xf32>
    %35 = math.exp %34 : vector<2x32xf32>
    %cst_17 = arith.constant 1.000000e+00 : f32
    %36 = vector.broadcast %cst_17 : f32 to vector<2x32xf32>
    %37 = arith.addf %36, %35 : vector<2x32xf32>
    %38 = arith.divf %36, %37 : vector<2x32xf32>
    %39 = arith.mulf %32, %38 : vector<2x32xf32>
    %cst_18 = arith.constant 0.000000e+00 : f32
    %40 = vector.broadcast %cst_18 : f32 to vector<2x32xf32>
    %cst_19 = arith.constant 0.000000e+00 : f32
    %41 = vector.broadcast %cst_19 : f32 to vector<2x32xf32>
    %cst_20 = arith.constant 0.000000e+00 : f32
    %42 = vector.broadcast %cst_20 : f32 to vector<2x32xf32>
    %cst_21 = arith.constant 0.000000e+00 : f32
    %43 = vector.broadcast %cst_21 : f32 to vector<2x32xf32>
    %44 = tpu.concatenate %39, %42, %40 in 1 : vector<2x32xf32>, vector<2x32xf32>, vector<2x32xf32> -> vector<2x96xf32>
    %c0_22 = arith.constant 0 : index
    %c0_23 = arith.constant 0 : index
    %45 = vector.load %arg7[%c0_22, %c0_23] : memref<96x144xf32, #tpu.memory_space<vmem>>, vector<96x144xf32>
    %cst_24 = arith.constant dense<0.000000e+00> : vector<2x144xf32>
    %46 = tpu.matmul %44, %45, %cst_24 {dimension_numbers = #tpu.dot_dimension_numbers<[1], [0], [0], [1], [0, 0, 1, 1], [], []>} : vector<2x96xf32>, vector<96x144xf32>, vector<2x144xf32> -> vector<2x144xf32>
    %c0_25 = arith.constant 0 : index
    %c0_26 = arith.constant 0 : index
    %47 = vector.load %arg8[%c0_25, %c0_26] : memref<1x144xf32, #tpu.memory_space<vmem>>, vector<1x144xf32>
    %48 = vector.broadcast %47 : vector<1x144xf32> to vector<2x144xf32>
    %49 = arith.addf %46, %48 : vector<2x144xf32>
    %50 = vector.extract_strided_slice %49 {offsets = [0, 0], sizes = [2, 128], strides = [1, 1]} : vector<2x144xf32> to vector<2x128xf32>
    %51 = vector.extract_strided_slice %49 {offsets = [0, 128], sizes = [2, 16], strides = [1, 1]} : vector<2x144xf32> to vector<2x16xf32>
    %52 = vector.extract_strided_slice %51 {offsets = [0, 0], sizes = [2, 8], strides = [1, 1]} : vector<2x16xf32> to vector<2x8xf32>
    %53 = vector.extract_strided_slice %51 {offsets = [0, 8], sizes = [2, 8], strides = [1, 1]} : vector<2x16xf32> to vector<2x8xf32>
    %54 = arith.negf %53 : vector<2x8xf32>
    %55 = math.exp %54 : vector<2x8xf32>
    %cst_27 = arith.constant 1.000000e+00 : f32
    %56 = vector.broadcast %cst_27 : f32 to vector<2x8xf32>
    %57 = arith.addf %56, %55 : vector<2x8xf32>
    %58 = arith.divf %56, %57 : vector<2x8xf32>
    %cst_28 = arith.constant 9.900000e-01 : f32
    %59 = vector.broadcast %cst_28 : f32 to vector<2x8xf32>
    %60 = arith.mulf %58, %59 : vector<2x8xf32>
    %cst_29 = arith.constant 0.00999999977 : f32
    %61 = vector.broadcast %cst_29 : f32 to vector<2x8xf32>
    %62 = arith.addf %60, %61 : vector<2x8xf32>
    %63 = vector.extract_strided_slice %50 {offsets = [0, 0], sizes = [2, 32], strides = [1, 1]} : vector<2x128xf32> to vector<2x32xf32>
    %64 = arith.negf %63 : vector<2x32xf32>
    %65 = math.exp %64 : vector<2x32xf32>
    %cst_30 = arith.constant 1.000000e+00 : f32
    %66 = vector.broadcast %cst_30 : f32 to vector<2x32xf32>
    %67 = arith.addf %66, %65 : vector<2x32xf32>
    %68 = arith.divf %66, %67 : vector<2x32xf32>
    %69 = vector.extract_strided_slice %50 {offsets = [0, 32], sizes = [2, 32], strides = [1, 1]} : vector<2x128xf32> to vector<2x32xf32>
    %70 = arith.negf %69 : vector<2x32xf32>
    %71 = math.exp %70 : vector<2x32xf32>
    %cst_31 = arith.constant 1.000000e+00 : f32
    %72 = vector.broadcast %cst_31 : f32 to vector<2x32xf32>
    %73 = arith.addf %72, %71 : vector<2x32xf32>
    %74 = arith.divf %72, %73 : vector<2x32xf32>
    %75 = vector.extract_strided_slice %50 {offsets = [0, 64], sizes = [2, 32], strides = [1, 1]} : vector<2x128xf32> to vector<2x32xf32>
    %76 = math.tanh %75 : vector<2x32xf32>
    %77 = vector.extract_strided_slice %50 {offsets = [0, 96], sizes = [2, 32], strides = [1, 1]} : vector<2x128xf32> to vector<2x32xf32>
    %78 = arith.negf %77 : vector<2x32xf32>
    %79 = math.exp %78 : vector<2x32xf32>
    %cst_32 = arith.constant 1.000000e+00 : f32
    %80 = vector.broadcast %cst_32 : f32 to vector<2x32xf32>
    %81 = arith.addf %80, %79 : vector<2x32xf32>
    %82 = arith.divf %80, %81 : vector<2x32xf32>
    %83 = arith.mulf %74, %41 : vector<2x32xf32>
    %84 = arith.mulf %68, %76 : vector<2x32xf32>
    %85 = arith.addf %83, %84 : vector<2x32xf32>
    %86 = math.tanh %85 : vector<2x32xf32>
    %87 = arith.mulf %82, %86 : vector<2x32xf32>
    %c0_33 = arith.constant 0 : index
    %c0_34 = arith.constant 0 : index
    %88 = vector.load %arg9[%c0_33, %c0_34] : memref<32x16xf32, #tpu.memory_space<vmem>>, vector<32x16xf32>
    %cst_35 = arith.constant dense<0.000000e+00> : vector<2x16xf32>
    %89 = tpu.matmul %87, %88, %cst_35 {dimension_numbers = #tpu.dot_dimension_numbers<[1], [0], [0], [1], [0, 0, 1, 1], [], []>} : vector<2x32xf32>, vector<32x16xf32>, vector<2x16xf32> -> vector<2x16xf32>
    %c0_36 = arith.constant 0 : index
    %c0_37 = arith.constant 0 : index
    %90 = vector.load %arg10[%c0_36, %c0_37] : memref<1x16xf32, #tpu.memory_space<vmem>>, vector<1x16xf32>
    %91 = vector.broadcast %90 : vector<1x16xf32> to vector<2x16xf32>
    %92 = arith.addf %89, %91 : vector<2x16xf32>
    %93 = vector.extract_strided_slice %92 {offsets = [0, 0], sizes = [2, 8], strides = [1, 1]} : vector<2x16xf32> to vector<2x8xf32>
    %94 = vector.extract_strided_slice %92 {offsets = [0, 8], sizes = [2, 8], strides = [1, 1]} : vector<2x16xf32> to vector<2x8xf32>
    %95 = arith.negf %94 : vector<2x8xf32>
    %96 = math.exp %95 : vector<2x8xf32>
    %cst_38 = arith.constant 1.000000e+00 : f32
    %97 = vector.broadcast %cst_38 : f32 to vector<2x8xf32>
    %98 = arith.addf %97, %96 : vector<2x8xf32>
    %99 = arith.divf %97, %98 : vector<2x8xf32>
    %cst_39 = arith.constant 9.900000e-01 : f32
    %100 = vector.broadcast %cst_39 : f32 to vector<2x8xf32>
    %101 = arith.mulf %99, %100 : vector<2x8xf32>
    %cst_40 = arith.constant 0.00999999977 : f32
    %102 = vector.broadcast %cst_40 : f32 to vector<2x8xf32>
    %103 = arith.addf %101, %102 : vector<2x8xf32>
    %c0_41 = arith.constant 0 : index
    %c0_42 = arith.constant 0 : index
    %c0_43 = arith.constant 0 : index
    %104 = vector.load %arg17[%c0_41, %c0_42, %c0_43] : memref<3x2x8xf32, #tpu.memory_space<vmem>>, vector<1x2x8xf32>
    %105 = vector.shape_cast %104 : vector<1x2x8xf32> to vector<2x8xf32>
    %106 = arith.mulf %103, %105 : vector<2x8xf32>
    %107 = arith.addf %93, %106 : vector<2x8xf32>
    %108 = tpu.concatenate %107, %42 in 1 : vector<2x8xf32>, vector<2x32xf32> -> vector<2x40xf32>
    %c0_44 = arith.constant 0 : index
    %c0_45 = arith.constant 0 : index
    %109 = vector.load %arg11[%c0_44, %c0_45] : memref<40x128xf32, #tpu.memory_space<vmem>>, vector<40x128xf32>
    %cst_46 = arith.constant dense<0.000000e+00> : vector<2x128xf32>
    %110 = tpu.matmul %108, %109, %cst_46 {dimension_numbers = #tpu.dot_dimension_numbers<[1], [0], [0], [1], [0, 0, 1, 1], [], []>} : vector<2x40xf32>, vector<40x128xf32>, vector<2x128xf32> -> vector<2x128xf32>
    %c0_47 = arith.constant 0 : index
    %c0_48 = arith.constant 0 : index
    %111 = vector.load %arg12[%c0_47, %c0_48] : memref<1x128xf32, #tpu.memory_space<vmem>>, vector<1x128xf32>
    %112 = vector.broadcast %111 : vector<1x128xf32> to vector<2x128xf32>
    %113 = arith.addf %110, %112 : vector<2x128xf32>
    %114 = vector.extract_strided_slice %113 {offsets = [0, 0], sizes = [2, 32], strides = [1, 1]} : vector<2x128xf32> to vector<2x32xf32>
    %115 = arith.negf %114 : vector<2x32xf32>
    %116 = math.exp %115 : vector<2x32xf32>
    %cst_49 = arith.constant 1.000000e+00 : f32
    %117 = vector.broadcast %cst_49 : f32 to vector<2x32xf32>
    %118 = arith.addf %117, %116 : vector<2x32xf32>
    %119 = arith.divf %117, %118 : vector<2x32xf32>
    %120 = vector.extract_strided_slice %113 {offsets = [0, 32], sizes = [2, 32], strides = [1, 1]} : vector<2x128xf32> to vector<2x32xf32>
    %121 = arith.negf %120 : vector<2x32xf32>
    %122 = math.exp %121 : vector<2x32xf32>
    %cst_50 = arith.constant 1.000000e+00 : f32
    %123 = vector.broadcast %cst_50 : f32 to vector<2x32xf32>
    %124 = arith.addf %123, %122 : vector<2x32xf32>
    %125 = arith.divf %123, %124 : vector<2x32xf32>
    %126 = vector.extract_strided_slice %113 {offsets = [0, 64], sizes = [2, 32], strides = [1, 1]} : vector<2x128xf32> to vector<2x32xf32>
    %127 = math.tanh %126 : vector<2x32xf32>
    %128 = vector.extract_strided_slice %113 {offsets = [0, 96], sizes = [2, 32], strides = [1, 1]} : vector<2x128xf32> to vector<2x32xf32>
    %129 = arith.negf %128 : vector<2x32xf32>
    %130 = math.exp %129 : vector<2x32xf32>
    %cst_51 = arith.constant 1.000000e+00 : f32
    %131 = vector.broadcast %cst_51 : f32 to vector<2x32xf32>
    %132 = arith.addf %131, %130 : vector<2x32xf32>
    %133 = arith.divf %131, %132 : vector<2x32xf32>
    %134 = arith.mulf %125, %43 : vector<2x32xf32>
    %135 = arith.mulf %119, %127 : vector<2x32xf32>
    %136 = arith.addf %134, %135 : vector<2x32xf32>
    %137 = math.tanh %136 : vector<2x32xf32>
    %138 = arith.mulf %133, %137 : vector<2x32xf32>
    %139 = tpu.reciprocal %103 : vector<2x8xf32> -> vector<2x8xf32>
    %140 = tpu.reciprocal %62 : vector<2x8xf32> -> vector<2x8xf32>
    %141 = arith.subf %93, %52 : vector<2x8xf32>
    %142 = arith.mulf %62, %139 : vector<2x8xf32>
    %143 = math.log %142 : vector<2x8xf32>
    %144 = arith.mulf %103, %103 : vector<2x8xf32>
    %145 = arith.mulf %141, %141 : vector<2x8xf32>
    %146 = arith.addf %144, %145 : vector<2x8xf32>
    %cst_52 = arith.constant 5.000000e-01 : f32
    %147 = vector.broadcast %cst_52 : f32 to vector<2x8xf32>
    %148 = arith.mulf %147, %146 : vector<2x8xf32>
    %149 = arith.mulf %140, %140 : vector<2x8xf32>
    %150 = arith.mulf %148, %149 : vector<2x8xf32>
    %151 = arith.addf %143, %150 : vector<2x8xf32>
    %cst_53 = arith.constant 5.000000e-01 : f32
    %152 = vector.broadcast %cst_53 : f32 to vector<2x8xf32>
    %153 = arith.subf %151, %152 : vector<2x8xf32>
    %154 = tpu.concatenate %39, %138, %87 in 1 : vector<2x32xf32>, vector<2x32xf32>, vector<2x32xf32> -> vector<2x96xf32>
    %c0_54 = arith.constant 0 : index
    %c0_55 = arith.constant 0 : index
    %155 = vector.load %arg7[%c0_54, %c0_55] : memref<96x144xf32, #tpu.memory_space<vmem>>, vector<96x144xf32>
    %cst_56 = arith.constant dense<0.000000e+00> : vector<2x144xf32>
    %156 = tpu.matmul %154, %155, %cst_56 {dimension_numbers = #tpu.dot_dimension_numbers<[1], [0], [0], [1], [0, 0, 1, 1], [], []>} : vector<2x96xf32>, vector<96x144xf32>, vector<2x144xf32> -> vector<2x144xf32>
    %c0_57 = arith.constant 0 : index
    %c0_58 = arith.constant 0 : index
    %157 = vector.load %arg8[%c0_57, %c0_58] : memref<1x144xf32, #tpu.memory_space<vmem>>, vector<1x144xf32>
    %158 = vector.broadcast %157 : vector<1x144xf32> to vector<2x144xf32>
    %159 = arith.addf %156, %158 : vector<2x144xf32>
    %160 = vector.extract_strided_slice %159 {offsets = [0, 0], sizes = [2, 128], strides = [1, 1]} : vector<2x144xf32> to vector<2x128xf32>
    %161 = vector.extract_strided_slice %159 {offsets = [0, 128], sizes = [2, 16], strides = [1, 1]} : vector<2x144xf32> to vector<2x16xf32>
    %162 = vector.extract_strided_slice %161 {offsets = [0, 0], sizes = [2, 8], strides = [1, 1]} : vector<2x16xf32> to vector<2x8xf32>
    %163 = vector.extract_strided_slice %161 {offsets = [0, 8], sizes = [2, 8], strides = [1, 1]} : vector<2x16xf32> to vector<2x8xf32>
    %164 = arith.negf %163 : vector<2x8xf32>
    %165 = math.exp %164 : vector<2x8xf32>
    %cst_59 = arith.constant 1.000000e+00 : f32
    %166 = vector.broadcast %cst_59 : f32 to vector<2x8xf32>
    %167 = arith.addf %166, %165 : vector<2x8xf32>
    %168 = arith.divf %166, %167 : vector<2x8xf32>
    %cst_60 = arith.constant 9.900000e-01 : f32
    %169 = vector.broadcast %cst_60 : f32 to vector<2x8xf32>
    %170 = arith.mulf %168, %169 : vector<2x8xf32>
    %cst_61 = arith.constant 0.00999999977 : f32
    %171 = vector.broadcast %cst_61 : f32 to vector<2x8xf32>
    %172 = arith.addf %170, %171 : vector<2x8xf32>
    %173 = vector.extract_strided_slice %160 {offsets = [0, 0], sizes = [2, 32], strides = [1, 1]} : vector<2x128xf32> to vector<2x32xf32>
    %174 = arith.negf %173 : vector<2x32xf32>
    %175 = math.exp %174 : vector<2x32xf32>
    %cst_62 = arith.constant 1.000000e+00 : f32
    %176 = vector.broadcast %cst_62 : f32 to vector<2x32xf32>
    %177 = arith.addf %176, %175 : vector<2x32xf32>
    %178 = arith.divf %176, %177 : vector<2x32xf32>
    %179 = vector.extract_strided_slice %160 {offsets = [0, 32], sizes = [2, 32], strides = [1, 1]} : vector<2x128xf32> to vector<2x32xf32>
    %180 = arith.negf %179 : vector<2x32xf32>
    %181 = math.exp %180 : vector<2x32xf32>
    %cst_63 = arith.constant 1.000000e+00 : f32
    %182 = vector.broadcast %cst_63 : f32 to vector<2x32xf32>
    %183 = arith.addf %182, %181 : vector<2x32xf32>
    %184 = arith.divf %182, %183 : vector<2x32xf32>
    %185 = vector.extract_strided_slice %160 {offsets = [0, 64], sizes = [2, 32], strides = [1, 1]} : vector<2x128xf32> to vector<2x32xf32>
    %186 = math.tanh %185 : vector<2x32xf32>
    %187 = vector.extract_strided_slice %160 {offsets = [0, 96], sizes = [2, 32], strides = [1, 1]} : vector<2x128xf32> to vector<2x32xf32>
    %188 = arith.negf %187 : vector<2x32xf32>
    %189 = math.exp %188 : vector<2x32xf32>
    %cst_64 = arith.constant 1.000000e+00 : f32
    %190 = vector.broadcast %cst_64 : f32 to vector<2x32xf32>
    %191 = arith.addf %190, %189 : vector<2x32xf32>
    %192 = arith.divf %190, %191 : vector<2x32xf32>
    %193 = arith.mulf %184, %85 : vector<2x32xf32>
    %194 = arith.mulf %178, %186 : vector<2x32xf32>
    %195 = arith.addf %193, %194 : vector<2x32xf32>
    %196 = math.tanh %195 : vector<2x32xf32>
    %197 = arith.mulf %192, %196 : vector<2x32xf32>
    %c0_65 = arith.constant 0 : index
    %c0_66 = arith.constant 0 : index
    %198 = vector.load %arg9[%c0_65, %c0_66] : memref<32x16xf32, #tpu.memory_space<vmem>>, vector<32x16xf32>
    %cst_67 = arith.constant dense<0.000000e+00> : vector<2x16xf32>
    %199 = tpu.matmul %197, %198, %cst_67 {dimension_numbers = #tpu.dot_dimension_numbers<[1], [0], [0], [1], [0, 0, 1, 1], [], []>} : vector<2x32xf32>, vector<32x16xf32>, vector<2x16xf32> -> vector<2x16xf32>
    %c0_68 = arith.constant 0 : index
    %c0_69 = arith.constant 0 : index
    %200 = vector.load %arg10[%c0_68, %c0_69] : memref<1x16xf32, #tpu.memory_space<vmem>>, vector<1x16xf32>
    %201 = vector.broadcast %200 : vector<1x16xf32> to vector<2x16xf32>
    %202 = arith.addf %199, %201 : vector<2x16xf32>
    %203 = vector.extract_strided_slice %202 {offsets = [0, 0], sizes = [2, 8], strides = [1, 1]} : vector<2x16xf32> to vector<2x8xf32>
    %204 = vector.extract_strided_slice %202 {offsets = [0, 8], sizes = [2, 8], strides = [1, 1]} : vector<2x16xf32> to vector<2x8xf32>
    %205 = arith.negf %204 : vector<2x8xf32>
    %206 = math.exp %205 : vector<2x8xf32>
    %cst_70 = arith.constant 1.000000e+00 : f32
    %207 = vector.broadcast %cst_70 : f32 to vector<2x8xf32>
    %208 = arith.addf %207, %206 : vector<2x8xf32>
    %209 = arith.divf %207, %208 : vector<2x8xf32>
    %cst_71 = arith.constant 9.900000e-01 : f32
    %210 = vector.broadcast %cst_71 : f32 to vector<2x8xf32>
    %211 = arith.mulf %209, %210 : vector<2x8xf32>
    %cst_72 = arith.constant 0.00999999977 : f32
    %212 = vector.broadcast %cst_72 : f32 to vector<2x8xf32>
    %213 = arith.addf %211, %212 : vector<2x8xf32>
    %c1 = arith.constant 1 : index
    %c0_73 = arith.constant 0 : index
    %c0_74 = arith.constant 0 : index
    %214 = vector.load %arg17[%c1, %c0_73, %c0_74] : memref<3x2x8xf32, #tpu.memory_space<vmem>>, vector<1x2x8xf32>
    %215 = vector.shape_cast %214 : vector<1x2x8xf32> to vector<2x8xf32>
    %216 = arith.mulf %213, %215 : vector<2x8xf32>
    %217 = arith.addf %203, %216 : vector<2x8xf32>
    %218 = tpu.concatenate %217, %138 in 1 : vector<2x8xf32>, vector<2x32xf32> -> vector<2x40xf32>
    %c0_75 = arith.constant 0 : index
    %c0_76 = arith.constant 0 : index
    %219 = vector.load %arg11[%c0_75, %c0_76] : memref<40x128xf32, #tpu.memory_space<vmem>>, vector<40x128xf32>
    %cst_77 = arith.constant dense<0.000000e+00> : vector<2x128xf32>
    %220 = tpu.matmul %218, %219, %cst_77 {dimension_numbers = #tpu.dot_dimension_numbers<[1], [0], [0], [1], [0, 0, 1, 1], [], []>} : vector<2x40xf32>, vector<40x128xf32>, vector<2x128xf32> -> vector<2x128xf32>
    %c0_78 = arith.constant 0 : index
    %c0_79 = arith.constant 0 : index
    %221 = vector.load %arg12[%c0_78, %c0_79] : memref<1x128xf32, #tpu.memory_space<vmem>>, vector<1x128xf32>
    %222 = vector.broadcast %221 : vector<1x128xf32> to vector<2x128xf32>
    %223 = arith.addf %220, %222 : vector<2x128xf32>
    %224 = vector.extract_strided_slice %223 {offsets = [0, 0], sizes = [2, 32], strides = [1, 1]} : vector<2x128xf32> to vector<2x32xf32>
    %225 = arith.negf %224 : vector<2x32xf32>
    %226 = math.exp %225 : vector<2x32xf32>
    %cst_80 = arith.constant 1.000000e+00 : f32
    %227 = vector.broadcast %cst_80 : f32 to vector<2x32xf32>
    %228 = arith.addf %227, %226 : vector<2x32xf32>
    %229 = arith.divf %227, %228 : vector<2x32xf32>
    %230 = vector.extract_strided_slice %223 {offsets = [0, 32], sizes = [2, 32], strides = [1, 1]} : vector<2x128xf32> to vector<2x32xf32>
    %231 = arith.negf %230 : vector<2x32xf32>
    %232 = math.exp %231 : vector<2x32xf32>
    %cst_81 = arith.constant 1.000000e+00 : f32
    %233 = vector.broadcast %cst_81 : f32 to vector<2x32xf32>
    %234 = arith.addf %233, %232 : vector<2x32xf32>
    %235 = arith.divf %233, %234 : vector<2x32xf32>
    %236 = vector.extract_strided_slice %223 {offsets = [0, 64], sizes = [2, 32], strides = [1, 1]} : vector<2x128xf32> to vector<2x32xf32>
    %237 = math.tanh %236 : vector<2x32xf32>
    %238 = vector.extract_strided_slice %223 {offsets = [0, 96], sizes = [2, 32], strides = [1, 1]} : vector<2x128xf32> to vector<2x32xf32>
    %239 = arith.negf %238 : vector<2x32xf32>
    %240 = math.exp %239 : vector<2x32xf32>
    %cst_82 = arith.constant 1.000000e+00 : f32
    %241 = vector.broadcast %cst_82 : f32 to vector<2x32xf32>
    %242 = arith.addf %241, %240 : vector<2x32xf32>
    %243 = arith.divf %241, %242 : vector<2x32xf32>
    %244 = arith.mulf %235, %136 : vector<2x32xf32>
    %245 = arith.mulf %229, %237 : vector<2x32xf32>
    %246 = arith.addf %244, %245 : vector<2x32xf32>
    %247 = math.tanh %246 : vector<2x32xf32>
    %248 = arith.mulf %243, %247 : vector<2x32xf32>
    %249 = tpu.reciprocal %213 : vector<2x8xf32> -> vector<2x8xf32>
    %250 = tpu.reciprocal %172 : vector<2x8xf32> -> vector<2x8xf32>
    %251 = arith.subf %203, %162 : vector<2x8xf32>
    %252 = arith.mulf %172, %249 : vector<2x8xf32>
    %253 = math.log %252 : vector<2x8xf32>
    %254 = arith.mulf %213, %213 : vector<2x8xf32>
    %255 = arith.mulf %251, %251 : vector<2x8xf32>
    %256 = arith.addf %254, %255 : vector<2x8xf32>
    %cst_83 = arith.constant 5.000000e-01 : f32
    %257 = vector.broadcast %cst_83 : f32 to vector<2x8xf32>
    %258 = arith.mulf %257, %256 : vector<2x8xf32>
    %259 = arith.mulf %250, %250 : vector<2x8xf32>
    %260 = arith.mulf %258, %259 : vector<2x8xf32>
    %261 = arith.addf %253, %260 : vector<2x8xf32>
    %cst_84 = arith.constant 5.000000e-01 : f32
    %262 = vector.broadcast %cst_84 : f32 to vector<2x8xf32>
    %263 = arith.subf %261, %262 : vector<2x8xf32>
    %264 = tpu.concatenate %39, %248, %197 in 1 : vector<2x32xf32>, vector<2x32xf32>, vector<2x32xf32> -> vector<2x96xf32>
    %c0_85 = arith.constant 0 : index
    %c0_86 = arith.constant 0 : index
    %265 = vector.load %arg7[%c0_85, %c0_86] : memref<96x144xf32, #tpu.memory_space<vmem>>, vector<96x144xf32>
    %cst_87 = arith.constant dense<0.000000e+00> : vector<2x144xf32>
    %266 = tpu.matmul %264, %265, %cst_87 {dimension_numbers = #tpu.dot_dimension_numbers<[1], [0], [0], [1], [0, 0, 1, 1], [], []>} : vector<2x96xf32>, vector<96x144xf32>, vector<2x144xf32> -> vector<2x144xf32>
    %c0_88 = arith.constant 0 : index
    %c0_89 = arith.constant 0 : index
    %267 = vector.load %arg8[%c0_88, %c0_89] : memref<1x144xf32, #tpu.memory_space<vmem>>, vector<1x144xf32>
    %268 = vector.broadcast %267 : vector<1x144xf32> to vector<2x144xf32>
    %269 = arith.addf %266, %268 : vector<2x144xf32>
    %270 = vector.extract_strided_slice %269 {offsets = [0, 0], sizes = [2, 128], strides = [1, 1]} : vector<2x144xf32> to vector<2x128xf32>
    %271 = vector.extract_strided_slice %269 {offsets = [0, 128], sizes = [2, 16], strides = [1, 1]} : vector<2x144xf32> to vector<2x16xf32>
    %272 = vector.extract_strided_slice %271 {offsets = [0, 0], sizes = [2, 8], strides = [1, 1]} : vector<2x16xf32> to vector<2x8xf32>
    %273 = vector.extract_strided_slice %271 {offsets = [0, 8], sizes = [2, 8], strides = [1, 1]} : vector<2x16xf32> to vector<2x8xf32>
    %274 = arith.negf %273 : vector<2x8xf32>
    %275 = math.exp %274 : vector<2x8xf32>
    %cst_90 = arith.constant 1.000000e+00 : f32
    %276 = vector.broadcast %cst_90 : f32 to vector<2x8xf32>
    %277 = arith.addf %276, %275 : vector<2x8xf32>
    %278 = arith.divf %276, %277 : vector<2x8xf32>
    %cst_91 = arith.constant 9.900000e-01 : f32
    %279 = vector.broadcast %cst_91 : f32 to vector<2x8xf32>
    %280 = arith.mulf %278, %279 : vector<2x8xf32>
    %cst_92 = arith.constant 0.00999999977 : f32
    %281 = vector.broadcast %cst_92 : f32 to vector<2x8xf32>
    %282 = arith.addf %280, %281 : vector<2x8xf32>
    %283 = vector.extract_strided_slice %270 {offsets = [0, 0], sizes = [2, 32], strides = [1, 1]} : vector<2x128xf32> to vector<2x32xf32>
    %284 = arith.negf %283 : vector<2x32xf32>
    %285 = math.exp %284 : vector<2x32xf32>
    %cst_93 = arith.constant 1.000000e+00 : f32
    %286 = vector.broadcast %cst_93 : f32 to vector<2x32xf32>
    %287 = arith.addf %286, %285 : vector<2x32xf32>
    %288 = arith.divf %286, %287 : vector<2x32xf32>
    %289 = vector.extract_strided_slice %270 {offsets = [0, 32], sizes = [2, 32], strides = [1, 1]} : vector<2x128xf32> to vector<2x32xf32>
    %290 = arith.negf %289 : vector<2x32xf32>
    %291 = math.exp %290 : vector<2x32xf32>
    %cst_94 = arith.constant 1.000000e+00 : f32
    %292 = vector.broadcast %cst_94 : f32 to vector<2x32xf32>
    %293 = arith.addf %292, %291 : vector<2x32xf32>
    %294 = arith.divf %292, %293 : vector<2x32xf32>
    %295 = vector.extract_strided_slice %270 {offsets = [0, 64], sizes = [2, 32], strides = [1, 1]} : vector<2x128xf32> to vector<2x32xf32>
    %296 = math.tanh %295 : vector<2x32xf32>
    %297 = vector.extract_strided_slice %270 {offsets = [0, 96], sizes = [2, 32], strides = [1, 1]} : vector<2x128xf32> to vector<2x32xf32>
    %298 = arith.negf %297 : vector<2x32xf32>
    %299 = math.exp %298 : vector<2x32xf32>
    %cst_95 = arith.constant 1.000000e+00 : f32
    %300 = vector.broadcast %cst_95 : f32 to vector<2x32xf32>
    %301 = arith.addf %300, %299 : vector<2x32xf32>
    %302 = arith.divf %300, %301 : vector<2x32xf32>
    %303 = arith.mulf %294, %195 : vector<2x32xf32>
    %304 = arith.mulf %288, %296 : vector<2x32xf32>
    %305 = arith.addf %303, %304 : vector<2x32xf32>
    %306 = math.tanh %305 : vector<2x32xf32>
    %307 = arith.mulf %302, %306 : vector<2x32xf32>
    %c0_96 = arith.constant 0 : index
    %c0_97 = arith.constant 0 : index
    %308 = vector.load %arg9[%c0_96, %c0_97] : memref<32x16xf32, #tpu.memory_space<vmem>>, vector<32x16xf32>
    %cst_98 = arith.constant dense<0.000000e+00> : vector<2x16xf32>
    %309 = tpu.matmul %307, %308, %cst_98 {dimension_numbers = #tpu.dot_dimension_numbers<[1], [0], [0], [1], [0, 0, 1, 1], [], []>} : vector<2x32xf32>, vector<32x16xf32>, vector<2x16xf32> -> vector<2x16xf32>
    %c0_99 = arith.constant 0 : index
    %c0_100 = arith.constant 0 : index
    %310 = vector.load %arg10[%c0_99, %c0_100] : memref<1x16xf32, #tpu.memory_space<vmem>>, vector<1x16xf32>
    %311 = vector.broadcast %310 : vector<1x16xf32> to vector<2x16xf32>
    %312 = arith.addf %309, %311 : vector<2x16xf32>
    %313 = vector.extract_strided_slice %312 {offsets = [0, 0], sizes = [2, 8], strides = [1, 1]} : vector<2x16xf32> to vector<2x8xf32>
    %314 = vector.extract_strided_slice %312 {offsets = [0, 8], sizes = [2, 8], strides = [1, 1]} : vector<2x16xf32> to vector<2x8xf32>
    %315 = arith.negf %314 : vector<2x8xf32>
    %316 = math.exp %315 : vector<2x8xf32>
    %cst_101 = arith.constant 1.000000e+00 : f32
    %317 = vector.broadcast %cst_101 : f32 to vector<2x8xf32>
    %318 = arith.addf %317, %316 : vector<2x8xf32>
    %319 = arith.divf %317, %318 : vector<2x8xf32>
    %cst_102 = arith.constant 9.900000e-01 : f32
    %320 = vector.broadcast %cst_102 : f32 to vector<2x8xf32>
    %321 = arith.mulf %319, %320 : vector<2x8xf32>
    %cst_103 = arith.constant 0.00999999977 : f32
    %322 = vector.broadcast %cst_103 : f32 to vector<2x8xf32>
    %323 = arith.addf %321, %322 : vector<2x8xf32>
    %c2 = arith.constant 2 : index
    %c0_104 = arith.constant 0 : index
    %c0_105 = arith.constant 0 : index
    %324 = vector.load %arg17[%c2, %c0_104, %c0_105] : memref<3x2x8xf32, #tpu.memory_space<vmem>>, vector<1x2x8xf32>
    %325 = vector.shape_cast %324 : vector<1x2x8xf32> to vector<2x8xf32>
    %326 = arith.mulf %323, %325 : vector<2x8xf32>
    %327 = arith.addf %313, %326 : vector<2x8xf32>
    %328 = tpu.reciprocal %323 : vector<2x8xf32> -> vector<2x8xf32>
    %329 = tpu.reciprocal %282 : vector<2x8xf32> -> vector<2x8xf32>
    %330 = arith.subf %313, %272 : vector<2x8xf32>
    %331 = arith.mulf %282, %328 : vector<2x8xf32>
    %332 = math.log %331 : vector<2x8xf32>
    %333 = arith.mulf %323, %323 : vector<2x8xf32>
    %334 = arith.mulf %330, %330 : vector<2x8xf32>
    %335 = arith.addf %333, %334 : vector<2x8xf32>
    %cst_106 = arith.constant 5.000000e-01 : f32
    %336 = vector.broadcast %cst_106 : f32 to vector<2x8xf32>
    %337 = arith.mulf %336, %335 : vector<2x8xf32>
    %338 = arith.mulf %329, %329 : vector<2x8xf32>
    %339 = arith.mulf %337, %338 : vector<2x8xf32>
    %340 = arith.addf %332, %339 : vector<2x8xf32>
    %cst_107 = arith.constant 5.000000e-01 : f32
    %341 = vector.broadcast %cst_107 : f32 to vector<2x8xf32>
    %342 = arith.subf %340, %341 : vector<2x8xf32>
    %343 = tpu.concatenate %153, %263, %342 in 1 : vector<2x8xf32>, vector<2x8xf32>, vector<2x8xf32> -> vector<2x24xf32>
    %c0_108 = arith.constant 0 : index
    %c0_109 = arith.constant 0 : index
    %344 = vector.load %arg19[%c0_108, %c0_109] : memref<2x24xf32, #tpu.memory_space<vmem>>, vector<2x24xf32>
    tpu.vector_store %arg19[%c0_108, %c0_109], %343 {strides = array<i32>} : memref<2x24xf32, #tpu.memory_space<vmem>>, vector<2x24xf32>,
    %345 = tpu.concatenate %107, %217, %327 in 0 : vector<2x8xf32>, vector<2x8xf32>, vector<2x8xf32> -> vector<6x8xf32>
    %c0_110 = arith.constant 0 : index
    %c0_111 = arith.constant 0 : index
    %346 = vector.load %arg13[%c0_110, %c0_111] : memref<8x32xf32, #tpu.memory_space<vmem>>, vector<8x32xf32>
    %cst_112 = arith.constant dense<0.000000e+00> : vector<6x32xf32>
    %347 = tpu.matmul %345, %346, %cst_112 {dimension_numbers = #tpu.dot_dimension_numbers<[1], [0], [0], [1], [0, 0, 1, 1], [], []>} : vector<6x8xf32>, vector<8x32xf32>, vector<6x32xf32> -> vector<6x32xf32>
    %c0_113 = arith.constant 0 : index
    %c0_114 = arith.constant 0 : index
    %348 = vector.load %arg14[%c0_113, %c0_114] : memref<1x32xf32, #tpu.memory_space<vmem>>, vector<1x32xf32>
    %349 = vector.broadcast %348 : vector<1x32xf32> to vector<6x32xf32>
    %350 = arith.addf %347, %349 : vector<6x32xf32>
    %cst_115 = arith.constant 0.000000e+00 : f32
    %351 = vector.broadcast %cst_115 : f32 to vector<6x32xf32>
    %352 = arith.maximumf %350, %351 : vector<6x32xf32>
    %c0_116 = arith.constant 0 : index
    %c0_117 = arith.constant 0 : index
    %353 = vector.load %arg15[%c0_116, %c0_117] : memref<32x256xf32, #tpu.memory_space<vmem>>, vector<32x256xf32>
    %cst_118 = arith.constant dense<0.000000e+00> : vector<6x256xf32>
    %354 = tpu.matmul %352, %353, %cst_118 {dimension_numbers = #tpu.dot_dimension_numbers<[1], [0], [0], [1], [0, 0, 1, 1], [], []>} : vector<6x32xf32>, vector<32x256xf32>, vector<6x256xf32> -> vector<6x256xf32>
    %c0_119 = arith.constant 0 : index
    %c0_120 = arith.constant 0 : index
    %355 = vector.load %arg16[%c0_119, %c0_120] : memref<1x256xf32, #tpu.memory_space<vmem>>, vector<1x256xf32>
    %356 = vector.broadcast %355 : vector<1x256xf32> to vector<6x256xf32>
    %357 = arith.addf %354, %356 : vector<6x256xf32>
    %cst_121 = arith.constant 0.000000e+00 : f32
    %358 = vector.broadcast %cst_121 : f32 to vector<2x256xf32>
    %359 = vector.extract_strided_slice %357 {offsets = [0, 0], sizes = [2, 256], strides = [1, 1]} : vector<6x256xf32> to vector<2x256xf32>
    %360 = math.absf %359 : vector<2x256xf32>
    %cst_122 = arith.constant 0.000000e+00 : f32
    %361 = vector.broadcast %cst_122 : f32 to vector<2x256xf32>
    %362 = arith.subf %361, %360 : vector<2x256xf32>
    %363 = math.exp %362 : vector<2x256xf32>
    %cst_123 = arith.constant 1.000000e+00 : f32
    %364 = vector.broadcast %cst_123 : f32 to vector<2x256xf32>
    %365 = arith.addf %364, %363 : vector<2x256xf32>
    %366 = math.log %365 : vector<2x256xf32>
    %cst_124 = arith.constant 0.000000e+00 : f32
    %367 = vector.broadcast %cst_124 : f32 to vector<2x256xf32>
    %368 = arith.minimumf %359, %367 : vector<2x256xf32>
    %369 = arith.addf %358, %368 : vector<2x256xf32>
    %370 = arith.subf %369, %366 : vector<2x256xf32>
    %c0_125 = arith.constant 0 : index
    %c0_126 = arith.constant 0 : index
    %c0_127 = arith.constant 0 : index
    %371 = vector.load %arg18[%c0_125, %c0_126, %c0_127] : memref<3x2x256xf32, #tpu.memory_space<vmem>>, vector<1x2x256xf32>
    %372 = vector.shape_cast %371 : vector<1x2x256xf32> to vector<2x256xf32>
    %373 = vector.shape_cast %370 : vector<2x256xf32> to vector<1x2x256xf32>
    tpu.vector_store %arg18[%c0_125, %c0_126, %c0_127], %373 {strides = array<i32>} : memref<3x2x256xf32, #tpu.memory_space<vmem>>, vector<1x2x256xf32>,
    %cst_128 = arith.constant 0.000000e+00 : f32
    %374 = vector.broadcast %cst_128 : f32 to vector<2x256xf32>
    %375 = arith.subf %374, %359 : vector<2x256xf32>
    %cst_129 = arith.constant 0.000000e+00 : f32
    %376 = vector.broadcast %cst_129 : f32 to vector<2x256xf32>
    %377 = arith.minimumf %375, %376 : vector<2x256xf32>
    %378 = arith.addf %358, %377 : vector<2x256xf32>
    %379 = arith.subf %378, %366 : vector<2x256xf32>
    %380 = vector.extract_strided_slice %357 {offsets = [2, 0], sizes = [2, 256], strides = [1, 1]} : vector<6x256xf32> to vector<2x256xf32>
    %381 = math.absf %380 : vector<2x256xf32>
    %cst_130 = arith.constant 0.000000e+00 : f32
    %382 = vector.broadcast %cst_130 : f32 to vector<2x256xf32>
    %383 = arith.subf %382, %381 : vector<2x256xf32>
    %384 = math.exp %383 : vector<2x256xf32>
    %cst_131 = arith.constant 1.000000e+00 : f32
    %385 = vector.broadcast %cst_131 : f32 to vector<2x256xf32>
    %386 = arith.addf %385, %384 : vector<2x256xf32>
    %387 = math.log %386 : vector<2x256xf32>
    %cst_132 = arith.constant 0.000000e+00 : f32
    %388 = vector.broadcast %cst_132 : f32 to vector<2x256xf32>
    %389 = arith.minimumf %380, %388 : vector<2x256xf32>
    %390 = arith.addf %379, %389 : vector<2x256xf32>
    %391 = arith.subf %390, %387 : vector<2x256xf32>
    %c1_133 = arith.constant 1 : index
    %c0_134 = arith.constant 0 : index
    %c0_135 = arith.constant 0 : index
    %392 = vector.load %arg18[%c1_133, %c0_134, %c0_135] : memref<3x2x256xf32, #tpu.memory_space<vmem>>, vector<1x2x256xf32>
    %393 = vector.shape_cast %392 : vector<1x2x256xf32> to vector<2x256xf32>
    %394 = vector.shape_cast %391 : vector<2x256xf32> to vector<1x2x256xf32>
    tpu.vector_store %arg18[%c1_133, %c0_134, %c0_135], %394 {strides = array<i32>} : memref<3x2x256xf32, #tpu.memory_space<vmem>>, vector<1x2x256xf32>,
    %cst_136 = arith.constant 0.000000e+00 : f32
    %395 = vector.broadcast %cst_136 : f32 to vector<2x256xf32>
    %396 = arith.subf %395, %380 : vector<2x256xf32>
    %cst_137 = arith.constant 0.000000e+00 : f32
    %397 = vector.broadcast %cst_137 : f32 to vector<2x256xf32>
    %398 = arith.minimumf %396, %397 : vector<2x256xf32>
    %399 = arith.addf %379, %398 : vector<2x256xf32>
    %400 = arith.subf %399, %387 : vector<2x256xf32>
    %c2_138 = arith.constant 2 : index
    %c0_139 = arith.constant 0 : index
    %c0_140 = arith.constant 0 : index
    %401 = vector.load %arg18[%c2_138, %c0_139, %c0_140] : memref<3x2x256xf32, #tpu.memory_space<vmem>>, vector<1x2x256xf32>
    %402 = vector.shape_cast %401 : vector<1x2x256xf32> to vector<2x256xf32>
    %403 = vector.shape_cast %400 : vector<2x256xf32> to vector<1x2x256xf32>
    tpu.vector_store %arg18[%c2_138, %c0_139, %c0_140], %403 {strides = array<i32>} : memref<3x2x256xf32, #tpu.memory_space<vmem>>, vector<1x2x256xf32>,
    return
  }
}

</mosaic_0001>

<llo_original>
// kernel: gated_recurrent_sbp_forward.1
$region0: #{gated_recurrent_sbp_forward.1}
  #allocation0 [shape = 'u32[]', space=smem, size = 0x4, offset = 0x4, fixed_abs, tag = 'smem constant byte address 0x4 - core index']
  #allocation1 [shape = 'u32[144,128]{1,0:T(1,128)}', space=vmem, size = 0x12000, scoped, tag = 'internal scratch']
  %s0 = inlined_call_operand.vmem [shape: f32[2,1024], index: 0, kind: input, shape index: {}]
  %s1 = inlined_call_operand.hbm [shape: f32[1024,2048], index: 1, kind: input, shape index: {}]
  %s2 = inlined_call_operand.hbm [shape: f32[1,2048], index: 2, kind: input, shape index: {}]
  %s3 = inlined_call_operand.hbm [shape: f32[1024,1024], index: 3, kind: input, shape index: {}]
  %s4 = inlined_call_operand.hbm [shape: f32[1,1024], index: 4, kind: input, shape index: {}]
  %s5 = inlined_call_operand.vmem [shape: f32[512,64], index: 5, kind: input, shape index: {}]
  %s6 = inlined_call_operand.hbm [shape: f32[1,64], index: 6, kind: input, shape index: {}]
  %s7 = inlined_call_operand.vmem [shape: f32[96,144], index: 7, kind: input, shape index: {}]
  %s8 = inlined_call_operand.hbm [shape: f32[1,144], index: 8, kind: input, shape index: {}]
  %s9 = inlined_call_operand.vmem [shape: f32[32,16], index: 9, kind: input, shape index: {}]
  %s10 = inlined_call_operand.hbm [shape: f32[1,16], index: 10, kind: input, shape index: {}]
  %s11 = inlined_call_operand.hbm [shape: f32[40,128], index: 11, kind: input, shape index: {}]
  %s12 = inlined_call_operand.hbm [shape: f32[1,128], index: 12, kind: input, shape index: {}]
  %s13 = inlined_call_operand.hbm [shape: f32[8,32], index: 13, kind: input, shape index: {}]
  %s14 = inlined_call_operand.hbm [shape: f32[1,32], index: 14, kind: input, shape index: {}]
  %s15 = inlined_call_operand.hbm [shape: f32[32,256], index: 15, kind: input, shape index: {}]
  %s16 = inlined_call_operand.hbm [shape: f32[1,256], index: 16, kind: input, shape index: {}]
  %s17 = inlined_call_operand.hbm [shape: f32[3,2,8], index: 17, kind: input, shape index: {}]
  %s18 = inlined_call_operand.vmem [shape: f32[3,2,256], index: 18, kind: output, shape index: {0}]
  %s19 = inlined_call_operand.vmem [shape: f32[2,24], index: 19, kind: output, shape index: {1}]
  %20 = xla_tuple %s18, %s19
  %s21 = sld [smem:[#allocation0]]
  $region146: #{gated_recurrent_sbp_forward.1} parent=0
    _
  %s23 = ssub.s32 1, %s21
  %s24 = scalar_select 0, %s23, %s21
  $region1: #{gated_recurrent_sbp_forward.1} parent=0
    #allocation2 [shape = 'u8[8388608]{0}', space=vmem, size = 0x800000, scoped, tag = 'input window, operand 1, single buffered']
    #allocation3 [shape = 's32[1]{0}', space=sflag, size = 0x4, scoped, tag = 'scoped memory for gated_recurrent_sbp_forward.1']
    #allocation4 [shape = 'u8[8192]{0}', space=vmem, size = 0x2000, scoped, tag = 'input window, operand 2, single buffered']
    #allocation5 [shape = 's32[1]{0}', space=sflag, size = 0x4, scoped, tag = 'scoped memory for gated_recurrent_sbp_forward.1']
    #allocation6 [shape = 'u8[4194304]{0}', space=vmem, size = 0x400000, scoped, tag = 'input window, operand 3, single buffered']
    #allocation7 [shape = 'u8[4096]{0}', space=vmem, size = 0x1000, scoped, tag = 'input window, operand 4, single buffered']
    #allocation8 [shape = 's32[1]{0}', space=sflag, size = 0x4, scoped, tag = 'scoped memory for gated_recurrent_sbp_forward.1']
    #allocation9 [shape = 'u8[512]{0}', space=vmem, size = 0x400, scoped, tag = 'input window, operand 6, single buffered']
    #allocation10 [shape = 'u8[1024]{0}', space=vmem, size = 0x400, scoped, tag = 'input window, operand 8, single buffered']
    #allocation11 [shape = 's32[1]{0}', space=sflag, size = 0x4, scoped, tag = 'scoped memory for gated_recurrent_sbp_forward.1']
    #allocation12 [shape = 'u8[512]{0}', space=vmem, size = 0x400, scoped, tag = 'input window, operand 10, single buffered']
    #allocation13 [shape = 'u8[20480]{0}', space=vmem, size = 0x5000, scoped, tag = 'input window, operand 11, single buffered']
    #allocation14 [shape = 's32[1]{0}', space=sflag, size = 0x4, scoped, tag = 'scoped memory for gated_recurrent_sbp_forward.1']
    #allocation15 [shape = 'u8[512]{0}', space=vmem, size = 0x400, scoped, tag = 'input window, operand 12, single buffered']
    #allocation16 [shape = 'u8[4096]{0}', space=vmem, size = 0x1000, scoped, tag = 'input window, operand 13, single buffered']
    #allocation17 [shape = 's32[1]{0}', space=sflag, size = 0x4, scoped, tag = 'scoped memory for gated_recurrent_sbp_forward.1']
    #allocation18 [shape = 'u8[512]{0}', space=vmem, size = 0x400, scoped, tag = 'input window, operand 14, single buffered']
    #allocation19 [shape = 'u8[32768]{0}', space=vmem, size = 0x8000, scoped, tag = 'input window, operand 15, single buffered']
    #allocation20 [shape = 's32[1]{0}', space=sflag, size = 0x4, scoped, tag = 'scoped memory for gated_recurrent_sbp_forward.1']
    #allocation21 [shape = 'u8[1024]{0}', space=vmem, size = 0x400, scoped, tag = 'input window, operand 16, single buffered']
    #allocation22 [shape = 'u8[3072]{0}', space=vmem, size = 0xc00, scoped, tag = 'input window, operand 17, single buffered']
    #allocation23 [shape = 's32[1]{0}', space=sflag, size = 0x4, scoped, tag = 'scoped memory for gated_recurrent_sbp_forward.1']
    %25 = vsyncpa [#allocation3], 0
    %26 = vsyncpa [#allocation5], 0
    %27 = vsyncpa [#allocation8], 0
    %28 = vsyncpa [#allocation11], 0
    %29 = vsyncpa [#allocation14], 0
    %30 = vsyncpa [#allocation17], 0
    %31 = vsyncpa [#allocation20], 0
    %32 = vsyncpa [#allocation23], 0
    // Predicated region
    $region2: #{gated_recurrent_sbp_forward.1} parent=1 // pred_check
      _
    $region3: #{gated_recurrent_sbp_forward.1} parent=1 // pred_check_branch
      %34 = sbr.rel (0) target = $region5
    $region4: #{gated_recurrent_sbp_forward.1} parent=1 // pred_region
      _
    $region5: #{gated_recurrent_sbp_forward.1} parent=1 // pred_fallthru
      _
    // Predicated region
    $region6: #{gated_recurrent_sbp_forward.1} parent=1 // pred_check
      _
    $region7: #{gated_recurrent_sbp_forward.1} parent=1 // pred_check_branch
      %36 = sbr.rel (0) target = $region9
    $region8: #{gated_recurrent_sbp_forward.1} parent=1 // pred_region
      %s38 = ssub.s32 262144, 262144
      %39 = vsyncadd [#allocation3], %s38
      %s40 = sshll.u32 [#allocation2], 4
      %s41 = int_to_ptr.vmem [resolvable:$true] %s40
      %46 = dma.hbm_to_vmem [thread:$0]  %s1, 262144, %s41, [#allocation3], 2048, 2048, 128
    $region9: #{gated_recurrent_sbp_forward.1} parent=1 // pred_fallthru
      _
    // Predicated region
    $region10: #{gated_recurrent_sbp_forward.1} parent=1 // pred_check
      _
    $region11: #{gated_recurrent_sbp_forward.1} parent=1 // pred_check_branch
      %48 = sbr.rel (0) target = $region13
    $region12: #{gated_recurrent_sbp_forward.1} parent=1 // pred_region
      %s50 = ssub.s32 256, 256
      %51 = vsyncadd [#allocation5], %s50
      %s53 = sshll.u32 [#allocation4], 4
      %s54 = int_to_ptr.vmem [resolvable:$true] %s53
      %56 = dma.hbm_to_vmem [thread:$0]  %s2, 256, %s54, [#allocation5]
    $region13: #{gated_recurrent_sbp_forward.1} parent=1 // pred_fallthru
      _
    // Predicated region
    $region14: #{gated_recurrent_sbp_forward.1} parent=1 // pred_check
      _
    $region15: #{gated_recurrent_sbp_forward.1} parent=1 // pred_check_branch
      %58 = sbr.rel (0) target = $region17
    $region16: #{gated_recurrent_sbp_forward.1} parent=1 // pred_region
      %s60 = ssub.s32 131072, 131072
      %61 = vsyncadd [#allocation5], %s60
      %s62 = sshll.u32 [#allocation6], 4
      %s63 = int_to_ptr.vmem [resolvable:$true] %s62
      %68 = dma.hbm_to_vmem [thread:$0]  %s3, 131072, %s63, [#allocation5], 1024, 1024, 64
    $region17: #{gated_recurrent_sbp_forward.1} parent=1 // pred_fallthru
      _
    // Predicated region
    $region18: #{gated_recurrent_sbp_forward.1} parent=1 // pred_check
      _
    $region19: #{gated_recurrent_sbp_forward.1} parent=1 // pred_check_branch
      %70 = sbr.rel (0) target = $region21
    $region20: #{gated_recurrent_sbp_forward.1} parent=1 // pred_region
      %s72 = ssub.s32 128, 128
      %73 = vsyncadd [#allocation8], %s72
      %s75 = sshll.u32 [#allocation7], 4
      %s76 = int_to_ptr.vmem [resolvable:$true] %s75
      %78 = dma.hbm_to_vmem [thread:$0]  %s4, 128, %s76, [#allocation8]
    $region21: #{gated_recurrent_sbp_forward.1} parent=1 // pred_fallthru
      _
    // Predicated region
    $region22: #{gated_recurrent_sbp_forward.1} parent=1 // pred_check
      _
    $region23: #{gated_recurrent_sbp_forward.1} parent=1 // pred_check_branch
      %80 = sbr.rel (0) target = $region25
    $region24: #{gated_recurrent_sbp_forward.1} parent=1 // pred_region
      _
    $region25: #{gated_recurrent_sbp_forward.1} parent=1 // pred_fallthru
      _
    // Predicated region
    $region26: #{gated_recurrent_sbp_forward.1} parent=1 // pred_check
      _
    $region27: #{gated_recurrent_sbp_forward.1} parent=1 // pred_check_branch
      %82 = sbr.rel (0) target = $region29
    $region28: #{gated_recurrent_sbp_forward.1} parent=1 // pred_region
      %s84 = ssub.s32 16, 16
      %85 = vsyncadd [#allocation8], %s84
      %s87 = sshll.u32 [#allocation9], 4
      %s88 = int_to_ptr.vmem [resolvable:$true] %s87
      %90 = dma.hbm_to_vmem [thread:$0]  %s6, 16, %s88, [#allocation8]
    $region29: #{gated_recurrent_sbp_forward.1} parent=1 // pred_fallthru
      _
    // Predicated region
    $region30: #{gated_recurrent_sbp_forward.1} parent=1 // pred_check
      _
    $region31: #{gated_recurrent_sbp_forward.1} parent=1 // pred_check_branch
      %92 = sbr.rel (0) target = $region33
    $region32: #{gated_recurrent_sbp_forward.1} parent=1 // pred_region
      _
    $region33: #{gated_recurrent_sbp_forward.1} parent=1 // pred_fallthru
      _
    // Predicated region
    $region34: #{gated_recurrent_sbp_forward.1} parent=1 // pred_check
      _
    $region35: #{gated_recurrent_sbp_forward.1} parent=1 // pred_check_branch
      %94 = sbr.rel (0) target = $region37
    $region36: #{gated_recurrent_sbp_forward.1} parent=1 // pred_region
      %s96 = ssub.s32 32, 32
      %97 = vsyncadd [#allocation11], %s96
      %s99 = sshll.u32 [#allocation10], 4
      %s100 = int_to_ptr.vmem [resolvable:$true] %s99
      %102 = dma.hbm_to_vmem [thread:$0]  %s8, 32, %s100, [#allocation11]
    $region37: #{gated_recurrent_sbp_forward.1} parent=1 // pred_fallthru
      _
    // Predicated region
    $region38: #{gated_recurrent_sbp_forward.1} parent=1 // pred_check
      _
    $region39: #{gated_recurrent_sbp_forward.1} parent=1 // pred_check_branch
      %104 = sbr.rel (0) target = $region41
    $region40: #{gated_recurrent_sbp_forward.1} parent=1 // pred_region
      _
    $region41: #{gated_recurrent_sbp_forward.1} parent=1 // pred_fallthru
      _
    // Predicated region
    $region42: #{gated_recurrent_sbp_forward.1} parent=1 // pred_check
      _
    $region43: #{gated_recurrent_sbp_forward.1} parent=1 // pred_check_branch
      %106 = sbr.rel (0) target = $region45
    $region44: #{gated_recurrent_sbp_forward.1} parent=1 // pred_region
      %s108 = ssub.s32 16, 16
      %109 = vsyncadd [#allocation11], %s108
      %s111 = sshll.u32 [#allocation12], 4
      %s112 = int_to_ptr.vmem [resolvable:$true] %s111
      %114 = dma.hbm_to_vmem [thread:$0]  %s10, 16, %s112, [#allocation11]
    $region45: #{gated_recurrent_sbp_forward.1} parent=1 // pred_fallthru
      _
    // Predicated region
    $region46: #{gated_recurrent_sbp_forward.1} parent=1 // pred_check
      _
    $region47: #{gated_recurrent_sbp_forward.1} parent=1 // pred_check_branch
      %116 = sbr.rel (0) target = $region49
    $region48: #{gated_recurrent_sbp_forward.1} parent=1 // pred_region
      %s118 = ssub.s32 640, 640
      %119 = vsyncadd [#allocation14], %s118
      %s120 = sshll.u32 [#allocation13], 4
      %s121 = int_to_ptr.vmem [resolvable:$true] %s120
      %126 = dma.hbm_to_vmem [thread:$0]  %s11, 640, %s121, [#allocation14], 128, 128, 8
    $region49: #{gated_recurrent_sbp_forward.1} parent=1 // pred_fallthru
      _
    // Predicated region
    $region50: #{gated_recurrent_sbp_forward.1} parent=1 // pred_check
      _
    $region51: #{gated_recurrent_sbp_forward.1} parent=1 // pred_check_branch
      %128 = sbr.rel (0) target = $region53
    $region52: #{gated_recurrent_sbp_forward.1} parent=1 // pred_region
      %s130 = ssub.s32 16, 16
      %131 = vsyncadd [#allocation14], %s130
      %s133 = sshll.u32 [#allocation15], 4
      %s134 = int_to_ptr.vmem [resolvable:$true] %s133
      %136 = dma.hbm_to_vmem [thread:$0]  %s12, 16, %s134, [#allocation14]
    $region53: #{gated_recurrent_sbp_forward.1} parent=1 // pred_fallthru
      _
    // Predicated region
    $region54: #{gated_recurrent_sbp_forward.1} parent=1 // pred_check
      _
    $region55: #{gated_recurrent_sbp_forward.1} parent=1 // pred_check_branch
      %138 = sbr.rel (0) target = $region57
    $region56: #{gated_recurrent_sbp_forward.1} parent=1 // pred_region
      %s140 = ssub.s32 128, 128
      %141 = vsyncadd [#allocation17], %s140
      %s143 = sshll.u32 [#allocation16], 4
      %s144 = int_to_ptr.vmem [resolvable:$true] %s143
      %146 = dma.hbm_to_vmem [thread:$0]  %s13, 128, %s144, [#allocation17]
    $region57: #{gated_recurrent_sbp_forward.1} parent=1 // pred_fallthru
      _
    // Predicated region
    $region58: #{gated_recurrent_sbp_forward.1} parent=1 // pred_check
      _
    $region59: #{gated_recurrent_sbp_forward.1} parent=1 // pred_check_branch
      %148 = sbr.rel (0) target = $region61
    $region60: #{gated_recurrent_sbp_forward.1} parent=1 // pred_region
      %s150 = ssub.s32 16, 16
      %151 = vsyncadd [#allocation17], %s150
      %s153 = sshll.u32 [#allocation18], 4
      %s154 = int_to_ptr.vmem [resolvable:$true] %s153
      %156 = dma.hbm_to_vmem [thread:$0]  %s14, 16, %s154, [#allocation17]
    $region61: #{gated_recurrent_sbp_forward.1} parent=1 // pred_fallthru
      _
    // Predicated region
    $region62: #{gated_recurrent_sbp_forward.1} parent=1 // pred_check
      _
    $region63: #{gated_recurrent_sbp_forward.1} parent=1 // pred_check_branch
      %158 = sbr.rel (0) target = $region65
    $region64: #{gated_recurrent_sbp_forward.1} parent=1 // pred_region
      %s160 = ssub.s32 1024, 1024
      %161 = vsyncadd [#allocation20], %s160
      %s162 = sshll.u32 [#allocation19], 4
      %s163 = int_to_ptr.vmem [resolvable:$true] %s162
      %168 = dma.hbm_to_vmem [thread:$0]  %s15, 1024, %s163, [#allocation20], 256, 256, 16
    $region65: #{gated_recurrent_sbp_forward.1} parent=1 // pred_fallthru
      _
    // Predicated region
    $region66: #{gated_recurrent_sbp_forward.1} parent=1 // pred_check
      _
    $region67: #{gated_recurrent_sbp_forward.1} parent=1 // pred_check_branch
      %170 = sbr.rel (0) target = $region69
    $region68: #{gated_recurrent_sbp_forward.1} parent=1 // pred_region
      %s172 = ssub.s32 32, 32
      %173 = vsyncadd [#allocation20], %s172
      %s175 = sshll.u32 [#allocation21], 4
      %s176 = int_to_ptr.vmem [resolvable:$true] %s175
      %178 = dma.hbm_to_vmem [thread:$0]  %s16, 32, %s176, [#allocation20]
    $region69: #{gated_recurrent_sbp_forward.1} parent=1 // pred_fallthru
      _
    // Predicated region
    $region70: #{gated_recurrent_sbp_forward.1} parent=1 // pred_check
      _
    $region71: #{gated_recurrent_sbp_forward.1} parent=1 // pred_check_branch
      %180 = sbr.rel (0) target = $region73
    $region72: #{gated_recurrent_sbp_forward.1} parent=1 // pred_region
      %s182 = ssub.s32 96, 96
      %183 = vsyncadd [#allocation23], %s182
      %s184 = sshll.u32 [#allocation22], 4
      %s185 = int_to_ptr.vmem [resolvable:$true] %s184
      %190 = dma.hbm_to_vmem [thread:$0]  %s17, 96, %s185, [#allocation23], 32, 32, 2
    $region73: #{gated_recurrent_sbp_forward.1} parent=1 // pred_fallthru
      _
    // Predicated region
    $region74: #{gated_recurrent_sbp_forward.1} parent=1 // pred_check
      _
    $region75: #{gated_recurrent_sbp_forward.1} parent=1 // pred_check_branch
      %192 = sbr.rel (0) target = $region77
    $region76: #{gated_recurrent_sbp_forward.1} parent=1 // pred_region
      %193 = dma.done [#allocation3], 262144
    $region77: #{gated_recurrent_sbp_forward.1} parent=1 // pred_fallthru
      _
    // Predicated region
    $region78: #{gated_recurrent_sbp_forward.1} parent=1 // pred_check
      _
    $region79: #{gated_recurrent_sbp_forward.1} parent=1 // pred_check_branch
      %195 = sbr.rel (0) target = $region81
    $region80: #{gated_recurrent_sbp_forward.1} parent=1 // pred_region
      %196 = dma.done [#allocation5], 256
    $region81: #{gated_recurrent_sbp_forward.1} parent=1 // pred_fallthru
      _
    // Predicated region
    $region82: #{gated_recurrent_sbp_forward.1} parent=1 // pred_check
      _
    $region83: #{gated_recurrent_sbp_forward.1} parent=1 // pred_check_branch
      %198 = sbr.rel (0) target = $region85
    $region84: #{gated_recurrent_sbp_forward.1} parent=1 // pred_region
      %199 = dma.done [#allocation5], 131072
    $region85: #{gated_recurrent_sbp_forward.1} parent=1 // pred_fallthru
      _
    // Predicated region
    $region86: #{gated_recurrent_sbp_forward.1} parent=1 // pred_check
      _
    $region87: #{gated_recurrent_sbp_forward.1} parent=1 // pred_check_branch
      %201 = sbr.rel (0) target = $region89
    $region88: #{gated_recurrent_sbp_forward.1} parent=1 // pred_region
      %202 = dma.done [#allocation8], 128
    $region89: #{gated_recurrent_sbp_forward.1} parent=1 // pred_fallthru
      _
    // Predicated region
    $region90: #{gated_recurrent_sbp_forward.1} parent=1 // pred_check
      _
    $region91: #{gated_recurrent_sbp_forward.1} parent=1 // pred_check_branch
      %204 = sbr.rel (0) target = $region93
    $region92: #{gated_recurrent_sbp_forward.1} parent=1 // pred_region
      %205 = dma.done [#allocation8], 16
    $region93: #{gated_recurrent_sbp_forward.1} parent=1 // pred_fallthru
      _
    // Predicated region
    $region94: #{gated_recurrent_sbp_forward.1} parent=1 // pred_check
      _
    $region95: #{gated_recurrent_sbp_forward.1} parent=1 // pred_check_branch
      %207 = sbr.rel (0) target = $region97
    $region96: #{gated_recurrent_sbp_forward.1} parent=1 // pred_region
      %208 = dma.done [#allocation11], 32
    $region97: #{gated_recurrent_sbp_forward.1} parent=1 // pred_fallthru
      _
    // Predicated region
    $region98: #{gated_recurrent_sbp_forward.1} parent=1 // pred_check
      _
    $region99: #{gated_recurrent_sbp_forward.1} parent=1 // pred_check_branch
      %210 = sbr.rel (0) target = $region101
    $region100: #{gated_recurrent_sbp_forward.1} parent=1 // pred_region
      %211 = dma.done [#allocation11], 16
    $region101: #{gated_recurrent_sbp_forward.1} parent=1 // pred_fallthru
      _
    // Predicated region
    $region102: #{gated_recurrent_sbp_forward.1} parent=1 // pred_check
      _
    $region103: #{gated_recurrent_sbp_forward.1} parent=1 // pred_check_branch
      %213 = sbr.rel (0) target = $region105
    $region104: #{gated_recurrent_sbp_forward.1} parent=1 // pred_region
      %214 = dma.done [#allocation14], 640
    $region105: #{gated_recurrent_sbp_forward.1} parent=1 // pred_fallthru
      _
    // Predicated region
    $region106: #{gated_recurrent_sbp_forward.1} parent=1 // pred_check
      _
    $region107: #{gated_recurrent_sbp_forward.1} parent=1 // pred_check_branch
      %216 = sbr.rel (0) target = $region109
    $region108: #{gated_recurrent_sbp_forward.1} parent=1 // pred_region
      %217 = dma.done [#allocation14], 16
    $region109: #{gated_recurrent_sbp_forward.1} parent=1 // pred_fallthru
      _
    // Predicated region
    $region110: #{gated_recurrent_sbp_forward.1} parent=1 // pred_check
      _
    $region111: #{gated_recurrent_sbp_forward.1} parent=1 // pred_check_branch
      %219 = sbr.rel (0) target = $region113
    $region112: #{gated_recurrent_sbp_forward.1} parent=1 // pred_region
      %220 = dma.done [#allocation17], 128
    $region113: #{gated_recurrent_sbp_forward.1} parent=1 // pred_fallthru
      _
    // Predicated region
    $region114: #{gated_recurrent_sbp_forward.1} parent=1 // pred_check
      _
    $region115: #{gated_recurrent_sbp_forward.1} parent=1 // pred_check_branch
      %222 = sbr.rel (0) target = $region117
    $region116: #{gated_recurrent_sbp_forward.1} parent=1 // pred_region
      %223 = dma.done [#allocation17], 16
    $region117: #{gated_recurrent_sbp_forward.1} parent=1 // pred_fallthru
      _
    // Predicated region
    $region118: #{gated_recurrent_sbp_forward.1} parent=1 // pred_check
      _
    $region119: #{gated_recurrent_sbp_forward.1} parent=1 // pred_check_branch
      %225 = sbr.rel (0) target = $region121
    $region120: #{gated_recurrent_sbp_forward.1} parent=1 // pred_region
      %226 = dma.done [#allocation20], 1024
    $region121: #{gated_recurrent_sbp_forward.1} parent=1 // pred_fallthru
      _
    // Predicated region
    $region122: #{gated_recurrent_sbp_forward.1} parent=1 // pred_check
      _
    $region123: #{gated_recurrent_sbp_forward.1} parent=1 // pred_check_branch
      %228 = sbr.rel (0) target = $region125
    $region124: #{gated_recurrent_sbp_forward.1} parent=1 // pred_region
      %229 = dma.done [#allocation20], 32
    $region125: #{gated_recurrent_sbp_forward.1} parent=1 // pred_fallthru
      _
    // Predicated region
    $region126: #{gated_recurrent_sbp_forward.1} parent=1 // pred_check
      _
    $region127: #{gated_recurrent_sbp_forward.1} parent=1 // pred_check_branch
      %231 = sbr.rel (0) target = $region129
    $region128: #{gated_recurrent_sbp_forward.1} parent=1 // pred_region
      %232 = dma.done [#allocation23], 96
    $region129: #{gated_recurrent_sbp_forward.1} parent=1 // pred_fallthru
      _
    %v233 = vld [vmem:[%s0] sm:$0xff]
    %v234 = vld [vmem:[%s0 + $0x8] sm:$0xff]
    %v235 = vld [vmem:[#allocation2] sm:$0xff]
    %v236 = vld [vmem:[#allocation2 + $0x8] sm:$0xff]
    %v237 = vld [vmem:[#allocation2 + $0x10] sm:$0xff]
    %v238 = vld [vmem:[#allocation2 + $0x18] sm:$0xff]
    %v239 = vld [vmem:[#allocation2 + $0x20] sm:$0xff]
    %v240 = vld [vmem:[#allocation2 + $0x28] sm:$0xff]
    %v241 = vld [vmem:[#allocation2 + $0x30] sm:$0xff]
    %v242 = vld [vmem:[#allocation2 + $0x38] sm:$0xff]
    %v243 = vld [vmem:[#allocation2 + $0x40] sm:$0xff]
    %v244 = vld [vmem:[#allocation2 + $0x48] sm:$0xff]
    %v245 = vld [vmem:[#allocation2 + $0x50] sm:$0xff]
    %v246 = vld [vmem:[#allocation2 + $0x58] sm:$0xff]
    %v247 = vld [vmem:[#allocation2 + $0x60] sm:$0xff]
    %v248 = vld [vmem:[#allocation2 + $0x68] sm:$0xff]
    %v249 = vld [vmem:[#allocation2 + $0x70] sm:$0xff]
    %v250 = vld [vmem:[#allocation2 + $0x78] sm:$0xff]
    %v251 = vld [vmem:[#allocation2 + $0x80] sm:$0xff]
    %v252 = vld [vmem:[#allocation2 + $0x88] sm:$0xff]
    %v253 = vld [vmem:[#allocation2 + $0x90] sm:$0xff]
    %v254 = vld [vmem:[#allocation2 + $0x98] sm:$0xff]
    %v255 = vld [vmem:[#allocation2 + $0xa0] sm:$0xff]
    %v256 = vld [vmem:[#allocation2 + $0xa8] sm:$0xff]
    %v257 = vld [vmem:[#allocation2 + $0xb0] sm:$0xff]
    %v258 = vld [vmem:[#allocation2 + $0xb8] sm:$0xff]
    %v259 = vld [vmem:[#allocation2 + $0xc0] sm:$0xff]
    %v260 = vld [vmem:[#allocation2 + $0xc8] sm:$0xff]
    %v261 = vld [vmem:[#allocation2 + $0xd0] sm:$0xff]
    %v262 = vld [vmem:[#allocation2 + $0xd8] sm:$0xff]
    %v263 = vld [vmem:[#allocation2 + $0xe0] sm:$0xff]
    %v264 = vld [vmem:[#allocation2 + $0xe8] sm:$0xff]
    %v265 = vld [vmem:[#allocation2 + $0xf0] sm:$0xff]
    %v266 = vld [vmem:[#allocation2 + $0xf8] sm:$0xff]
    %v267 = vld [vmem:[#allocation2 + $0x100] sm:$0xff]
    %v268 = vld [vmem:[#allocation2 + $0x108] sm:$0xff]
    %v269 = vld [vmem:[#allocation2 + $0x110] sm:$0xff]
    %v270 = vld [vmem:[#allocation2 + $0x118] sm:$0xff]
    %v271 = vld [vmem:[#allocation2 + $0x120] sm:$0xff]
    %v272 = vld [vmem:[#allocation2 + $0x128] sm:$0xff]
    %v273 = vld [vmem:[#allocation2 + $0x130] sm:$0xff]
    %v274 = vld [vmem:[#allocation2 + $0x138] sm:$0xff]
    %v275 = vld [vmem:[#allocation2 + $0x140] sm:$0xff]
    %v276 = vld [vmem:[#allocation2 + $0x148] sm:$0xff]
    %v277 = vld [vmem:[#allocation2 + $0x150] sm:$0xff]
    %v278 = vld [vmem:[#allocation2 + $0x158] sm:$0xff]
    %v279 = vld [vmem:[#allocation2 + $0x160] sm:$0xff]
    %v280 = vld [vmem:[#allocation2 + $0x168] sm:$0xff]
    %v281 = vld [vmem:[#allocation2 + $0x170] sm:$0xff]
    %v282 = vld [vmem:[#allocation2 + $0x178] sm:$0xff]
    %v283 = vld [vmem:[#allocation2 + $0x180] sm:$0xff]
    %v284 = vld [vmem:[#allocation2 + $0x188] sm:$0xff]
    %v285 = vld [vmem:[#allocation2 + $0x190] sm:$0xff]
    %v286 = vld [vmem:[#allocation2 + $0x198] sm:$0xff]
    %v287 = vld [vmem:[#allocation2 + $0x1a0] sm:$0xff]
    %v288 = vld [vmem:[#allocation2 + $0x1a8] sm:$0xff]
    %v289 = vld [vmem:[#allocation2 + $0x1b0] sm:$0xff]
    %v290 = vld [vmem:[#allocation2 + $0x1b8] sm:$0xff]
    %v291 = vld [vmem:[#allocation2 + $0x1c0] sm:$0xff]
    %v292 = vld [vmem:[#allocation2 + $0x1c8] sm:$0xff]
    %v293 = vld [vmem:[#allocation2 + $0x1d0] sm:$0xff]
    %v294 = vld [vmem:[#allocation2 + $0x1d8] sm:$0xff]
    %v295 = vld [vmem:[#allocation2 + $0x1e0] sm:$0xff]
    %v296 = vld [vmem:[#allocation2 + $0x1e8] sm:$0xff]
    %v297 = vld [vmem:[#allocation2 + $0x1f0] sm:$0xff]
    %v298 = vld [vmem:[#allocation2 + $0x1f8] sm:$0xff]
    %v299 = vld [vmem:[#allocation2 + $0x200] sm:$0xff]
    %v300 = vld [vmem:[#allocation2 + $0x208] sm:$0xff]
    %v301 = vld [vmem:[#allocation2 + $0x210] sm:$0xff]
    %v302 = vld [vmem:[#allocation2 + $0x218] sm:$0xff]
    %v303 = vld [vmem:[#allocation2 + $0x220] sm:$0xff]
    %v304 = vld [vmem:[#allocation2 + $0x228] sm:$0xff]
    %v305 = vld [vmem:[#allocation2 + $0x230] sm:$0xff]
    %v306 = vld [vmem:[#allocation2 + $0x238] sm:$0xff]
    %v307 = vld [vmem:[#allocation2 + $0x240] sm:$0xff]
    %v308 = vld [vmem:[#allocation2 + $0x248] sm:$0xff]
    %v309 = vld [vmem:[#allocation2 + $0x250] sm:$0xff]
    %v310 = vld [vmem:[#allocation2 + $0x258] sm:$0xff]
    %v311 = vld [vmem:[#allocation2 + $0x260] sm:$0xff]
    %v312 = vld [vmem:[#allocation2 + $0x268] sm:$0xff]
    %v313 = vld [vmem:[#allocation2 + $0x270] sm:$0xff]
    %v314 = vld [vmem:[#allocation2 + $0x278] sm:$0xff]
    %v315 = vld [vmem:[#allocation2 + $0x280] sm:$0xff]
    %v316 = vld [vmem:[#allocation2 + $0x288] sm:$0xff]
    %v317 = vld [vmem:[#allocation2 + $0x290] sm:$0xff]
    %v318 = vld [vmem:[#allocation2 + $0x298] sm:$0xff]
    %v319 = vld [vmem:[#allocation2 + $0x2a0] sm:$0xff]
    %v320 = vld [vmem:[#allocation2 + $0x2a8] sm:$0xff]
    %v321 = vld [vmem:[#allocation2 + $0x2b0] sm:$0xff]
    %v322 = vld [vmem:[#allocation2 + $0x2b8] sm:$0xff]
    %v323 = vld [vmem:[#allocation2 + $0x2c0] sm:$0xff]
    %v324 = vld [vmem:[#allocation2 + $0x2c8] sm:$0xff]
    %v325 = vld [vmem:[#allocation2 + $0x2d0] sm:$0xff]
    %v326 = vld [vmem:[#allocation2 + $0x2d8] sm:$0xff]
    %v327 = vld [vmem:[#allocation2 + $0x2e0] sm:$0xff]
    %v328 = vld [vmem:[#allocation2 + $0x2e8] sm:$0xff]
    %v329 = vld [vmem:[#allocation2 + $0x2f0] sm:$0xff]
    %v330 = vld [vmem:[#allocation2 + $0x2f8] sm:$0xff]
    %v331 = vld [vmem:[#allocation2 + $0x300] sm:$0xff]
    %v332 = vld [vmem:[#allocation2 + $0x308] sm:$0xff]
    %v333 = vld [vmem:[#allocation2 + $0x310] sm:$0xff]
    %v334 = vld [vmem:[#allocation2 + $0x318] sm:$0xff]
    %v335 = vld [vmem:[#allocation2 + $0x320] sm:$0xff]
    %v336 = vld [vmem:[#allocation2 + $0x328] sm:$0xff]
    %v337 = vld [vmem:[#allocation2 + $0x330] sm:$0xff]
    %v338 = vld [vmem:[#allocation2 + $0x338] sm:$0xff]
    %v339 = vld [vmem:[#allocation2 + $0x340] sm:$0xff]
    %v340 = vld [vmem:[#allocation2 + $0x348] sm:$0xff]
    %v341 = vld [vmem:[#allocation2 + $0x350] sm:$0xff]
    %v342 = vld [vmem:[#allocation2 + $0x358] sm:$0xff]
    %v343 = vld [vmem:[#allocation2 + $0x360] sm:$0xff]
    %v344 = vld [vmem:[#allocation2 + $0x368] sm:$0xff]
    %v345 = vld [vmem:[#allocation2 + $0x370] sm:$0xff]
    %v346 = vld [vmem:[#allocation2 + $0x378] sm:$0xff]
    %v347 = vld [vmem:[#allocation2 + $0x380] sm:$0xff]
    %v348 = vld [vmem:[#allocation2 + $0x388] sm:$0xff]
    %v349 = vld [vmem:[#allocation2 + $0x390] sm:$0xff]
    %v350 = vld [vmem:[#allocation2 + $0x398] sm:$0xff]
    %v351 = vld [vmem:[#allocation2 + $0x3a0] sm:$0xff]
    %v352 = vld [vmem:[#allocation2 + $0x3a8] sm:$0xff]
    %v353 = vld [vmem:[#allocation2 + $0x3b0] sm:$0xff]
    %v354 = vld [vmem:[#allocation2 + $0x3b8] sm:$0xff]
    %v355 = vld [vmem:[#allocation2 + $0x3c0] sm:$0xff]
    %v356 = vld [vmem:[#allocation2 + $0x3c8] sm:$0xff]
    %v357 = vld [vmem:[#allocation2 + $0x3d0] sm:$0xff]
    %v358 = vld [vmem:[#allocation2 + $0x3d8] sm:$0xff]
    %v359 = vld [vmem:[#allocation2 + $0x3e0] sm:$0xff]
    %v360 = vld [vmem:[#allocation2 + $0x3e8] sm:$0xff]
    %v361 = vld [vmem:[#allocation2 + $0x3f0] sm:$0xff]
    %v362 = vld [vmem:[#allocation2 + $0x3f8] sm:$0xff]
    %v363 = vld [vmem:[#allocation2 + $0x400] sm:$0xff]
    %v364 = vld [vmem:[#allocation2 + $0x408] sm:$0xff]
    %v365 = vld [vmem:[#allocation2 + $0x410] sm:$0xff]
    %v366 = vld [vmem:[#allocation2 + $0x418] sm:$0xff]
    %v367 = vld [vmem:[#allocation2 + $0x420] sm:$0xff]
    %v368 = vld [vmem:[#allocation2 + $0x428] sm:$0xff]
    %v369 = vld [vmem:[#allocation2 + $0x430] sm:$0xff]
    %v370 = vld [vmem:[#allocation2 + $0x438] sm:$0xff]
    %v371 = vld [vmem:[#allocation2 + $0x440] sm:$0xff]
    %v372 = vld [vmem:[#allocation2 + $0x448] sm:$0xff]
    %v373 = vld [vmem:[#allocation2 + $0x450] sm:$0xff]
    %v374 = vld [vmem:[#allocation2 + $0x458] sm:$0xff]
    %v375 = vld [vmem:[#allocation2 + $0x460] sm:$0xff]
    %v376 = vld [vmem:[#allocation2 + $0x468] sm:$0xff]
    %v377 = vld [vmem:[#allocation2 + $0x470] sm:$0xff]
    %v378 = vld [vmem:[#allocation2 + $0x478] sm:$0xff]
    %v379 = vld [vmem:[#allocation2 + $0x480] sm:$0xff]
    %v380 = vld [vmem:[#allocation2 + $0x488] sm:$0xff]
    %v381 = vld [vmem:[#allocation2 + $0x490] sm:$0xff]
    %v382 = vld [vmem:[#allocation2 + $0x498] sm:$0xff]
    %v383 = vld [vmem:[#allocation2 + $0x4a0] sm:$0xff]
    %v384 = vld [vmem:[#allocation2 + $0x4a8] sm:$0xff]
    %v385 = vld [vmem:[#allocation2 + $0x4b0] sm:$0xff]
    %v386 = vld [vmem:[#allocation2 + $0x4b8] sm:$0xff]
    %v387 = vld [vmem:[#allocation2 + $0x4c0] sm:$0xff]
    %v388 = vld [vmem:[#allocation2 + $0x4c8] sm:$0xff]
    %v389 = vld [vmem:[#allocation2 + $0x4d0] sm:$0xff]
    %v390 = vld [vmem:[#allocation2 + $0x4d8] sm:$0xff]
    %v391 = vld [vmem:[#allocation2 + $0x4e0] sm:$0xff]
    %v392 = vld [vmem:[#allocation2 + $0x4e8] sm:$0xff]
    %v393 = vld [vmem:[#allocation2 + $0x4f0] sm:$0xff]
    %v394 = vld [vmem:[#allocation2 + $0x4f8] sm:$0xff]
    %v395 = vld [vmem:[#allocation2 + $0x500] sm:$0xff]
    %v396 = vld [vmem:[#allocation2 + $0x508] sm:$0xff]
    %v397 = vld [vmem:[#allocation2 + $0x510] sm:$0xff]
    %v398 = vld [vmem:[#allocation2 + $0x518] sm:$0xff]
    %v399 = vld [vmem:[#allocation2 + $0x520] sm:$0xff]
    %v400 = vld [vmem:[#allocation2 + $0x528] sm:$0xff]
    %v401 = vld [vmem:[#allocation2 + $0x530] sm:$0xff]
    %v402 = vld [vmem:[#allocation2 + $0x538] sm:$0xff]
    %v403 = vld [vmem:[#allocation2 + $0x540] sm:$0xff]
    %v404 = vld [vmem:[#allocation2 + $0x548] sm:$0xff]
    %v405 = vld [vmem:[#allocation2 + $0x550] sm:$0xff]
    %v406 = vld [vmem:[#allocation2 + $0x558] sm:$0xff]
    %v407 = vld [vmem:[#allocation2 + $0x560] sm:$0xff]
    %v408 = vld [vmem:[#allocation2 + $0x568] sm:$0xff]
    %v409 = vld [vmem:[#allocation2 + $0x570] sm:$0xff]
    %v410 = vld [vmem:[#allocation2 + $0x578] sm:$0xff]
    %v411 = vld [vmem:[#allocation2 + $0x580] sm:$0xff]
    %v412 = vld [vmem:[#allocation2 + $0x588] sm:$0xff]
    %v413 = vld [vmem:[#allocation2 + $0x590] sm:$0xff]
    %v414 = vld [vmem:[#allocation2 + $0x598] sm:$0xff]
    %v415 = vld [vmem:[#allocation2 + $0x5a0] sm:$0xff]
    %v416 = vld [vmem:[#allocation2 + $0x5a8] sm:$0xff]
    %v417 = vld [vmem:[#allocation2 + $0x5b0] sm:$0xff]
    %v418 = vld [vmem:[#allocation2 + $0x5b8] sm:$0xff]
    %v419 = vld [vmem:[#allocation2 + $0x5c0] sm:$0xff]
    %v420 = vld [vmem:[#allocation2 + $0x5c8] sm:$0xff]
    %v421 = vld [vmem:[#allocation2 + $0x5d0] sm:$0xff]
    %v422 = vld [vmem:[#allocation2 + $0x5d8] sm:$0xff]
    %v423 = vld [vmem:[#allocation2 + $0x5e0] sm:$0xff]
    %v424 = vld [vmem:[#allocation2 + $0x5e8] sm:$0xff]
    %v425 = vld [vmem:[#allocation2 + $0x5f0] sm:$0xff]
    %v426 = vld [vmem:[#allocation2 + $0x5f8] sm:$0xff]
    %v427 = vld [vmem:[#allocation2 + $0x600] sm:$0xff]
    %v428 = vld [vmem:[#allocation2 + $0x608] sm:$0xff]
    %v429 = vld [vmem:[#allocation2 + $0x610] sm:$0xff]
    %v430 = vld [vmem:[#allocation2 + $0x618] sm:$0xff]
    %v431 = vld [vmem:[#allocation2 + $0x620] sm:$0xff]
    %v432 = vld [vmem:[#allocation2 + $0x628] sm:$0xff]
    %v433 = vld [vmem:[#allocation2 + $0x630] sm:$0xff]
    %v434 = vld [vmem:[#allocation2 + $0x638] sm:$0xff]
    %v435 = vld [vmem:[#allocation2 + $0x640] sm:$0xff]
    %v436 = vld [vmem:[#allocation2 + $0x648] sm:$0xff]
    %v437 = vld [vmem:[#allocation2 + $0x650] sm:$0xff]
    %v438 = vld [vmem:[#allocation2 + $0x658] sm:$0xff]
    %v439 = vld [vmem:[#allocation2 + $0x660] sm:$0xff]
    %v440 = vld [vmem:[#allocation2 + $0x668] sm:$0xff]
    %v441 = vld [vmem:[#allocation2 + $0x670] sm:$0xff]
    %v442 = vld [vmem:[#allocation2 + $0x678] sm:$0xff]
    %v443 = vld [vmem:[#allocation2 + $0x680] sm:$0xff]
    %v444 = vld [vmem:[#allocation2 + $0x688] sm:$0xff]
    %v445 = vld [vmem:[#allocation2 + $0x690] sm:$0xff]
    %v446 = vld [vmem:[#allocation2 + $0x698] sm:$0xff]
    %v447 = vld [vmem:[#allocation2 + $0x6a0] sm:$0xff]
    %v448 = vld [vmem:[#allocation2 + $0x6a8] sm:$0xff]
    %v449 = vld [vmem:[#allocation2 + $0x6b0] sm:$0xff]
    %v450 = vld [vmem:[#allocation2 + $0x6b8] sm:$0xff]
    %v451 = vld [vmem:[#allocation2 + $0x6c0] sm:$0xff]
    %v452 = vld [vmem:[#allocation2 + $0x6c8] sm:$0xff]
    %v453 = vld [vmem:[#allocation2 + $0x6d0] sm:$0xff]
    %v454 = vld [vmem:[#allocation2 + $0x6d8] sm:$0xff]
    %v455 = vld [vmem:[#allocation2 + $0x6e0] sm:$0xff]
    %v456 = vld [vmem:[#allocation2 + $0x6e8] sm:$0xff]
    %v457 = vld [vmem:[#allocation2 + $0x6f0] sm:$0xff]
    %v458 = vld [vmem:[#allocation2 + $0x6f8] sm:$0xff]
    %v459 = vld [vmem:[#allocation2 + $0x700] sm:$0xff]
    %v460 = vld [vmem:[#allocation2 + $0x708] sm:$0xff]
    %v461 = vld [vmem:[#allocation2 + $0x710] sm:$0xff]
    %v462 = vld [vmem:[#allocation2 + $0x718] sm:$0xff]
    %v463 = vld [vmem:[#allocation2 + $0x720] sm:$0xff]
    %v464 = vld [vmem:[#allocation2 + $0x728] sm:$0xff]
    %v465 = vld [vmem:[#allocation2 + $0x730] sm:$0xff]
    %v466 = vld [vmem:[#allocation2 + $0x738] sm:$0xff]
    %v467 = vld [vmem:[#allocation2 + $0x740] sm:$0xff]
    %v468 = vld [vmem:[#allocation2 + $0x748] sm:$0xff]
    %v469 = vld [vmem:[#allocation2 + $0x750] sm:$0xff]
    %v470 = vld [vmem:[#allocation2 + $0x758] sm:$0xff]
    %v471 = vld [vmem:[#allocation2 + $0x760] sm:$0xff]
    %v472 = vld [vmem:[#allocation2 + $0x768] sm:$0xff]
    %v473 = vld [vmem:[#allocation2 + $0x770] sm:$0xff]
    %v474 = vld [vmem:[#allocation2 + $0x778] sm:$0xff]
    %v475 = vld [vmem:[#allocation2 + $0x780] sm:$0xff]
    %v476 = vld [vmem:[#allocation2 + $0x788] sm:$0xff]
    %v477 = vld [vmem:[#allocation2 + $0x790] sm:$0xff]
    %v478 = vld [vmem:[#allocation2 + $0x798] sm:$0xff]
    %v479 = vld [vmem:[#allocation2 + $0x7a0] sm:$0xff]
    %v480 = vld [vmem:[#allocation2 + $0x7a8] sm:$0xff]
    %v481 = vld [vmem:[#allocation2 + $0x7b0] sm:$0xff]
    %v482 = vld [vmem:[#allocation2 + $0x7b8] sm:$0xff]
    %v483 = vld [vmem:[#allocation2 + $0x7c0] sm:$0xff]
    %v484 = vld [vmem:[#allocation2 + $0x7c8] sm:$0xff]
    %v485 = vld [vmem:[#allocation2 + $0x7d0] sm:$0xff]
    %v486 = vld [vmem:[#allocation2 + $0x7d8] sm:$0xff]
    %v487 = vld [vmem:[#allocation2 + $0x7e0] sm:$0xff]
    %v488 = vld [vmem:[#allocation2 + $0x7e8] sm:$0xff]
    %v489 = vld [vmem:[#allocation2 + $0x7f0] sm:$0xff]
    %v490 = vld [vmem:[#allocation2 + $0x7f8] sm:$0xff]
    %v491 = vld [vmem:[#allocation2 + $0x800] sm:$0xff]
    %v492 = vld [vmem:[#allocation2 + $0x808] sm:$0xff]
    %v493 = vld [vmem:[#allocation2 + $0x810] sm:$0xff]
    %v494 = vld [vmem:[#allocation2 + $0x818] sm:$0xff]
    %v495 = vld [vmem:[#allocation2 + $0x820] sm:$0xff]
    %v496 = vld [vmem:[#allocation2 + $0x828] sm:$0xff]
    %v497 = vld [vmem:[#allocation2 + $0x830] sm:$0xff]
    %v498 = vld [vmem:[#allocation2 + $0x838] sm:$0xff]
    %v499 = vld [vmem:[#allocation2 + $0x840] sm:$0xff]
    %v500 = vld [vmem:[#allocation2 + $0x848] sm:$0xff]
    %v501 = vld [vmem:[#allocation2 + $0x850] sm:$0xff]
    %v502 = vld [vmem:[#allocation2 + $0x858] sm:$0xff]
    %v503 = vld [vmem:[#allocation2 + $0x860] sm:$0xff]
    %v504 = vld [vmem:[#allocation2 + $0x868] sm:$0xff]
    %v505 = vld [vmem:[#allocation2 + $0x870] sm:$0xff]
    %v506 = vld [vmem:[#allocation2 + $0x878] sm:$0xff]
    %v507 = vld [vmem:[#allocation2 + $0x880] sm:$0xff]
    %v508 = vld [vmem:[#allocation2 + $0x888] sm:$0xff]
    %v509 = vld [vmem:[#allocation2 + $0x890] sm:$0xff]
    %v510 = vld [vmem:[#allocation2 + $0x898] sm:$0xff]
    %v511 = vld [vmem:[#allocation2 + $0x8a0] sm:$0xff]
    %v512 = vld [vmem:[#allocation2 + $0x8a8] sm:$0xff]
    %v513 = vld [vmem:[#allocation2 + $0x8b0] sm:$0xff]
    %v514 = vld [vmem:[#allocation2 + $0x8b8] sm:$0xff]
    %v515 = vld [vmem:[#allocation2 + $0x8c0] sm:$0xff]
    %v516 = vld [vmem:[#allocation2 + $0x8c8] sm:$0xff]
    %v517 = vld [vmem:[#allocation2 + $0x8d0] sm:$0xff]
    %v518 = vld [vmem:[#allocation2 + $0x8d8] sm:$0xff]
    %v519 = vld [vmem:[#allocation2 + $0x8e0] sm:$0xff]
    %v520 = vld [vmem:[#allocation2 + $0x8e8] sm:$0xff]
    %v521 = vld [vmem:[#allocation2 + $0x8f0] sm:$0xff]
    %v522 = vld [vmem:[#allocation2 + $0x8f8] sm:$0xff]
    %v523 = vld [vmem:[#allocation2 + $0x900] sm:$0xff]
    %v524 = vld [vmem:[#allocation2 + $0x908] sm:$0xff]
    %v525 = vld [vmem:[#allocation2 + $0x910] sm:$0xff]
    %v526 = vld [vmem:[#allocation2 + $0x918] sm:$0xff]
    %v527 = vld [vmem:[#allocation2 + $0x920] sm:$0xff]
    %v528 = vld [vmem:[#allocation2 + $0x928] sm:$0xff]
    %v529 = vld [vmem:[#allocation2 + $0x930] sm:$0xff]
    %v530 = vld [vmem:[#allocation2 + $0x938] sm:$0xff]
    %v531 = vld [vmem:[#allocation2 + $0x940] sm:$0xff]
    %v532 = vld [vmem:[#allocation2 + $0x948] sm:$0xff]
    %v533 = vld [vmem:[#allocation2 + $0x950] sm:$0xff]
    %v534 = vld [vmem:[#allocation2 + $0x958] sm:$0xff]
    %v535 = vld [vmem:[#allocation2 + $0x960] sm:$0xff]
    %v536 = vld [vmem:[#allocation2 + $0x968] sm:$0xff]
    %v537 = vld [vmem:[#allocation2 + $0x970] sm:$0xff]
    %v538 = vld [vmem:[#allocation2 + $0x978] sm:$0xff]
    %v539 = vld [vmem:[#allocation2 + $0x980] sm:$0xff]
    %v540 = vld [vmem:[#allocation2 + $0x988] sm:$0xff]
    %v541 = vld [vmem:[#allocation2 + $0x990] sm:$0xff]
    %v542 = vld [vmem:[#allocation2 + $0x998] sm:$0xff]
    %v543 = vld [vmem:[#allocation2 + $0x9a0] sm:$0xff]
    %v544 = vld [vmem:[#allocation2 + $0x9a8] sm:$0xff]
    %v545 = vld [vmem:[#allocation2 + $0x9b0] sm:$0xff]
    %v546 = vld [vmem:[#allocation2 + $0x9b8] sm:$0xff]
    %v547 = vld [vmem:[#allocation2 + $0x9c0] sm:$0xff]
    %v548 = vld [vmem:[#allocation2 + $0x9c8] sm:$0xff]
    %v549 = vld [vmem:[#allocation2 + $0x9d0] sm:$0xff]
    %v550 = vld [vmem:[#allocation2 + $0x9d8] sm:$0xff]
    %v551 = vld [vmem:[#allocation2 + $0x9e0] sm:$0xff]
    %v552 = vld [vmem:[#allocation2 + $0x9e8] sm:$0xff]
    %v553 = vld [vmem:[#allocation2 + $0x9f0] sm:$0xff]
    %v554 = vld [vmem:[#allocation2 + $0x9f8] sm:$0xff]
    %v555 = vld [vmem:[#allocation2 + $0xa00] sm:$0xff]
    %v556 = vld [vmem:[#allocation2 + $0xa08] sm:$0xff]
    %v557 = vld [vmem:[#allocation2 + $0xa10] sm:$0xff]
    %v558 = vld [vmem:[#allocation2 + $0xa18] sm:$0xff]
    %v559 = vld [vmem:[#allocation2 + $0xa20] sm:$0xff]
    %v560 = vld [vmem:[#allocation2 + $0xa28] sm:$0xff]
    %v561 = vld [vmem:[#allocation2 + $0xa30] sm:$0xff]
    %v562 = vld [vmem:[#allocation2 + $0xa38] sm:$0xff]
    %v563 = vld [vmem:[#allocation2 + $0xa40] sm:$0xff]
    %v564 = vld [vmem:[#allocation2 + $0xa48] sm:$0xff]
    %v565 = vld [vmem:[#allocation2 + $0xa50] sm:$0xff]
    %v566 = vld [vmem:[#allocation2 + $0xa58] sm:$0xff]
    %v567 = vld [vmem:[#allocation2 + $0xa60] sm:$0xff]
    %v568 = vld [vmem:[#allocation2 + $0xa68] sm:$0xff]
    %v569 = vld [vmem:[#allocation2 + $0xa70] sm:$0xff]
    %v570 = vld [vmem:[#allocation2 + $0xa78] sm:$0xff]
    %v571 = vld [vmem:[#allocation2 + $0xa80] sm:$0xff]
    %v572 = vld [vmem:[#allocation2 + $0xa88] sm:$0xff]
    %v573 = vld [vmem:[#allocation2 + $0xa90] sm:$0xff]
    %v574 = vld [vmem:[#allocation2 + $0xa98] sm:$0xff]
    %v575 = vld [vmem:[#allocation2 + $0xaa0] sm:$0xff]
    %v576 = vld [vmem:[#allocation2 + $0xaa8] sm:$0xff]
    %v577 = vld [vmem:[#allocation2 + $0xab0] sm:$0xff]
    %v578 = vld [vmem:[#allocation2 + $0xab8] sm:$0xff]
    %v579 = vld [vmem:[#allocation2 + $0xac0] sm:$0xff]
    %v580 = vld [vmem:[#allocation2 + $0xac8] sm:$0xff]
    %v581 = vld [vmem:[#allocation2 + $0xad0] sm:$0xff]
    %v582 = vld [vmem:[#allocation2 + $0xad8] sm:$0xff]
    %v583 = vld [vmem:[#allocation2 + $0xae0] sm:$0xff]
    %v584 = vld [vmem:[#allocation2 + $0xae8] sm:$0xff]
    %v585 = vld [vmem:[#allocation2 + $0xaf0] sm:$0xff]
    %v586 = vld [vmem:[#allocation2 + $0xaf8] sm:$0xff]
    %v587 = vld [vmem:[#allocation2 + $0xb00] sm:$0xff]
    %v588 = vld [vmem:[#allocation2 + $0xb08] sm:$0xff]
    %v589 = vld [vmem:[#allocation2 + $0xb10] sm:$0xff]
    %v590 = vld [vmem:[#allocation2 + $0xb18] sm:$0xff]
    %v591 = vld [vmem:[#allocation2 + $0xb20] sm:$0xff]
    %v592 = vld [vmem:[#allocation2 + $0xb28] sm:$0xff]
    %v593 = vld [vmem:[#allocation2 + $0xb30] sm:$0xff]
    %v594 = vld [vmem:[#allocation2 + $0xb38] sm:$0xff]
    %v595 = vld [vmem:[#allocation2 + $0xb40] sm:$0xff]
    %v596 = vld [vmem:[#allocation2 + $0xb48] sm:$0xff]
    %v597 = vld [vmem:[#allocation2 + $0xb50] sm:$0xff]
    %v598 = vld [vmem:[#allocation2 + $0xb58] sm:$0xff]
    %v599 = vld [vmem:[#allocation2 + $0xb60] sm:$0xff]
    %v600 = vld [vmem:[#allocation2 + $0xb68] sm:$0xff]
    %v601 = vld [vmem:[#allocation2 + $0xb70] sm:$0xff]
    %v602 = vld [vmem:[#allocation2 + $0xb78] sm:$0xff]
    %v603 = vld [vmem:[#allocation2 + $0xb80] sm:$0xff]
    %v604 = vld [vmem:[#allocation2 + $0xb88] sm:$0xff]
    %v605 = vld [vmem:[#allocation2 + $0xb90] sm:$0xff]
    %v606 = vld [vmem:[#allocation2 + $0xb98] sm:$0xff]
    %v607 = vld [vmem:[#allocation2 + $0xba0] sm:$0xff]
    %v608 = vld [vmem:[#allocation2 + $0xba8] sm:$0xff]
    %v609 = vld [vmem:[#allocation2 + $0xbb0] sm:$0xff]
    %v610 = vld [vmem:[#allocation2 + $0xbb8] sm:$0xff]
    %v611 = vld [vmem:[#allocation2 + $0xbc0] sm:$0xff]
    %v612 = vld [vmem:[#allocation2 + $0xbc8] sm:$0xff]
    %v613 = vld [vmem:[#allocation2 + $0xbd0] sm:$0xff]
    %v614 = vld [vmem:[#allocation2 + $0xbd8] sm:$0xff]
    %v615 = vld [vmem:[#allocation2 + $0xbe0] sm:$0xff]
    %v616 = vld [vmem:[#allocation2 + $0xbe8] sm:$0xff]
    %v617 = vld [vmem:[#allocation2 + $0xbf0] sm:$0xff]
    %v618 = vld [vmem:[#allocation2 + $0xbf8] sm:$0xff]
    %v619 = vld [vmem:[#allocation2 + $0xc00] sm:$0xff]
    %v620 = vld [vmem:[#allocation2 + $0xc08] sm:$0xff]
    %v621 = vld [vmem:[#allocation2 + $0xc10] sm:$0xff]
    %v622 = vld [vmem:[#allocation2 + $0xc18] sm:$0xff]
    %v623 = vld [vmem:[#allocation2 + $0xc20] sm:$0xff]
    %v624 = vld [vmem:[#allocation2 + $0xc28] sm:$0xff]
    %v625 = vld [vmem:[#allocation2 + $0xc30] sm:$0xff]
    %v626 = vld [vmem:[#allocation2 + $0xc38] sm:$0xff]
    %v627 = vld [vmem:[#allocation2 + $0xc40] sm:$0xff]
    %v628 = vld [vmem:[#allocation2 + $0xc48] sm:$0xff]
    %v629 = vld [vmem:[#allocation2 + $0xc50] sm:$0xff]
    %v630 = vld [vmem:[#allocation2 + $0xc58] sm:$0xff]
    %v631 = vld [vmem:[#allocation2 + $0xc60] sm:$0xff]
    %v632 = vld [vmem:[#allocation2 + $0xc68] sm:$0xff]
    %v633 = vld [vmem:[#allocation2 + $0xc70] sm:$0xff]
    %v634 = vld [vmem:[#allocation2 + $0xc78] sm:$0xff]
    %v635 = vld [vmem:[#allocation2 + $0xc80] sm:$0xff]
    %v636 = vld [vmem:[#allocation2 + $0xc88] sm:$0xff]
    %v637 = vld [vmem:[#allocation2 + $0xc90] sm:$0xff]
    %v638 = vld [vmem:[#allocation2 + $0xc98] sm:$0xff]
    %v639 = vld [vmem:[#allocation2 + $0xca0] sm:$0xff]
    %v640 = vld [vmem:[#allocation2 + $0xca8] sm:$0xff]
    %v641 = vld [vmem:[#allocation2 + $0xcb0] sm:$0xff]
    %v642 = vld [vmem:[#allocation2 + $0xcb8] sm:$0xff]
    %v643 = vld [vmem:[#allocation2 + $0xcc0] sm:$0xff]
    %v644 = vld [vmem:[#allocation2 + $0xcc8] sm:$0xff]
    %v645 = vld [vmem:[#allocation2 + $0xcd0] sm:$0xff]
    %v646 = vld [vmem:[#allocation2 + $0xcd8] sm:$0xff]
    %v647 = vld [vmem:[#allocation2 + $0xce0] sm:$0xff]
    %v648 = vld [vmem:[#allocation2 + $0xce8] sm:$0xff]
    %v649 = vld [vmem:[#allocation2 + $0xcf0] sm:$0xff]
    %v650 = vld [vmem:[#allocation2 + $0xcf8] sm:$0xff]
    %v651 = vld [vmem:[#allocation2 + $0xd00] sm:$0xff]
    %v652 = vld [vmem:[#allocation2 + $0xd08] sm:$0xff]
    %v653 = vld [vmem:[#allocation2 + $0xd10] sm:$0xff]
    %v654 = vld [vmem:[#allocation2 + $0xd18] sm:$0xff]
    %v655 = vld [vmem:[#allocation2 + $0xd20] sm:$0xff]
    %v656 = vld [vmem:[#allocation2 + $0xd28] sm:$0xff]
    %v657 = vld [vmem:[#allocation2 + $0xd30] sm:$0xff]
    %v658 = vld [vmem:[#allocation2 + $0xd38] sm:$0xff]
    %v659 = vld [vmem:[#allocation2 + $0xd40] sm:$0xff]
    %v660 = vld [vmem:[#allocation2 + $0xd48] sm:$0xff]
    %v661 = vld [vmem:[#allocation2 + $0xd50] sm:$0xff]
    %v662 = vld [vmem:[#allocation2 + $0xd58] sm:$0xff]
    %v663 = vld [vmem:[#allocation2 + $0xd60] sm:$0xff]
    %v664 = vld [vmem:[#allocation2 + $0xd68] sm:$0xff]
    %v665 = vld [vmem:[#allocation2 + $0xd70] sm:$0xff]
    %v666 = vld [vmem:[#allocation2 + $0xd78] sm:$0xff]
    %v667 = vld [vmem:[#allocation2 + $0xd80] sm:$0xff]
    %v668 = vld [vmem:[#allocation2 + $0xd88] sm:$0xff]
    %v669 = vld [vmem:[#allocation2 + $0xd90] sm:$0xff]
    %v670 = vld [vmem:[#allocation2 + $0xd98] sm:$0xff]
    %v671 = vld [vmem:[#allocation2 + $0xda0] sm:$0xff]
    %v672 = vld [vmem:[#allocation2 + $0xda8] sm:$0xff]
    %v673 = vld [vmem:[#allocation2 + $0xdb0] sm:$0xff]
    %v674 = vld [vmem:[#allocation2 + $0xdb8] sm:$0xff]
    %v675 = vld [vmem:[#allocation2 + $0xdc0] sm:$0xff]
    %v676 = vld [vmem:[#allocation2 + $0xdc8] sm:$0xff]
    %v677 = vld [vmem:[#allocation2 + $0xdd0] sm:$0xff]
    %v678 = vld [vmem:[#allocation2 + $0xdd8] sm:$0xff]
    %v679 = vld [vmem:[#allocation2 + $0xde0] sm:$0xff]
    %v680 = vld [vmem:[#allocation2 + $0xde8] sm:$0xff]
    %v681 = vld [vmem:[#allocation2 + $0xdf0] sm:$0xff]
    %v682 = vld [vmem:[#allocation2 + $0xdf8] sm:$0xff]
    %v683 = vld [vmem:[#allocation2 + $0xe00] sm:$0xff]
    %v684 = vld [vmem:[#allocation2 + $0xe08] sm:$0xff]
    %v685 = vld [vmem:[#allocation2 + $0xe10] sm:$0xff]
    %v686 = vld [vmem:[#allocation2 + $0xe18] sm:$0xff]
    %v687 = vld [vmem:[#allocation2 + $0xe20] sm:$0xff]
    %v688 = vld [vmem:[#allocation2 + $0xe28] sm:$0xff]
    %v689 = vld [vmem:[#allocation2 + $0xe30] sm:$0xff]
    %v690 = vld [vmem:[#allocation2 + $0xe38] sm:$0xff]
    %v691 = vld [vmem:[#allocation2 + $0xe40] sm:$0xff]
    %v692 = vld [vmem:[#allocation2 + $0xe48] sm:$0xff]
    %v693 = vld [vmem:[#allocation2 + $0xe50] sm:$0xff]
    %v694 = vld [vmem:[#allocation2 + $0xe58] sm:$0xff]
    %v695 = vld [vmem:[#allocation2 + $0xe60] sm:$0xff]
    %v696 = vld [vmem:[#allocation2 + $0xe68] sm:$0xff]
    %v697 = vld [vmem:[#allocation2 + $0xe70] sm:$0xff]
    %v698 = vld [vmem:[#allocation2 + $0xe78] sm:$0xff]
    %v699 = vld [vmem:[#allocation2 + $0xe80] sm:$0xff]
    %v700 = vld [vmem:[#allocation2 + $0xe88] sm:$0xff]
    %v701 = vld [vmem:[#allocation2 + $0xe90] sm:$0xff]
    %v702 = vld [vmem:[#allocation2 + $0xe98] sm:$0xff]
    %v703 = vld [vmem:[#allocation2 + $0xea0] sm:$0xff]
    %v704 = vld [vmem:[#allocation2 + $0xea8] sm:$0xff]
    %v705 = vld [vmem:[#allocation2 + $0xeb0] sm:$0xff]
    %v706 = vld [vmem:[#allocation2 + $0xeb8] sm:$0xff]
    %v707 = vld [vmem:[#allocation2 + $0xec0] sm:$0xff]
    %v708 = vld [vmem:[#allocation2 + $0xec8] sm:$0xff]
    %v709 = vld [vmem:[#allocation2 + $0xed0] sm:$0xff]
    %v710 = vld [vmem:[#allocation2 + $0xed8] sm:$0xff]
    %v711 = vld [vmem:[#allocation2 + $0xee0] sm:$0xff]
    %v712 = vld [vmem:[#allocation2 + $0xee8] sm:$0xff]
    %v713 = vld [vmem:[#allocation2 + $0xef0] sm:$0xff]
    %v714 = vld [vmem:[#allocation2 + $0xef8] sm:$0xff]
    %v715 = vld [vmem:[#allocation2 + $0xf00] sm:$0xff]
    %v716 = vld [vmem:[#allocation2 + $0xf08] sm:$0xff]
    %v717 = vld [vmem:[#allocation2 + $0xf10] sm:$0xff]
    %v718 = vld [vmem:[#allocation2 + $0xf18] sm:$0xff]
    %v719 = vld [vmem:[#allocation2 + $0xf20] sm:$0xff]
    %v720 = vld [vmem:[#allocation2 + $0xf28] sm:$0xff]
    %v721 = vld [vmem:[#allocation2 + $0xf30] sm:$0xff]
    %v722 = vld [vmem:[#allocation2 + $0xf38] sm:$0xff]
    %v723 = vld [vmem:[#allocation2 + $0xf40] sm:$0xff]
    %v724 = vld [vmem:[#allocation2 + $0xf48] sm:$0xff]
    %v725 = vld [vmem:[#allocation2 + $0xf50] sm:$0xff]
    %v726 = vld [vmem:[#allocation2 + $0xf58] sm:$0xff]
    %v727 = vld [vmem:[#allocation2 + $0xf60] sm:$0xff]
    %v728 = vld [vmem:[#allocation2 + $0xf68] sm:$0xff]
    %v729 = vld [vmem:[#allocation2 + $0xf70] sm:$0xff]
    %v730 = vld [vmem:[#allocation2 + $0xf78] sm:$0xff]
    %v731 = vld [vmem:[#allocation2 + $0xf80] sm:$0xff]
    %v732 = vld [vmem:[#allocation2 + $0xf88] sm:$0xff]
    %v733 = vld [vmem:[#allocation2 + $0xf90] sm:$0xff]
    %v734 = vld [vmem:[#allocation2 + $0xf98] sm:$0xff]
    %v735 = vld [vmem:[#allocation2 + $0xfa0] sm:$0xff]
    %v736 = vld [vmem:[#allocation2 + $0xfa8] sm:$0xff]
    %v737 = vld [vmem:[#allocation2 + $0xfb0] sm:$0xff]
    %v738 = vld [vmem:[#allocation2 + $0xfb8] sm:$0xff]
    %v739 = vld [vmem:[#allocation2 + $0xfc0] sm:$0xff]
    %v740 = vld [vmem:[#allocation2 + $0xfc8] sm:$0xff]
    %v741 = vld [vmem:[#allocation2 + $0xfd0] sm:$0xff]
    %v742 = vld [vmem:[#allocation2 + $0xfd8] sm:$0xff]
    %v743 = vld [vmem:[#allocation2 + $0xfe0] sm:$0xff]
    %v744 = vld [vmem:[#allocation2 + $0xfe8] sm:$0xff]
    %v745 = vld [vmem:[#allocation2 + $0xff0] sm:$0xff]
    %v746 = vld [vmem:[#allocation2 + $0xff8] sm:$0xff]
    %v747 = vld [vmem:[#allocation2 + $0x1000] sm:$0xff]
    %v748 = vld [vmem:[#allocation2 + $0x1008] sm:$0xff]
    %v749 = vld [vmem:[#allocation2 + $0x1010] sm:$0xff]
    %v750 = vld [vmem:[#allocation2 + $0x1018] sm:$0xff]
    %v751 = vld [vmem:[#allocation2 + $0x1020] sm:$0xff]
    %v752 = vld [vmem:[#allocation2 + $0x1028] sm:$0xff]
    %v753 = vld [vmem:[#allocation2 + $0x1030] sm:$0xff]
    %v754 = vld [vmem:[#allocation2 + $0x1038] sm:$0xff]
    %v755 = vld [vmem:[#allocation2 + $0x1040] sm:$0xff]
    %v756 = vld [vmem:[#allocation2 + $0x1048] sm:$0xff]
    %v757 = vld [vmem:[#allocation2 + $0x1050] sm:$0xff]
    %v758 = vld [vmem:[#allocation2 + $0x1058] sm:$0xff]
    %v759 = vld [vmem:[#allocation2 + $0x1060] sm:$0xff]
    %v760 = vld [vmem:[#allocation2 + $0x1068] sm:$0xff]
    %v761 = vld [vmem:[#allocation2 + $0x1070] sm:$0xff]
    %v762 = vld [vmem:[#allocation2 + $0x1078] sm:$0xff]
    %v763 = vld [vmem:[#allocation2 + $0x1080] sm:$0xff]
    %v764 = vld [vmem:[#allocation2 + $0x1088] sm:$0xff]
    %v765 = vld [vmem:[#allocation2 + $0x1090] sm:$0xff]
    %v766 = vld [vmem:[#allocation2 + $0x1098] sm:$0xff]
    %v767 = vld [vmem:[#allocation2 + $0x10a0] sm:$0xff]
    %v768 = vld [vmem:[#allocation2 + $0x10a8] sm:$0xff]
    %v769 = vld [vmem:[#allocation2 + $0x10b0] sm:$0xff]
    %v770 = vld [vmem:[#allocation2 + $0x10b8] sm:$0xff]
    %v771 = vld [vmem:[#allocation2 + $0x10c0] sm:$0xff]
    %v772 = vld [vmem:[#allocation2 + $0x10c8] sm:$0xff]
    %v773 = vld [vmem:[#allocation2 + $0x10d0] sm:$0xff]
    %v774 = vld [vmem:[#allocation2 + $0x10d8] sm:$0xff]
    %v775 = vld [vmem:[#allocation2 + $0x10e0] sm:$0xff]
    %v776 = vld [vmem:[#allocation2 + $0x10e8] sm:$0xff]
    %v777 = vld [vmem:[#allocation2 + $0x10f0] sm:$0xff]
    %v778 = vld [vmem:[#allocation2 + $0x10f8] sm:$0xff]
    %v779 = vld [vmem:[#allocation2 + $0x1100] sm:$0xff]
    %v780 = vld [vmem:[#allocation2 + $0x1108] sm:$0xff]
    %v781 = vld [vmem:[#allocation2 + $0x1110] sm:$0xff]
    %v782 = vld [vmem:[#allocation2 + $0x1118] sm:$0xff]
    %v783 = vld [vmem:[#allocation2 + $0x1120] sm:$0xff]
    %v784 = vld [vmem:[#allocation2 + $0x1128] sm:$0xff]
    %v785 = vld [vmem:[#allocation2 + $0x1130] sm:$0xff]
    %v786 = vld [vmem:[#allocation2 + $0x1138] sm:$0xff]
    %v787 = vld [vmem:[#allocation2 + $0x1140] sm:$0xff]
    %v788 = vld [vmem:[#allocation2 + $0x1148] sm:$0xff]
    %v789 = vld [vmem:[#allocation2 + $0x1150] sm:$0xff]
    %v790 = vld [vmem:[#allocation2 + $0x1158] sm:$0xff]
    %v791 = vld [vmem:[#allocation2 + $0x1160] sm:$0xff]
    %v792 = vld [vmem:[#allocation2 + $0x1168] sm:$0xff]
    %v793 = vld [vmem:[#allocation2 + $0x1170] sm:$0xff]
    %v794 = vld [vmem:[#allocation2 + $0x1178] sm:$0xff]
    %v795 = vld [vmem:[#allocation2 + $0x1180] sm:$0xff]
    %v796 = vld [vmem:[#allocation2 + $0x1188] sm:$0xff]
    %v797 = vld [vmem:[#allocation2 + $0x1190] sm:$0xff]
    %v798 = vld [vmem:[#allocation2 + $0x1198] sm:$0xff]
    %v799 = vld [vmem:[#allocation2 + $0x11a0] sm:$0xff]
    %v800 = vld [vmem:[#allocation2 + $0x11a8] sm:$0xff]
    %v801 = vld [vmem:[#allocation2 + $0x11b0] sm:$0xff]
    %v802 = vld [vmem:[#allocation2 + $0x11b8] sm:$0xff]
    %v803 = vld [vmem:[#allocation2 + $0x11c0] sm:$0xff]
    %v804 = vld [vmem:[#allocation2 + $0x11c8] sm:$0xff]
    %v805 = vld [vmem:[#allocation2 + $0x11d0] sm:$0xff]
    %v806 = vld [vmem:[#allocation2 + $0x11d8] sm:$0xff]
    %v807 = vld [vmem:[#allocation2 + $0x11e0] sm:$0xff]
    %v808 = vld [vmem:[#allocation2 + $0x11e8] sm:$0xff]
    %v809 = vld [vmem:[#allocation2 + $0x11f0] sm:$0xff]
    %v810 = vld [vmem:[#allocation2 + $0x11f8] sm:$0xff]
    %v811 = vld [vmem:[#allocation2 + $0x1200] sm:$0xff]
    %v812 = vld [vmem:[#allocation2 + $0x1208] sm:$0xff]
    %v813 = vld [vmem:[#allocation2 + $0x1210] sm:$0xff]
    %v814 = vld [vmem:[#allocation2 + $0x1218] sm:$0xff]
    %v815 = vld [vmem:[#allocation2 + $0x1220] sm:$0xff]
    %v816 = vld [vmem:[#allocation2 + $0x1228] sm:$0xff]
    %v817 = vld [vmem:[#allocation2 + $0x1230] sm:$0xff]
    %v818 = vld [vmem:[#allocation2 + $0x1238] sm:$0xff]
    %v819 = vld [vmem:[#allocation2 + $0x1240] sm:$0xff]
    %v820 = vld [vmem:[#allocation2 + $0x1248] sm:$0xff]
    %v821 = vld [vmem:[#allocation2 + $0x1250] sm:$0xff]
    %v822 = vld [vmem:[#allocation2 + $0x1258] sm:$0xff]
    %v823 = vld [vmem:[#allocation2 + $0x1260] sm:$0xff]
    %v824 = vld [vmem:[#allocation2 + $0x1268] sm:$0xff]
    %v825 = vld [vmem:[#allocation2 + $0x1270] sm:$0xff]
    %v826 = vld [vmem:[#allocation2 + $0x1278] sm:$0xff]
    %v827 = vld [vmem:[#allocation2 + $0x1280] sm:$0xff]
    %v828 = vld [vmem:[#allocation2 + $0x1288] sm:$0xff]
    %v829 = vld [vmem:[#allocation2 + $0x1290] sm:$0xff]
    %v830 = vld [vmem:[#allocation2 + $0x1298] sm:$0xff]
    %v831 = vld [vmem:[#allocation2 + $0x12a0] sm:$0xff]
    %v832 = vld [vmem:[#allocation2 + $0x12a8] sm:$0xff]
    %v833 = vld [vmem:[#allocation2 + $0x12b0] sm:$0xff]
    %v834 = vld [vmem:[#allocation2 + $0x12b8] sm:$0xff]
    %v835 = vld [vmem:[#allocation2 + $0x12c0] sm:$0xff]
    %v836 = vld [vmem:[#allocation2 + $0x12c8] sm:$0xff]
    %v837 = vld [vmem:[#allocation2 + $0x12d0] sm:$0xff]
    %v838 = vld [vmem:[#allocation2 + $0x12d8] sm:$0xff]
    %v839 = vld [vmem:[#allocation2 + $0x12e0] sm:$0xff]
    %v840 = vld [vmem:[#allocation2 + $0x12e8] sm:$0xff]
    %v841 = vld [vmem:[#allocation2 + $0x12f0] sm:$0xff]
    %v842 = vld [vmem:[#allocation2 + $0x12f8] sm:$0xff]
    %v843 = vld [vmem:[#allocation2 + $0x1300] sm:$0xff]
    %v844 = vld [vmem:[#allocation2 + $0x1308] sm:$0xff]
    %v845 = vld [vmem:[#allocation2 + $0x1310] sm:$0xff]
    %v846 = vld [vmem:[#allocation2 + $0x1318] sm:$0xff]
    %v847 = vld [vmem:[#allocation2 + $0x1320] sm:$0xff]
    %v848 = vld [vmem:[#allocation2 + $0x1328] sm:$0xff]
    %v849 = vld [vmem:[#allocation2 + $0x1330] sm:$0xff]
    %v850 = vld [vmem:[#allocation2 + $0x1338] sm:$0xff]
    %v851 = vld [vmem:[#allocation2 + $0x1340] sm:$0xff]
    %v852 = vld [vmem:[#allocation2 + $0x1348] sm:$0xff]
    %v853 = vld [vmem:[#allocation2 + $0x1350] sm:$0xff]
    %v854 = vld [vmem:[#allocation2 + $0x1358] sm:$0xff]
    %v855 = vld [vmem:[#allocation2 + $0x1360] sm:$0xff]
    %v856 = vld [vmem:[#allocation2 + $0x1368] sm:$0xff]
    %v857 = vld [vmem:[#allocation2 + $0x1370] sm:$0xff]
    %v858 = vld [vmem:[#allocation2 + $0x1378] sm:$0xff]
    %v859 = vld [vmem:[#allocation2 + $0x1380] sm:$0xff]
    %v860 = vld [vmem:[#allocation2 + $0x1388] sm:$0xff]
    %v861 = vld [vmem:[#allocation2 + $0x1390] sm:$0xff]
    %v862 = vld [vmem:[#allocation2 + $0x1398] sm:$0xff]
    %v863 = vld [vmem:[#allocation2 + $0x13a0] sm:$0xff]
    %v864 = vld [vmem:[#allocation2 + $0x13a8] sm:$0xff]
    %v865 = vld [vmem:[#allocation2 + $0x13b0] sm:$0xff]
    %v866 = vld [vmem:[#allocation2 + $0x13b8] sm:$0xff]
    %v867 = vld [vmem:[#allocation2 + $0x13c0] sm:$0xff]
    %v868 = vld [vmem:[#allocation2 + $0x13c8] sm:$0xff]
    %v869 = vld [vmem:[#allocation2 + $0x13d0] sm:$0xff]
    %v870 = vld [vmem:[#allocation2 + $0x13d8] sm:$0xff]
    %v871 = vld [vmem:[#allocation2 + $0x13e0] sm:$0xff]
    %v872 = vld [vmem:[#allocation2 + $0x13e8] sm:$0xff]
    %v873 = vld [vmem:[#allocation2 + $0x13f0] sm:$0xff]
    %v874 = vld [vmem:[#allocation2 + $0x13f8] sm:$0xff]
    %v875 = vld [vmem:[#allocation2 + $0x1400] sm:$0xff]
    %v876 = vld [vmem:[#allocation2 + $0x1408] sm:$0xff]
    %v877 = vld [vmem:[#allocation2 + $0x1410] sm:$0xff]
    %v878 = vld [vmem:[#allocation2 + $0x1418] sm:$0xff]
    %v879 = vld [vmem:[#allocation2 + $0x1420] sm:$0xff]
    %v880 = vld [vmem:[#allocation2 + $0x1428] sm:$0xff]
    %v881 = vld [vmem:[#allocation2 + $0x1430] sm:$0xff]
    %v882 = vld [vmem:[#allocation2 + $0x1438] sm:$0xff]
    %v883 = vld [vmem:[#allocation2 + $0x1440] sm:$0xff]
    %v884 = vld [vmem:[#allocation2 + $0x1448] sm:$0xff]
    %v885 = vld [vmem:[#allocation2 + $0x1450] sm:$0xff]
    %v886 = vld [vmem:[#allocation2 + $0x1458] sm:$0xff]
    %v887 = vld [vmem:[#allocation2 + $0x1460] sm:$0xff]
    %v888 = vld [vmem:[#allocation2 + $0x1468] sm:$0xff]
    %v889 = vld [vmem:[#allocation2 + $0x1470] sm:$0xff]
    %v890 = vld [vmem:[#allocation2 + $0x1478] sm:$0xff]
    %v891 = vld [vmem:[#allocation2 + $0x1480] sm:$0xff]
    %v892 = vld [vmem:[#allocation2 + $0x1488] sm:$0xff]
    %v893 = vld [vmem:[#allocation2 + $0x1490] sm:$0xff]
    %v894 = vld [vmem:[#allocation2 + $0x1498] sm:$0xff]
    %v895 = vld [vmem:[#allocation2 + $0x14a0] sm:$0xff]
    %v896 = vld [vmem:[#allocation2 + $0x14a8] sm:$0xff]
    %v897 = vld [vmem:[#allocation2 + $0x14b0] sm:$0xff]
    %v898 = vld [vmem:[#allocation2 + $0x14b8] sm:$0xff]
    %v899 = vld [vmem:[#allocation2 + $0x14c0] sm:$0xff]
    %v900 = vld [vmem:[#allocation2 + $0x14c8] sm:$0xff]
    %v901 = vld [vmem:[#allocation2 + $0x14d0] sm:$0xff]
    %v902 = vld [vmem:[#allocation2 + $0x14d8] sm:$0xff]
    %v903 = vld [vmem:[#allocation2 + $0x14e0] sm:$0xff]
    %v904 = vld [vmem:[#allocation2 + $0x14e8] sm:$0xff]
    %v905 = vld [vmem:[#allocation2 + $0x14f0] sm:$0xff]
    %v906 = vld [vmem:[#allocation2 + $0x14f8] sm:$0xff]
    %v907 = vld [vmem:[#allocation2 + $0x1500] sm:$0xff]
    %v908 = vld [vmem:[#allocation2 + $0x1508] sm:$0xff]
    %v909 = vld [vmem:[#allocation2 + $0x1510] sm:$0xff]
    %v910 = vld [vmem:[#allocation2 + $0x1518] sm:$0xff]
    %v911 = vld [vmem:[#allocation2 + $0x1520] sm:$0xff]
    %v912 = vld [vmem:[#allocation2 + $0x1528] sm:$0xff]
    %v913 = vld [vmem:[#allocation2 + $0x1530] sm:$0xff]
    %v914 = vld [vmem:[#allocation2 + $0x1538] sm:$0xff]
    %v915 = vld [vmem:[#allocation2 + $0x1540] sm:$0xff]
    %v916 = vld [vmem:[#allocation2 + $0x1548] sm:$0xff]
    %v917 = vld [vmem:[#allocation2 + $0x1550] sm:$0xff]
    %v918 = vld [vmem:[#allocation2 + $0x1558] sm:$0xff]
    %v919 = vld [vmem:[#allocation2 + $0x1560] sm:$0xff]
    %v920 = vld [vmem:[#allocation2 + $0x1568] sm:$0xff]
    %v921 = vld [vmem:[#allocation2 + $0x1570] sm:$0xff]
    %v922 = vld [vmem:[#allocation2 + $0x1578] sm:$0xff]
    %v923 = vld [vmem:[#allocation2 + $0x1580] sm:$0xff]
    %v924 = vld [vmem:[#allocation2 + $0x1588] sm:$0xff]
    %v925 = vld [vmem:[#allocation2 + $0x1590] sm:$0xff]
    %v926 = vld [vmem:[#allocation2 + $0x1598] sm:$0xff]
    %v927 = vld [vmem:[#allocation2 + $0x15a0] sm:$0xff]
    %v928 = vld [vmem:[#allocation2 + $0x15a8] sm:$0xff]
    %v929 = vld [vmem:[#allocation2 + $0x15b0] sm:$0xff]
    %v930 = vld [vmem:[#allocation2 + $0x15b8] sm:$0xff]
    %v931 = vld [vmem:[#allocation2 + $0x15c0] sm:$0xff]
    %v932 = vld [vmem:[#allocation2 + $0x15c8] sm:$0xff]
    %v933 = vld [vmem:[#allocation2 + $0x15d0] sm:$0xff]
    %v934 = vld [vmem:[#allocation2 + $0x15d8] sm:$0xff]
    %v935 = vld [vmem:[#allocation2 + $0x15e0] sm:$0xff]
    %v936 = vld [vmem:[#allocation2 + $0x15e8] sm:$0xff]
    %v937 = vld [vmem:[#allocation2 + $0x15f0] sm:$0xff]
    %v938 = vld [vmem:[#allocation2 + $0x15f8] sm:$0xff]
    %v939 = vld [vmem:[#allocation2 + $0x1600] sm:$0xff]
    %v940 = vld [vmem:[#allocation2 + $0x1608] sm:$0xff]
    %v941 = vld [vmem:[#allocation2 + $0x1610] sm:$0xff]
    %v942 = vld [vmem:[#allocation2 + $0x1618] sm:$0xff]
    %v943 = vld [vmem:[#allocation2 + $0x1620] sm:$0xff]
    %v944 = vld [vmem:[#allocation2 + $0x1628] sm:$0xff]
    %v945 = vld [vmem:[#allocation2 + $0x1630] sm:$0xff]
    %v946 = vld [vmem:[#allocation2 + $0x1638] sm:$0xff]
    %v947 = vld [vmem:[#allocation2 + $0x1640] sm:$0xff]
    %v948 = vld [vmem:[#allocation2 + $0x1648] sm:$0xff]
    %v949 = vld [vmem:[#allocation2 + $0x1650] sm:$0xff]
    %v950 = vld [vmem:[#allocation2 + $0x1658] sm:$0xff]
    %v951 = vld [vmem:[#allocation2 + $0x1660] sm:$0xff]
    %v952 = vld [vmem:[#allocation2 + $0x1668] sm:$0xff]
    %v953 = vld [vmem:[#allocation2 + $0x1670] sm:$0xff]
    %v954 = vld [vmem:[#allocation2 + $0x1678] sm:$0xff]
    %v955 = vld [vmem:[#allocation2 + $0x1680] sm:$0xff]
    %v956 = vld [vmem:[#allocation2 + $0x1688] sm:$0xff]
    %v957 = vld [vmem:[#allocation2 + $0x1690] sm:$0xff]
    %v958 = vld [vmem:[#allocation2 + $0x1698] sm:$0xff]
    %v959 = vld [vmem:[#allocation2 + $0x16a0] sm:$0xff]
    %v960 = vld [vmem:[#allocation2 + $0x16a8] sm:$0xff]
    %v961 = vld [vmem:[#allocation2 + $0x16b0] sm:$0xff]
    %v962 = vld [vmem:[#allocation2 + $0x16b8] sm:$0xff]
    %v963 = vld [vmem:[#allocation2 + $0x16c0] sm:$0xff]
    %v964 = vld [vmem:[#allocation2 + $0x16c8] sm:$0xff]
    %v965 = vld [vmem:[#allocation2 + $0x16d0] sm:$0xff]
    %v966 = vld [vmem:[#allocation2 + $0x16d8] sm:$0xff]
    %v967 = vld [vmem:[#allocation2 + $0x16e0] sm:$0xff]
    %v968 = vld [vmem:[#allocation2 + $0x16e8] sm:$0xff]
    %v969 = vld [vmem:[#allocation2 + $0x16f0] sm:$0xff]
    %v970 = vld [vmem:[#allocation2 + $0x16f8] sm:$0xff]
    %v971 = vld [vmem:[#allocation2 + $0x1700] sm:$0xff]
    %v972 = vld [vmem:[#allocation2 + $0x1708] sm:$0xff]
    %v973 = vld [vmem:[#allocation2 + $0x1710] sm:$0xff]
    %v974 = vld [vmem:[#allocation2 + $0x1718] sm:$0xff]
    %v975 = vld [vmem:[#allocation2 + $0x1720] sm:$0xff]
    %v976 = vld [vmem:[#allocation2 + $0x1728] sm:$0xff]
    %v977 = vld [vmem:[#allocation2 + $0x1730] sm:$0xff]
    %v978 = vld [vmem:[#allocation2 + $0x1738] sm:$0xff]
    %v979 = vld [vmem:[#allocation2 + $0x1740] sm:$0xff]
    %v980 = vld [vmem:[#allocation2 + $0x1748] sm:$0xff]
    %v981 = vld [vmem:[#allocation2 + $0x1750] sm:$0xff]
    %v982 = vld [vmem:[#allocation2 + $0x1758] sm:$0xff]
    %v983 = vld [vmem:[#allocation2 + $0x1760] sm:$0xff]
    %v984 = vld [vmem:[#allocation2 + $0x1768] sm:$0xff]
    %v985 = vld [vmem:[#allocation2 + $0x1770] sm:$0xff]
    %v986 = vld [vmem:[#allocation2 + $0x1778] sm:$0xff]
    %v987 = vld [vmem:[#allocation2 + $0x1780] sm:$0xff]
    %v988 = vld [vmem:[#allocation2 + $0x1788] sm:$0xff]
    %v989 = vld [vmem:[#allocation2 + $0x1790] sm:$0xff]
    %v990 = vld [vmem:[#allocation2 + $0x1798] sm:$0xff]
    %v991 = vld [vmem:[#allocation2 + $0x17a0] sm:$0xff]
    %v992 = vld [vmem:[#allocation2 + $0x17a8] sm:$0xff]
    %v993 = vld [vmem:[#allocation2 + $0x17b0] sm:$0xff]
    %v994 = vld [vmem:[#allocation2 + $0x17b8] sm:$0xff]
    %v995 = vld [vmem:[#allocation2 + $0x17c0] sm:$0xff]
    %v996 = vld [vmem:[#allocation2 + $0x17c8] sm:$0xff]
    %v997 = vld [vmem:[#allocation2 + $0x17d0] sm:$0xff]
    %v998 = vld [vmem:[#allocation2 + $0x17d8] sm:$0xff]
    %v999 = vld [vmem:[#allocation2 + $0x17e0] sm:$0xff]
    %v1000 = vld [vmem:[#allocation2 + $0x17e8] sm:$0xff]
    %v1001 = vld [vmem:[#allocation2 + $0x17f0] sm:$0xff]
    %v1002 = vld [vmem:[#allocation2 + $0x17f8] sm:$0xff]
    %v1003 = vld [vmem:[#allocation2 + $0x1800] sm:$0xff]
    %v1004 = vld [vmem:[#allocation2 + $0x1808] sm:$0xff]
    %v1005 = vld [vmem:[#allocation2 + $0x1810] sm:$0xff]
    %v1006 = vld [vmem:[#allocation2 + $0x1818] sm:$0xff]
    %v1007 = vld [vmem:[#allocation2 + $0x1820] sm:$0xff]
    %v1008 = vld [vmem:[#allocation2 + $0x1828] sm:$0xff]
    %v1009 = vld [vmem:[#allocation2 + $0x1830] sm:$0xff]
    %v1010 = vld [vmem:[#allocation2 + $0x1838] sm:$0xff]
    %v1011 = vld [vmem:[#allocation2 + $0x1840] sm:$0xff]
    %v1012 = vld [vmem:[#allocation2 + $0x1848] sm:$0xff]
    %v1013 = vld [vmem:[#allocation2 + $0x1850] sm:$0xff]
    %v1014 = vld [vmem:[#allocation2 + $0x1858] sm:$0xff]
    %v1015 = vld [vmem:[#allocation2 + $0x1860] sm:$0xff]
    %v1016 = vld [vmem:[#allocation2 + $0x1868] sm:$0xff]
    %v1017 = vld [vmem:[#allocation2 + $0x1870] sm:$0xff]
    %v1018 = vld [vmem:[#allocation2 + $0x1878] sm:$0xff]
    %v1019 = vld [vmem:[#allocation2 + $0x1880] sm:$0xff]
    %v1020 = vld [vmem:[#allocation2 + $0x1888] sm:$0xff]
    %v1021 = vld [vmem:[#allocation2 + $0x1890] sm:$0xff]
    %v1022 = vld [vmem:[#allocation2 + $0x1898] sm:$0xff]
    %v1023 = vld [vmem:[#allocation2 + $0x18a0] sm:$0xff]
    %v1024 = vld [vmem:[#allocation2 + $0x18a8] sm:$0xff]
    %v1025 = vld [vmem:[#allocation2 + $0x18b0] sm:$0xff]
    %v1026 = vld [vmem:[#allocation2 + $0x18b8] sm:$0xff]
    %v1027 = vld [vmem:[#allocation2 + $0x18c0] sm:$0xff]
    %v1028 = vld [vmem:[#allocation2 + $0x18c8] sm:$0xff]
    %v1029 = vld [vmem:[#allocation2 + $0x18d0] sm:$0xff]
    %v1030 = vld [vmem:[#allocation2 + $0x18d8] sm:$0xff]
    %v1031 = vld [vmem:[#allocation2 + $0x18e0] sm:$0xff]
    %v1032 = vld [vmem:[#allocation2 + $0x18e8] sm:$0xff]
    %v1033 = vld [vmem:[#allocation2 + $0x18f0] sm:$0xff]
    %v1034 = vld [vmem:[#allocation2 + $0x18f8] sm:$0xff]
    %v1035 = vld [vmem:[#allocation2 + $0x1900] sm:$0xff]
    %v1036 = vld [vmem:[#allocation2 + $0x1908] sm:$0xff]
    %v1037 = vld [vmem:[#allocation2 + $0x1910] sm:$0xff]
    %v1038 = vld [vmem:[#allocation2 + $0x1918] sm:$0xff]
    %v1039 = vld [vmem:[#allocation2 + $0x1920] sm:$0xff]
    %v1040 = vld [vmem:[#allocation2 + $0x1928] sm:$0xff]
    %v1041 = vld [vmem:[#allocation2 + $0x1930] sm:$0xff]
    %v1042 = vld [vmem:[#allocation2 + $0x1938] sm:$0xff]
    %v1043 = vld [vmem:[#allocation2 + $0x1940] sm:$0xff]
    %v1044 = vld [vmem:[#allocation2 + $0x1948] sm:$0xff]
    %v1045 = vld [vmem:[#allocation2 + $0x1950] sm:$0xff]
    %v1046 = vld [vmem:[#allocation2 + $0x1958] sm:$0xff]
    %v1047 = vld [vmem:[#allocation2 + $0x1960] sm:$0xff]
    %v1048 = vld [vmem:[#allocation2 + $0x1968] sm:$0xff]
    %v1049 = vld [vmem:[#allocation2 + $0x1970] sm:$0xff]
    %v1050 = vld [vmem:[#allocation2 + $0x1978] sm:$0xff]
    %v1051 = vld [vmem:[#allocation2 + $0x1980] sm:$0xff]
    %v1052 = vld [vmem:[#allocation2 + $0x1988] sm:$0xff]
    %v1053 = vld [vmem:[#allocation2 + $0x1990] sm:$0xff]
    %v1054 = vld [vmem:[#allocation2 + $0x1998] sm:$0xff]
    %v1055 = vld [vmem:[#allocation2 + $0x19a0] sm:$0xff]
    %v1056 = vld [vmem:[#allocation2 + $0x19a8] sm:$0xff]
    %v1057 = vld [vmem:[#allocation2 + $0x19b0] sm:$0xff]
    %v1058 = vld [vmem:[#allocation2 + $0x19b8] sm:$0xff]
    %v1059 = vld [vmem:[#allocation2 + $0x19c0] sm:$0xff]
    %v1060 = vld [vmem:[#allocation2 + $0x19c8] sm:$0xff]
    %v1061 = vld [vmem:[#allocation2 + $0x19d0] sm:$0xff]
    %v1062 = vld [vmem:[#allocation2 + $0x19d8] sm:$0xff]
    %v1063 = vld [vmem:[#allocation2 + $0x19e0] sm:$0xff]
    %v1064 = vld [vmem:[#allocation2 + $0x19e8] sm:$0xff]
    %v1065 = vld [vmem:[#allocation2 + $0x19f0] sm:$0xff]
    %v1066 = vld [vmem:[#allocation2 + $0x19f8] sm:$0xff]
    %v1067 = vld [vmem:[#allocation2 + $0x1a00] sm:$0xff]
    %v1068 = vld [vmem:[#allocation2 + $0x1a08] sm:$0xff]
    %v1069 = vld [vmem:[#allocation2 + $0x1a10] sm:$0xff]
    %v1070 = vld [vmem:[#allocation2 + $0x1a18] sm:$0xff]
    %v1071 = vld [vmem:[#allocation2 + $0x1a20] sm:$0xff]
    %v1072 = vld [vmem:[#allocation2 + $0x1a28] sm:$0xff]
    %v1073 = vld [vmem:[#allocation2 + $0x1a30] sm:$0xff]
    %v1074 = vld [vmem:[#allocation2 + $0x1a38] sm:$0xff]
    %v1075 = vld [vmem:[#allocation2 + $0x1a40] sm:$0xff]
    %v1076 = vld [vmem:[#allocation2 + $0x1a48] sm:$0xff]
    %v1077 = vld [vmem:[#allocation2 + $0x1a50] sm:$0xff]
    %v1078 = vld [vmem:[#allocation2 + $0x1a58] sm:$0xff]
    %v1079 = vld [vmem:[#allocation2 + $0x1a60] sm:$0xff]
    %v1080 = vld [vmem:[#allocation2 + $0x1a68] sm:$0xff]
    %v1081 = vld [vmem:[#allocation2 + $0x1a70] sm:$0xff]
    %v1082 = vld [vmem:[#allocation2 + $0x1a78] sm:$0xff]
    %v1083 = vld [vmem:[#allocation2 + $0x1a80] sm:$0xff]
    %v1084 = vld [vmem:[#allocation2 + $0x1a88] sm:$0xff]
    %v1085 = vld [vmem:[#allocation2 + $0x1a90] sm:$0xff]
    %v1086 = vld [vmem:[#allocation2 + $0x1a98] sm:$0xff]
    %v1087 = vld [vmem:[#allocation2 + $0x1aa0] sm:$0xff]
    %v1088 = vld [vmem:[#allocation2 + $0x1aa8] sm:$0xff]
    %v1089 = vld [vmem:[#allocation2 + $0x1ab0] sm:$0xff]
    %v1090 = vld [vmem:[#allocation2 + $0x1ab8] sm:$0xff]
    %v1091 = vld [vmem:[#allocation2 + $0x1ac0] sm:$0xff]
    %v1092 = vld [vmem:[#allocation2 + $0x1ac8] sm:$0xff]
    %v1093 = vld [vmem:[#allocation2 + $0x1ad0] sm:$0xff]
    %v1094 = vld [vmem:[#allocation2 + $0x1ad8] sm:$0xff]
    %v1095 = vld [vmem:[#allocation2 + $0x1ae0] sm:$0xff]
    %v1096 = vld [vmem:[#allocation2 + $0x1ae8] sm:$0xff]
    %v1097 = vld [vmem:[#allocation2 + $0x1af0] sm:$0xff]
    %v1098 = vld [vmem:[#allocation2 + $0x1af8] sm:$0xff]
    %v1099 = vld [vmem:[#allocation2 + $0x1b00] sm:$0xff]
    %v1100 = vld [vmem:[#allocation2 + $0x1b08] sm:$0xff]
    %v1101 = vld [vmem:[#allocation2 + $0x1b10] sm:$0xff]
    %v1102 = vld [vmem:[#allocation2 + $0x1b18] sm:$0xff]
    %v1103 = vld [vmem:[#allocation2 + $0x1b20] sm:$0xff]
    %v1104 = vld [vmem:[#allocation2 + $0x1b28] sm:$0xff]
    %v1105 = vld [vmem:[#allocation2 + $0x1b30] sm:$0xff]
    %v1106 = vld [vmem:[#allocation2 + $0x1b38] sm:$0xff]
    %v1107 = vld [vmem:[#allocation2 + $0x1b40] sm:$0xff]
    %v1108 = vld [vmem:[#allocation2 + $0x1b48] sm:$0xff]
    %v1109 = vld [vmem:[#allocation2 + $0x1b50] sm:$0xff]
    %v1110 = vld [vmem:[#allocation2 + $0x1b58] sm:$0xff]
    %v1111 = vld [vmem:[#allocation2 + $0x1b60] sm:$0xff]
    %v1112 = vld [vmem:[#allocation2 + $0x1b68] sm:$0xff]
    %v1113 = vld [vmem:[#allocation2 + $0x1b70] sm:$0xff]
    %v1114 = vld [vmem:[#allocation2 + $0x1b78] sm:$0xff]
    %v1115 = vld [vmem:[#allocation2 + $0x1b80] sm:$0xff]
    %v1116 = vld [vmem:[#allocation2 + $0x1b88] sm:$0xff]
    %v1117 = vld [vmem:[#allocation2 + $0x1b90] sm:$0xff]
    %v1118 = vld [vmem:[#allocation2 + $0x1b98] sm:$0xff]
    %v1119 = vld [vmem:[#allocation2 + $0x1ba0] sm:$0xff]
    %v1120 = vld [vmem:[#allocation2 + $0x1ba8] sm:$0xff]
    %v1121 = vld [vmem:[#allocation2 + $0x1bb0] sm:$0xff]
    %v1122 = vld [vmem:[#allocation2 + $0x1bb8] sm:$0xff]
    %v1123 = vld [vmem:[#allocation2 + $0x1bc0] sm:$0xff]
    %v1124 = vld [vmem:[#allocation2 + $0x1bc8] sm:$0xff]
    %v1125 = vld [vmem:[#allocation2 + $0x1bd0] sm:$0xff]
    %v1126 = vld [vmem:[#allocation2 + $0x1bd8] sm:$0xff]
    %v1127 = vld [vmem:[#allocation2 + $0x1be0] sm:$0xff]
    %v1128 = vld [vmem:[#allocation2 + $0x1be8] sm:$0xff]
    %v1129 = vld [vmem:[#allocation2 + $0x1bf0] sm:$0xff]
    %v1130 = vld [vmem:[#allocation2 + $0x1bf8] sm:$0xff]
    %v1131 = vld [vmem:[#allocation2 + $0x1c00] sm:$0xff]
    %v1132 = vld [vmem:[#allocation2 + $0x1c08] sm:$0xff]
    %v1133 = vld [vmem:[#allocation2 + $0x1c10] sm:$0xff]
    %v1134 = vld [vmem:[#allocation2 + $0x1c18] sm:$0xff]
    %v1135 = vld [vmem:[#allocation2 + $0x1c20] sm:$0xff]
    %v1136 = vld [vmem:[#allocation2 + $0x1c28] sm:$0xff]
    %v1137 = vld [vmem:[#allocation2 + $0x1c30] sm:$0xff]
    %v1138 = vld [vmem:[#allocation2 + $0x1c38] sm:$0xff]
    %v1139 = vld [vmem:[#allocation2 + $0x1c40] sm:$0xff]
    %v1140 = vld [vmem:[#allocation2 + $0x1c48] sm:$0xff]
    %v1141 = vld [vmem:[#allocation2 + $0x1c50] sm:$0xff]
    %v1142 = vld [vmem:[#allocation2 + $0x1c58] sm:$0xff]
    %v1143 = vld [vmem:[#allocation2 + $0x1c60] sm:$0xff]
    %v1144 = vld [vmem:[#allocation2 + $0x1c68] sm:$0xff]
    %v1145 = vld [vmem:[#allocation2 + $0x1c70] sm:$0xff]
    %v1146 = vld [vmem:[#allocation2 + $0x1c78] sm:$0xff]
    %v1147 = vld [vmem:[#allocation2 + $0x1c80] sm:$0xff]
    %v1148 = vld [vmem:[#allocation2 + $0x1c88] sm:$0xff]
    %v1149 = vld [vmem:[#allocation2 + $0x1c90] sm:$0xff]
    %v1150 = vld [vmem:[#allocation2 + $0x1c98] sm:$0xff]
    %v1151 = vld [vmem:[#allocation2 + $0x1ca0] sm:$0xff]
    %v1152 = vld [vmem:[#allocation2 + $0x1ca8] sm:$0xff]
    %v1153 = vld [vmem:[#allocation2 + $0x1cb0] sm:$0xff]
    %v1154 = vld [vmem:[#allocation2 + $0x1cb8] sm:$0xff]
    %v1155 = vld [vmem:[#allocation2 + $0x1cc0] sm:$0xff]
    %v1156 = vld [vmem:[#allocation2 + $0x1cc8] sm:$0xff]
    %v1157 = vld [vmem:[#allocation2 + $0x1cd0] sm:$0xff]
    %v1158 = vld [vmem:[#allocation2 + $0x1cd8] sm:$0xff]
    %v1159 = vld [vmem:[#allocation2 + $0x1ce0] sm:$0xff]
    %v1160 = vld [vmem:[#allocation2 + $0x1ce8] sm:$0xff]
    %v1161 = vld [vmem:[#allocation2 + $0x1cf0] sm:$0xff]
    %v1162 = vld [vmem:[#allocation2 + $0x1cf8] sm:$0xff]
    %v1163 = vld [vmem:[#allocation2 + $0x1d00] sm:$0xff]
    %v1164 = vld [vmem:[#allocation2 + $0x1d08] sm:$0xff]
    %v1165 = vld [vmem:[#allocation2 + $0x1d10] sm:$0xff]
    %v1166 = vld [vmem:[#allocation2 + $0x1d18] sm:$0xff]
    %v1167 = vld [vmem:[#allocation2 + $0x1d20] sm:$0xff]
    %v1168 = vld [vmem:[#allocation2 + $0x1d28] sm:$0xff]
    %v1169 = vld [vmem:[#allocation2 + $0x1d30] sm:$0xff]
    %v1170 = vld [vmem:[#allocation2 + $0x1d38] sm:$0xff]
    %v1171 = vld [vmem:[#allocation2 + $0x1d40] sm:$0xff]
    %v1172 = vld [vmem:[#allocation2 + $0x1d48] sm:$0xff]
    %v1173 = vld [vmem:[#allocation2 + $0x1d50] sm:$0xff]
    %v1174 = vld [vmem:[#allocation2 + $0x1d58] sm:$0xff]
    %v1175 = vld [vmem:[#allocation2 + $0x1d60] sm:$0xff]
    %v1176 = vld [vmem:[#allocation2 + $0x1d68] sm:$0xff]
    %v1177 = vld [vmem:[#allocation2 + $0x1d70] sm:$0xff]
    %v1178 = vld [vmem:[#allocation2 + $0x1d78] sm:$0xff]
    %v1179 = vld [vmem:[#allocation2 + $0x1d80] sm:$0xff]
    %v1180 = vld [vmem:[#allocation2 + $0x1d88] sm:$0xff]
    %v1181 = vld [vmem:[#allocation2 + $0x1d90] sm:$0xff]
    %v1182 = vld [vmem:[#allocation2 + $0x1d98] sm:$0xff]
    %v1183 = vld [vmem:[#allocation2 + $0x1da0] sm:$0xff]
    %v1184 = vld [vmem:[#allocation2 + $0x1da8] sm:$0xff]
    %v1185 = vld [vmem:[#allocation2 + $0x1db0] sm:$0xff]
    %v1186 = vld [vmem:[#allocation2 + $0x1db8] sm:$0xff]
    %v1187 = vld [vmem:[#allocation2 + $0x1dc0] sm:$0xff]
    %v1188 = vld [vmem:[#allocation2 + $0x1dc8] sm:$0xff]
    %v1189 = vld [vmem:[#allocation2 + $0x1dd0] sm:$0xff]
    %v1190 = vld [vmem:[#allocation2 + $0x1dd8] sm:$0xff]
    %v1191 = vld [vmem:[#allocation2 + $0x1de0] sm:$0xff]
    %v1192 = vld [vmem:[#allocation2 + $0x1de8] sm:$0xff]
    %v1193 = vld [vmem:[#allocation2 + $0x1df0] sm:$0xff]
    %v1194 = vld [vmem:[#allocation2 + $0x1df8] sm:$0xff]
    %v1195 = vld [vmem:[#allocation2 + $0x1e00] sm:$0xff]
    %v1196 = vld [vmem:[#allocation2 + $0x1e08] sm:$0xff]
    %v1197 = vld [vmem:[#allocation2 + $0x1e10] sm:$0xff]
    %v1198 = vld [vmem:[#allocation2 + $0x1e18] sm:$0xff]
    %v1199 = vld [vmem:[#allocation2 + $0x1e20] sm:$0xff]
    %v1200 = vld [vmem:[#allocation2 + $0x1e28] sm:$0xff]
    %v1201 = vld [vmem:[#allocation2 + $0x1e30] sm:$0xff]
    %v1202 = vld [vmem:[#allocation2 + $0x1e38] sm:$0xff]
    %v1203 = vld [vmem:[#allocation2 + $0x1e40] sm:$0xff]
    %v1204 = vld [vmem:[#allocation2 + $0x1e48] sm:$0xff]
    %v1205 = vld [vmem:[#allocation2 + $0x1e50] sm:$0xff]
    %v1206 = vld [vmem:[#allocation2 + $0x1e58] sm:$0xff]
    %v1207 = vld [vmem:[#allocation2 + $0x1e60] sm:$0xff]
    %v1208 = vld [vmem:[#allocation2 + $0x1e68] sm:$0xff]
    %v1209 = vld [vmem:[#allocation2 + $0x1e70] sm:$0xff]
    %v1210 = vld [vmem:[#allocation2 + $0x1e78] sm:$0xff]
    %v1211 = vld [vmem:[#allocation2 + $0x1e80] sm:$0xff]
    %v1212 = vld [vmem:[#allocation2 + $0x1e88] sm:$0xff]
    %v1213 = vld [vmem:[#allocation2 + $0x1e90] sm:$0xff]
    %v1214 = vld [vmem:[#allocation2 + $0x1e98] sm:$0xff]
    %v1215 = vld [vmem:[#allocation2 + $0x1ea0] sm:$0xff]
    %v1216 = vld [vmem:[#allocation2 + $0x1ea8] sm:$0xff]
    %v1217 = vld [vmem:[#allocation2 + $0x1eb0] sm:$0xff]
    %v1218 = vld [vmem:[#allocation2 + $0x1eb8] sm:$0xff]
    %v1219 = vld [vmem:[#allocation2 + $0x1ec0] sm:$0xff]
    %v1220 = vld [vmem:[#allocation2 + $0x1ec8] sm:$0xff]
    %v1221 = vld [vmem:[#allocation2 + $0x1ed0] sm:$0xff]
    %v1222 = vld [vmem:[#allocation2 + $0x1ed8] sm:$0xff]
    %v1223 = vld [vmem:[#allocation2 + $0x1ee0] sm:$0xff]
    %v1224 = vld [vmem:[#allocation2 + $0x1ee8] sm:$0xff]
    %v1225 = vld [vmem:[#allocation2 + $0x1ef0] sm:$0xff]
    %v1226 = vld [vmem:[#allocation2 + $0x1ef8] sm:$0xff]
    %v1227 = vld [vmem:[#allocation2 + $0x1f00] sm:$0xff]
    %v1228 = vld [vmem:[#allocation2 + $0x1f08] sm:$0xff]
    %v1229 = vld [vmem:[#allocation2 + $0x1f10] sm:$0xff]
    %v1230 = vld [vmem:[#allocation2 + $0x1f18] sm:$0xff]
    %v1231 = vld [vmem:[#allocation2 + $0x1f20] sm:$0xff]
    %v1232 = vld [vmem:[#allocation2 + $0x1f28] sm:$0xff]
    %v1233 = vld [vmem:[#allocation2 + $0x1f30] sm:$0xff]
    %v1234 = vld [vmem:[#allocation2 + $0x1f38] sm:$0xff]
    %v1235 = vld [vmem:[#allocation2 + $0x1f40] sm:$0xff]
    %v1236 = vld [vmem:[#allocation2 + $0x1f48] sm:$0xff]
    %v1237 = vld [vmem:[#allocation2 + $0x1f50] sm:$0xff]
    %v1238 = vld [vmem:[#allocation2 + $0x1f58] sm:$0xff]
    %v1239 = vld [vmem:[#allocation2 + $0x1f60] sm:$0xff]
    %v1240 = vld [vmem:[#allocation2 + $0x1f68] sm:$0xff]
    %v1241 = vld [vmem:[#allocation2 + $0x1f70] sm:$0xff]
    %v1242 = vld [vmem:[#allocation2 + $0x1f78] sm:$0xff]
    %v1243 = vld [vmem:[#allocation2 + $0x1f80] sm:$0xff]
    %v1244 = vld [vmem:[#allocation2 + $0x1f88] sm:$0xff]
    %v1245 = vld [vmem:[#allocation2 + $0x1f90] sm:$0xff]
    %v1246 = vld [vmem:[#allocation2 + $0x1f98] sm:$0xff]
    %v1247 = vld [vmem:[#allocation2 + $0x1fa0] sm:$0xff]
    %v1248 = vld [vmem:[#allocation2 + $0x1fa8] sm:$0xff]
    %v1249 = vld [vmem:[#allocation2 + $0x1fb0] sm:$0xff]
    %v1250 = vld [vmem:[#allocation2 + $0x1fb8] sm:$0xff]
    %v1251 = vld [vmem:[#allocation2 + $0x1fc0] sm:$0xff]
    %v1252 = vld [vmem:[#allocation2 + $0x1fc8] sm:$0xff]
    %v1253 = vld [vmem:[#allocation2 + $0x1fd0] sm:$0xff]
    %v1254 = vld [vmem:[#allocation2 + $0x1fd8] sm:$0xff]
    %v1255 = vld [vmem:[#allocation2 + $0x1fe0] sm:$0xff]
    %v1256 = vld [vmem:[#allocation2 + $0x1fe8] sm:$0xff]
    %v1257 = vld [vmem:[#allocation2 + $0x1ff0] sm:$0xff]
    %v1258 = vld [vmem:[#allocation2 + $0x1ff8] sm:$0xff]
    %v1259 = vld [vmem:[#allocation2 + $0x2000] sm:$0xff]
    %v1260 = vld [vmem:[#allocation2 + $0x2008] sm:$0xff]
    %v1261 = vld [vmem:[#allocation2 + $0x2010] sm:$0xff]
    %v1262 = vld [vmem:[#allocation2 + $0x2018] sm:$0xff]
    %v1263 = vld [vmem:[#allocation2 + $0x2020] sm:$0xff]
    %v1264 = vld [vmem:[#allocation2 + $0x2028] sm:$0xff]
    %v1265 = vld [vmem:[#allocation2 + $0x2030] sm:$0xff]
    %v1266 = vld [vmem:[#allocation2 + $0x2038] sm:$0xff]
    %v1267 = vld [vmem:[#allocation2 + $0x2040] sm:$0xff]
    %v1268 = vld [vmem:[#allocation2 + $0x2048] sm:$0xff]
    %v1269 = vld [vmem:[#allocation2 + $0x2050] sm:$0xff]
    %v1270 = vld [vmem:[#allocation2 + $0x2058] sm:$0xff]
    %v1271 = vld [vmem:[#allocation2 + $0x2060] sm:$0xff]
    %v1272 = vld [vmem:[#allocation2 + $0x2068] sm:$0xff]
    %v1273 = vld [vmem:[#allocation2 + $0x2070] sm:$0xff]
    %v1274 = vld [vmem:[#allocation2 + $0x2078] sm:$0xff]
    %v1275 = vld [vmem:[#allocation2 + $0x2080] sm:$0xff]
    %v1276 = vld [vmem:[#allocation2 + $0x2088] sm:$0xff]
    %v1277 = vld [vmem:[#allocation2 + $0x2090] sm:$0xff]
    %v1278 = vld [vmem:[#allocation2 + $0x2098] sm:$0xff]
    %v1279 = vld [vmem:[#allocation2 + $0x20a0] sm:$0xff]
    %v1280 = vld [vmem:[#allocation2 + $0x20a8] sm:$0xff]
    %v1281 = vld [vmem:[#allocation2 + $0x20b0] sm:$0xff]
    %v1282 = vld [vmem:[#allocation2 + $0x20b8] sm:$0xff]
    %v1283 = vld [vmem:[#allocation2 + $0x20c0] sm:$0xff]
    %v1284 = vld [vmem:[#allocation2 + $0x20c8] sm:$0xff]
    %v1285 = vld [vmem:[#allocation2 + $0x20d0] sm:$0xff]
    %v1286 = vld [vmem:[#allocation2 + $0x20d8] sm:$0xff]
    %v1287 = vld [vmem:[#allocation2 + $0x20e0] sm:$0xff]
    %v1288 = vld [vmem:[#allocation2 + $0x20e8] sm:$0xff]
    %v1289 = vld [vmem:[#allocation2 + $0x20f0] sm:$0xff]
    %v1290 = vld [vmem:[#allocation2 + $0x20f8] sm:$0xff]
    %v1291 = vld [vmem:[#allocation2 + $0x2100] sm:$0xff]
    %v1292 = vld [vmem:[#allocation2 + $0x2108] sm:$0xff]
    %v1293 = vld [vmem:[#allocation2 + $0x2110] sm:$0xff]
    %v1294 = vld [vmem:[#allocation2 + $0x2118] sm:$0xff]
    %v1295 = vld [vmem:[#allocation2 + $0x2120] sm:$0xff]
    %v1296 = vld [vmem:[#allocation2 + $0x2128] sm:$0xff]
    %v1297 = vld [vmem:[#allocation2 + $0x2130] sm:$0xff]
    %v1298 = vld [vmem:[#allocation2 + $0x2138] sm:$0xff]
    %v1299 = vld [vmem:[#allocation2 + $0x2140] sm:$0xff]
    %v1300 = vld [vmem:[#allocation2 + $0x2148] sm:$0xff]
    %v1301 = vld [vmem:[#allocation2 + $0x2150] sm:$0xff]
    %v1302 = vld [vmem:[#allocation2 + $0x2158] sm:$0xff]
    %v1303 = vld [vmem:[#allocation2 + $0x2160] sm:$0xff]
    %v1304 = vld [vmem:[#allocation2 + $0x2168] sm:$0xff]
    %v1305 = vld [vmem:[#allocation2 + $0x2170] sm:$0xff]
    %v1306 = vld [vmem:[#allocation2 + $0x2178] sm:$0xff]
    %v1307 = vld [vmem:[#allocation2 + $0x2180] sm:$0xff]
    %v1308 = vld [vmem:[#allocation2 + $0x2188] sm:$0xff]
    %v1309 = vld [vmem:[#allocation2 + $0x2190] sm:$0xff]
    %v1310 = vld [vmem:[#allocation2 + $0x2198] sm:$0xff]
    %v1311 = vld [vmem:[#allocation2 + $0x21a0] sm:$0xff]
    %v1312 = vld [vmem:[#allocation2 + $0x21a8] sm:$0xff]
    %v1313 = vld [vmem:[#allocation2 + $0x21b0] sm:$0xff]
    %v1314 = vld [vmem:[#allocation2 + $0x21b8] sm:$0xff]
    %v1315 = vld [vmem:[#allocation2 + $0x21c0] sm:$0xff]
    %v1316 = vld [vmem:[#allocation2 + $0x21c8] sm:$0xff]
    %v1317 = vld [vmem:[#allocation2 + $0x21d0] sm:$0xff]
    %v1318 = vld [vmem:[#allocation2 + $0x21d8] sm:$0xff]
    %v1319 = vld [vmem:[#allocation2 + $0x21e0] sm:$0xff]
    %v1320 = vld [vmem:[#allocation2 + $0x21e8] sm:$0xff]
    %v1321 = vld [vmem:[#allocation2 + $0x21f0] sm:$0xff]
    %v1322 = vld [vmem:[#allocation2 + $0x21f8] sm:$0xff]
    %v1323 = vld [vmem:[#allocation2 + $0x2200] sm:$0xff]
    %v1324 = vld [vmem:[#allocation2 + $0x2208] sm:$0xff]
    %v1325 = vld [vmem:[#allocation2 + $0x2210] sm:$0xff]
    %v1326 = vld [vmem:[#allocation2 + $0x2218] sm:$0xff]
    %v1327 = vld [vmem:[#allocation2 + $0x2220] sm:$0xff]
    %v1328 = vld [vmem:[#allocation2 + $0x2228] sm:$0xff]
    %v1329 = vld [vmem:[#allocation2 + $0x2230] sm:$0xff]
    %v1330 = vld [vmem:[#allocation2 + $0x2238] sm:$0xff]
    %v1331 = vld [vmem:[#allocation2 + $0x2240] sm:$0xff]
    %v1332 = vld [vmem:[#allocation2 + $0x2248] sm:$0xff]
    %v1333 = vld [vmem:[#allocation2 + $0x2250] sm:$0xff]
    %v1334 = vld [vmem:[#allocation2 + $0x2258] sm:$0xff]
    %v1335 = vld [vmem:[#allocation2 + $0x2260] sm:$0xff]
    %v1336 = vld [vmem:[#allocation2 + $0x2268] sm:$0xff]
    %v1337 = vld [vmem:[#allocation2 + $0x2270] sm:$0xff]
    %v1338 = vld [vmem:[#allocation2 + $0x2278] sm:$0xff]
    %v1339 = vld [vmem:[#allocation2 + $0x2280] sm:$0xff]
    %v1340 = vld [vmem:[#allocation2 + $0x2288] sm:$0xff]
    %v1341 = vld [vmem:[#allocation2 + $0x2290] sm:$0xff]
    %v1342 = vld [vmem:[#allocation2 + $0x2298] sm:$0xff]
    %v1343 = vld [vmem:[#allocation2 + $0x22a0] sm:$0xff]
    %v1344 = vld [vmem:[#allocation2 + $0x22a8] sm:$0xff]
    %v1345 = vld [vmem:[#allocation2 + $0x22b0] sm:$0xff]
    %v1346 = vld [vmem:[#allocation2 + $0x22b8] sm:$0xff]
    %v1347 = vld [vmem:[#allocation2 + $0x22c0] sm:$0xff]
    %v1348 = vld [vmem:[#allocation2 + $0x22c8] sm:$0xff]
    %v1349 = vld [vmem:[#allocation2 + $0x22d0] sm:$0xff]
    %v1350 = vld [vmem:[#allocation2 + $0x22d8] sm:$0xff]
    %v1351 = vld [vmem:[#allocation2 + $0x22e0] sm:$0xff]
    %v1352 = vld [vmem:[#allocation2 + $0x22e8] sm:$0xff]
    %v1353 = vld [vmem:[#allocation2 + $0x22f0] sm:$0xff]
    %v1354 = vld [vmem:[#allocation2 + $0x22f8] sm:$0xff]
    %v1355 = vld [vmem:[#allocation2 + $0x2300] sm:$0xff]
    %v1356 = vld [vmem:[#allocation2 + $0x2308] sm:$0xff]
    %v1357 = vld [vmem:[#allocation2 + $0x2310] sm:$0xff]
    %v1358 = vld [vmem:[#allocation2 + $0x2318] sm:$0xff]
    %v1359 = vld [vmem:[#allocation2 + $0x2320] sm:$0xff]
    %v1360 = vld [vmem:[#allocation2 + $0x2328] sm:$0xff]
    %v1361 = vld [vmem:[#allocation2 + $0x2330] sm:$0xff]
    %v1362 = vld [vmem:[#allocation2 + $0x2338] sm:$0xff]
    %v1363 = vld [vmem:[#allocation2 + $0x2340] sm:$0xff]
    %v1364 = vld [vmem:[#allocation2 + $0x2348] sm:$0xff]
    %v1365 = vld [vmem:[#allocation2 + $0x2350] sm:$0xff]
    %v1366 = vld [vmem:[#allocation2 + $0x2358] sm:$0xff]
    %v1367 = vld [vmem:[#allocation2 + $0x2360] sm:$0xff]
    %v1368 = vld [vmem:[#allocation2 + $0x2368] sm:$0xff]
    %v1369 = vld [vmem:[#allocation2 + $0x2370] sm:$0xff]
    %v1370 = vld [vmem:[#allocation2 + $0x2378] sm:$0xff]
    %v1371 = vld [vmem:[#allocation2 + $0x2380] sm:$0xff]
    %v1372 = vld [vmem:[#allocation2 + $0x2388] sm:$0xff]
    %v1373 = vld [vmem:[#allocation2 + $0x2390] sm:$0xff]
    %v1374 = vld [vmem:[#allocation2 + $0x2398] sm:$0xff]
    %v1375 = vld [vmem:[#allocation2 + $0x23a0] sm:$0xff]
    %v1376 = vld [vmem:[#allocation2 + $0x23a8] sm:$0xff]
    %v1377 = vld [vmem:[#allocation2 + $0x23b0] sm:$0xff]
    %v1378 = vld [vmem:[#allocation2 + $0x23b8] sm:$0xff]
    %v1379 = vld [vmem:[#allocation2 + $0x23c0] sm:$0xff]
    %v1380 = vld [vmem:[#allocation2 + $0x23c8] sm:$0xff]
    %v1381 = vld [vmem:[#allocation2 + $0x23d0] sm:$0xff]
    %v1382 = vld [vmem:[#allocation2 + $0x23d8] sm:$0xff]
    %v1383 = vld [vmem:[#allocation2 + $0x23e0] sm:$0xff]
    %v1384 = vld [vmem:[#allocation2 + $0x23e8] sm:$0xff]
    %v1385 = vld [vmem:[#allocation2 + $0x23f0] sm:$0xff]
    %v1386 = vld [vmem:[#allocation2 + $0x23f8] sm:$0xff]
    %v1387 = vld [vmem:[#allocation2 + $0x2400] sm:$0xff]
    %v1388 = vld [vmem:[#allocation2 + $0x2408] sm:$0xff]
    %v1389 = vld [vmem:[#allocation2 + $0x2410] sm:$0xff]
    %v1390 = vld [vmem:[#allocation2 + $0x2418] sm:$0xff]
    %v1391 = vld [vmem:[#allocation2 + $0x2420] sm:$0xff]
    %v1392 = vld [vmem:[#allocation2 + $0x2428] sm:$0xff]
    %v1393 = vld [vmem:[#allocation2 + $0x2430] sm:$0xff]
    %v1394 = vld [vmem:[#allocation2 + $0x2438] sm:$0xff]
    %v1395 = vld [vmem:[#allocation2 + $0x2440] sm:$0xff]
    %v1396 = vld [vmem:[#allocation2 + $0x2448] sm:$0xff]
    %v1397 = vld [vmem:[#allocation2 + $0x2450] sm:$0xff]
    %v1398 = vld [vmem:[#allocation2 + $0x2458] sm:$0xff]
    %v1399 = vld [vmem:[#allocation2 + $0x2460] sm:$0xff]
    %v1400 = vld [vmem:[#allocation2 + $0x2468] sm:$0xff]
    %v1401 = vld [vmem:[#allocation2 + $0x2470] sm:$0xff]
    %v1402 = vld [vmem:[#allocation2 + $0x2478] sm:$0xff]
    %v1403 = vld [vmem:[#allocation2 + $0x2480] sm:$0xff]
    %v1404 = vld [vmem:[#allocation2 + $0x2488] sm:$0xff]
    %v1405 = vld [vmem:[#allocation2 + $0x2490] sm:$0xff]
    %v1406 = vld [vmem:[#allocation2 + $0x2498] sm:$0xff]
    %v1407 = vld [vmem:[#allocation2 + $0x24a0] sm:$0xff]
    %v1408 = vld [vmem:[#allocation2 + $0x24a8] sm:$0xff]
    %v1409 = vld [vmem:[#allocation2 + $0x24b0] sm:$0xff]
    %v1410 = vld [vmem:[#allocation2 + $0x24b8] sm:$0xff]
    %v1411 = vld [vmem:[#allocation2 + $0x24c0] sm:$0xff]
    %v1412 = vld [vmem:[#allocation2 + $0x24c8] sm:$0xff]
    %v1413 = vld [vmem:[#allocation2 + $0x24d0] sm:$0xff]
    %v1414 = vld [vmem:[#allocation2 + $0x24d8] sm:$0xff]
    %v1415 = vld [vmem:[#allocation2 + $0x24e0] sm:$0xff]
    %v1416 = vld [vmem:[#allocation2 + $0x24e8] sm:$0xff]
    %v1417 = vld [vmem:[#allocation2 + $0x24f0] sm:$0xff]
    %v1418 = vld [vmem:[#allocation2 + $0x24f8] sm:$0xff]
    %v1419 = vld [vmem:[#allocation2 + $0x2500] sm:$0xff]
    %v1420 = vld [vmem:[#allocation2 + $0x2508] sm:$0xff]
    %v1421 = vld [vmem:[#allocation2 + $0x2510] sm:$0xff]
    %v1422 = vld [vmem:[#allocation2 + $0x2518] sm:$0xff]
    %v1423 = vld [vmem:[#allocation2 + $0x2520] sm:$0xff]
    %v1424 = vld [vmem:[#allocation2 + $0x2528] sm:$0xff]
    %v1425 = vld [vmem:[#allocation2 + $0x2530] sm:$0xff]
    %v1426 = vld [vmem:[#allocation2 + $0x2538] sm:$0xff]
    %v1427 = vld [vmem:[#allocation2 + $0x2540] sm:$0xff]
    %v1428 = vld [vmem:[#allocation2 + $0x2548] sm:$0xff]
    %v1429 = vld [vmem:[#allocation2 + $0x2550] sm:$0xff]
    %v1430 = vld [vmem:[#allocation2 + $0x2558] sm:$0xff]
    %v1431 = vld [vmem:[#allocation2 + $0x2560] sm:$0xff]
    %v1432 = vld [vmem:[#allocation2 + $0x2568] sm:$0xff]
    %v1433 = vld [vmem:[#allocation2 + $0x2570] sm:$0xff]
    %v1434 = vld [vmem:[#allocation2 + $0x2578] sm:$0xff]
    %v1435 = vld [vmem:[#allocation2 + $0x2580] sm:$0xff]
    %v1436 = vld [vmem:[#allocation2 + $0x2588] sm:$0xff]
    %v1437 = vld [vmem:[#allocation2 + $0x2590] sm:$0xff]
    %v1438 = vld [vmem:[#allocation2 + $0x2598] sm:$0xff]
    %v1439 = vld [vmem:[#allocation2 + $0x25a0] sm:$0xff]
    %v1440 = vld [vmem:[#allocation2 + $0x25a8] sm:$0xff]
    %v1441 = vld [vmem:[#allocation2 + $0x25b0] sm:$0xff]
    %v1442 = vld [vmem:[#allocation2 + $0x25b8] sm:$0xff]
    %v1443 = vld [vmem:[#allocation2 + $0x25c0] sm:$0xff]
    %v1444 = vld [vmem:[#allocation2 + $0x25c8] sm:$0xff]
    %v1445 = vld [vmem:[#allocation2 + $0x25d0] sm:$0xff]
    %v1446 = vld [vmem:[#allocation2 + $0x25d8] sm:$0xff]
    %v1447 = vld [vmem:[#allocation2 + $0x25e0] sm:$0xff]
    %v1448 = vld [vmem:[#allocation2 + $0x25e8] sm:$0xff]
    %v1449 = vld [vmem:[#allocation2 + $0x25f0] sm:$0xff]
    %v1450 = vld [vmem:[#allocation2 + $0x25f8] sm:$0xff]
    %v1451 = vld [vmem:[#allocation2 + $0x2600] sm:$0xff]
    %v1452 = vld [vmem:[#allocation2 + $0x2608] sm:$0xff]
    %v1453 = vld [vmem:[#allocation2 + $0x2610] sm:$0xff]
    %v1454 = vld [vmem:[#allocation2 + $0x2618] sm:$0xff]
    %v1455 = vld [vmem:[#allocation2 + $0x2620] sm:$0xff]
    %v1456 = vld [vmem:[#allocation2 + $0x2628] sm:$0xff]
    %v1457 = vld [vmem:[#allocation2 + $0x2630] sm:$0xff]
    %v1458 = vld [vmem:[#allocation2 + $0x2638] sm:$0xff]
    %v1459 = vld [vmem:[#allocation2 + $0x2640] sm:$0xff]
    %v1460 = vld [vmem:[#allocation2 + $0x2648] sm:$0xff]
    %v1461 = vld [vmem:[#allocation2 + $0x2650] sm:$0xff]
    %v1462 = vld [vmem:[#allocation2 + $0x2658] sm:$0xff]
    %v1463 = vld [vmem:[#allocation2 + $0x2660] sm:$0xff]
    %v1464 = vld [vmem:[#allocation2 + $0x2668] sm:$0xff]
    %v1465 = vld [vmem:[#allocation2 + $0x2670] sm:$0xff]
    %v1466 = vld [vmem:[#allocation2 + $0x2678] sm:$0xff]
    %v1467 = vld [vmem:[#allocation2 + $0x2680] sm:$0xff]
    %v1468 = vld [vmem:[#allocation2 + $0x2688] sm:$0xff]
    %v1469 = vld [vmem:[#allocation2 + $0x2690] sm:$0xff]
    %v1470 = vld [vmem:[#allocation2 + $0x2698] sm:$0xff]
    %v1471 = vld [vmem:[#allocation2 + $0x26a0] sm:$0xff]
    %v1472 = vld [vmem:[#allocation2 + $0x26a8] sm:$0xff]
    %v1473 = vld [vmem:[#allocation2 + $0x26b0] sm:$0xff]
    %v1474 = vld [vmem:[#allocation2 + $0x26b8] sm:$0xff]
    %v1475 = vld [vmem:[#allocation2 + $0x26c0] sm:$0xff]
    %v1476 = vld [vmem:[#allocation2 + $0x26c8] sm:$0xff]
    %v1477 = vld [vmem:[#allocation2 + $0x26d0] sm:$0xff]
    %v1478 = vld [vmem:[#allocation2 + $0x26d8] sm:$0xff]
    %v1479 = vld [vmem:[#allocation2 + $0x26e0] sm:$0xff]
    %v1480 = vld [vmem:[#allocation2 + $0x26e8] sm:$0xff]
    %v1481 = vld [vmem:[#allocation2 + $0x26f0] sm:$0xff]
    %v1482 = vld [vmem:[#allocation2 + $0x26f8] sm:$0xff]
    %v1483 = vld [vmem:[#allocation2 + $0x2700] sm:$0xff]
    %v1484 = vld [vmem:[#allocation2 + $0x2708] sm:$0xff]
    %v1485 = vld [vmem:[#allocation2 + $0x2710] sm:$0xff]
    %v1486 = vld [vmem:[#allocation2 + $0x2718] sm:$0xff]
    %v1487 = vld [vmem:[#allocation2 + $0x2720] sm:$0xff]
    %v1488 = vld [vmem:[#allocation2 + $0x2728] sm:$0xff]
    %v1489 = vld [vmem:[#allocation2 + $0x2730] sm:$0xff]
    %v1490 = vld [vmem:[#allocation2 + $0x2738] sm:$0xff]
    %v1491 = vld [vmem:[#allocation2 + $0x2740] sm:$0xff]
    %v1492 = vld [vmem:[#allocation2 + $0x2748] sm:$0xff]
    %v1493 = vld [vmem:[#allocation2 + $0x2750] sm:$0xff]
    %v1494 = vld [vmem:[#allocation2 + $0x2758] sm:$0xff]
    %v1495 = vld [vmem:[#allocation2 + $0x2760] sm:$0xff]
    %v1496 = vld [vmem:[#allocation2 + $0x2768] sm:$0xff]
    %v1497 = vld [vmem:[#allocation2 + $0x2770] sm:$0xff]
    %v1498 = vld [vmem:[#allocation2 + $0x2778] sm:$0xff]
    %v1499 = vld [vmem:[#allocation2 + $0x2780] sm:$0xff]
    %v1500 = vld [vmem:[#allocation2 + $0x2788] sm:$0xff]
    %v1501 = vld [vmem:[#allocation2 + $0x2790] sm:$0xff]
    %v1502 = vld [vmem:[#allocation2 + $0x2798] sm:$0xff]
    %v1503 = vld [vmem:[#allocation2 + $0x27a0] sm:$0xff]
    %v1504 = vld [vmem:[#allocation2 + $0x27a8] sm:$0xff]
    %v1505 = vld [vmem:[#allocation2 + $0x27b0] sm:$0xff]
    %v1506 = vld [vmem:[#allocation2 + $0x27b8] sm:$0xff]
    %v1507 = vld [vmem:[#allocation2 + $0x27c0] sm:$0xff]
    %v1508 = vld [vmem:[#allocation2 + $0x27c8] sm:$0xff]
    %v1509 = vld [vmem:[#allocation2 + $0x27d0] sm:$0xff]
    %v1510 = vld [vmem:[#allocation2 + $0x27d8] sm:$0xff]
    %v1511 = vld [vmem:[#allocation2 + $0x27e0] sm:$0xff]
    %v1512 = vld [vmem:[#allocation2 + $0x27e8] sm:$0xff]
    %v1513 = vld [vmem:[#allocation2 + $0x27f0] sm:$0xff]
    %v1514 = vld [vmem:[#allocation2 + $0x27f8] sm:$0xff]
    %v1515 = vld [vmem:[#allocation2 + $0x2800] sm:$0xff]
    %v1516 = vld [vmem:[#allocation2 + $0x2808] sm:$0xff]
    %v1517 = vld [vmem:[#allocation2 + $0x2810] sm:$0xff]
    %v1518 = vld [vmem:[#allocation2 + $0x2818] sm:$0xff]
    %v1519 = vld [vmem:[#allocation2 + $0x2820] sm:$0xff]
    %v1520 = vld [vmem:[#allocation2 + $0x2828] sm:$0xff]
    %v1521 = vld [vmem:[#allocation2 + $0x2830] sm:$0xff]
    %v1522 = vld [vmem:[#allocation2 + $0x2838] sm:$0xff]
    %v1523 = vld [vmem:[#allocation2 + $0x2840] sm:$0xff]
    %v1524 = vld [vmem:[#allocation2 + $0x2848] sm:$0xff]
    %v1525 = vld [vmem:[#allocation2 + $0x2850] sm:$0xff]
    %v1526 = vld [vmem:[#allocation2 + $0x2858] sm:$0xff]
    %v1527 = vld [vmem:[#allocation2 + $0x2860] sm:$0xff]
    %v1528 = vld [vmem:[#allocation2 + $0x2868] sm:$0xff]
    %v1529 = vld [vmem:[#allocation2 + $0x2870] sm:$0xff]
    %v1530 = vld [vmem:[#allocation2 + $0x2878] sm:$0xff]
    %v1531 = vld [vmem:[#allocation2 + $0x2880] sm:$0xff]
    %v1532 = vld [vmem:[#allocation2 + $0x2888] sm:$0xff]
    %v1533 = vld [vmem:[#allocation2 + $0x2890] sm:$0xff]
    %v1534 = vld [vmem:[#allocation2 + $0x2898] sm:$0xff]
    %v1535 = vld [vmem:[#allocation2 + $0x28a0] sm:$0xff]
    %v1536 = vld [vmem:[#allocation2 + $0x28a8] sm:$0xff]
    %v1537 = vld [vmem:[#allocation2 + $0x28b0] sm:$0xff]
    %v1538 = vld [vmem:[#allocation2 + $0x28b8] sm:$0xff]
    %v1539 = vld [vmem:[#allocation2 + $0x28c0] sm:$0xff]
    %v1540 = vld [vmem:[#allocation2 + $0x28c8] sm:$0xff]
    %v1541 = vld [vmem:[#allocation2 + $0x28d0] sm:$0xff]
    %v1542 = vld [vmem:[#allocation2 + $0x28d8] sm:$0xff]
    %v1543 = vld [vmem:[#allocation2 + $0x28e0] sm:$0xff]
    %v1544 = vld [vmem:[#allocation2 + $0x28e8] sm:$0xff]
    %v1545 = vld [vmem:[#allocation2 + $0x28f0] sm:$0xff]
    %v1546 = vld [vmem:[#allocation2 + $0x28f8] sm:$0xff]
    %v1547 = vld [vmem:[#allocation2 + $0x2900] sm:$0xff]
    %v1548 = vld [vmem:[#allocation2 + $0x2908] sm:$0xff]
    %v1549 = vld [vmem:[#allocation2 + $0x2910] sm:$0xff]
    %v1550 = vld [vmem:[#allocation2 + $0x2918] sm:$0xff]
    %v1551 = vld [vmem:[#allocation2 + $0x2920] sm:$0xff]
    %v1552 = vld [vmem:[#allocation2 + $0x2928] sm:$0xff]
    %v1553 = vld [vmem:[#allocation2 + $0x2930] sm:$0xff]
    %v1554 = vld [vmem:[#allocation2 + $0x2938] sm:$0xff]
    %v1555 = vld [vmem:[#allocation2 + $0x2940] sm:$0xff]
    %v1556 = vld [vmem:[#allocation2 + $0x2948] sm:$0xff]
    %v1557 = vld [vmem:[#allocation2 + $0x2950] sm:$0xff]
    %v1558 = vld [vmem:[#allocation2 + $0x2958] sm:$0xff]
    %v1559 = vld [vmem:[#allocation2 + $0x2960] sm:$0xff]
    %v1560 = vld [vmem:[#allocation2 + $0x2968] sm:$0xff]
    %v1561 = vld [vmem:[#allocation2 + $0x2970] sm:$0xff]
    %v1562 = vld [vmem:[#allocation2 + $0x2978] sm:$0xff]
    %v1563 = vld [vmem:[#allocation2 + $0x2980] sm:$0xff]
    %v1564 = vld [vmem:[#allocation2 + $0x2988] sm:$0xff]
    %v1565 = vld [vmem:[#allocation2 + $0x2990] sm:$0xff]
    %v1566 = vld [vmem:[#allocation2 + $0x2998] sm:$0xff]
    %v1567 = vld [vmem:[#allocation2 + $0x29a0] sm:$0xff]
    %v1568 = vld [vmem:[#allocation2 + $0x29a8] sm:$0xff]
    %v1569 = vld [vmem:[#allocation2 + $0x29b0] sm:$0xff]
    %v1570 = vld [vmem:[#allocation2 + $0x29b8] sm:$0xff]
    %v1571 = vld [vmem:[#allocation2 + $0x29c0] sm:$0xff]
    %v1572 = vld [vmem:[#allocation2 + $0x29c8] sm:$0xff]
    %v1573 = vld [vmem:[#allocation2 + $0x29d0] sm:$0xff]
    %v1574 = vld [vmem:[#allocation2 + $0x29d8] sm:$0xff]
    %v1575 = vld [vmem:[#allocation2 + $0x29e0] sm:$0xff]
    %v1576 = vld [vmem:[#allocation2 + $0x29e8] sm:$0xff]
    %v1577 = vld [vmem:[#allocation2 + $0x29f0] sm:$0xff]
    %v1578 = vld [vmem:[#allocation2 + $0x29f8] sm:$0xff]
    %v1579 = vld [vmem:[#allocation2 + $0x2a00] sm:$0xff]
    %v1580 = vld [vmem:[#allocation2 + $0x2a08] sm:$0xff]
    %v1581 = vld [vmem:[#allocation2 + $0x2a10] sm:$0xff]
    %v1582 = vld [vmem:[#allocation2 + $0x2a18] sm:$0xff]
    %v1583 = vld [vmem:[#allocation2 + $0x2a20] sm:$0xff]
    %v1584 = vld [vmem:[#allocation2 + $0x2a28] sm:$0xff]
    %v1585 = vld [vmem:[#allocation2 + $0x2a30] sm:$0xff]
    %v1586 = vld [vmem:[#allocation2 + $0x2a38] sm:$0xff]
    %v1587 = vld [vmem:[#allocation2 + $0x2a40] sm:$0xff]
    %v1588 = vld [vmem:[#allocation2 + $0x2a48] sm:$0xff]
    %v1589 = vld [vmem:[#allocation2 + $0x2a50] sm:$0xff]
    %v1590 = vld [vmem:[#allocation2 + $0x2a58] sm:$0xff]
    %v1591 = vld [vmem:[#allocation2 + $0x2a60] sm:$0xff]
    %v1592 = vld [vmem:[#allocation2 + $0x2a68] sm:$0xff]
    %v1593 = vld [vmem:[#allocation2 + $0x2a70] sm:$0xff]
    %v1594 = vld [vmem:[#allocation2 + $0x2a78] sm:$0xff]
    %v1595 = vld [vmem:[#allocation2 + $0x2a80] sm:$0xff]
    %v1596 = vld [vmem:[#allocation2 + $0x2a88] sm:$0xff]
    %v1597 = vld [vmem:[#allocation2 + $0x2a90] sm:$0xff]
    %v1598 = vld [vmem:[#allocation2 + $0x2a98] sm:$0xff]
    %v1599 = vld [vmem:[#allocation2 + $0x2aa0] sm:$0xff]
    %v1600 = vld [vmem:[#allocation2 + $0x2aa8] sm:$0xff]
    %v1601 = vld [vmem:[#allocation2 + $0x2ab0] sm:$0xff]
    %v1602 = vld [vmem:[#allocation2 + $0x2ab8] sm:$0xff]
    %v1603 = vld [vmem:[#allocation2 + $0x2ac0] sm:$0xff]
    %v1604 = vld [vmem:[#allocation2 + $0x2ac8] sm:$0xff]
    %v1605 = vld [vmem:[#allocation2 + $0x2ad0] sm:$0xff]
    %v1606 = vld [vmem:[#allocation2 + $0x2ad8] sm:$0xff]
    %v1607 = vld [vmem:[#allocation2 + $0x2ae0] sm:$0xff]
    %v1608 = vld [vmem:[#allocation2 + $0x2ae8] sm:$0xff]
    %v1609 = vld [vmem:[#allocation2 + $0x2af0] sm:$0xff]
    %v1610 = vld [vmem:[#allocation2 + $0x2af8] sm:$0xff]
    %v1611 = vld [vmem:[#allocation2 + $0x2b00] sm:$0xff]
    %v1612 = vld [vmem:[#allocation2 + $0x2b08] sm:$0xff]
    %v1613 = vld [vmem:[#allocation2 + $0x2b10] sm:$0xff]
    %v1614 = vld [vmem:[#allocation2 + $0x2b18] sm:$0xff]
    %v1615 = vld [vmem:[#allocation2 + $0x2b20] sm:$0xff]
    %v1616 = vld [vmem:[#allocation2 + $0x2b28] sm:$0xff]
    %v1617 = vld [vmem:[#allocation2 + $0x2b30] sm:$0xff]
    %v1618 = vld [vmem:[#allocation2 + $0x2b38] sm:$0xff]
    %v1619 = vld [vmem:[#allocation2 + $0x2b40] sm:$0xff]
    %v1620 = vld [vmem:[#allocation2 + $0x2b48] sm:$0xff]
    %v1621 = vld [vmem:[#allocation2 + $0x2b50] sm:$0xff]
    %v1622 = vld [vmem:[#allocation2 + $0x2b58] sm:$0xff]
    %v1623 = vld [vmem:[#allocation2 + $0x2b60] sm:$0xff]
    %v1624 = vld [vmem:[#allocation2 + $0x2b68] sm:$0xff]
    %v1625 = vld [vmem:[#allocation2 + $0x2b70] sm:$0xff]
    %v1626 = vld [vmem:[#allocation2 + $0x2b78] sm:$0xff]
    %v1627 = vld [vmem:[#allocation2 + $0x2b80] sm:$0xff]
    %v1628 = vld [vmem:[#allocation2 + $0x2b88] sm:$0xff]
    %v1629 = vld [vmem:[#allocation2 + $0x2b90] sm:$0xff]
    %v1630 = vld [vmem:[#allocation2 + $0x2b98] sm:$0xff]
    %v1631 = vld [vmem:[#allocation2 + $0x2ba0] sm:$0xff]
    %v1632 = vld [vmem:[#allocation2 + $0x2ba8] sm:$0xff]
    %v1633 = vld [vmem:[#allocation2 + $0x2bb0] sm:$0xff]
    %v1634 = vld [vmem:[#allocation2 + $0x2bb8] sm:$0xff]
    %v1635 = vld [vmem:[#allocation2 + $0x2bc0] sm:$0xff]
    %v1636 = vld [vmem:[#allocation2 + $0x2bc8] sm:$0xff]
    %v1637 = vld [vmem:[#allocation2 + $0x2bd0] sm:$0xff]
    %v1638 = vld [vmem:[#allocation2 + $0x2bd8] sm:$0xff]
    %v1639 = vld [vmem:[#allocation2 + $0x2be0] sm:$0xff]
    %v1640 = vld [vmem:[#allocation2 + $0x2be8] sm:$0xff]
    %v1641 = vld [vmem:[#allocation2 + $0x2bf0] sm:$0xff]
    %v1642 = vld [vmem:[#allocation2 + $0x2bf8] sm:$0xff]
    %v1643 = vld [vmem:[#allocation2 + $0x2c00] sm:$0xff]
    %v1644 = vld [vmem:[#allocation2 + $0x2c08] sm:$0xff]
    %v1645 = vld [vmem:[#allocation2 + $0x2c10] sm:$0xff]
    %v1646 = vld [vmem:[#allocation2 + $0x2c18] sm:$0xff]
    %v1647 = vld [vmem:[#allocation2 + $0x2c20] sm:$0xff]
    %v1648 = vld [vmem:[#allocation2 + $0x2c28] sm:$0xff]
    %v1649 = vld [vmem:[#allocation2 + $0x2c30] sm:$0xff]
    %v1650 = vld [vmem:[#allocation2 + $0x2c38] sm:$0xff]
    %v1651 = vld [vmem:[#allocation2 + $0x2c40] sm:$0xff]
    %v1652 = vld [vmem:[#allocation2 + $0x2c48] sm:$0xff]
    %v1653 = vld [vmem:[#allocation2 + $0x2c50] sm:$0xff]
    %v1654 = vld [vmem:[#allocation2 + $0x2c58] sm:$0xff]
    %v1655 = vld [vmem:[#allocation2 + $0x2c60] sm:$0xff]
    %v1656 = vld [vmem:[#allocation2 + $0x2c68] sm:$0xff]
    %v1657 = vld [vmem:[#allocation2 + $0x2c70] sm:$0xff]
    %v1658 = vld [vmem:[#allocation2 + $0x2c78] sm:$0xff]
    %v1659 = vld [vmem:[#allocation2 + $0x2c80] sm:$0xff]
    %v1660 = vld [vmem:[#allocation2 + $0x2c88] sm:$0xff]
    %v1661 = vld [vmem:[#allocation2 + $0x2c90] sm:$0xff]
    %v1662 = vld [vmem:[#allocation2 + $0x2c98] sm:$0xff]
    %v1663 = vld [vmem:[#allocation2 + $0x2ca0] sm:$0xff]
    %v1664 = vld [vmem:[#allocation2 + $0x2ca8] sm:$0xff]
    %v1665 = vld [vmem:[#allocation2 + $0x2cb0] sm:$0xff]
    %v1666 = vld [vmem:[#allocation2 + $0x2cb8] sm:$0xff]
    %v1667 = vld [vmem:[#allocation2 + $0x2cc0] sm:$0xff]
    %v1668 = vld [vmem:[#allocation2 + $0x2cc8] sm:$0xff]
    %v1669 = vld [vmem:[#allocation2 + $0x2cd0] sm:$0xff]
    %v1670 = vld [vmem:[#allocation2 + $0x2cd8] sm:$0xff]
    %v1671 = vld [vmem:[#allocation2 + $0x2ce0] sm:$0xff]
    %v1672 = vld [vmem:[#allocation2 + $0x2ce8] sm:$0xff]
    %v1673 = vld [vmem:[#allocation2 + $0x2cf0] sm:$0xff]
    %v1674 = vld [vmem:[#allocation2 + $0x2cf8] sm:$0xff]
    %v1675 = vld [vmem:[#allocation2 + $0x2d00] sm:$0xff]
    %v1676 = vld [vmem:[#allocation2 + $0x2d08] sm:$0xff]
    %v1677 = vld [vmem:[#allocation2 + $0x2d10] sm:$0xff]
    %v1678 = vld [vmem:[#allocation2 + $0x2d18] sm:$0xff]
    %v1679 = vld [vmem:[#allocation2 + $0x2d20] sm:$0xff]
    %v1680 = vld [vmem:[#allocation2 + $0x2d28] sm:$0xff]
    %v1681 = vld [vmem:[#allocation2 + $0x2d30] sm:$0xff]
    %v1682 = vld [vmem:[#allocation2 + $0x2d38] sm:$0xff]
    %v1683 = vld [vmem:[#allocation2 + $0x2d40] sm:$0xff]
    %v1684 = vld [vmem:[#allocation2 + $0x2d48] sm:$0xff]
    %v1685 = vld [vmem:[#allocation2 + $0x2d50] sm:$0xff]
    %v1686 = vld [vmem:[#allocation2 + $0x2d58] sm:$0xff]
    %v1687 = vld [vmem:[#allocation2 + $0x2d60] sm:$0xff]
    %v1688 = vld [vmem:[#allocation2 + $0x2d68] sm:$0xff]
    %v1689 = vld [vmem:[#allocation2 + $0x2d70] sm:$0xff]
    %v1690 = vld [vmem:[#allocation2 + $0x2d78] sm:$0xff]
    %v1691 = vld [vmem:[#allocation2 + $0x2d80] sm:$0xff]
    %v1692 = vld [vmem:[#allocation2 + $0x2d88] sm:$0xff]
    %v1693 = vld [vmem:[#allocation2 + $0x2d90] sm:$0xff]
    %v1694 = vld [vmem:[#allocation2 + $0x2d98] sm:$0xff]
    %v1695 = vld [vmem:[#allocation2 + $0x2da0] sm:$0xff]
    %v1696 = vld [vmem:[#allocation2 + $0x2da8] sm:$0xff]
    %v1697 = vld [vmem:[#allocation2 + $0x2db0] sm:$0xff]
    %v1698 = vld [vmem:[#allocation2 + $0x2db8] sm:$0xff]
    %v1699 = vld [vmem:[#allocation2 + $0x2dc0] sm:$0xff]
    %v1700 = vld [vmem:[#allocation2 + $0x2dc8] sm:$0xff]
    %v1701 = vld [vmem:[#allocation2 + $0x2dd0] sm:$0xff]
    %v1702 = vld [vmem:[#allocation2 + $0x2dd8] sm:$0xff]
    %v1703 = vld [vmem:[#allocation2 + $0x2de0] sm:$0xff]
    %v1704 = vld [vmem:[#allocation2 + $0x2de8] sm:$0xff]
    %v1705 = vld [vmem:[#allocation2 + $0x2df0] sm:$0xff]
    %v1706 = vld [vmem:[#allocation2 + $0x2df8] sm:$0xff]
    %v1707 = vld [vmem:[#allocation2 + $0x2e00] sm:$0xff]
    %v1708 = vld [vmem:[#allocation2 + $0x2e08] sm:$0xff]
    %v1709 = vld [vmem:[#allocation2 + $0x2e10] sm:$0xff]
    %v1710 = vld [vmem:[#allocation2 + $0x2e18] sm:$0xff]
    %v1711 = vld [vmem:[#allocation2 + $0x2e20] sm:$0xff]
    %v1712 = vld [vmem:[#allocation2 + $0x2e28] sm:$0xff]
    %v1713 = vld [vmem:[#allocation2 + $0x2e30] sm:$0xff]
    %v1714 = vld [vmem:[#allocation2 + $0x2e38] sm:$0xff]
    %v1715 = vld [vmem:[#allocation2 + $0x2e40] sm:$0xff]
    %v1716 = vld [vmem:[#allocation2 + $0x2e48] sm:$0xff]
    %v1717 = vld [vmem:[#allocation2 + $0x2e50] sm:$0xff]
    %v1718 = vld [vmem:[#allocation2 + $0x2e58] sm:$0xff]
    %v1719 = vld [vmem:[#allocation2 + $0x2e60] sm:$0xff]
    %v1720 = vld [vmem:[#allocation2 + $0x2e68] sm:$0xff]
    %v1721 = vld [vmem:[#allocation2 + $0x2e70] sm:$0xff]
    %v1722 = vld [vmem:[#allocation2 + $0x2e78] sm:$0xff]
    %v1723 = vld [vmem:[#allocation2 + $0x2e80] sm:$0xff]
    %v1724 = vld [vmem:[#allocation2 + $0x2e88] sm:$0xff]
    %v1725 = vld [vmem:[#allocation2 + $0x2e90] sm:$0xff]
    %v1726 = vld [vmem:[#allocation2 + $0x2e98] sm:$0xff]
    %v1727 = vld [vmem:[#allocation2 + $0x2ea0] sm:$0xff]
    %v1728 = vld [vmem:[#allocation2 + $0x2ea8] sm:$0xff]
    %v1729 = vld [vmem:[#allocation2 + $0x2eb0] sm:$0xff]
    %v1730 = vld [vmem:[#allocation2 + $0x2eb8] sm:$0xff]
    %v1731 = vld [vmem:[#allocation2 + $0x2ec0] sm:$0xff]
    %v1732 = vld [vmem:[#allocation2 + $0x2ec8] sm:$0xff]
    %v1733 = vld [vmem:[#allocation2 + $0x2ed0] sm:$0xff]
    %v1734 = vld [vmem:[#allocation2 + $0x2ed8] sm:$0xff]
    %v1735 = vld [vmem:[#allocation2 + $0x2ee0] sm:$0xff]
    %v1736 = vld [vmem:[#allocation2 + $0x2ee8] sm:$0xff]
    %v1737 = vld [vmem:[#allocation2 + $0x2ef0] sm:$0xff]
    %v1738 = vld [vmem:[#allocation2 + $0x2ef8] sm:$0xff]
    %v1739 = vld [vmem:[#allocation2 + $0x2f00] sm:$0xff]
    %v1740 = vld [vmem:[#allocation2 + $0x2f08] sm:$0xff]
    %v1741 = vld [vmem:[#allocation2 + $0x2f10] sm:$0xff]
    %v1742 = vld [vmem:[#allocation2 + $0x2f18] sm:$0xff]
    %v1743 = vld [vmem:[#allocation2 + $0x2f20] sm:$0xff]
    %v1744 = vld [vmem:[#allocation2 + $0x2f28] sm:$0xff]
    %v1745 = vld [vmem:[#allocation2 + $0x2f30] sm:$0xff]
    %v1746 = vld [vmem:[#allocation2 + $0x2f38] sm:$0xff]
    %v1747 = vld [vmem:[#allocation2 + $0x2f40] sm:$0xff]
    %v1748 = vld [vmem:[#allocation2 + $0x2f48] sm:$0xff]
    %v1749 = vld [vmem:[#allocation2 + $0x2f50] sm:$0xff]
    %v1750 = vld [vmem:[#allocation2 + $0x2f58] sm:$0xff]
    %v1751 = vld [vmem:[#allocation2 + $0x2f60] sm:$0xff]
    %v1752 = vld [vmem:[#allocation2 + $0x2f68] sm:$0xff]
    %v1753 = vld [vmem:[#allocation2 + $0x2f70] sm:$0xff]
    %v1754 = vld [vmem:[#allocation2 + $0x2f78] sm:$0xff]
    %v1755 = vld [vmem:[#allocation2 + $0x2f80] sm:$0xff]
    %v1756 = vld [vmem:[#allocation2 + $0x2f88] sm:$0xff]
    %v1757 = vld [vmem:[#allocation2 + $0x2f90] sm:$0xff]
    %v1758 = vld [vmem:[#allocation2 + $0x2f98] sm:$0xff]
    %v1759 = vld [vmem:[#allocation2 + $0x2fa0] sm:$0xff]
    %v1760 = vld [vmem:[#allocation2 + $0x2fa8] sm:$0xff]
    %v1761 = vld [vmem:[#allocation2 + $0x2fb0] sm:$0xff]
    %v1762 = vld [vmem:[#allocation2 + $0x2fb8] sm:$0xff]
    %v1763 = vld [vmem:[#allocation2 + $0x2fc0] sm:$0xff]
    %v1764 = vld [vmem:[#allocation2 + $0x2fc8] sm:$0xff]
    %v1765 = vld [vmem:[#allocation2 + $0x2fd0] sm:$0xff]
    %v1766 = vld [vmem:[#allocation2 + $0x2fd8] sm:$0xff]
    %v1767 = vld [vmem:[#allocation2 + $0x2fe0] sm:$0xff]
    %v1768 = vld [vmem:[#allocation2 + $0x2fe8] sm:$0xff]
    %v1769 = vld [vmem:[#allocation2 + $0x2ff0] sm:$0xff]
    %v1770 = vld [vmem:[#allocation2 + $0x2ff8] sm:$0xff]
    %v1771 = vld [vmem:[#allocation2 + $0x3000] sm:$0xff]
    %v1772 = vld [vmem:[#allocation2 + $0x3008] sm:$0xff]
    %v1773 = vld [vmem:[#allocation2 + $0x3010] sm:$0xff]
    %v1774 = vld [vmem:[#allocation2 + $0x3018] sm:$0xff]
    %v1775 = vld [vmem:[#allocation2 + $0x3020] sm:$0xff]
    %v1776 = vld [vmem:[#allocation2 + $0x3028] sm:$0xff]
    %v1777 = vld [vmem:[#allocation2 + $0x3030] sm:$0xff]
    %v1778 = vld [vmem:[#allocation2 + $0x3038] sm:$0xff]
    %v1779 = vld [vmem:[#allocation2 + $0x3040] sm:$0xff]
    %v1780 = vld [vmem:[#allocation2 + $0x3048] sm:$0xff]
    %v1781 = vld [vmem:[#allocation2 + $0x3050] sm:$0xff]
    %v1782 = vld [vmem:[#allocation2 + $0x3058] sm:$0xff]
    %v1783 = vld [vmem:[#allocation2 + $0x3060] sm:$0xff]
    %v1784 = vld [vmem:[#allocation2 + $0x3068] sm:$0xff]
    %v1785 = vld [vmem:[#allocation2 + $0x3070] sm:$0xff]
    %v1786 = vld [vmem:[#allocation2 + $0x3078] sm:$0xff]
    %v1787 = vld [vmem:[#allocation2 + $0x3080] sm:$0xff]
    %v1788 = vld [vmem:[#allocation2 + $0x3088] sm:$0xff]
    %v1789 = vld [vmem:[#allocation2 + $0x3090] sm:$0xff]
    %v1790 = vld [vmem:[#allocation2 + $0x3098] sm:$0xff]
    %v1791 = vld [vmem:[#allocation2 + $0x30a0] sm:$0xff]
    %v1792 = vld [vmem:[#allocation2 + $0x30a8] sm:$0xff]
    %v1793 = vld [vmem:[#allocation2 + $0x30b0] sm:$0xff]
    %v1794 = vld [vmem:[#allocation2 + $0x30b8] sm:$0xff]
    %v1795 = vld [vmem:[#allocation2 + $0x30c0] sm:$0xff]
    %v1796 = vld [vmem:[#allocation2 + $0x30c8] sm:$0xff]
    %v1797 = vld [vmem:[#allocation2 + $0x30d0] sm:$0xff]
    %v1798 = vld [vmem:[#allocation2 + $0x30d8] sm:$0xff]
    %v1799 = vld [vmem:[#allocation2 + $0x30e0] sm:$0xff]
    %v1800 = vld [vmem:[#allocation2 + $0x30e8] sm:$0xff]
    %v1801 = vld [vmem:[#allocation2 + $0x30f0] sm:$0xff]
    %v1802 = vld [vmem:[#allocation2 + $0x30f8] sm:$0xff]
    %v1803 = vld [vmem:[#allocation2 + $0x3100] sm:$0xff]
    %v1804 = vld [vmem:[#allocation2 + $0x3108] sm:$0xff]
    %v1805 = vld [vmem:[#allocation2 + $0x3110] sm:$0xff]
    %v1806 = vld [vmem:[#allocation2 + $0x3118] sm:$0xff]
    %v1807 = vld [vmem:[#allocation2 + $0x3120] sm:$0xff]
    %v1808 = vld [vmem:[#allocation2 + $0x3128] sm:$0xff]
    %v1809 = vld [vmem:[#allocation2 + $0x3130] sm:$0xff]
    %v1810 = vld [vmem:[#allocation2 + $0x3138] sm:$0xff]
    %v1811 = vld [vmem:[#allocation2 + $0x3140] sm:$0xff]
    %v1812 = vld [vmem:[#allocation2 + $0x3148] sm:$0xff]
    %v1813 = vld [vmem:[#allocation2 + $0x3150] sm:$0xff]
    %v1814 = vld [vmem:[#allocation2 + $0x3158] sm:$0xff]
    %v1815 = vld [vmem:[#allocation2 + $0x3160] sm:$0xff]
    %v1816 = vld [vmem:[#allocation2 + $0x3168] sm:$0xff]
    %v1817 = vld [vmem:[#allocation2 + $0x3170] sm:$0xff]
    %v1818 = vld [vmem:[#allocation2 + $0x3178] sm:$0xff]
    %v1819 = vld [vmem:[#allocation2 + $0x3180] sm:$0xff]
    %v1820 = vld [vmem:[#allocation2 + $0x3188] sm:$0xff]
    %v1821 = vld [vmem:[#allocation2 + $0x3190] sm:$0xff]
    %v1822 = vld [vmem:[#allocation2 + $0x3198] sm:$0xff]
    %v1823 = vld [vmem:[#allocation2 + $0x31a0] sm:$0xff]
    %v1824 = vld [vmem:[#allocation2 + $0x31a8] sm:$0xff]
    %v1825 = vld [vmem:[#allocation2 + $0x31b0] sm:$0xff]
    %v1826 = vld [vmem:[#allocation2 + $0x31b8] sm:$0xff]
    %v1827 = vld [vmem:[#allocation2 + $0x31c0] sm:$0xff]
    %v1828 = vld [vmem:[#allocation2 + $0x31c8] sm:$0xff]
    %v1829 = vld [vmem:[#allocation2 + $0x31d0] sm:$0xff]
    %v1830 = vld [vmem:[#allocation2 + $0x31d8] sm:$0xff]
    %v1831 = vld [vmem:[#allocation2 + $0x31e0] sm:$0xff]
    %v1832 = vld [vmem:[#allocation2 + $0x31e8] sm:$0xff]
    %v1833 = vld [vmem:[#allocation2 + $0x31f0] sm:$0xff]
    %v1834 = vld [vmem:[#allocation2 + $0x31f8] sm:$0xff]
    %v1835 = vld [vmem:[#allocation2 + $0x3200] sm:$0xff]
    %v1836 = vld [vmem:[#allocation2 + $0x3208] sm:$0xff]
    %v1837 = vld [vmem:[#allocation2 + $0x3210] sm:$0xff]
    %v1838 = vld [vmem:[#allocation2 + $0x3218] sm:$0xff]
    %v1839 = vld [vmem:[#allocation2 + $0x3220] sm:$0xff]
    %v1840 = vld [vmem:[#allocation2 + $0x3228] sm:$0xff]
    %v1841 = vld [vmem:[#allocation2 + $0x3230] sm:$0xff]
    %v1842 = vld [vmem:[#allocation2 + $0x3238] sm:$0xff]
    %v1843 = vld [vmem:[#allocation2 + $0x3240] sm:$0xff]
    %v1844 = vld [vmem:[#allocation2 + $0x3248] sm:$0xff]
    %v1845 = vld [vmem:[#allocation2 + $0x3250] sm:$0xff]
    %v1846 = vld [vmem:[#allocation2 + $0x3258] sm:$0xff]
    %v1847 = vld [vmem:[#allocation2 + $0x3260] sm:$0xff]
    %v1848 = vld [vmem:[#allocation2 + $0x3268] sm:$0xff]
    %v1849 = vld [vmem:[#allocation2 + $0x3270] sm:$0xff]
    %v1850 = vld [vmem:[#allocation2 + $0x3278] sm:$0xff]
    %v1851 = vld [vmem:[#allocation2 + $0x3280] sm:$0xff]
    %v1852 = vld [vmem:[#allocation2 + $0x3288] sm:$0xff]
    %v1853 = vld [vmem:[#allocation2 + $0x3290] sm:$0xff]
    %v1854 = vld [vmem:[#allocation2 + $0x3298] sm:$0xff]
    %v1855 = vld [vmem:[#allocation2 + $0x32a0] sm:$0xff]
    %v1856 = vld [vmem:[#allocation2 + $0x32a8] sm:$0xff]
    %v1857 = vld [vmem:[#allocation2 + $0x32b0] sm:$0xff]
    %v1858 = vld [vmem:[#allocation2 + $0x32b8] sm:$0xff]
    %v1859 = vld [vmem:[#allocation2 + $0x32c0] sm:$0xff]
    %v1860 = vld [vmem:[#allocation2 + $0x32c8] sm:$0xff]
    %v1861 = vld [vmem:[#allocation2 + $0x32d0] sm:$0xff]
    %v1862 = vld [vmem:[#allocation2 + $0x32d8] sm:$0xff]
    %v1863 = vld [vmem:[#allocation2 + $0x32e0] sm:$0xff]
    %v1864 = vld [vmem:[#allocation2 + $0x32e8] sm:$0xff]
    %v1865 = vld [vmem:[#allocation2 + $0x32f0] sm:$0xff]
    %v1866 = vld [vmem:[#allocation2 + $0x32f8] sm:$0xff]
    %v1867 = vld [vmem:[#allocation2 + $0x3300] sm:$0xff]
    %v1868 = vld [vmem:[#allocation2 + $0x3308] sm:$0xff]
    %v1869 = vld [vmem:[#allocation2 + $0x3310] sm:$0xff]
    %v1870 = vld [vmem:[#allocation2 + $0x3318] sm:$0xff]
    %v1871 = vld [vmem:[#allocation2 + $0x3320] sm:$0xff]
    %v1872 = vld [vmem:[#allocation2 + $0x3328] sm:$0xff]
    %v1873 = vld [vmem:[#allocation2 + $0x3330] sm:$0xff]
    %v1874 = vld [vmem:[#allocation2 + $0x3338] sm:$0xff]
    %v1875 = vld [vmem:[#allocation2 + $0x3340] sm:$0xff]
    %v1876 = vld [vmem:[#allocation2 + $0x3348] sm:$0xff]
    %v1877 = vld [vmem:[#allocation2 + $0x3350] sm:$0xff]
    %v1878 = vld [vmem:[#allocation2 + $0x3358] sm:$0xff]
    %v1879 = vld [vmem:[#allocation2 + $0x3360] sm:$0xff]
    %v1880 = vld [vmem:[#allocation2 + $0x3368] sm:$0xff]
    %v1881 = vld [vmem:[#allocation2 + $0x3370] sm:$0xff]
    %v1882 = vld [vmem:[#allocation2 + $0x3378] sm:$0xff]
    %v1883 = vld [vmem:[#allocation2 + $0x3380] sm:$0xff]
    %v1884 = vld [vmem:[#allocation2 + $0x3388] sm:$0xff]
    %v1885 = vld [vmem:[#allocation2 + $0x3390] sm:$0xff]
    %v1886 = vld [vmem:[#allocation2 + $0x3398] sm:$0xff]
    %v1887 = vld [vmem:[#allocation2 + $0x33a0] sm:$0xff]
    %v1888 = vld [vmem:[#allocation2 + $0x33a8] sm:$0xff]
    %v1889 = vld [vmem:[#allocation2 + $0x33b0] sm:$0xff]
    %v1890 = vld [vmem:[#allocation2 + $0x33b8] sm:$0xff]
    %v1891 = vld [vmem:[#allocation2 + $0x33c0] sm:$0xff]
    %v1892 = vld [vmem:[#allocation2 + $0x33c8] sm:$0xff]
    %v1893 = vld [vmem:[#allocation2 + $0x33d0] sm:$0xff]
    %v1894 = vld [vmem:[#allocation2 + $0x33d8] sm:$0xff]
    %v1895 = vld [vmem:[#allocation2 + $0x33e0] sm:$0xff]
    %v1896 = vld [vmem:[#allocation2 + $0x33e8] sm:$0xff]
    %v1897 = vld [vmem:[#allocation2 + $0x33f0] sm:$0xff]
    %v1898 = vld [vmem:[#allocation2 + $0x33f8] sm:$0xff]
    %v1899 = vld [vmem:[#allocation2 + $0x3400] sm:$0xff]
    %v1900 = vld [vmem:[#allocation2 + $0x3408] sm:$0xff]
    %v1901 = vld [vmem:[#allocation2 + $0x3410] sm:$0xff]
    %v1902 = vld [vmem:[#allocation2 + $0x3418] sm:$0xff]
    %v1903 = vld [vmem:[#allocation2 + $0x3420] sm:$0xff]
    %v1904 = vld [vmem:[#allocation2 + $0x3428] sm:$0xff]
    %v1905 = vld [vmem:[#allocation2 + $0x3430] sm:$0xff]
    %v1906 = vld [vmem:[#allocation2 + $0x3438] sm:$0xff]
    %v1907 = vld [vmem:[#allocation2 + $0x3440] sm:$0xff]
    %v1908 = vld [vmem:[#allocation2 + $0x3448] sm:$0xff]
    %v1909 = vld [vmem:[#allocation2 + $0x3450] sm:$0xff]
    %v1910 = vld [vmem:[#allocation2 + $0x3458] sm:$0xff]
    %v1911 = vld [vmem:[#allocation2 + $0x3460] sm:$0xff]
    %v1912 = vld [vmem:[#allocation2 + $0x3468] sm:$0xff]
    %v1913 = vld [vmem:[#allocation2 + $0x3470] sm:$0xff]
    %v1914 = vld [vmem:[#allocation2 + $0x3478] sm:$0xff]
    %v1915 = vld [vmem:[#allocation2 + $0x3480] sm:$0xff]
    %v1916 = vld [vmem:[#allocation2 + $0x3488] sm:$0xff]
    %v1917 = vld [vmem:[#allocation2 + $0x3490] sm:$0xff]
    %v1918 = vld [vmem:[#allocation2 + $0x3498] sm:$0xff]
    %v1919 = vld [vmem:[#allocation2 + $0x34a0] sm:$0xff]
    %v1920 = vld [vmem:[#allocation2 + $0x34a8] sm:$0xff]
    %v1921 = vld [vmem:[#allocation2 + $0x34b0] sm:$0xff]
    %v1922 = vld [vmem:[#allocation2 + $0x34b8] sm:$0xff]
    %v1923 = vld [vmem:[#allocation2 + $0x34c0] sm:$0xff]
    %v1924 = vld [vmem:[#allocation2 + $0x34c8] sm:$0xff]
    %v1925 = vld [vmem:[#allocation2 + $0x34d0] sm:$0xff]
    %v1926 = vld [vmem:[#allocation2 + $0x34d8] sm:$0xff]
    %v1927 = vld [vmem:[#allocation2 + $0x34e0] sm:$0xff]
    %v1928 = vld [vmem:[#allocation2 + $0x34e8] sm:$0xff]
    %v1929 = vld [vmem:[#allocation2 + $0x34f0] sm:$0xff]
    %v1930 = vld [vmem:[#allocation2 + $0x34f8] sm:$0xff]
    %v1931 = vld [vmem:[#allocation2 + $0x3500] sm:$0xff]
    %v1932 = vld [vmem:[#allocation2 + $0x3508] sm:$0xff]
    %v1933 = vld [vmem:[#allocation2 + $0x3510] sm:$0xff]
    %v1934 = vld [vmem:[#allocation2 + $0x3518] sm:$0xff]
    %v1935 = vld [vmem:[#allocation2 + $0x3520] sm:$0xff]
    %v1936 = vld [vmem:[#allocation2 + $0x3528] sm:$0xff]
    %v1937 = vld [vmem:[#allocation2 + $0x3530] sm:$0xff]
    %v1938 = vld [vmem:[#allocation2 + $0x3538] sm:$0xff]
    %v1939 = vld [vmem:[#allocation2 + $0x3540] sm:$0xff]
    %v1940 = vld [vmem:[#allocation2 + $0x3548] sm:$0xff]
    %v1941 = vld [vmem:[#allocation2 + $0x3550] sm:$0xff]
    %v1942 = vld [vmem:[#allocation2 + $0x3558] sm:$0xff]
    %v1943 = vld [vmem:[#allocation2 + $0x3560] sm:$0xff]
    %v1944 = vld [vmem:[#allocation2 + $0x3568] sm:$0xff]
    %v1945 = vld [vmem:[#allocation2 + $0x3570] sm:$0xff]
    %v1946 = vld [vmem:[#allocation2 + $0x3578] sm:$0xff]
    %v1947 = vld [vmem:[#allocation2 + $0x3580] sm:$0xff]
    %v1948 = vld [vmem:[#allocation2 + $0x3588] sm:$0xff]
    %v1949 = vld [vmem:[#allocation2 + $0x3590] sm:$0xff]
    %v1950 = vld [vmem:[#allocation2 + $0x3598] sm:$0xff]
    %v1951 = vld [vmem:[#allocation2 + $0x35a0] sm:$0xff]
    %v1952 = vld [vmem:[#allocation2 + $0x35a8] sm:$0xff]
    %v1953 = vld [vmem:[#allocation2 + $0x35b0] sm:$0xff]
    %v1954 = vld [vmem:[#allocation2 + $0x35b8] sm:$0xff]
    %v1955 = vld [vmem:[#allocation2 + $0x35c0] sm:$0xff]
    %v1956 = vld [vmem:[#allocation2 + $0x35c8] sm:$0xff]
    %v1957 = vld [vmem:[#allocation2 + $0x35d0] sm:$0xff]
    %v1958 = vld [vmem:[#allocation2 + $0x35d8] sm:$0xff]
    %v1959 = vld [vmem:[#allocation2 + $0x35e0] sm:$0xff]
    %v1960 = vld [vmem:[#allocation2 + $0x35e8] sm:$0xff]
    %v1961 = vld [vmem:[#allocation2 + $0x35f0] sm:$0xff]
    %v1962 = vld [vmem:[#allocation2 + $0x35f8] sm:$0xff]
    %v1963 = vld [vmem:[#allocation2 + $0x3600] sm:$0xff]
    %v1964 = vld [vmem:[#allocation2 + $0x3608] sm:$0xff]
    %v1965 = vld [vmem:[#allocation2 + $0x3610] sm:$0xff]
    %v1966 = vld [vmem:[#allocation2 + $0x3618] sm:$0xff]
    %v1967 = vld [vmem:[#allocation2 + $0x3620] sm:$0xff]
    %v1968 = vld [vmem:[#allocation2 + $0x3628] sm:$0xff]
    %v1969 = vld [vmem:[#allocation2 + $0x3630] sm:$0xff]
    %v1970 = vld [vmem:[#allocation2 + $0x3638] sm:$0xff]
    %v1971 = vld [vmem:[#allocation2 + $0x3640] sm:$0xff]
    %v1972 = vld [vmem:[#allocation2 + $0x3648] sm:$0xff]
    %v1973 = vld [vmem:[#allocation2 + $0x3650] sm:$0xff]
    %v1974 = vld [vmem:[#allocation2 + $0x3658] sm:$0xff]
    %v1975 = vld [vmem:[#allocation2 + $0x3660] sm:$0xff]
    %v1976 = vld [vmem:[#allocation2 + $0x3668] sm:$0xff]
    %v1977 = vld [vmem:[#allocation2 + $0x3670] sm:$0xff]
    %v1978 = vld [vmem:[#allocation2 + $0x3678] sm:$0xff]
    %v1979 = vld [vmem:[#allocation2 + $0x3680] sm:$0xff]
    %v1980 = vld [vmem:[#allocation2 + $0x3688] sm:$0xff]
    %v1981 = vld [vmem:[#allocation2 + $0x3690] sm:$0xff]
    %v1982 = vld [vmem:[#allocation2 + $0x3698] sm:$0xff]
    %v1983 = vld [vmem:[#allocation2 + $0x36a0] sm:$0xff]
    %v1984 = vld [vmem:[#allocation2 + $0x36a8] sm:$0xff]
    %v1985 = vld [vmem:[#allocation2 + $0x36b0] sm:$0xff]
    %v1986 = vld [vmem:[#allocation2 + $0x36b8] sm:$0xff]
    %v1987 = vld [vmem:[#allocation2 + $0x36c0] sm:$0xff]
    %v1988 = vld [vmem:[#allocation2 + $0x36c8] sm:$0xff]
    %v1989 = vld [vmem:[#allocation2 + $0x36d0] sm:$0xff]
    %v1990 = vld [vmem:[#allocation2 + $0x36d8] sm:$0xff]
    %v1991 = vld [vmem:[#allocation2 + $0x36e0] sm:$0xff]
    %v1992 = vld [vmem:[#allocation2 + $0x36e8] sm:$0xff]
    %v1993 = vld [vmem:[#allocation2 + $0x36f0] sm:$0xff]
    %v1994 = vld [vmem:[#allocation2 + $0x36f8] sm:$0xff]
    %v1995 = vld [vmem:[#allocation2 + $0x3700] sm:$0xff]
    %v1996 = vld [vmem:[#allocation2 + $0x3708] sm:$0xff]
    %v1997 = vld [vmem:[#allocation2 + $0x3710] sm:$0xff]
    %v1998 = vld [vmem:[#allocation2 + $0x3718] sm:$0xff]
    %v1999 = vld [vmem:[#allocation2 + $0x3720] sm:$0xff]
    %v2000 = vld [vmem:[#allocation2 + $0x3728] sm:$0xff]
    %v2001 = vld [vmem:[#allocation2 + $0x3730] sm:$0xff]
    %v2002 = vld [vmem:[#allocation2 + $0x3738] sm:$0xff]
    %v2003 = vld [vmem:[#allocation2 + $0x3740] sm:$0xff]
    %v2004 = vld [vmem:[#allocation2 + $0x3748] sm:$0xff]
    %v2005 = vld [vmem:[#allocation2 + $0x3750] sm:$0xff]
    %v2006 = vld [vmem:[#allocation2 + $0x3758] sm:$0xff]
    %v2007 = vld [vmem:[#allocation2 + $0x3760] sm:$0xff]
    %v2008 = vld [vmem:[#allocation2 + $0x3768] sm:$0xff]
    %v2009 = vld [vmem:[#allocation2 + $0x3770] sm:$0xff]
    %v2010 = vld [vmem:[#allocation2 + $0x3778] sm:$0xff]
    %v2011 = vld [vmem:[#allocation2 + $0x3780] sm:$0xff]
    %v2012 = vld [vmem:[#allocation2 + $0x3788] sm:$0xff]
    %v2013 = vld [vmem:[#allocation2 + $0x3790] sm:$0xff]
    %v2014 = vld [vmem:[#allocation2 + $0x3798] sm:$0xff]
    %v2015 = vld [vmem:[#allocation2 + $0x37a0] sm:$0xff]
    %v2016 = vld [vmem:[#allocation2 + $0x37a8] sm:$0xff]
    %v2017 = vld [vmem:[#allocation2 + $0x37b0] sm:$0xff]
    %v2018 = vld [vmem:[#allocation2 + $0x37b8] sm:$0xff]
    %v2019 = vld [vmem:[#allocation2 + $0x37c0] sm:$0xff]
    %v2020 = vld [vmem:[#allocation2 + $0x37c8] sm:$0xff]
    %v2021 = vld [vmem:[#allocation2 + $0x37d0] sm:$0xff]
    %v2022 = vld [vmem:[#allocation2 + $0x37d8] sm:$0xff]
    %v2023 = vld [vmem:[#allocation2 + $0x37e0] sm:$0xff]
    %v2024 = vld [vmem:[#allocation2 + $0x37e8] sm:$0xff]
    %v2025 = vld [vmem:[#allocation2 + $0x37f0] sm:$0xff]
    %v2026 = vld [vmem:[#allocation2 + $0x37f8] sm:$0xff]
    %v2027 = vld [vmem:[#allocation2 + $0x3800] sm:$0xff]
    %v2028 = vld [vmem:[#allocation2 + $0x3808] sm:$0xff]
    %v2029 = vld [vmem:[#allocation2 + $0x3810] sm:$0xff]
    %v2030 = vld [vmem:[#allocation2 + $0x3818] sm:$0xff]
    %v2031 = vld [vmem:[#allocation2 + $0x3820] sm:$0xff]
    %v2032 = vld [vmem:[#allocation2 + $0x3828] sm:$0xff]
    %v2033 = vld [vmem:[#allocation2 + $0x3830] sm:$0xff]
    %v2034 = vld [vmem:[#allocation2 + $0x3838] sm:$0xff]
    %v2035 = vld [vmem:[#allocation2 + $0x3840] sm:$0xff]
    %v2036 = vld [vmem:[#allocation2 + $0x3848] sm:$0xff]
    %v2037 = vld [vmem:[#allocation2 + $0x3850] sm:$0xff]
    %v2038 = vld [vmem:[#allocation2 + $0x3858] sm:$0xff]
    %v2039 = vld [vmem:[#allocation2 + $0x3860] sm:$0xff]
    %v2040 = vld [vmem:[#allocation2 + $0x3868] sm:$0xff]
    %v2041 = vld [vmem:[#allocation2 + $0x3870] sm:$0xff]
    %v2042 = vld [vmem:[#allocation2 + $0x3878] sm:$0xff]
    %v2043 = vld [vmem:[#allocation2 + $0x3880] sm:$0xff]
    %v2044 = vld [vmem:[#allocation2 + $0x3888] sm:$0xff]
    %v2045 = vld [vmem:[#allocation2 + $0x3890] sm:$0xff]
    %v2046 = vld [vmem:[#allocation2 + $0x3898] sm:$0xff]
    %v2047 = vld [vmem:[#allocation2 + $0x38a0] sm:$0xff]
    %v2048 = vld [vmem:[#allocation2 + $0x38a8] sm:$0xff]
    %v2049 = vld [vmem:[#allocation2 + $0x38b0] sm:$0xff]
    %v2050 = vld [vmem:[#allocation2 + $0x38b8] sm:$0xff]
    %v2051 = vld [vmem:[#allocation2 + $0x38c0] sm:$0xff]
    %v2052 = vld [vmem:[#allocation2 + $0x38c8] sm:$0xff]
    %v2053 = vld [vmem:[#allocation2 + $0x38d0] sm:$0xff]
    %v2054 = vld [vmem:[#allocation2 + $0x38d8] sm:$0xff]
    %v2055 = vld [vmem:[#allocation2 + $0x38e0] sm:$0xff]
    %v2056 = vld [vmem:[#allocation2 + $0x38e8] sm:$0xff]
    %v2057 = vld [vmem:[#allocation2 + $0x38f0] sm:$0xff]
    %v2058 = vld [vmem:[#allocation2 + $0x38f8] sm:$0xff]
    %v2059 = vld [vmem:[#allocation2 + $0x3900] sm:$0xff]
    %v2060 = vld [vmem:[#allocation2 + $0x3908] sm:$0xff]
    %v2061 = vld [vmem:[#allocation2 + $0x3910] sm:$0xff]
    %v2062 = vld [vmem:[#allocation2 + $0x3918] sm:$0xff]
    %v2063 = vld [vmem:[#allocation2 + $0x3920] sm:$0xff]
    %v2064 = vld [vmem:[#allocation2 + $0x3928] sm:$0xff]
    %v2065 = vld [vmem:[#allocation2 + $0x3930] sm:$0xff]
    %v2066 = vld [vmem:[#allocation2 + $0x3938] sm:$0xff]
    %v2067 = vld [vmem:[#allocation2 + $0x3940] sm:$0xff]
    %v2068 = vld [vmem:[#allocation2 + $0x3948] sm:$0xff]
    %v2069 = vld [vmem:[#allocation2 + $0x3950] sm:$0xff]
    %v2070 = vld [vmem:[#allocation2 + $0x3958] sm:$0xff]
    %v2071 = vld [vmem:[#allocation2 + $0x3960] sm:$0xff]
    %v2072 = vld [vmem:[#allocation2 + $0x3968] sm:$0xff]
    %v2073 = vld [vmem:[#allocation2 + $0x3970] sm:$0xff]
    %v2074 = vld [vmem:[#allocation2 + $0x3978] sm:$0xff]
    %v2075 = vld [vmem:[#allocation2 + $0x3980] sm:$0xff]
    %v2076 = vld [vmem:[#allocation2 + $0x3988] sm:$0xff]
    %v2077 = vld [vmem:[#allocation2 + $0x3990] sm:$0xff]
    %v2078 = vld [vmem:[#allocation2 + $0x3998] sm:$0xff]
    %v2079 = vld [vmem:[#allocation2 + $0x39a0] sm:$0xff]
    %v2080 = vld [vmem:[#allocation2 + $0x39a8] sm:$0xff]
    %v2081 = vld [vmem:[#allocation2 + $0x39b0] sm:$0xff]
    %v2082 = vld [vmem:[#allocation2 + $0x39b8] sm:$0xff]
    %v2083 = vld [vmem:[#allocation2 + $0x39c0] sm:$0xff]
    %v2084 = vld [vmem:[#allocation2 + $0x39c8] sm:$0xff]
    %v2085 = vld [vmem:[#allocation2 + $0x39d0] sm:$0xff]
    %v2086 = vld [vmem:[#allocation2 + $0x39d8] sm:$0xff]
    %v2087 = vld [vmem:[#allocation2 + $0x39e0] sm:$0xff]
    %v2088 = vld [vmem:[#allocation2 + $0x39e8] sm:$0xff]
    %v2089 = vld [vmem:[#allocation2 + $0x39f0] sm:$0xff]
    %v2090 = vld [vmem:[#allocation2 + $0x39f8] sm:$0xff]
    %v2091 = vld [vmem:[#allocation2 + $0x3a00] sm:$0xff]
    %v2092 = vld [vmem:[#allocation2 + $0x3a08] sm:$0xff]
    %v2093 = vld [vmem:[#allocation2 + $0x3a10] sm:$0xff]
    %v2094 = vld [vmem:[#allocation2 + $0x3a18] sm:$0xff]
    %v2095 = vld [vmem:[#allocation2 + $0x3a20] sm:$0xff]
    %v2096 = vld [vmem:[#allocation2 + $0x3a28] sm:$0xff]
    %v2097 = vld [vmem:[#allocation2 + $0x3a30] sm:$0xff]
    %v2098 = vld [vmem:[#allocation2 + $0x3a38] sm:$0xff]
    %v2099 = vld [vmem:[#allocation2 + $0x3a40] sm:$0xff]
    %v2100 = vld [vmem:[#allocation2 + $0x3a48] sm:$0xff]
    %v2101 = vld [vmem:[#allocation2 + $0x3a50] sm:$0xff]
    %v2102 = vld [vmem:[#allocation2 + $0x3a58] sm:$0xff]
    %v2103 = vld [vmem:[#allocation2 + $0x3a60] sm:$0xff]
    %v2104 = vld [vmem:[#allocation2 + $0x3a68] sm:$0xff]
    %v2105 = vld [vmem:[#allocation2 + $0x3a70] sm:$0xff]
    %v2106 = vld [vmem:[#allocation2 + $0x3a78] sm:$0xff]
    %v2107 = vld [vmem:[#allocation2 + $0x3a80] sm:$0xff]
    %v2108 = vld [vmem:[#allocation2 + $0x3a88] sm:$0xff]
    %v2109 = vld [vmem:[#allocation2 + $0x3a90] sm:$0xff]
    %v2110 = vld [vmem:[#allocation2 + $0x3a98] sm:$0xff]
    %v2111 = vld [vmem:[#allocation2 + $0x3aa0] sm:$0xff]
    %v2112 = vld [vmem:[#allocation2 + $0x3aa8] sm:$0xff]
    %v2113 = vld [vmem:[#allocation2 + $0x3ab0] sm:$0xff]
    %v2114 = vld [vmem:[#allocation2 + $0x3ab8] sm:$0xff]
    %v2115 = vld [vmem:[#allocation2 + $0x3ac0] sm:$0xff]
    %v2116 = vld [vmem:[#allocation2 + $0x3ac8] sm:$0xff]
    %v2117 = vld [vmem:[#allocation2 + $0x3ad0] sm:$0xff]
    %v2118 = vld [vmem:[#allocation2 + $0x3ad8] sm:$0xff]
    %v2119 = vld [vmem:[#allocation2 + $0x3ae0] sm:$0xff]
    %v2120 = vld [vmem:[#allocation2 + $0x3ae8] sm:$0xff]
    %v2121 = vld [vmem:[#allocation2 + $0x3af0] sm:$0xff]
    %v2122 = vld [vmem:[#allocation2 + $0x3af8] sm:$0xff]
    %v2123 = vld [vmem:[#allocation2 + $0x3b00] sm:$0xff]
    %v2124 = vld [vmem:[#allocation2 + $0x3b08] sm:$0xff]
    %v2125 = vld [vmem:[#allocation2 + $0x3b10] sm:$0xff]
    %v2126 = vld [vmem:[#allocation2 + $0x3b18] sm:$0xff]
    %v2127 = vld [vmem:[#allocation2 + $0x3b20] sm:$0xff]
    %v2128 = vld [vmem:[#allocation2 + $0x3b28] sm:$0xff]
    %v2129 = vld [vmem:[#allocation2 + $0x3b30] sm:$0xff]
    %v2130 = vld [vmem:[#allocation2 + $0x3b38] sm:$0xff]
    %v2131 = vld [vmem:[#allocation2 + $0x3b40] sm:$0xff]
    %v2132 = vld [vmem:[#allocation2 + $0x3b48] sm:$0xff]
    %v2133 = vld [vmem:[#allocation2 + $0x3b50] sm:$0xff]
    %v2134 = vld [vmem:[#allocation2 + $0x3b58] sm:$0xff]
    %v2135 = vld [vmem:[#allocation2 + $0x3b60] sm:$0xff]
    %v2136 = vld [vmem:[#allocation2 + $0x3b68] sm:$0xff]
    %v2137 = vld [vmem:[#allocation2 + $0x3b70] sm:$0xff]
    %v2138 = vld [vmem:[#allocation2 + $0x3b78] sm:$0xff]
    %v2139 = vld [vmem:[#allocation2 + $0x3b80] sm:$0xff]
    %v2140 = vld [vmem:[#allocation2 + $0x3b88] sm:$0xff]
    %v2141 = vld [vmem:[#allocation2 + $0x3b90] sm:$0xff]
    %v2142 = vld [vmem:[#allocation2 + $0x3b98] sm:$0xff]
    %v2143 = vld [vmem:[#allocation2 + $0x3ba0] sm:$0xff]
    %v2144 = vld [vmem:[#allocation2 + $0x3ba8] sm:$0xff]
    %v2145 = vld [vmem:[#allocation2 + $0x3bb0] sm:$0xff]
    %v2146 = vld [vmem:[#allocation2 + $0x3bb8] sm:$0xff]
    %v2147 = vld [vmem:[#allocation2 + $0x3bc0] sm:$0xff]
    %v2148 = vld [vmem:[#allocation2 + $0x3bc8] sm:$0xff]
    %v2149 = vld [vmem:[#allocation2 + $0x3bd0] sm:$0xff]
    %v2150 = vld [vmem:[#allocation2 + $0x3bd8] sm:$0xff]
    %v2151 = vld [vmem:[#allocation2 + $0x3be0] sm:$0xff]
    %v2152 = vld [vmem:[#allocation2 + $0x3be8] sm:$0xff]
    %v2153 = vld [vmem:[#allocation2 + $0x3bf0] sm:$0xff]
    %v2154 = vld [vmem:[#allocation2 + $0x3bf8] sm:$0xff]
    %v2155 = vld [vmem:[#allocation2 + $0x3c00] sm:$0xff]
    %v2156 = vld [vmem:[#allocation2 + $0x3c08] sm:$0xff]
    %v2157 = vld [vmem:[#allocation2 + $0x3c10] sm:$0xff]
    %v2158 = vld [vmem:[#allocation2 + $0x3c18] sm:$0xff]
    %v2159 = vld [vmem:[#allocation2 + $0x3c20] sm:$0xff]
    %v2160 = vld [vmem:[#allocation2 + $0x3c28] sm:$0xff]
    %v2161 = vld [vmem:[#allocation2 + $0x3c30] sm:$0xff]
    %v2162 = vld [vmem:[#allocation2 + $0x3c38] sm:$0xff]
    %v2163 = vld [vmem:[#allocation2 + $0x3c40] sm:$0xff]
    %v2164 = vld [vmem:[#allocation2 + $0x3c48] sm:$0xff]
    %v2165 = vld [vmem:[#allocation2 + $0x3c50] sm:$0xff]
    %v2166 = vld [vmem:[#allocation2 + $0x3c58] sm:$0xff]
    %v2167 = vld [vmem:[#allocation2 + $0x3c60] sm:$0xff]
    %v2168 = vld [vmem:[#allocation2 + $0x3c68] sm:$0xff]
    %v2169 = vld [vmem:[#allocation2 + $0x3c70] sm:$0xff]
    %v2170 = vld [vmem:[#allocation2 + $0x3c78] sm:$0xff]
    %v2171 = vld [vmem:[#allocation2 + $0x3c80] sm:$0xff]
    %v2172 = vld [vmem:[#allocation2 + $0x3c88] sm:$0xff]
    %v2173 = vld [vmem:[#allocation2 + $0x3c90] sm:$0xff]
    %v2174 = vld [vmem:[#allocation2 + $0x3c98] sm:$0xff]
    %v2175 = vld [vmem:[#allocation2 + $0x3ca0] sm:$0xff]
    %v2176 = vld [vmem:[#allocation2 + $0x3ca8] sm:$0xff]
    %v2177 = vld [vmem:[#allocation2 + $0x3cb0] sm:$0xff]
    %v2178 = vld [vmem:[#allocation2 + $0x3cb8] sm:$0xff]
    %v2179 = vld [vmem:[#allocation2 + $0x3cc0] sm:$0xff]
    %v2180 = vld [vmem:[#allocation2 + $0x3cc8] sm:$0xff]
    %v2181 = vld [vmem:[#allocation2 + $0x3cd0] sm:$0xff]
    %v2182 = vld [vmem:[#allocation2 + $0x3cd8] sm:$0xff]
    %v2183 = vld [vmem:[#allocation2 + $0x3ce0] sm:$0xff]
    %v2184 = vld [vmem:[#allocation2 + $0x3ce8] sm:$0xff]
    %v2185 = vld [vmem:[#allocation2 + $0x3cf0] sm:$0xff]
    %v2186 = vld [vmem:[#allocation2 + $0x3cf8] sm:$0xff]
    %v2187 = vld [vmem:[#allocation2 + $0x3d00] sm:$0xff]
    %v2188 = vld [vmem:[#allocation2 + $0x3d08] sm:$0xff]
    %v2189 = vld [vmem:[#allocation2 + $0x3d10] sm:$0xff]
    %v2190 = vld [vmem:[#allocation2 + $0x3d18] sm:$0xff]
    %v2191 = vld [vmem:[#allocation2 + $0x3d20] sm:$0xff]
    %v2192 = vld [vmem:[#allocation2 + $0x3d28] sm:$0xff]
    %v2193 = vld [vmem:[#allocation2 + $0x3d30] sm:$0xff]
    %v2194 = vld [vmem:[#allocation2 + $0x3d38] sm:$0xff]
    %v2195 = vld [vmem:[#allocation2 + $0x3d40] sm:$0xff]
    %v2196 = vld [vmem:[#allocation2 + $0x3d48] sm:$0xff]
    %v2197 = vld [vmem:[#allocation2 + $0x3d50] sm:$0xff]
    %v2198 = vld [vmem:[#allocation2 + $0x3d58] sm:$0xff]
    %v2199 = vld [vmem:[#allocation2 + $0x3d60] sm:$0xff]
    %v2200 = vld [vmem:[#allocation2 + $0x3d68] sm:$0xff]
    %v2201 = vld [vmem:[#allocation2 + $0x3d70] sm:$0xff]
    %v2202 = vld [vmem:[#allocation2 + $0x3d78] sm:$0xff]
    %v2203 = vld [vmem:[#allocation2 + $0x3d80] sm:$0xff]
    %v2204 = vld [vmem:[#allocation2 + $0x3d88] sm:$0xff]
    %v2205 = vld [vmem:[#allocation2 + $0x3d90] sm:$0xff]
    %v2206 = vld [vmem:[#allocation2 + $0x3d98] sm:$0xff]
    %v2207 = vld [vmem:[#allocation2 + $0x3da0] sm:$0xff]
    %v2208 = vld [vmem:[#allocation2 + $0x3da8] sm:$0xff]
    %v2209 = vld [vmem:[#allocation2 + $0x3db0] sm:$0xff]
    %v2210 = vld [vmem:[#allocation2 + $0x3db8] sm:$0xff]
    %v2211 = vld [vmem:[#allocation2 + $0x3dc0] sm:$0xff]
    %v2212 = vld [vmem:[#allocation2 + $0x3dc8] sm:$0xff]
    %v2213 = vld [vmem:[#allocation2 + $0x3dd0] sm:$0xff]
    %v2214 = vld [vmem:[#allocation2 + $0x3dd8] sm:$0xff]
    %v2215 = vld [vmem:[#allocation2 + $0x3de0] sm:$0xff]
    %v2216 = vld [vmem:[#allocation2 + $0x3de8] sm:$0xff]
    %v2217 = vld [vmem:[#allocation2 + $0x3df0] sm:$0xff]
    %v2218 = vld [vmem:[#allocation2 + $0x3df8] sm:$0xff]
    %v2219 = vld [vmem:[#allocation2 + $0x3e00] sm:$0xff]
    %v2220 = vld [vmem:[#allocation2 + $0x3e08] sm:$0xff]
    %v2221 = vld [vmem:[#allocation2 + $0x3e10] sm:$0xff]
    %v2222 = vld [vmem:[#allocation2 + $0x3e18] sm:$0xff]
    %v2223 = vld [vmem:[#allocation2 + $0x3e20] sm:$0xff]
    %v2224 = vld [vmem:[#allocation2 + $0x3e28] sm:$0xff]
    %v2225 = vld [vmem:[#allocation2 + $0x3e30] sm:$0xff]
    %v2226 = vld [vmem:[#allocation2 + $0x3e38] sm:$0xff]
    %v2227 = vld [vmem:[#allocation2 + $0x3e40] sm:$0xff]
    %v2228 = vld [vmem:[#allocation2 + $0x3e48] sm:$0xff]
    %v2229 = vld [vmem:[#allocation2 + $0x3e50] sm:$0xff]
    %v2230 = vld [vmem:[#allocation2 + $0x3e58] sm:$0xff]
    %v2231 = vld [vmem:[#allocation2 + $0x3e60] sm:$0xff]
    %v2232 = vld [vmem:[#allocation2 + $0x3e68] sm:$0xff]
    %v2233 = vld [vmem:[#allocation2 + $0x3e70] sm:$0xff]
    %v2234 = vld [vmem:[#allocation2 + $0x3e78] sm:$0xff]
    %v2235 = vld [vmem:[#allocation2 + $0x3e80] sm:$0xff]
    %v2236 = vld [vmem:[#allocation2 + $0x3e88] sm:$0xff]
    %v2237 = vld [vmem:[#allocation2 + $0x3e90] sm:$0xff]
    %v2238 = vld [vmem:[#allocation2 + $0x3e98] sm:$0xff]
    %v2239 = vld [vmem:[#allocation2 + $0x3ea0] sm:$0xff]
    %v2240 = vld [vmem:[#allocation2 + $0x3ea8] sm:$0xff]
    %v2241 = vld [vmem:[#allocation2 + $0x3eb0] sm:$0xff]
    %v2242 = vld [vmem:[#allocation2 + $0x3eb8] sm:$0xff]
    %v2243 = vld [vmem:[#allocation2 + $0x3ec0] sm:$0xff]
    %v2244 = vld [vmem:[#allocation2 + $0x3ec8] sm:$0xff]
    %v2245 = vld [vmem:[#allocation2 + $0x3ed0] sm:$0xff]
    %v2246 = vld [vmem:[#allocation2 + $0x3ed8] sm:$0xff]
    %v2247 = vld [vmem:[#allocation2 + $0x3ee0] sm:$0xff]
    %v2248 = vld [vmem:[#allocation2 + $0x3ee8] sm:$0xff]
    %v2249 = vld [vmem:[#allocation2 + $0x3ef0] sm:$0xff]
    %v2250 = vld [vmem:[#allocation2 + $0x3ef8] sm:$0xff]
    %v2251 = vld [vmem:[#allocation2 + $0x3f00] sm:$0xff]
    %v2252 = vld [vmem:[#allocation2 + $0x3f08] sm:$0xff]
    %v2253 = vld [vmem:[#allocation2 + $0x3f10] sm:$0xff]
    %v2254 = vld [vmem:[#allocation2 + $0x3f18] sm:$0xff]
    %v2255 = vld [vmem:[#allocation2 + $0x3f20] sm:$0xff]
    %v2256 = vld [vmem:[#allocation2 + $0x3f28] sm:$0xff]
    %v2257 = vld [vmem:[#allocation2 + $0x3f30] sm:$0xff]
    %v2258 = vld [vmem:[#allocation2 + $0x3f38] sm:$0xff]
    %v2259 = vld [vmem:[#allocation2 + $0x3f40] sm:$0xff]
    %v2260 = vld [vmem:[#allocation2 + $0x3f48] sm:$0xff]
    %v2261 = vld [vmem:[#allocation2 + $0x3f50] sm:$0xff]
    %v2262 = vld [vmem:[#allocation2 + $0x3f58] sm:$0xff]
    %v2263 = vld [vmem:[#allocation2 + $0x3f60] sm:$0xff]
    %v2264 = vld [vmem:[#allocation2 + $0x3f68] sm:$0xff]
    %v2265 = vld [vmem:[#allocation2 + $0x3f70] sm:$0xff]
    %v2266 = vld [vmem:[#allocation2 + $0x3f78] sm:$0xff]
    %v2267 = vld [vmem:[#allocation2 + $0x3f80] sm:$0xff]
    %v2268 = vld [vmem:[#allocation2 + $0x3f88] sm:$0xff]
    %v2269 = vld [vmem:[#allocation2 + $0x3f90] sm:$0xff]
    %v2270 = vld [vmem:[#allocation2 + $0x3f98] sm:$0xff]
    %v2271 = vld [vmem:[#allocation2 + $0x3fa0] sm:$0xff]
    %v2272 = vld [vmem:[#allocation2 + $0x3fa8] sm:$0xff]
    %v2273 = vld [vmem:[#allocation2 + $0x3fb0] sm:$0xff]
    %v2274 = vld [vmem:[#allocation2 + $0x3fb8] sm:$0xff]
    %v2275 = vld [vmem:[#allocation2 + $0x3fc0] sm:$0xff]
    %v2276 = vld [vmem:[#allocation2 + $0x3fc8] sm:$0xff]
    %v2277 = vld [vmem:[#allocation2 + $0x3fd0] sm:$0xff]
    %v2278 = vld [vmem:[#allocation2 + $0x3fd8] sm:$0xff]
    %v2279 = vld [vmem:[#allocation2 + $0x3fe0] sm:$0xff]
    %v2280 = vld [vmem:[#allocation2 + $0x3fe8] sm:$0xff]
    %v2281 = vld [vmem:[#allocation2 + $0x3ff0] sm:$0xff]
    %v2282 = vld [vmem:[#allocation2 + $0x3ff8] sm:$0xff]
    %v2283 = vld [vmem:[#allocation4] sm:$0xff]
    %v2284 = vld [vmem:[#allocation4 + $0x8] sm:$0xff]
    %v2287 = vlaneseq
    %v2288 = vshrl.u32 %v2287, 7
    %v2289 = vsub.s32 0, %v2288
    %v2290 = vrot.slane %v2283, %v2289
    %v2291 = vlaneseq
    %v2292 = vshrl.u32 %v2291, 7
    %v2293 = vsub.s32 1, %v2292
    %v2294 = vrot.slane %v2283, %v2293
    %v2295 = vlaneseq
    %v2296 = vshrl.u32 %v2295, 7
    %v2297 = vsub.s32 2, %v2296
    %v2298 = vrot.slane %v2283, %v2297
    %v2299 = vlaneseq
    %v2300 = vshrl.u32 %v2299, 7
    %v2301 = vsub.s32 3, %v2300
    %v2302 = vrot.slane %v2283, %v2301
    %v2303 = vlaneseq
    %v2304 = vshrl.u32 %v2303, 7
    %v2305 = vsub.s32 4, %v2304
    %v2306 = vrot.slane %v2283, %v2305
    %v2307 = vlaneseq
    %v2308 = vshrl.u32 %v2307, 7
    %v2309 = vsub.s32 5, %v2308
    %v2310 = vrot.slane %v2283, %v2309
    %v2311 = vlaneseq
    %v2312 = vshrl.u32 %v2311, 7
    %v2313 = vsub.s32 6, %v2312
    %v2314 = vrot.slane %v2283, %v2313
    %v2315 = vlaneseq
    %v2316 = vshrl.u32 %v2315, 7
    %v2317 = vsub.s32 7, %v2316
    %v2318 = vrot.slane %v2283, %v2317
    %v2319 = vlaneseq
    %v2320 = vshrl.u32 %v2319, 7
    %v2321 = vsub.s32 0, %v2320
    %v2322 = vrot.slane %v2284, %v2321
    %v2323 = vlaneseq
    %v2324 = vshrl.u32 %v2323, 7
    %v2325 = vsub.s32 1, %v2324
    %v2326 = vrot.slane %v2284, %v2325
    %v2327 = vlaneseq
    %v2328 = vshrl.u32 %v2327, 7
    %v2329 = vsub.s32 2, %v2328
    %v2330 = vrot.slane %v2284, %v2329
    %v2331 = vlaneseq
    %v2332 = vshrl.u32 %v2331, 7
    %v2333 = vsub.s32 3, %v2332
    %v2334 = vrot.slane %v2284, %v2333
    %v2335 = vlaneseq
    %v2336 = vshrl.u32 %v2335, 7
    %v2337 = vsub.s32 4, %v2336
    %v2338 = vrot.slane %v2284, %v2337
    %v2339 = vlaneseq
    %v2340 = vshrl.u32 %v2339, 7
    %v2341 = vsub.s32 5, %v2340
    %v2342 = vrot.slane %v2284, %v2341
    %v2343 = vlaneseq
    %v2344 = vshrl.u32 %v2343, 7
    %v2345 = vsub.s32 6, %v2344
    %v2346 = vrot.slane %v2284, %v2345
    %v2347 = vlaneseq
    %v2348 = vshrl.u32 %v2347, 7
    %v2349 = vsub.s32 7, %v2348
    %v2350 = vrot.slane %v2284, %v2349
    %v2369 = vcombine.high %v233, %v233
    %v2371 = vunpack.c.l.s4 1983009808
    %v2372 = vunpack.c.0.s8 %v2371
    %v2373 = vlaneseq
    %v2374 = vshrl.u32 %v2373, 7
    %v2375 = vsub.s32 %v2372, %v2374
    %v2376 = vrot.slane %v233, %v2375
    %v2378 = vunpack.c.l.s4 1983009808
    %v2379 = vunpack.c.0.s8 %v2378
    %v2380 = vlaneseq
    %v2381 = vshrl.u32 %v2380, 7
    %v2382 = vsub.s32 %v2379, %v2381
    %v2383 = vrot.slane %v2369, %v2382
    %v2384 = vcombine.high %v2376, %v2376
    %v2385 = vcombine.high %v2383, %v2383
    %v2386 = vcombine.high %v234, %v234
    %v2388 = vunpack.c.l.s4 1983009808
    %v2389 = vunpack.c.0.s8 %v2388
    %v2390 = vlaneseq
    %v2391 = vshrl.u32 %v2390, 7
    %v2392 = vsub.s32 %v2389, %v2391
    %v2393 = vrot.slane %v234, %v2392
    %v2395 = vunpack.c.l.s4 1983009808
    %v2396 = vunpack.c.0.s8 %v2395
    %v2397 = vlaneseq
    %v2398 = vshrl.u32 %v2397, 7
    %v2399 = vsub.s32 %v2396, %v2398
    %v2400 = vrot.slane %v2386, %v2399
    %v2401 = vcombine.high %v2393, %v2393
    %v2402 = vcombine.high %v2400, %v2400
    %2411 = vmatprep.subr.mxu0 %v236
    %2412 = vmatpush1.msra.mxu0 %v235
    %2413 = vmatprep.subr.mxu0 %v252
    %2414 = vmatpush1.msra.mxu0 %v251
    %2415 = vmatprep.subr.mxu0 %v268
    %2416 = vmatpush1.msra.mxu0 %v267
    %2417 = vmatprep.subr.mxu0 %v284
    %2418 = vmatpush1.msra.mxu0 %v283
    %2419 = vmatprep.subr.mxu0 %v300
    %2420 = vmatpush1.msra.mxu0 %v299
    %2421 = vmatprep.subr.mxu0 %v316
    %2422 = vmatpush1.msra.mxu0 %v315
    %2423 = vmatprep.subr.mxu0 %v332
    %2424 = vmatpush1.msra.mxu0 %v331
    %2425 = vmatprep.subr.mxu0 %v348
    %2426 = vmatpush1.msra.mxu0 %v347
    %2427 = vmatprep.subr.mxu0 %v364
    %2428 = vmatpush1.msra.mxu0 %v363
    %2429 = vmatprep.subr.mxu0 %v380
    %2430 = vmatpush1.msra.mxu0 %v379
    %2431 = vmatprep.subr.mxu0 %v396
    %2432 = vmatpush1.msra.mxu0 %v395
    %2433 = vmatprep.subr.mxu0 %v412
    %2434 = vmatpush1.msra.mxu0 %v411
    %2435 = vmatprep.subr.mxu0 %v428
    %2436 = vmatpush1.msra.mxu0 %v427
    %2437 = vmatprep.subr.mxu0 %v444
    %2438 = vmatpush1.msra.mxu0 %v443
    %2439 = vmatprep.subr.mxu0 %v460
    %2440 = vmatpush1.msra.mxu0 %v459
    %2441 = vmatprep.subr.mxu0 %v476
    %2442 = vmatpush1.msra.mxu0 %v475
    %2443 = vmatprep.subr.mxu0 %v492
    %2444 = vmatpush1.msra.mxu0 %v491
    %2445 = vmatprep.subr.mxu0 %v508
    %2446 = vmatpush1.msra.mxu0 %v507
    %2447 = vmatprep.subr.mxu0 %v524
    %2448 = vmatpush1.msra.mxu0 %v523
    %2449 = vmatprep.subr.mxu0 %v540
    %2450 = vmatpush1.msra.mxu0 %v539
    %2451 = vmatprep.subr.mxu0 %v556
    %2452 = vmatpush1.msra.mxu0 %v555
    %2453 = vmatprep.subr.mxu0 %v572
    %2454 = vmatpush1.msra.mxu0 %v571
    %2455 = vmatprep.subr.mxu0 %v588
    %2456 = vmatpush1.msra.mxu0 %v587
    %2457 = vmatprep.subr.mxu0 %v604
    %2458 = vmatpush1.msra.mxu0 %v603
    %2459 = vmatprep.subr.mxu0 %v620
    %2460 = vmatpush1.msra.mxu0 %v619
    %2461 = vmatprep.subr.mxu0 %v636
    %2462 = vmatpush1.msra.mxu0 %v635
    %2463 = vmatprep.subr.mxu0 %v652
    %2464 = vmatpush1.msra.mxu0 %v651
    %2465 = vmatprep.subr.mxu0 %v668
    %2466 = vmatpush1.msra.mxu0 %v667
    %2467 = vmatprep.subr.mxu0 %v684
    %2468 = vmatpush1.msra.mxu0 %v683
    %2469 = vmatprep.subr.mxu0 %v700
    %2470 = vmatpush1.msra.mxu0 %v699
    %2471 = vmatprep.subr.mxu0 %v716
    %2472 = vmatpush1.msra.mxu0 %v715
    %2473 = vmatprep.subr.mxu0 %v732
    %2474 = vmatpush1.msra.mxu0 %v731
    %2475 = vmatprep.mubr.f32.mxu0 %v2384
    %2476 = vmatmul.mubr.f32.gmra.mrb[0].mxu0 %v2376
    %v2477 = vpop.f32.mrb[0].mxu0
    %v2478 = vadd.f32 %v2290, %v2477
    %v2479 = vpop.f32.mrb[0].mxu0
    %v2480 = vadd.f32 %v2294, %v2479
    %2481 = vdwg.mxu0
    %2482 = vmatprep.subr.mxu0 %v748
    %2483 = vmatpush1.msra.mxu0 %v747
    %2484 = vmatprep.subr.mxu0 %v764
    %2485 = vmatpush1.msra.mxu0 %v763
    %2486 = vmatprep.subr.mxu0 %v780
    %2487 = vmatpush1.msra.mxu0 %v779
    %2488 = vmatprep.subr.mxu0 %v796
    %2489 = vmatpush1.msra.mxu0 %v795
    %2490 = vmatprep.subr.mxu0 %v812
    %2491 = vmatpush1.msra.mxu0 %v811
    %2492 = vmatprep.subr.mxu0 %v828
    %2493 = vmatpush1.msra.mxu0 %v827
    %2494 = vmatprep.subr.mxu0 %v844
    %2495 = vmatpush1.msra.mxu0 %v843
    %2496 = vmatprep.subr.mxu0 %v860
    %2497 = vmatpush1.msra.mxu0 %v859
    %2498 = vmatprep.subr.mxu0 %v876
    %2499 = vmatpush1.msra.mxu0 %v875
    %2500 = vmatprep.subr.mxu0 %v892
    %2501 = vmatpush1.msra.mxu0 %v891
    %2502 = vmatprep.subr.mxu0 %v908
    %2503 = vmatpush1.msra.mxu0 %v907
    %2504 = vmatprep.subr.mxu0 %v924
    %2505 = vmatpush1.msra.mxu0 %v923
    %2506 = vmatprep.subr.mxu0 %v940
    %2507 = vmatpush1.msra.mxu0 %v939
    %2508 = vmatprep.subr.mxu0 %v956
    %2509 = vmatpush1.msra.mxu0 %v955
    %2510 = vmatprep.subr.mxu0 %v972
    %2511 = vmatpush1.msra.mxu0 %v971
    %2512 = vmatprep.subr.mxu0 %v988
    %2513 = vmatpush1.msra.mxu0 %v987
    %2514 = vmatprep.subr.mxu0 %v1004
    %2515 = vmatpush1.msra.mxu0 %v1003
    %2516 = vmatprep.subr.mxu0 %v1020
    %2517 = vmatpush1.msra.mxu0 %v1019
    %2518 = vmatprep.subr.mxu0 %v1036
    %2519 = vmatpush1.msra.mxu0 %v1035
    %2520 = vmatprep.subr.mxu0 %v1052
    %2521 = vmatpush1.msra.mxu0 %v1051
    %2522 = vmatprep.subr.mxu0 %v1068
    %2523 = vmatpush1.msra.mxu0 %v1067
    %2524 = vmatprep.subr.mxu0 %v1084
    %2525 = vmatpush1.msra.mxu0 %v1083
    %2526 = vmatprep.subr.mxu0 %v1100
    %2527 = vmatpush1.msra.mxu0 %v1099
    %2528 = vmatprep.subr.mxu0 %v1116
    %2529 = vmatpush1.msra.mxu0 %v1115
    %2530 = vmatprep.subr.mxu0 %v1132
    %2531 = vmatpush1.msra.mxu0 %v1131
    %2532 = vmatprep.subr.mxu0 %v1148
    %2533 = vmatpush1.msra.mxu0 %v1147
    %2534 = vmatprep.subr.mxu0 %v1164
    %2535 = vmatpush1.msra.mxu0 %v1163
    %2536 = vmatprep.subr.mxu0 %v1180
    %2537 = vmatpush1.msra.mxu0 %v1179
    %2538 = vmatprep.subr.mxu0 %v1196
    %2539 = vmatpush1.msra.mxu0 %v1195
    %2540 = vmatprep.subr.mxu0 %v1212
    %2541 = vmatpush1.msra.mxu0 %v1211
    %2542 = vmatprep.subr.mxu0 %v1228
    %2543 = vmatpush1.msra.mxu0 %v1227
    %2544 = vmatprep.subr.mxu0 %v1244
    %2545 = vmatpush1.msra.mxu0 %v1243
    %2546 = vmatprep.mubr.f32.mxu0 %v2385
    %2547 = vmatmul.mubr.f32.gmra.mrb[0].mxu0 %v2383
    %v2548 = vpop.f32.mrb[0].mxu0
    %v2549 = vadd.f32 %v2478, %v2548
    %v2550 = vpop.f32.mrb[0].mxu0
    %v2551 = vadd.f32 %v2480, %v2550
    %2552 = vdwg.mxu0
    %2553 = vmatprep.subr.mxu0 %v1260
    %2554 = vmatpush1.msra.mxu0 %v1259
    %2555 = vmatprep.subr.mxu0 %v1276
    %2556 = vmatpush1.msra.mxu0 %v1275
    %2557 = vmatprep.subr.mxu0 %v1292
    %2558 = vmatpush1.msra.mxu0 %v1291
    %2559 = vmatprep.subr.mxu0 %v1308
    %2560 = vmatpush1.msra.mxu0 %v1307
    %2561 = vmatprep.subr.mxu0 %v1324
    %2562 = vmatpush1.msra.mxu0 %v1323
    %2563 = vmatprep.subr.mxu0 %v1340
    %2564 = vmatpush1.msra.mxu0 %v1339
    %2565 = vmatprep.subr.mxu0 %v1356
    %2566 = vmatpush1.msra.mxu0 %v1355
    %2567 = vmatprep.subr.mxu0 %v1372
    %2568 = vmatpush1.msra.mxu0 %v1371
    %2569 = vmatprep.subr.mxu0 %v1388
    %2570 = vmatpush1.msra.mxu0 %v1387
    %2571 = vmatprep.subr.mxu0 %v1404
    %2572 = vmatpush1.msra.mxu0 %v1403
    %2573 = vmatprep.subr.mxu0 %v1420
    %2574 = vmatpush1.msra.mxu0 %v1419
    %2575 = vmatprep.subr.mxu0 %v1436
    %2576 = vmatpush1.msra.mxu0 %v1435
    %2577 = vmatprep.subr.mxu0 %v1452
    %2578 = vmatpush1.msra.mxu0 %v1451
    %2579 = vmatprep.subr.mxu0 %v1468
    %2580 = vmatpush1.msra.mxu0 %v1467
    %2581 = vmatprep.subr.mxu0 %v1484
    %2582 = vmatpush1.msra.mxu0 %v1483
    %2583 = vmatprep.subr.mxu0 %v1500
    %2584 = vmatpush1.msra.mxu0 %v1499
    %2585 = vmatprep.subr.mxu0 %v1516
    %2586 = vmatpush1.msra.mxu0 %v1515
    %2587 = vmatprep.subr.mxu0 %v1532
    %2588 = vmatpush1.msra.mxu0 %v1531
    %2589 = vmatprep.subr.mxu0 %v1548
    %2590 = vmatpush1.msra.mxu0 %v1547
    %2591 = vmatprep.subr.mxu0 %v1564
    %2592 = vmatpush1.msra.mxu0 %v1563
    %2593 = vmatprep.subr.mxu0 %v1580
    %2594 = vmatpush1.msra.mxu0 %v1579
    %2595 = vmatprep.subr.mxu0 %v1596
    %2596 = vmatpush1.msra.mxu0 %v1595
    %2597 = vmatprep.subr.mxu0 %v1612
    %2598 = vmatpush1.msra.mxu0 %v1611
    %2599 = vmatprep.subr.mxu0 %v1628
    %2600 = vmatpush1.msra.mxu0 %v1627
    %2601 = vmatprep.subr.mxu0 %v1644
    %2602 = vmatpush1.msra.mxu0 %v1643
    %2603 = vmatprep.subr.mxu0 %v1660
    %2604 = vmatpush1.msra.mxu0 %v1659
    %2605 = vmatprep.subr.mxu0 %v1676
    %2606 = vmatpush1.msra.mxu0 %v1675
    %2607 = vmatprep.subr.mxu0 %v1692
    %2608 = vmatpush1.msra.mxu0 %v1691
    %2609 = vmatprep.subr.mxu0 %v1708
    %2610 = vmatpush1.msra.mxu0 %v1707
    %2611 = vmatprep.subr.mxu0 %v1724
    %2612 = vmatpush1.msra.mxu0 %v1723
    %2613 = vmatprep.subr.mxu0 %v1740
    %2614 = vmatpush1.msra.mxu0 %v1739
    %2615 = vmatprep.subr.mxu0 %v1756
    %2616 = vmatpush1.msra.mxu0 %v1755
    %2617 = vmatprep.mubr.f32.mxu0 %v2401
    %2618 = vmatmul.mubr.f32.gmra.mrb[0].mxu0 %v2393
    %v2619 = vpop.f32.mrb[0].mxu0
    %v2620 = vadd.f32 %v2549, %v2619
    %v2621 = vpop.f32.mrb[0].mxu0
    %v2622 = vadd.f32 %v2551, %v2621
    %2623 = vdwg.mxu0
    %2624 = vmatprep.subr.mxu0 %v1772
    %2625 = vmatpush1.msra.mxu0 %v1771
    %2626 = vmatprep.subr.mxu0 %v1788
    %2627 = vmatpush1.msra.mxu0 %v1787
    %2628 = vmatprep.subr.mxu0 %v1804
    %2629 = vmatpush1.msra.mxu0 %v1803
    %2630 = vmatprep.subr.mxu0 %v1820
    %2631 = vmatpush1.msra.mxu0 %v1819
    %2632 = vmatprep.subr.mxu0 %v1836
    %2633 = vmatpush1.msra.mxu0 %v1835
    %2634 = vmatprep.subr.mxu0 %v1852
    %2635 = vmatpush1.msra.mxu0 %v1851
    %2636 = vmatprep.subr.mxu0 %v1868
    %2637 = vmatpush1.msra.mxu0 %v1867
    %2638 = vmatprep.subr.mxu0 %v1884
    %2639 = vmatpush1.msra.mxu0 %v1883
    %2640 = vmatprep.subr.mxu0 %v1900
    %2641 = vmatpush1.msra.mxu0 %v1899
    %2642 = vmatprep.subr.mxu0 %v1916
    %2643 = vmatpush1.msra.mxu0 %v1915
    %2644 = vmatprep.subr.mxu0 %v1932
    %2645 = vmatpush1.msra.mxu0 %v1931
    %2646 = vmatprep.subr.mxu0 %v1948
    %2647 = vmatpush1.msra.mxu0 %v1947
    %2648 = vmatprep.subr.mxu0 %v1964
    %2649 = vmatpush1.msra.mxu0 %v1963
    %2650 = vmatprep.subr.mxu0 %v1980
    %2651 = vmatpush1.msra.mxu0 %v1979
    %2652 = vmatprep.subr.mxu0 %v1996
    %2653 = vmatpush1.msra.mxu0 %v1995
    %2654 = vmatprep.subr.mxu0 %v2012
    %2655 = vmatpush1.msra.mxu0 %v2011
    %2656 = vmatprep.subr.mxu0 %v2028
    %2657 = vmatpush1.msra.mxu0 %v2027
    %2658 = vmatprep.subr.mxu0 %v2044
    %2659 = vmatpush1.msra.mxu0 %v2043
    %2660 = vmatprep.subr.mxu0 %v2060
    %2661 = vmatpush1.msra.mxu0 %v2059
    %2662 = vmatprep.subr.mxu0 %v2076
    %2663 = vmatpush1.msra.mxu0 %v2075
    %2664 = vmatprep.subr.mxu0 %v2092
    %2665 = vmatpush1.msra.mxu0 %v2091
    %2666 = vmatprep.subr.mxu0 %v2108
    %2667 = vmatpush1.msra.mxu0 %v2107
    %2668 = vmatprep.subr.mxu0 %v2124
    %2669 = vmatpush1.msra.mxu0 %v2123
    %2670 = vmatprep.subr.mxu0 %v2140
    %2671 = vmatpush1.msra.mxu0 %v2139
    %2672 = vmatprep.subr.mxu0 %v2156
    %2673 = vmatpush1.msra.mxu0 %v2155
    %2674 = vmatprep.subr.mxu0 %v2172
    %2675 = vmatpush1.msra.mxu0 %v2171
    %2676 = vmatprep.subr.mxu0 %v2188
    %2677 = vmatpush1.msra.mxu0 %v2187
    %2678 = vmatprep.subr.mxu0 %v2204
    %2679 = vmatpush1.msra.mxu0 %v2203
    %2680 = vmatprep.subr.mxu0 %v2220
    %2681 = vmatpush1.msra.mxu0 %v2219
    %2682 = vmatprep.subr.mxu0 %v2236
    %2683 = vmatpush1.msra.mxu0 %v2235
    %2684 = vmatprep.subr.mxu0 %v2252
    %2685 = vmatpush1.msra.mxu0 %v2251
    %2686 = vmatprep.subr.mxu0 %v2268
    %2687 = vmatpush1.msra.mxu0 %v2267
    %2688 = vmatprep.mubr.f32.mxu0 %v2402
    %2689 = vmatmul.mubr.f32.gmra.mrb[0].mxu0 %v2400
    %v2690 = vpop.f32.mrb[0].mxu0
    %v2691 = vadd.f32 %v2620, %v2690
    %v2692 = vpop.f32.mrb[0].mxu0
    %v2693 = vadd.f32 %v2622, %v2692
    %2694 = vdwg.mxu0
    %2695 = vmatprep.subr.mxu0 %v238
    %2696 = vmatpush1.msra.mxu0 %v237
    %2697 = vmatprep.subr.mxu0 %v254
    %2698 = vmatpush1.msra.mxu0 %v253
    %2699 = vmatprep.subr.mxu0 %v270
    %2700 = vmatpush1.msra.mxu0 %v269
    %2701 = vmatprep.subr.mxu0 %v286
    %2702 = vmatpush1.msra.mxu0 %v285
    %2703 = vmatprep.subr.mxu0 %v302
    %2704 = vmatpush1.msra.mxu0 %v301
    %2705 = vmatprep.subr.mxu0 %v318
    %2706 = vmatpush1.msra.mxu0 %v317
    %2707 = vmatprep.subr.mxu0 %v334
    %2708 = vmatpush1.msra.mxu0 %v333
    %2709 = vmatprep.subr.mxu0 %v350
    %2710 = vmatpush1.msra.mxu0 %v349
    %2711 = vmatprep.subr.mxu0 %v366
    %2712 = vmatpush1.msra.mxu0 %v365
    %2713 = vmatprep.subr.mxu0 %v382
    %2714 = vmatpush1.msra.mxu0 %v381
    %2715 = vmatprep.subr.mxu0 %v398
    %2716 = vmatpush1.msra.mxu0 %v397
    %2717 = vmatprep.subr.mxu0 %v414
    %2718 = vmatpush1.msra.mxu0 %v413
    %2719 = vmatprep.subr.mxu0 %v430
    %2720 = vmatpush1.msra.mxu0 %v429
    %2721 = vmatprep.subr.mxu0 %v446
    %2722 = vmatpush1.msra.mxu0 %v445
    %2723 = vmatprep.subr.mxu0 %v462
    %2724 = vmatpush1.msra.mxu0 %v461
    %2725 = vmatprep.subr.mxu0 %v478
    %2726 = vmatpush1.msra.mxu0 %v477
    %2727 = vmatprep.subr.mxu0 %v494
    %2728 = vmatpush1.msra.mxu0 %v493
    %2729 = vmatprep.subr.mxu0 %v510
    %2730 = vmatpush1.msra.mxu0 %v509
    %2731 = vmatprep.subr.mxu0 %v526
    %2732 = vmatpush1.msra.mxu0 %v525
    %2733 = vmatprep.subr.mxu0 %v542
    %2734 = vmatpush1.msra.mxu0 %v541
    %2735 = vmatprep.subr.mxu0 %v558
    %2736 = vmatpush1.msra.mxu0 %v557
    %2737 = vmatprep.subr.mxu0 %v574
    %2738 = vmatpush1.msra.mxu0 %v573
    %2739 = vmatprep.subr.mxu0 %v590
    %2740 = vmatpush1.msra.mxu0 %v589
    %2741 = vmatprep.subr.mxu0 %v606
    %2742 = vmatpush1.msra.mxu0 %v605
    %2743 = vmatprep.subr.mxu0 %v622
    %2744 = vmatpush1.msra.mxu0 %v621
    %2745 = vmatprep.subr.mxu0 %v638
    %2746 = vmatpush1.msra.mxu0 %v637
    %2747 = vmatprep.subr.mxu0 %v654
    %2748 = vmatpush1.msra.mxu0 %v653
    %2749 = vmatprep.subr.mxu0 %v670
    %2750 = vmatpush1.msra.mxu0 %v669
    %2751 = vmatprep.subr.mxu0 %v686
    %2752 = vmatpush1.msra.mxu0 %v685
    %2753 = vmatprep.subr.mxu0 %v702
    %2754 = vmatpush1.msra.mxu0 %v701
    %2755 = vmatprep.subr.mxu0 %v718
    %2756 = vmatpush1.msra.mxu0 %v717
    %2757 = vmatprep.subr.mxu0 %v734
    %2758 = vmatpush1.msra.mxu0 %v733
    %2759 = vmatprep.mubr.f32.mxu0 %v2384
    %2760 = vmatmul.mubr.f32.gmra.mrb[0].mxu0 %v2376
    %v2761 = vpop.f32.mrb[0].mxu0
    %v2762 = vadd.f32 %v2298, %v2761
    %v2763 = vpop.f32.mrb[0].mxu0
    %v2764 = vadd.f32 %v2302, %v2763
    %2765 = vdwg.mxu0
    %2766 = vmatprep.subr.mxu0 %v750
    %2767 = vmatpush1.msra.mxu0 %v749
    %2768 = vmatprep.subr.mxu0 %v766
    %2769 = vmatpush1.msra.mxu0 %v765
    %2770 = vmatprep.subr.mxu0 %v782
    %2771 = vmatpush1.msra.mxu0 %v781
    %2772 = vmatprep.subr.mxu0 %v798
    %2773 = vmatpush1.msra.mxu0 %v797
    %2774 = vmatprep.subr.mxu0 %v814
    %2775 = vmatpush1.msra.mxu0 %v813
    %2776 = vmatprep.subr.mxu0 %v830
    %2777 = vmatpush1.msra.mxu0 %v829
    %2778 = vmatprep.subr.mxu0 %v846
    %2779 = vmatpush1.msra.mxu0 %v845
    %2780 = vmatprep.subr.mxu0 %v862
    %2781 = vmatpush1.msra.mxu0 %v861
    %2782 = vmatprep.subr.mxu0 %v878
    %2783 = vmatpush1.msra.mxu0 %v877
    %2784 = vmatprep.subr.mxu0 %v894
    %2785 = vmatpush1.msra.mxu0 %v893
    %2786 = vmatprep.subr.mxu0 %v910
    %2787 = vmatpush1.msra.mxu0 %v909
    %2788 = vmatprep.subr.mxu0 %v926
    %2789 = vmatpush1.msra.mxu0 %v925
    %2790 = vmatprep.subr.mxu0 %v942
    %2791 = vmatpush1.msra.mxu0 %v941
    %2792 = vmatprep.subr.mxu0 %v958
    %2793 = vmatpush1.msra.mxu0 %v957
    %2794 = vmatprep.subr.mxu0 %v974
    %2795 = vmatpush1.msra.mxu0 %v973
    %2796 = vmatprep.subr.mxu0 %v990
    %2797 = vmatpush1.msra.mxu0 %v989
    %2798 = vmatprep.subr.mxu0 %v1006
    %2799 = vmatpush1.msra.mxu0 %v1005
    %2800 = vmatprep.subr.mxu0 %v1022
    %2801 = vmatpush1.msra.mxu0 %v1021
    %2802 = vmatprep.subr.mxu0 %v1038
    %2803 = vmatpush1.msra.mxu0 %v1037
    %2804 = vmatprep.subr.mxu0 %v1054
    %2805 = vmatpush1.msra.mxu0 %v1053
    %2806 = vmatprep.subr.mxu0 %v1070
    %2807 = vmatpush1.msra.mxu0 %v1069
    %2808 = vmatprep.subr.mxu0 %v1086
    %2809 = vmatpush1.msra.mxu0 %v1085
    %2810 = vmatprep.subr.mxu0 %v1102
    %2811 = vmatpush1.msra.mxu0 %v1101
    %2812 = vmatprep.subr.mxu0 %v1118
    %2813 = vmatpush1.msra.mxu0 %v1117
    %2814 = vmatprep.subr.mxu0 %v1134
    %2815 = vmatpush1.msra.mxu0 %v1133
    %2816 = vmatprep.subr.mxu0 %v1150
    %2817 = vmatpush1.msra.mxu0 %v1149
    %2818 = vmatprep.subr.mxu0 %v1166
    %2819 = vmatpush1.msra.mxu0 %v1165
    %2820 = vmatprep.subr.mxu0 %v1182
    %2821 = vmatpush1.msra.mxu0 %v1181
    %2822 = vmatprep.subr.mxu0 %v1198
    %2823 = vmatpush1.msra.mxu0 %v1197
    %2824 = vmatprep.subr.mxu0 %v1214
    %2825 = vmatpush1.msra.mxu0 %v1213
    %2826 = vmatprep.subr.mxu0 %v1230
    %2827 = vmatpush1.msra.mxu0 %v1229
    %2828 = vmatprep.subr.mxu0 %v1246
    %2829 = vmatpush1.msra.mxu0 %v1245
    %2830 = vmatprep.mubr.f32.mxu0 %v2385
    %2831 = vmatmul.mubr.f32.gmra.mrb[0].mxu0 %v2383
    %v2832 = vpop.f32.mrb[0].mxu0
    %v2833 = vadd.f32 %v2762, %v2832
    %v2834 = vpop.f32.mrb[0].mxu0
    %v2835 = vadd.f32 %v2764, %v2834
    %2836 = vdwg.mxu0
    %2837 = vmatprep.subr.mxu0 %v1262
    %2838 = vmatpush1.msra.mxu0 %v1261
    %2839 = vmatprep.subr.mxu0 %v1278
    %2840 = vmatpush1.msra.mxu0 %v1277
    %2841 = vmatprep.subr.mxu0 %v1294
    %2842 = vmatpush1.msra.mxu0 %v1293
    %2843 = vmatprep.subr.mxu0 %v1310
    %2844 = vmatpush1.msra.mxu0 %v1309
    %2845 = vmatprep.subr.mxu0 %v1326
    %2846 = vmatpush1.msra.mxu0 %v1325
    %2847 = vmatprep.subr.mxu0 %v1342
    %2848 = vmatpush1.msra.mxu0 %v1341
    %2849 = vmatprep.subr.mxu0 %v1358
    %2850 = vmatpush1.msra.mxu0 %v1357
    %2851 = vmatprep.subr.mxu0 %v1374
    %2852 = vmatpush1.msra.mxu0 %v1373
    %2853 = vmatprep.subr.mxu0 %v1390
    %2854 = vmatpush1.msra.mxu0 %v1389
    %2855 = vmatprep.subr.mxu0 %v1406
    %2856 = vmatpush1.msra.mxu0 %v1405
    %2857 = vmatprep.subr.mxu0 %v1422
    %2858 = vmatpush1.msra.mxu0 %v1421
    %2859 = vmatprep.subr.mxu0 %v1438
    %2860 = vmatpush1.msra.mxu0 %v1437
    %2861 = vmatprep.subr.mxu0 %v1454
    %2862 = vmatpush1.msra.mxu0 %v1453
    %2863 = vmatprep.subr.mxu0 %v1470
    %2864 = vmatpush1.msra.mxu0 %v1469
    %2865 = vmatprep.subr.mxu0 %v1486
    %2866 = vmatpush1.msra.mxu0 %v1485
    %2867 = vmatprep.subr.mxu0 %v1502
    %2868 = vmatpush1.msra.mxu0 %v1501
    %2869 = vmatprep.subr.mxu0 %v1518
    %2870 = vmatpush1.msra.mxu0 %v1517
    %2871 = vmatprep.subr.mxu0 %v1534
    %2872 = vmatpush1.msra.mxu0 %v1533
    %2873 = vmatprep.subr.mxu0 %v1550
    %2874 = vmatpush1.msra.mxu0 %v1549
    %2875 = vmatprep.subr.mxu0 %v1566
    %2876 = vmatpush1.msra.mxu0 %v1565
    %2877 = vmatprep.subr.mxu0 %v1582
    %2878 = vmatpush1.msra.mxu0 %v1581
    %2879 = vmatprep.subr.mxu0 %v1598
    %2880 = vmatpush1.msra.mxu0 %v1597
    %2881 = vmatprep.subr.mxu0 %v1614
    %2882 = vmatpush1.msra.mxu0 %v1613
    %2883 = vmatprep.subr.mxu0 %v1630
    %2884 = vmatpush1.msra.mxu0 %v1629
    %2885 = vmatprep.subr.mxu0 %v1646
    %2886 = vmatpush1.msra.mxu0 %v1645
    %2887 = vmatprep.subr.mxu0 %v1662
    %2888 = vmatpush1.msra.mxu0 %v1661
    %2889 = vmatprep.subr.mxu0 %v1678
    %2890 = vmatpush1.msra.mxu0 %v1677
    %2891 = vmatprep.subr.mxu0 %v1694
    %2892 = vmatpush1.msra.mxu0 %v1693
    %2893 = vmatprep.subr.mxu0 %v1710
    %2894 = vmatpush1.msra.mxu0 %v1709
    %2895 = vmatprep.subr.mxu0 %v1726
    %2896 = vmatpush1.msra.mxu0 %v1725
    %2897 = vmatprep.subr.mxu0 %v1742
    %2898 = vmatpush1.msra.mxu0 %v1741
    %2899 = vmatprep.subr.mxu0 %v1758
    %2900 = vmatpush1.msra.mxu0 %v1757
    %2901 = vmatprep.mubr.f32.mxu0 %v2401
    %2902 = vmatmul.mubr.f32.gmra.mrb[0].mxu0 %v2393
    %v2903 = vpop.f32.mrb[0].mxu0
    %v2904 = vadd.f32 %v2833, %v2903
    %v2905 = vpop.f32.mrb[0].mxu0
    %v2906 = vadd.f32 %v2835, %v2905
    %2907 = vdwg.mxu0
    %2908 = vmatprep.subr.mxu0 %v1774
    %2909 = vmatpush1.msra.mxu0 %v1773
    %2910 = vmatprep.subr.mxu0 %v1790
    %2911 = vmatpush1.msra.mxu0 %v1789
    %2912 = vmatprep.subr.mxu0 %v1806
    %2913 = vmatpush1.msra.mxu0 %v1805
    %2914 = vmatprep.subr.mxu0 %v1822
    %2915 = vmatpush1.msra.mxu0 %v1821
    %2916 = vmatprep.subr.mxu0 %v1838
    %2917 = vmatpush1.msra.mxu0 %v1837
    %2918 = vmatprep.subr.mxu0 %v1854
    %2919 = vmatpush1.msra.mxu0 %v1853
    %2920 = vmatprep.subr.mxu0 %v1870
    %2921 = vmatpush1.msra.mxu0 %v1869
    %2922 = vmatprep.subr.mxu0 %v1886
    %2923 = vmatpush1.msra.mxu0 %v1885
    %2924 = vmatprep.subr.mxu0 %v1902
    %2925 = vmatpush1.msra.mxu0 %v1901
    %2926 = vmatprep.subr.mxu0 %v1918
    %2927 = vmatpush1.msra.mxu0 %v1917
    %2928 = vmatprep.subr.mxu0 %v1934
    %2929 = vmatpush1.msra.mxu0 %v1933
    %2930 = vmatprep.subr.mxu0 %v1950
    %2931 = vmatpush1.msra.mxu0 %v1949
    %2932 = vmatprep.subr.mxu0 %v1966
    %2933 = vmatpush1.msra.mxu0 %v1965
    %2934 = vmatprep.subr.mxu0 %v1982
    %2935 = vmatpush1.msra.mxu0 %v1981
    %2936 = vmatprep.subr.mxu0 %v1998
    %2937 = vmatpush1.msra.mxu0 %v1997
    %2938 = vmatprep.subr.mxu0 %v2014
    %2939 = vmatpush1.msra.mxu0 %v2013
    %2940 = vmatprep.subr.mxu0 %v2030
    %2941 = vmatpush1.msra.mxu0 %v2029
    %2942 = vmatprep.subr.mxu0 %v2046
    %2943 = vmatpush1.msra.mxu0 %v2045
    %2944 = vmatprep.subr.mxu0 %v2062
    %2945 = vmatpush1.msra.mxu0 %v2061
    %2946 = vmatprep.subr.mxu0 %v2078
    %2947 = vmatpush1.msra.mxu0 %v2077
    %2948 = vmatprep.subr.mxu0 %v2094
    %2949 = vmatpush1.msra.mxu0 %v2093
    %2950 = vmatprep.subr.mxu0 %v2110
    %2951 = vmatpush1.msra.mxu0 %v2109
    %2952 = vmatprep.subr.mxu0 %v2126
    %2953 = vmatpush1.msra.mxu0 %v2125
    %2954 = vmatprep.subr.mxu0 %v2142
    %2955 = vmatpush1.msra.mxu0 %v2141
    %2956 = vmatprep.subr.mxu0 %v2158
    %2957 = vmatpush1.msra.mxu0 %v2157
    %2958 = vmatprep.subr.mxu0 %v2174
    %2959 = vmatpush1.msra.mxu0 %v2173
    %2960 = vmatprep.subr.mxu0 %v2190
    %2961 = vmatpush1.msra.mxu0 %v2189
    %2962 = vmatprep.subr.mxu0 %v2206
    %2963 = vmatpush1.msra.mxu0 %v2205
    %2964 = vmatprep.subr.mxu0 %v2222
    %2965 = vmatpush1.msra.mxu0 %v2221
    %2966 = vmatprep.subr.mxu0 %v2238
    %2967 = vmatpush1.msra.mxu0 %v2237
    %2968 = vmatprep.subr.mxu0 %v2254
    %2969 = vmatpush1.msra.mxu0 %v2253
    %2970 = vmatprep.subr.mxu0 %v2270
    %2971 = vmatpush1.msra.mxu0 %v2269
    %2972 = vmatprep.mubr.f32.mxu0 %v2402
    %2973 = vmatmul.mubr.f32.gmra.mrb[0].mxu0 %v2400
    %v2974 = vpop.f32.mrb[0].mxu0
    %v2975 = vadd.f32 %v2904, %v2974
    %v2976 = vpop.f32.mrb[0].mxu0
    %v2977 = vadd.f32 %v2906, %v2976
    %2978 = vdwg.mxu0
    %2979 = vmatprep.subr.mxu0 %v240
    %2980 = vmatpush1.msra.mxu0 %v239
    %2981 = vmatprep.subr.mxu0 %v256
    %2982 = vmatpush1.msra.mxu0 %v255
    %2983 = vmatprep.subr.mxu0 %v272
    %2984 = vmatpush1.msra.mxu0 %v271
    %2985 = vmatprep.subr.mxu0 %v288
    %2986 = vmatpush1.msra.mxu0 %v287
    %2987 = vmatprep.subr.mxu0 %v304
    %2988 = vmatpush1.msra.mxu0 %v303
    %2989 = vmatprep.subr.mxu0 %v320
    %2990 = vmatpush1.msra.mxu0 %v319
    %2991 = vmatprep.subr.mxu0 %v336
    %2992 = vmatpush1.msra.mxu0 %v335
    %2993 = vmatprep.subr.mxu0 %v352
    %2994 = vmatpush1.msra.mxu0 %v351
    %2995 = vmatprep.subr.mxu0 %v368
    %2996 = vmatpush1.msra.mxu0 %v367
    %2997 = vmatprep.subr.mxu0 %v384
    %2998 = vmatpush1.msra.mxu0 %v383
    %2999 = vmatprep.subr.mxu0 %v400
    %3000 = vmatpush1.msra.mxu0 %v399
    %3001 = vmatprep.subr.mxu0 %v416
    %3002 = vmatpush1.msra.mxu0 %v415
    %3003 = vmatprep.subr.mxu0 %v432
    %3004 = vmatpush1.msra.mxu0 %v431
    %3005 = vmatprep.subr.mxu0 %v448
    %3006 = vmatpush1.msra.mxu0 %v447
    %3007 = vmatprep.subr.mxu0 %v464
    %3008 = vmatpush1.msra.mxu0 %v463
    %3009 = vmatprep.subr.mxu0 %v480
    %3010 = vmatpush1.msra.mxu0 %v479
    %3011 = vmatprep.subr.mxu0 %v496
    %3012 = vmatpush1.msra.mxu0 %v495
    %3013 = vmatprep.subr.mxu0 %v512
    %3014 = vmatpush1.msra.mxu0 %v511
    %3015 = vmatprep.subr.mxu0 %v528
    %3016 = vmatpush1.msra.mxu0 %v527
    %3017 = vmatprep.subr.mxu0 %v544
    %3018 = vmatpush1.msra.mxu0 %v543
    %3019 = vmatprep.subr.mxu0 %v560
    %3020 = vmatpush1.msra.mxu0 %v559
    %3021 = vmatprep.subr.mxu0 %v576
    %3022 = vmatpush1.msra.mxu0 %v575
    %3023 = vmatprep.subr.mxu0 %v592
    %3024 = vmatpush1.msra.mxu0 %v591
    %3025 = vmatprep.subr.mxu0 %v608
    %3026 = vmatpush1.msra.mxu0 %v607
    %3027 = vmatprep.subr.mxu0 %v624
    %3028 = vmatpush1.msra.mxu0 %v623
    %3029 = vmatprep.subr.mxu0 %v640
    %3030 = vmatpush1.msra.mxu0 %v639
    %3031 = vmatprep.subr.mxu0 %v656
    %3032 = vmatpush1.msra.mxu0 %v655
    %3033 = vmatprep.subr.mxu0 %v672
    %3034 = vmatpush1.msra.mxu0 %v671
    %3035 = vmatprep.subr.mxu0 %v688
    %3036 = vmatpush1.msra.mxu0 %v687
    %3037 = vmatprep.subr.mxu0 %v704
    %3038 = vmatpush1.msra.mxu0 %v703
    %3039 = vmatprep.subr.mxu0 %v720
    %3040 = vmatpush1.msra.mxu0 %v719
    %3041 = vmatprep.subr.mxu0 %v736
    %3042 = vmatpush1.msra.mxu0 %v735
    %3043 = vmatprep.mubr.f32.mxu0 %v2384
    %3044 = vmatmul.mubr.f32.gmra.mrb[0].mxu0 %v2376
    %v3045 = vpop.f32.mrb[0].mxu0
    %v3046 = vadd.f32 %v2306, %v3045
    %v3047 = vpop.f32.mrb[0].mxu0
    %v3048 = vadd.f32 %v2310, %v3047
    %3049 = vdwg.mxu0
    %3050 = vmatprep.subr.mxu0 %v752
    %3051 = vmatpush1.msra.mxu0 %v751
    %3052 = vmatprep.subr.mxu0 %v768
    %3053 = vmatpush1.msra.mxu0 %v767
    %3054 = vmatprep.subr.mxu0 %v784
    %3055 = vmatpush1.msra.mxu0 %v783
    %3056 = vmatprep.subr.mxu0 %v800
    %3057 = vmatpush1.msra.mxu0 %v799
    %3058 = vmatprep.subr.mxu0 %v816
    %3059 = vmatpush1.msra.mxu0 %v815
    %3060 = vmatprep.subr.mxu0 %v832
    %3061 = vmatpush1.msra.mxu0 %v831
    %3062 = vmatprep.subr.mxu0 %v848
    %3063 = vmatpush1.msra.mxu0 %v847
    %3064 = vmatprep.subr.mxu0 %v864
    %3065 = vmatpush1.msra.mxu0 %v863
    %3066 = vmatprep.subr.mxu0 %v880
    %3067 = vmatpush1.msra.mxu0 %v879
    %3068 = vmatprep.subr.mxu0 %v896
    %3069 = vmatpush1.msra.mxu0 %v895
    %3070 = vmatprep.subr.mxu0 %v912
    %3071 = vmatpush1.msra.mxu0 %v911
    %3072 = vmatprep.subr.mxu0 %v928
    %3073 = vmatpush1.msra.mxu0 %v927
    %3074 = vmatprep.subr.mxu0 %v944
    %3075 = vmatpush1.msra.mxu0 %v943
    %3076 = vmatprep.subr.mxu0 %v960
    %3077 = vmatpush1.msra.mxu0 %v959
    %3078 = vmatprep.subr.mxu0 %v976
    %3079 = vmatpush1.msra.mxu0 %v975
    %3080 = vmatprep.subr.mxu0 %v992
    %3081 = vmatpush1.msra.mxu0 %v991
    %3082 = vmatprep.subr.mxu0 %v1008
    %3083 = vmatpush1.msra.mxu0 %v1007
    %3084 = vmatprep.subr.mxu0 %v1024
    %3085 = vmatpush1.msra.mxu0 %v1023
    %3086 = vmatprep.subr.mxu0 %v1040
    %3087 = vmatpush1.msra.mxu0 %v1039
    %3088 = vmatprep.subr.mxu0 %v1056
    %3089 = vmatpush1.msra.mxu0 %v1055
    %3090 = vmatprep.subr.mxu0 %v1072
    %3091 = vmatpush1.msra.mxu0 %v1071
    %3092 = vmatprep.subr.mxu0 %v1088
    %3093 = vmatpush1.msra.mxu0 %v1087
    %3094 = vmatprep.subr.mxu0 %v1104
    %3095 = vmatpush1.msra.mxu0 %v1103
    %3096 = vmatprep.subr.mxu0 %v1120
    %3097 = vmatpush1.msra.mxu0 %v1119
    %3098 = vmatprep.subr.mxu0 %v1136
    %3099 = vmatpush1.msra.mxu0 %v1135
    %3100 = vmatprep.subr.mxu0 %v1152
    %3101 = vmatpush1.msra.mxu0 %v1151
    %3102 = vmatprep.subr.mxu0 %v1168
    %3103 = vmatpush1.msra.mxu0 %v1167
    %3104 = vmatprep.subr.mxu0 %v1184
    %3105 = vmatpush1.msra.mxu0 %v1183
    %3106 = vmatprep.subr.mxu0 %v1200
    %3107 = vmatpush1.msra.mxu0 %v1199
    %3108 = vmatprep.subr.mxu0 %v1216
    %3109 = vmatpush1.msra.mxu0 %v1215
    %3110 = vmatprep.subr.mxu0 %v1232
    %3111 = vmatpush1.msra.mxu0 %v1231
    %3112 = vmatprep.subr.mxu0 %v1248
    %3113 = vmatpush1.msra.mxu0 %v1247
    %3114 = vmatprep.mubr.f32.mxu0 %v2385
    %3115 = vmatmul.mubr.f32.gmra.mrb[0].mxu0 %v2383
    %v3116 = vpop.f32.mrb[0].mxu0
    %v3117 = vadd.f32 %v3046, %v3116
    %v3118 = vpop.f32.mrb[0].mxu0
    %v3119 = vadd.f32 %v3048, %v3118
    %3120 = vdwg.mxu0
    %3121 = vmatprep.subr.mxu0 %v1264
    %3122 = vmatpush1.msra.mxu0 %v1263
    %3123 = vmatprep.subr.mxu0 %v1280
    %3124 = vmatpush1.msra.mxu0 %v1279
    %3125 = vmatprep.subr.mxu0 %v1296
    %3126 = vmatpush1.msra.mxu0 %v1295
    %3127 = vmatprep.subr.mxu0 %v1312
    %3128 = vmatpush1.msra.mxu0 %v1311
    %3129 = vmatprep.subr.mxu0 %v1328
    %3130 = vmatpush1.msra.mxu0 %v1327
    %3131 = vmatprep.subr.mxu0 %v1344
    %3132 = vmatpush1.msra.mxu0 %v1343
    %3133 = vmatprep.subr.mxu0 %v1360
    %3134 = vmatpush1.msra.mxu0 %v1359
    %3135 = vmatprep.subr.mxu0 %v1376
    %3136 = vmatpush1.msra.mxu0 %v1375
    %3137 = vmatprep.subr.mxu0 %v1392
    %3138 = vmatpush1.msra.mxu0 %v1391
    %3139 = vmatprep.subr.mxu0 %v1408
    %3140 = vmatpush1.msra.mxu0 %v1407
    %3141 = vmatprep.subr.mxu0 %v1424
    %3142 = vmatpush1.msra.mxu0 %v1423
    %3143 = vmatprep.subr.mxu0 %v1440
    %3144 = vmatpush1.msra.mxu0 %v1439
    %3145 = vmatprep.subr.mxu0 %v1456
    %3146 = vmatpush1.msra.mxu0 %v1455
    %3147 = vmatprep.subr.mxu0 %v1472
    %3148 = vmatpush1.msra.mxu0 %v1471
    %3149 = vmatprep.subr.mxu0 %v1488
    %3150 = vmatpush1.msra.mxu0 %v1487
    %3151 = vmatprep.subr.mxu0 %v1504
    %3152 = vmatpush1.msra.mxu0 %v1503
    %3153 = vmatprep.subr.mxu0 %v1520
    %3154 = vmatpush1.msra.mxu0 %v1519
    %3155 = vmatprep.subr.mxu0 %v1536
    %3156 = vmatpush1.msra.mxu0 %v1535
    %3157 = vmatprep.subr.mxu0 %v1552
    %3158 = vmatpush1.msra.mxu0 %v1551
    %3159 = vmatprep.subr.mxu0 %v1568
    %3160 = vmatpush1.msra.mxu0 %v1567
    %3161 = vmatprep.subr.mxu0 %v1584
    %3162 = vmatpush1.msra.mxu0 %v1583
    %3163 = vmatprep.subr.mxu0 %v1600
    %3164 = vmatpush1.msra.mxu0 %v1599
    %3165 = vmatprep.subr.mxu0 %v1616
    %3166 = vmatpush1.msra.mxu0 %v1615
    %3167 = vmatprep.subr.mxu0 %v1632
    %3168 = vmatpush1.msra.mxu0 %v1631
    %3169 = vmatprep.subr.mxu0 %v1648
    %3170 = vmatpush1.msra.mxu0 %v1647
    %3171 = vmatprep.subr.mxu0 %v1664
    %3172 = vmatpush1.msra.mxu0 %v1663
    %3173 = vmatprep.subr.mxu0 %v1680
    %3174 = vmatpush1.msra.mxu0 %v1679
    %3175 = vmatprep.subr.mxu0 %v1696
    %3176 = vmatpush1.msra.mxu0 %v1695
    %3177 = vmatprep.subr.mxu0 %v1712
    %3178 = vmatpush1.msra.mxu0 %v1711
    %3179 = vmatprep.subr.mxu0 %v1728
    %3180 = vmatpush1.msra.mxu0 %v1727
    %3181 = vmatprep.subr.mxu0 %v1744
    %3182 = vmatpush1.msra.mxu0 %v1743
    %3183 = vmatprep.subr.mxu0 %v1760
    %3184 = vmatpush1.msra.mxu0 %v1759
    %3185 = vmatprep.mubr.f32.mxu0 %v2401
    %3186 = vmatmul.mubr.f32.gmra.mrb[0].mxu0 %v2393
    %v3187 = vpop.f32.mrb[0].mxu0
    %v3188 = vadd.f32 %v3117, %v3187
    %v3189 = vpop.f32.mrb[0].mxu0
    %v3190 = vadd.f32 %v3119, %v3189
    %3191 = vdwg.mxu0
    %3192 = vmatprep.subr.mxu0 %v1776
    %3193 = vmatpush1.msra.mxu0 %v1775
    %3194 = vmatprep.subr.mxu0 %v1792
    %3195 = vmatpush1.msra.mxu0 %v1791
    %3196 = vmatprep.subr.mxu0 %v1808
    %3197 = vmatpush1.msra.mxu0 %v1807
    %3198 = vmatprep.subr.mxu0 %v1824
    %3199 = vmatpush1.msra.mxu0 %v1823
    %3200 = vmatprep.subr.mxu0 %v1840
    %3201 = vmatpush1.msra.mxu0 %v1839
    %3202 = vmatprep.subr.mxu0 %v1856
    %3203 = vmatpush1.msra.mxu0 %v1855
    %3204 = vmatprep.subr.mxu0 %v1872
    %3205 = vmatpush1.msra.mxu0 %v1871
    %3206 = vmatprep.subr.mxu0 %v1888
    %3207 = vmatpush1.msra.mxu0 %v1887
    %3208 = vmatprep.subr.mxu0 %v1904
    %3209 = vmatpush1.msra.mxu0 %v1903
    %3210 = vmatprep.subr.mxu0 %v1920
    %3211 = vmatpush1.msra.mxu0 %v1919
    %3212 = vmatprep.subr.mxu0 %v1936
    %3213 = vmatpush1.msra.mxu0 %v1935
    %3214 = vmatprep.subr.mxu0 %v1952
    %3215 = vmatpush1.msra.mxu0 %v1951
    %3216 = vmatprep.subr.mxu0 %v1968
    %3217 = vmatpush1.msra.mxu0 %v1967
    %3218 = vmatprep.subr.mxu0 %v1984
    %3219 = vmatpush1.msra.mxu0 %v1983
    %3220 = vmatprep.subr.mxu0 %v2000
    %3221 = vmatpush1.msra.mxu0 %v1999
    %3222 = vmatprep.subr.mxu0 %v2016
    %3223 = vmatpush1.msra.mxu0 %v2015
    %3224 = vmatprep.subr.mxu0 %v2032
    %3225 = vmatpush1.msra.mxu0 %v2031
    %3226 = vmatprep.subr.mxu0 %v2048
    %3227 = vmatpush1.msra.mxu0 %v2047
    %3228 = vmatprep.subr.mxu0 %v2064
    %3229 = vmatpush1.msra.mxu0 %v2063
    %3230 = vmatprep.subr.mxu0 %v2080
    %3231 = vmatpush1.msra.mxu0 %v2079
    %3232 = vmatprep.subr.mxu0 %v2096
    %3233 = vmatpush1.msra.mxu0 %v2095
    %3234 = vmatprep.subr.mxu0 %v2112
    %3235 = vmatpush1.msra.mxu0 %v2111
    %3236 = vmatprep.subr.mxu0 %v2128
    %3237 = vmatpush1.msra.mxu0 %v2127
    %3238 = vmatprep.subr.mxu0 %v2144
    %3239 = vmatpush1.msra.mxu0 %v2143
    %3240 = vmatprep.subr.mxu0 %v2160
    %3241 = vmatpush1.msra.mxu0 %v2159
    %3242 = vmatprep.subr.mxu0 %v2176
    %3243 = vmatpush1.msra.mxu0 %v2175
    %3244 = vmatprep.subr.mxu0 %v2192
    %3245 = vmatpush1.msra.mxu0 %v2191
    %3246 = vmatprep.subr.mxu0 %v2208
    %3247 = vmatpush1.msra.mxu0 %v2207
    %3248 = vmatprep.subr.mxu0 %v2224
    %3249 = vmatpush1.msra.mxu0 %v2223
    %3250 = vmatprep.subr.mxu0 %v2240
    %3251 = vmatpush1.msra.mxu0 %v2239
    %3252 = vmatprep.subr.mxu0 %v2256
    %3253 = vmatpush1.msra.mxu0 %v2255
    %3254 = vmatprep.subr.mxu0 %v2272
    %3255 = vmatpush1.msra.mxu0 %v2271
    %3256 = vmatprep.mubr.f32.mxu0 %v2402
    %3257 = vmatmul.mubr.f32.gmra.mrb[0].mxu0 %v2400
    %v3258 = vpop.f32.mrb[0].mxu0
    %v3259 = vadd.f32 %v3188, %v3258
    %v3260 = vpop.f32.mrb[0].mxu0
    %v3261 = vadd.f32 %v3190, %v3260
    %3262 = vdwg.mxu0
    %3263 = vmatprep.subr.mxu0 %v242
    %3264 = vmatpush1.msra.mxu0 %v241
    %3265 = vmatprep.subr.mxu0 %v258
    %3266 = vmatpush1.msra.mxu0 %v257
    %3267 = vmatprep.subr.mxu0 %v274
    %3268 = vmatpush1.msra.mxu0 %v273
    %3269 = vmatprep.subr.mxu0 %v290
    %3270 = vmatpush1.msra.mxu0 %v289
    %3271 = vmatprep.subr.mxu0 %v306
    %3272 = vmatpush1.msra.mxu0 %v305
    %3273 = vmatprep.subr.mxu0 %v322
    %3274 = vmatpush1.msra.mxu0 %v321
    %3275 = vmatprep.subr.mxu0 %v338
    %3276 = vmatpush1.msra.mxu0 %v337
    %3277 = vmatprep.subr.mxu0 %v354
    %3278 = vmatpush1.msra.mxu0 %v353
    %3279 = vmatprep.subr.mxu0 %v370
    %3280 = vmatpush1.msra.mxu0 %v369
    %3281 = vmatprep.subr.mxu0 %v386
    %3282 = vmatpush1.msra.mxu0 %v385
    %3283 = vmatprep.subr.mxu0 %v402
    %3284 = vmatpush1.msra.mxu0 %v401
    %3285 = vmatprep.subr.mxu0 %v418
    %3286 = vmatpush1.msra.mxu0 %v417
    %3287 = vmatprep.subr.mxu0 %v434
    %3288 = vmatpush1.msra.mxu0 %v433
    %3289 = vmatprep.subr.mxu0 %v450
    %3290 = vmatpush1.msra.mxu0 %v449
    %3291 = vmatprep.subr.mxu0 %v466
    %3292 = vmatpush1.msra.mxu0 %v465
    %3293 = vmatprep.subr.mxu0 %v482
    %3294 = vmatpush1.msra.mxu0 %v481
    %3295 = vmatprep.subr.mxu0 %v498
    %3296 = vmatpush1.msra.mxu0 %v497
    %3297 = vmatprep.subr.mxu0 %v514
    %3298 = vmatpush1.msra.mxu0 %v513
    %3299 = vmatprep.subr.mxu0 %v530
    %3300 = vmatpush1.msra.mxu0 %v529
    %3301 = vmatprep.subr.mxu0 %v546
    %3302 = vmatpush1.msra.mxu0 %v545
    %3303 = vmatprep.subr.mxu0 %v562
    %3304 = vmatpush1.msra.mxu0 %v561
    %3305 = vmatprep.subr.mxu0 %v578
    %3306 = vmatpush1.msra.mxu0 %v577
    %3307 = vmatprep.subr.mxu0 %v594
    %3308 = vmatpush1.msra.mxu0 %v593
    %3309 = vmatprep.subr.mxu0 %v610
    %3310 = vmatpush1.msra.mxu0 %v609
    %3311 = vmatprep.subr.mxu0 %v626
    %3312 = vmatpush1.msra.mxu0 %v625
    %3313 = vmatprep.subr.mxu0 %v642
    %3314 = vmatpush1.msra.mxu0 %v641
    %3315 = vmatprep.subr.mxu0 %v658
    %3316 = vmatpush1.msra.mxu0 %v657
    %3317 = vmatprep.subr.mxu0 %v674
    %3318 = vmatpush1.msra.mxu0 %v673
    %3319 = vmatprep.subr.mxu0 %v690
    %3320 = vmatpush1.msra.mxu0 %v689
    %3321 = vmatprep.subr.mxu0 %v706
    %3322 = vmatpush1.msra.mxu0 %v705
    %3323 = vmatprep.subr.mxu0 %v722
    %3324 = vmatpush1.msra.mxu0 %v721
    %3325 = vmatprep.subr.mxu0 %v738
    %3326 = vmatpush1.msra.mxu0 %v737
    %3327 = vmatprep.mubr.f32.mxu0 %v2384
    %3328 = vmatmul.mubr.f32.gmra.mrb[0].mxu0 %v2376
    %v3329 = vpop.f32.mrb[0].mxu0
    %v3330 = vadd.f32 %v2314, %v3329
    %v3331 = vpop.f32.mrb[0].mxu0
    %v3332 = vadd.f32 %v2318, %v3331
    %3333 = vdwg.mxu0
    %3334 = vmatprep.subr.mxu0 %v754
    %3335 = vmatpush1.msra.mxu0 %v753
    %3336 = vmatprep.subr.mxu0 %v770
    %3337 = vmatpush1.msra.mxu0 %v769
    %3338 = vmatprep.subr.mxu0 %v786
    %3339 = vmatpush1.msra.mxu0 %v785
    %3340 = vmatprep.subr.mxu0 %v802
    %3341 = vmatpush1.msra.mxu0 %v801
    %3342 = vmatprep.subr.mxu0 %v818
    %3343 = vmatpush1.msra.mxu0 %v817
    %3344 = vmatprep.subr.mxu0 %v834
    %3345 = vmatpush1.msra.mxu0 %v833
    %3346 = vmatprep.subr.mxu0 %v850
    %3347 = vmatpush1.msra.mxu0 %v849
    %3348 = vmatprep.subr.mxu0 %v866
    %3349 = vmatpush1.msra.mxu0 %v865
    %3350 = vmatprep.subr.mxu0 %v882
    %3351 = vmatpush1.msra.mxu0 %v881
    %3352 = vmatprep.subr.mxu0 %v898
    %3353 = vmatpush1.msra.mxu0 %v897
    %3354 = vmatprep.subr.mxu0 %v914
    %3355 = vmatpush1.msra.mxu0 %v913
    %3356 = vmatprep.subr.mxu0 %v930
    %3357 = vmatpush1.msra.mxu0 %v929
    %3358 = vmatprep.subr.mxu0 %v946
    %3359 = vmatpush1.msra.mxu0 %v945
    %3360 = vmatprep.subr.mxu0 %v962
    %3361 = vmatpush1.msra.mxu0 %v961
    %3362 = vmatprep.subr.mxu0 %v978
    %3363 = vmatpush1.msra.mxu0 %v977
    %3364 = vmatprep.subr.mxu0 %v994
    %3365 = vmatpush1.msra.mxu0 %v993
    %3366 = vmatprep.subr.mxu0 %v1010
    %3367 = vmatpush1.msra.mxu0 %v1009
    %3368 = vmatprep.subr.mxu0 %v1026
    %3369 = vmatpush1.msra.mxu0 %v1025
    %3370 = vmatprep.subr.mxu0 %v1042
    %3371 = vmatpush1.msra.mxu0 %v1041
    %3372 = vmatprep.subr.mxu0 %v1058
    %3373 = vmatpush1.msra.mxu0 %v1057
    %3374 = vmatprep.subr.mxu0 %v1074
    %3375 = vmatpush1.msra.mxu0 %v1073
    %3376 = vmatprep.subr.mxu0 %v1090
    %3377 = vmatpush1.msra.mxu0 %v1089
    %3378 = vmatprep.subr.mxu0 %v1106
    %3379 = vmatpush1.msra.mxu0 %v1105
    %3380 = vmatprep.subr.mxu0 %v1122
    %3381 = vmatpush1.msra.mxu0 %v1121
    %3382 = vmatprep.subr.mxu0 %v1138
    %3383 = vmatpush1.msra.mxu0 %v1137
    %3384 = vmatprep.subr.mxu0 %v1154
    %3385 = vmatpush1.msra.mxu0 %v1153
    %3386 = vmatprep.subr.mxu0 %v1170
    %3387 = vmatpush1.msra.mxu0 %v1169
    %3388 = vmatprep.subr.mxu0 %v1186
    %3389 = vmatpush1.msra.mxu0 %v1185
    %3390 = vmatprep.subr.mxu0 %v1202
    %3391 = vmatpush1.msra.mxu0 %v1201
    %3392 = vmatprep.subr.mxu0 %v1218
    %3393 = vmatpush1.msra.mxu0 %v1217
    %3394 = vmatprep.subr.mxu0 %v1234
    %3395 = vmatpush1.msra.mxu0 %v1233
    %3396 = vmatprep.subr.mxu0 %v1250
    %3397 = vmatpush1.msra.mxu0 %v1249
    %3398 = vmatprep.mubr.f32.mxu0 %v2385
    %3399 = vmatmul.mubr.f32.gmra.mrb[0].mxu0 %v2383
    %v3400 = vpop.f32.mrb[0].mxu0
    %v3401 = vadd.f32 %v3330, %v3400
    %v3402 = vpop.f32.mrb[0].mxu0
    %v3403 = vadd.f32 %v3332, %v3402
    %3404 = vdwg.mxu0
    %3405 = vmatprep.subr.mxu0 %v1266
    %3406 = vmatpush1.msra.mxu0 %v1265
    %3407 = vmatprep.subr.mxu0 %v1282
    %3408 = vmatpush1.msra.mxu0 %v1281
    %3409 = vmatprep.subr.mxu0 %v1298
    %3410 = vmatpush1.msra.mxu0 %v1297
    %3411 = vmatprep.subr.mxu0 %v1314
    %3412 = vmatpush1.msra.mxu0 %v1313
    %3413 = vmatprep.subr.mxu0 %v1330
    %3414 = vmatpush1.msra.mxu0 %v1329
    %3415 = vmatprep.subr.mxu0 %v1346
    %3416 = vmatpush1.msra.mxu0 %v1345
    %3417 = vmatprep.subr.mxu0 %v1362
    %3418 = vmatpush1.msra.mxu0 %v1361
    %3419 = vmatprep.subr.mxu0 %v1378
    %3420 = vmatpush1.msra.mxu0 %v1377
    %3421 = vmatprep.subr.mxu0 %v1394
    %3422 = vmatpush1.msra.mxu0 %v1393
    %3423 = vmatprep.subr.mxu0 %v1410
    %3424 = vmatpush1.msra.mxu0 %v1409
    %3425 = vmatprep.subr.mxu0 %v1426
    %3426 = vmatpush1.msra.mxu0 %v1425
    %3427 = vmatprep.subr.mxu0 %v1442
    %3428 = vmatpush1.msra.mxu0 %v1441
    %3429 = vmatprep.subr.mxu0 %v1458
    %3430 = vmatpush1.msra.mxu0 %v1457
    %3431 = vmatprep.subr.mxu0 %v1474
    %3432 = vmatpush1.msra.mxu0 %v1473
    %3433 = vmatprep.subr.mxu0 %v1490
    %3434 = vmatpush1.msra.mxu0 %v1489
    %3435 = vmatprep.subr.mxu0 %v1506
    %3436 = vmatpush1.msra.mxu0 %v1505
    %3437 = vmatprep.subr.mxu0 %v1522
    %3438 = vmatpush1.msra.mxu0 %v1521
    %3439 = vmatprep.subr.mxu0 %v1538
    %3440 = vmatpush1.msra.mxu0 %v1537
    %3441 = vmatprep.subr.mxu0 %v1554
    %3442 = vmatpush1.msra.mxu0 %v1553
    %3443 = vmatprep.subr.mxu0 %v1570
    %3444 = vmatpush1.msra.mxu0 %v1569
    %3445 = vmatprep.subr.mxu0 %v1586
    %3446 = vmatpush1.msra.mxu0 %v1585
    %3447 = vmatprep.subr.mxu0 %v1602
    %3448 = vmatpush1.msra.mxu0 %v1601
    %3449 = vmatprep.subr.mxu0 %v1618
    %3450 = vmatpush1.msra.mxu0 %v1617
    %3451 = vmatprep.subr.mxu0 %v1634
    %3452 = vmatpush1.msra.mxu0 %v1633
    %3453 = vmatprep.subr.mxu0 %v1650
    %3454 = vmatpush1.msra.mxu0 %v1649
    %3455 = vmatprep.subr.mxu0 %v1666
    %3456 = vmatpush1.msra.mxu0 %v1665
    %3457 = vmatprep.subr.mxu0 %v1682
    %3458 = vmatpush1.msra.mxu0 %v1681
    %3459 = vmatprep.subr.mxu0 %v1698
    %3460 = vmatpush1.msra.mxu0 %v1697
    %3461 = vmatprep.subr.mxu0 %v1714
    %3462 = vmatpush1.msra.mxu0 %v1713
    %3463 = vmatprep.subr.mxu0 %v1730
    %3464 = vmatpush1.msra.mxu0 %v1729
    %3465 = vmatprep.subr.mxu0 %v1746
    %3466 = vmatpush1.msra.mxu0 %v1745
    %3467 = vmatprep.subr.mxu0 %v1762
    %3468 = vmatpush1.msra.mxu0 %v1761
    %3469 = vmatprep.mubr.f32.mxu0 %v2401
    %3470 = vmatmul.mubr.f32.gmra.mrb[0].mxu0 %v2393
    %v3471 = vpop.f32.mrb[0].mxu0
    %v3472 = vadd.f32 %v3401, %v3471
    %v3473 = vpop.f32.mrb[0].mxu0
    %v3474 = vadd.f32 %v3403, %v3473
    %3475 = vdwg.mxu0
    %3476 = vmatprep.subr.mxu0 %v1778
    %3477 = vmatpush1.msra.mxu0 %v1777
    %3478 = vmatprep.subr.mxu0 %v1794
    %3479 = vmatpush1.msra.mxu0 %v1793
    %3480 = vmatprep.subr.mxu0 %v1810
    %3481 = vmatpush1.msra.mxu0 %v1809
    %3482 = vmatprep.subr.mxu0 %v1826
    %3483 = vmatpush1.msra.mxu0 %v1825
    %3484 = vmatprep.subr.mxu0 %v1842
    %3485 = vmatpush1.msra.mxu0 %v1841
    %3486 = vmatprep.subr.mxu0 %v1858
    %3487 = vmatpush1.msra.mxu0 %v1857
    %3488 = vmatprep.subr.mxu0 %v1874
    %3489 = vmatpush1.msra.mxu0 %v1873
    %3490 = vmatprep.subr.mxu0 %v1890
    %3491 = vmatpush1.msra.mxu0 %v1889
    %3492 = vmatprep.subr.mxu0 %v1906
    %3493 = vmatpush1.msra.mxu0 %v1905
    %3494 = vmatprep.subr.mxu0 %v1922
    %3495 = vmatpush1.msra.mxu0 %v1921
    %3496 = vmatprep.subr.mxu0 %v1938
    %3497 = vmatpush1.msra.mxu0 %v1937
    %3498 = vmatprep.subr.mxu0 %v1954
    %3499 = vmatpush1.msra.mxu0 %v1953
    %3500 = vmatprep.subr.mxu0 %v1970
    %3501 = vmatpush1.msra.mxu0 %v1969
    %3502 = vmatprep.subr.mxu0 %v1986
    %3503 = vmatpush1.msra.mxu0 %v1985
    %3504 = vmatprep.subr.mxu0 %v2002
    %3505 = vmatpush1.msra.mxu0 %v2001
    %3506 = vmatprep.subr.mxu0 %v2018
    %3507 = vmatpush1.msra.mxu0 %v2017
    %3508 = vmatprep.subr.mxu0 %v2034
    %3509 = vmatpush1.msra.mxu0 %v2033
    %3510 = vmatprep.subr.mxu0 %v2050
    %3511 = vmatpush1.msra.mxu0 %v2049
    %3512 = vmatprep.subr.mxu0 %v2066
    %3513 = vmatpush1.msra.mxu0 %v2065
    %3514 = vmatprep.subr.mxu0 %v2082
    %3515 = vmatpush1.msra.mxu0 %v2081
    %3516 = vmatprep.subr.mxu0 %v2098
    %3517 = vmatpush1.msra.mxu0 %v2097
    %3518 = vmatprep.subr.mxu0 %v2114
    %3519 = vmatpush1.msra.mxu0 %v2113
    %3520 = vmatprep.subr.mxu0 %v2130
    %3521 = vmatpush1.msra.mxu0 %v2129
    %3522 = vmatprep.subr.mxu0 %v2146
    %3523 = vmatpush1.msra.mxu0 %v2145
    %3524 = vmatprep.subr.mxu0 %v2162
    %3525 = vmatpush1.msra.mxu0 %v2161
    %3526 = vmatprep.subr.mxu0 %v2178
    %3527 = vmatpush1.msra.mxu0 %v2177
    %3528 = vmatprep.subr.mxu0 %v2194
    %3529 = vmatpush1.msra.mxu0 %v2193
    %3530 = vmatprep.subr.mxu0 %v2210
    %3531 = vmatpush1.msra.mxu0 %v2209
    %3532 = vmatprep.subr.mxu0 %v2226
    %3533 = vmatpush1.msra.mxu0 %v2225
    %3534 = vmatprep.subr.mxu0 %v2242
    %3535 = vmatpush1.msra.mxu0 %v2241
    %3536 = vmatprep.subr.mxu0 %v2258
    %3537 = vmatpush1.msra.mxu0 %v2257
    %3538 = vmatprep.subr.mxu0 %v2274
    %3539 = vmatpush1.msra.mxu0 %v2273
    %3540 = vmatprep.mubr.f32.mxu0 %v2402
    %3541 = vmatmul.mubr.f32.gmra.mrb[0].mxu0 %v2400
    %v3542 = vpop.f32.mrb[0].mxu0
    %v3543 = vadd.f32 %v3472, %v3542
    %v3544 = vpop.f32.mrb[0].mxu0
    %v3545 = vadd.f32 %v3474, %v3544
    %3546 = vdwg.mxu0
    %3547 = vmatprep.subr.mxu0 %v244
    %3548 = vmatpush1.msra.mxu0 %v243
    %3549 = vmatprep.subr.mxu0 %v260
    %3550 = vmatpush1.msra.mxu0 %v259
    %3551 = vmatprep.subr.mxu0 %v276
    %3552 = vmatpush1.msra.mxu0 %v275
    %3553 = vmatprep.subr.mxu0 %v292
    %3554 = vmatpush1.msra.mxu0 %v291
    %3555 = vmatprep.subr.mxu0 %v308
    %3556 = vmatpush1.msra.mxu0 %v307
    %3557 = vmatprep.subr.mxu0 %v324
    %3558 = vmatpush1.msra.mxu0 %v323
    %3559 = vmatprep.subr.mxu0 %v340
    %3560 = vmatpush1.msra.mxu0 %v339
    %3561 = vmatprep.subr.mxu0 %v356
    %3562 = vmatpush1.msra.mxu0 %v355
    %3563 = vmatprep.subr.mxu0 %v372
    %3564 = vmatpush1.msra.mxu0 %v371
    %3565 = vmatprep.subr.mxu0 %v388
    %3566 = vmatpush1.msra.mxu0 %v387
    %3567 = vmatprep.subr.mxu0 %v404
    %3568 = vmatpush1.msra.mxu0 %v403
    %3569 = vmatprep.subr.mxu0 %v420
    %3570 = vmatpush1.msra.mxu0 %v419
    %3571 = vmatprep.subr.mxu0 %v436
    %3572 = vmatpush1.msra.mxu0 %v435
    %3573 = vmatprep.subr.mxu0 %v452
    %3574 = vmatpush1.msra.mxu0 %v451
    %3575 = vmatprep.subr.mxu0 %v468
    %3576 = vmatpush1.msra.mxu0 %v467
    %3577 = vmatprep.subr.mxu0 %v484
    %3578 = vmatpush1.msra.mxu0 %v483
    %3579 = vmatprep.subr.mxu0 %v500
    %3580 = vmatpush1.msra.mxu0 %v499
    %3581 = vmatprep.subr.mxu0 %v516
    %3582 = vmatpush1.msra.mxu0 %v515
    %3583 = vmatprep.subr.mxu0 %v532
    %3584 = vmatpush1.msra.mxu0 %v531
    %3585 = vmatprep.subr.mxu0 %v548
    %3586 = vmatpush1.msra.mxu0 %v547
    %3587 = vmatprep.subr.mxu0 %v564
    %3588 = vmatpush1.msra.mxu0 %v563
    %3589 = vmatprep.subr.mxu0 %v580
    %3590 = vmatpush1.msra.mxu0 %v579
    %3591 = vmatprep.subr.mxu0 %v596
    %3592 = vmatpush1.msra.mxu0 %v595
    %3593 = vmatprep.subr.mxu0 %v612
    %3594 = vmatpush1.msra.mxu0 %v611
    %3595 = vmatprep.subr.mxu0 %v628
    %3596 = vmatpush1.msra.mxu0 %v627
    %3597 = vmatprep.subr.mxu0 %v644
    %3598 = vmatpush1.msra.mxu0 %v643
    %3599 = vmatprep.subr.mxu0 %v660
    %3600 = vmatpush1.msra.mxu0 %v659
    %3601 = vmatprep.subr.mxu0 %v676
    %3602 = vmatpush1.msra.mxu0 %v675
    %3603 = vmatprep.subr.mxu0 %v692
    %3604 = vmatpush1.msra.mxu0 %v691
    %3605 = vmatprep.subr.mxu0 %v708
    %3606 = vmatpush1.msra.mxu0 %v707
    %3607 = vmatprep.subr.mxu0 %v724
    %3608 = vmatpush1.msra.mxu0 %v723
    %3609 = vmatprep.subr.mxu0 %v740
    %3610 = vmatpush1.msra.mxu0 %v739
    %3611 = vmatprep.mubr.f32.mxu0 %v2384
    %3612 = vmatmul.mubr.f32.gmra.mrb[0].mxu0 %v2376
    %v3613 = vpop.f32.mrb[0].mxu0
    %v3614 = vadd.f32 %v2322, %v3613
    %v3615 = vpop.f32.mrb[0].mxu0
    %v3616 = vadd.f32 %v2326, %v3615
    %3617 = vdwg.mxu0
    %3618 = vmatprep.subr.mxu0 %v756
    %3619 = vmatpush1.msra.mxu0 %v755
    %3620 = vmatprep.subr.mxu0 %v772
    %3621 = vmatpush1.msra.mxu0 %v771
    %3622 = vmatprep.subr.mxu0 %v788
    %3623 = vmatpush1.msra.mxu0 %v787
    %3624 = vmatprep.subr.mxu0 %v804
    %3625 = vmatpush1.msra.mxu0 %v803
    %3626 = vmatprep.subr.mxu0 %v820
    %3627 = vmatpush1.msra.mxu0 %v819
    %3628 = vmatprep.subr.mxu0 %v836
    %3629 = vmatpush1.msra.mxu0 %v835
    %3630 = vmatprep.subr.mxu0 %v852
    %3631 = vmatpush1.msra.mxu0 %v851
    %3632 = vmatprep.subr.mxu0 %v868
    %3633 = vmatpush1.msra.mxu0 %v867
    %3634 = vmatprep.subr.mxu0 %v884
    %3635 = vmatpush1.msra.mxu0 %v883
    %3636 = vmatprep.subr.mxu0 %v900
    %3637 = vmatpush1.msra.mxu0 %v899
    %3638 = vmatprep.subr.mxu0 %v916
    %3639 = vmatpush1.msra.mxu0 %v915
    %3640 = vmatprep.subr.mxu0 %v932
    %3641 = vmatpush1.msra.mxu0 %v931
    %3642 = vmatprep.subr.mxu0 %v948
    %3643 = vmatpush1.msra.mxu0 %v947
    %3644 = vmatprep.subr.mxu0 %v964
    %3645 = vmatpush1.msra.mxu0 %v963
    %3646 = vmatprep.subr.mxu0 %v980
    %3647 = vmatpush1.msra.mxu0 %v979
    %3648 = vmatprep.subr.mxu0 %v996
    %3649 = vmatpush1.msra.mxu0 %v995
    %3650 = vmatprep.subr.mxu0 %v1012
    %3651 = vmatpush1.msra.mxu0 %v1011
    %3652 = vmatprep.subr.mxu0 %v1028
    %3653 = vmatpush1.msra.mxu0 %v1027
    %3654 = vmatprep.subr.mxu0 %v1044
    %3655 = vmatpush1.msra.mxu0 %v1043
    %3656 = vmatprep.subr.mxu0 %v1060
    %3657 = vmatpush1.msra.mxu0 %v1059
    %3658 = vmatprep.subr.mxu0 %v1076
    %3659 = vmatpush1.msra.mxu0 %v1075
    %3660 = vmatprep.subr.mxu0 %v1092
    %3661 = vmatpush1.msra.mxu0 %v1091
    %3662 = vmatprep.subr.mxu0 %v1108
    %3663 = vmatpush1.msra.mxu0 %v1107
    %3664 = vmatprep.subr.mxu0 %v1124
    %3665 = vmatpush1.msra.mxu0 %v1123
    %3666 = vmatprep.subr.mxu0 %v1140
    %3667 = vmatpush1.msra.mxu0 %v1139
    %3668 = vmatprep.subr.mxu0 %v1156
    %3669 = vmatpush1.msra.mxu0 %v1155
    %3670 = vmatprep.subr.mxu0 %v1172
    %3671 = vmatpush1.msra.mxu0 %v1171
    %3672 = vmatprep.subr.mxu0 %v1188
    %3673 = vmatpush1.msra.mxu0 %v1187
    %3674 = vmatprep.subr.mxu0 %v1204
    %3675 = vmatpush1.msra.mxu0 %v1203
    %3676 = vmatprep.subr.mxu0 %v1220
    %3677 = vmatpush1.msra.mxu0 %v1219
    %3678 = vmatprep.subr.mxu0 %v1236
    %3679 = vmatpush1.msra.mxu0 %v1235
    %3680 = vmatprep.subr.mxu0 %v1252
    %3681 = vmatpush1.msra.mxu0 %v1251
    %3682 = vmatprep.mubr.f32.mxu0 %v2385
    %3683 = vmatmul.mubr.f32.gmra.mrb[0].mxu0 %v2383
    %v3684 = vpop.f32.mrb[0].mxu0
    %v3685 = vadd.f32 %v3614, %v3684
    %v3686 = vpop.f32.mrb[0].mxu0
    %v3687 = vadd.f32 %v3616, %v3686
    %3688 = vdwg.mxu0
    %3689 = vmatprep.subr.mxu0 %v1268
    %3690 = vmatpush1.msra.mxu0 %v1267
    %3691 = vmatprep.subr.mxu0 %v1284
    %3692 = vmatpush1.msra.mxu0 %v1283
    %3693 = vmatprep.subr.mxu0 %v1300
    %3694 = vmatpush1.msra.mxu0 %v1299
    %3695 = vmatprep.subr.mxu0 %v1316
    %3696 = vmatpush1.msra.mxu0 %v1315
    %3697 = vmatprep.subr.mxu0 %v1332
    %3698 = vmatpush1.msra.mxu0 %v1331
    %3699 = vmatprep.subr.mxu0 %v1348
    %3700 = vmatpush1.msra.mxu0 %v1347
    %3701 = vmatprep.subr.mxu0 %v1364
    %3702 = vmatpush1.msra.mxu0 %v1363
    %3703 = vmatprep.subr.mxu0 %v1380
    %3704 = vmatpush1.msra.mxu0 %v1379
    %3705 = vmatprep.subr.mxu0 %v1396
    %3706 = vmatpush1.msra.mxu0 %v1395
    %3707 = vmatprep.subr.mxu0 %v1412
    %3708 = vmatpush1.msra.mxu0 %v1411
    %3709 = vmatprep.subr.mxu0 %v1428
    %3710 = vmatpush1.msra.mxu0 %v1427
    %3711 = vmatprep.subr.mxu0 %v1444
    %3712 = vmatpush1.msra.mxu0 %v1443
    %3713 = vmatprep.subr.mxu0 %v1460
    %3714 = vmatpush1.msra.mxu0 %v1459
    %3715 = vmatprep.subr.mxu0 %v1476
    %3716 = vmatpush1.msra.mxu0 %v1475
    %3717 = vmatprep.subr.mxu0 %v1492
    %3718 = vmatpush1.msra.mxu0 %v1491
    %3719 = vmatprep.subr.mxu0 %v1508
    %3720 = vmatpush1.msra.mxu0 %v1507
    %3721 = vmatprep.subr.mxu0 %v1524
    %3722 = vmatpush1.msra.mxu0 %v1523
    %3723 = vmatprep.subr.mxu0 %v1540
    %3724 = vmatpush1.msra.mxu0 %v1539
    %3725 = vmatprep.subr.mxu0 %v1556
    %3726 = vmatpush1.msra.mxu0 %v1555
    %3727 = vmatprep.subr.mxu0 %v1572
    %3728 = vmatpush1.msra.mxu0 %v1571
    %3729 = vmatprep.subr.mxu0 %v1588
    %3730 = vmatpush1.msra.mxu0 %v1587
    %3731 = vmatprep.subr.mxu0 %v1604
    %3732 = vmatpush1.msra.mxu0 %v1603
    %3733 = vmatprep.subr.mxu0 %v1620
    %3734 = vmatpush1.msra.mxu0 %v1619
    %3735 = vmatprep.subr.mxu0 %v1636
    %3736 = vmatpush1.msra.mxu0 %v1635
    %3737 = vmatprep.subr.mxu0 %v1652
    %3738 = vmatpush1.msra.mxu0 %v1651
    %3739 = vmatprep.subr.mxu0 %v1668
    %3740 = vmatpush1.msra.mxu0 %v1667
    %3741 = vmatprep.subr.mxu0 %v1684
    %3742 = vmatpush1.msra.mxu0 %v1683
    %3743 = vmatprep.subr.mxu0 %v1700
    %3744 = vmatpush1.msra.mxu0 %v1699
    %3745 = vmatprep.subr.mxu0 %v1716
    %3746 = vmatpush1.msra.mxu0 %v1715
    %3747 = vmatprep.subr.mxu0 %v1732
    %3748 = vmatpush1.msra.mxu0 %v1731
    %3749 = vmatprep.subr.mxu0 %v1748
    %3750 = vmatpush1.msra.mxu0 %v1747
    %3751 = vmatprep.subr.mxu0 %v1764
    %3752 = vmatpush1.msra.mxu0 %v1763
    %3753 = vmatprep.mubr.f32.mxu0 %v2401
    %3754 = vmatmul.mubr.f32.gmra.mrb[0].mxu0 %v2393
    %v3755 = vpop.f32.mrb[0].mxu0
    %v3756 = vadd.f32 %v3685, %v3755
    %v3757 = vpop.f32.mrb[0].mxu0
    %v3758 = vadd.f32 %v3687, %v3757
    %3759 = vdwg.mxu0
    %3760 = vmatprep.subr.mxu0 %v1780
    %3761 = vmatpush1.msra.mxu0 %v1779
    %3762 = vmatprep.subr.mxu0 %v1796
    %3763 = vmatpush1.msra.mxu0 %v1795
    %3764 = vmatprep.subr.mxu0 %v1812
    %3765 = vmatpush1.msra.mxu0 %v1811
    %3766 = vmatprep.subr.mxu0 %v1828
    %3767 = vmatpush1.msra.mxu0 %v1827
    %3768 = vmatprep.subr.mxu0 %v1844
    %3769 = vmatpush1.msra.mxu0 %v1843
    %3770 = vmatprep.subr.mxu0 %v1860
    %3771 = vmatpush1.msra.mxu0 %v1859
    %3772 = vmatprep.subr.mxu0 %v1876
    %3773 = vmatpush1.msra.mxu0 %v1875
    %3774 = vmatprep.subr.mxu0 %v1892
    %3775 = vmatpush1.msra.mxu0 %v1891
    %3776 = vmatprep.subr.mxu0 %v1908
    %3777 = vmatpush1.msra.mxu0 %v1907
    %3778 = vmatprep.subr.mxu0 %v1924
    %3779 = vmatpush1.msra.mxu0 %v1923
    %3780 = vmatprep.subr.mxu0 %v1940
    %3781 = vmatpush1.msra.mxu0 %v1939
    %3782 = vmatprep.subr.mxu0 %v1956
    %3783 = vmatpush1.msra.mxu0 %v1955
    %3784 = vmatprep.subr.mxu0 %v1972
    %3785 = vmatpush1.msra.mxu0 %v1971
    %3786 = vmatprep.subr.mxu0 %v1988
    %3787 = vmatpush1.msra.mxu0 %v1987
    %3788 = vmatprep.subr.mxu0 %v2004
    %3789 = vmatpush1.msra.mxu0 %v2003
    %3790 = vmatprep.subr.mxu0 %v2020
    %3791 = vmatpush1.msra.mxu0 %v2019
    %3792 = vmatprep.subr.mxu0 %v2036
    %3793 = vmatpush1.msra.mxu0 %v2035
    %3794 = vmatprep.subr.mxu0 %v2052
    %3795 = vmatpush1.msra.mxu0 %v2051
    %3796 = vmatprep.subr.mxu0 %v2068
    %3797 = vmatpush1.msra.mxu0 %v2067
    %3798 = vmatprep.subr.mxu0 %v2084
    %3799 = vmatpush1.msra.mxu0 %v2083
    %3800 = vmatprep.subr.mxu0 %v2100
    %3801 = vmatpush1.msra.mxu0 %v2099
    %3802 = vmatprep.subr.mxu0 %v2116
    %3803 = vmatpush1.msra.mxu0 %v2115
    %3804 = vmatprep.subr.mxu0 %v2132
    %3805 = vmatpush1.msra.mxu0 %v2131
    %3806 = vmatprep.subr.mxu0 %v2148
    %3807 = vmatpush1.msra.mxu0 %v2147
    %3808 = vmatprep.subr.mxu0 %v2164
    %3809 = vmatpush1.msra.mxu0 %v2163
    %3810 = vmatprep.subr.mxu0 %v2180
    %3811 = vmatpush1.msra.mxu0 %v2179
    %3812 = vmatprep.subr.mxu0 %v2196
    %3813 = vmatpush1.msra.mxu0 %v2195
    %3814 = vmatprep.subr.mxu0 %v2212
    %3815 = vmatpush1.msra.mxu0 %v2211
    %3816 = vmatprep.subr.mxu0 %v2228
    %3817 = vmatpush1.msra.mxu0 %v2227
    %3818 = vmatprep.subr.mxu0 %v2244
    %3819 = vmatpush1.msra.mxu0 %v2243
    %3820 = vmatprep.subr.mxu0 %v2260
    %3821 = vmatpush1.msra.mxu0 %v2259
    %3822 = vmatprep.subr.mxu0 %v2276
    %3823 = vmatpush1.msra.mxu0 %v2275
    %3824 = vmatprep.mubr.f32.mxu0 %v2402
    %3825 = vmatmul.mubr.f32.gmra.mrb[0].mxu0 %v2400
    %v3826 = vpop.f32.mrb[0].mxu0
    %v3827 = vadd.f32 %v3756, %v3826
    %v3828 = vpop.f32.mrb[0].mxu0
    %v3829 = vadd.f32 %v3758, %v3828
    %3830 = vdwg.mxu0
    %3831 = vmatprep.subr.mxu0 %v246
    %3832 = vmatpush1.msra.mxu0 %v245
    %3833 = vmatprep.subr.mxu0 %v262
    %3834 = vmatpush1.msra.mxu0 %v261
    %3835 = vmatprep.subr.mxu0 %v278
    %3836 = vmatpush1.msra.mxu0 %v277
    %3837 = vmatprep.subr.mxu0 %v294
    %3838 = vmatpush1.msra.mxu0 %v293
    %3839 = vmatprep.subr.mxu0 %v310
    %3840 = vmatpush1.msra.mxu0 %v309
    %3841 = vmatprep.subr.mxu0 %v326
    %3842 = vmatpush1.msra.mxu0 %v325
    %3843 = vmatprep.subr.mxu0 %v342
    %3844 = vmatpush1.msra.mxu0 %v341
    %3845 = vmatprep.subr.mxu0 %v358
    %3846 = vmatpush1.msra.mxu0 %v357
    %3847 = vmatprep.subr.mxu0 %v374
    %3848 = vmatpush1.msra.mxu0 %v373
    %3849 = vmatprep.subr.mxu0 %v390
    %3850 = vmatpush1.msra.mxu0 %v389
    %3851 = vmatprep.subr.mxu0 %v406
    %3852 = vmatpush1.msra.mxu0 %v405
    %3853 = vmatprep.subr.mxu0 %v422
    %3854 = vmatpush1.msra.mxu0 %v421
    %3855 = vmatprep.subr.mxu0 %v438
    %3856 = vmatpush1.msra.mxu0 %v437
    %3857 = vmatprep.subr.mxu0 %v454
    %3858 = vmatpush1.msra.mxu0 %v453
    %3859 = vmatprep.subr.mxu0 %v470
    %3860 = vmatpush1.msra.mxu0 %v469
    %3861 = vmatprep.subr.mxu0 %v486
    %3862 = vmatpush1.msra.mxu0 %v485
    %3863 = vmatprep.subr.mxu0 %v502
    %3864 = vmatpush1.msra.mxu0 %v501
    %3865 = vmatprep.subr.mxu0 %v518
    %3866 = vmatpush1.msra.mxu0 %v517
    %3867 = vmatprep.subr.mxu0 %v534
    %3868 = vmatpush1.msra.mxu0 %v533
    %3869 = vmatprep.subr.mxu0 %v550
    %3870 = vmatpush1.msra.mxu0 %v549
    %3871 = vmatprep.subr.mxu0 %v566
    %3872 = vmatpush1.msra.mxu0 %v565
    %3873 = vmatprep.subr.mxu0 %v582
    %3874 = vmatpush1.msra.mxu0 %v581
    %3875 = vmatprep.subr.mxu0 %v598
    %3876 = vmatpush1.msra.mxu0 %v597
    %3877 = vmatprep.subr.mxu0 %v614
    %3878 = vmatpush1.msra.mxu0 %v613
    %3879 = vmatprep.subr.mxu0 %v630
    %3880 = vmatpush1.msra.mxu0 %v629
    %3881 = vmatprep.subr.mxu0 %v646
    %3882 = vmatpush1.msra.mxu0 %v645
    %3883 = vmatprep.subr.mxu0 %v662
    %3884 = vmatpush1.msra.mxu0 %v661
    %3885 = vmatprep.subr.mxu0 %v678
    %3886 = vmatpush1.msra.mxu0 %v677
    %3887 = vmatprep.subr.mxu0 %v694
    %3888 = vmatpush1.msra.mxu0 %v693
    %3889 = vmatprep.subr.mxu0 %v710
    %3890 = vmatpush1.msra.mxu0 %v709
    %3891 = vmatprep.subr.mxu0 %v726
    %3892 = vmatpush1.msra.mxu0 %v725
    %3893 = vmatprep.subr.mxu0 %v742
    %3894 = vmatpush1.msra.mxu0 %v741
    %3895 = vmatprep.mubr.f32.mxu0 %v2384
    %3896 = vmatmul.mubr.f32.gmra.mrb[0].mxu0 %v2376
    %v3897 = vpop.f32.mrb[0].mxu0
    %v3898 = vadd.f32 %v2330, %v3897
    %v3899 = vpop.f32.mrb[0].mxu0
    %v3900 = vadd.f32 %v2334, %v3899
    %3901 = vdwg.mxu0
    %3902 = vmatprep.subr.mxu0 %v758
    %3903 = vmatpush1.msra.mxu0 %v757
    %3904 = vmatprep.subr.mxu0 %v774
    %3905 = vmatpush1.msra.mxu0 %v773
    %3906 = vmatprep.subr.mxu0 %v790
    %3907 = vmatpush1.msra.mxu0 %v789
    %3908 = vmatprep.subr.mxu0 %v806
    %3909 = vmatpush1.msra.mxu0 %v805
    %3910 = vmatprep.subr.mxu0 %v822
    %3911 = vmatpush1.msra.mxu0 %v821
    %3912 = vmatprep.subr.mxu0 %v838
    %3913 = vmatpush1.msra.mxu0 %v837
    %3914 = vmatprep.subr.mxu0 %v854
    %3915 = vmatpush1.msra.mxu0 %v853
    %3916 = vmatprep.subr.mxu0 %v870
    %3917 = vmatpush1.msra.mxu0 %v869
    %3918 = vmatprep.subr.mxu0 %v886
    %3919 = vmatpush1.msra.mxu0 %v885
    %3920 = vmatprep.subr.mxu0 %v902
    %3921 = vmatpush1.msra.mxu0 %v901
    %3922 = vmatprep.subr.mxu0 %v918
    %3923 = vmatpush1.msra.mxu0 %v917
    %3924 = vmatprep.subr.mxu0 %v934
    %3925 = vmatpush1.msra.mxu0 %v933
    %3926 = vmatprep.subr.mxu0 %v950
    %3927 = vmatpush1.msra.mxu0 %v949
    %3928 = vmatprep.subr.mxu0 %v966
    %3929 = vmatpush1.msra.mxu0 %v965
    %3930 = vmatprep.subr.mxu0 %v982
    %3931 = vmatpush1.msra.mxu0 %v981
    %3932 = vmatprep.subr.mxu0 %v998
    %3933 = vmatpush1.msra.mxu0 %v997
    %3934 = vmatprep.subr.mxu0 %v1014
    %3935 = vmatpush1.msra.mxu0 %v1013
    %3936 = vmatprep.subr.mxu0 %v1030
    %3937 = vmatpush1.msra.mxu0 %v1029
    %3938 = vmatprep.subr.mxu0 %v1046
    %3939 = vmatpush1.msra.mxu0 %v1045
    %3940 = vmatprep.subr.mxu0 %v1062
    %3941 = vmatpush1.msra.mxu0 %v1061
    %3942 = vmatprep.subr.mxu0 %v1078
    %3943 = vmatpush1.msra.mxu0 %v1077
    %3944 = vmatprep.subr.mxu0 %v1094
    %3945 = vmatpush1.msra.mxu0 %v1093
    %3946 = vmatprep.subr.mxu0 %v1110
    %3947 = vmatpush1.msra.mxu0 %v1109
    %3948 = vmatprep.subr.mxu0 %v1126
    %3949 = vmatpush1.msra.mxu0 %v1125
    %3950 = vmatprep.subr.mxu0 %v1142
    %3951 = vmatpush1.msra.mxu0 %v1141
    %3952 = vmatprep.subr.mxu0 %v1158
    %3953 = vmatpush1.msra.mxu0 %v1157
    %3954 = vmatprep.subr.mxu0 %v1174
    %3955 = vmatpush1.msra.mxu0 %v1173
    %3956 = vmatprep.subr.mxu0 %v1190
    %3957 = vmatpush1.msra.mxu0 %v1189
    %3958 = vmatprep.subr.mxu0 %v1206
    %3959 = vmatpush1.msra.mxu0 %v1205
    %3960 = vmatprep.subr.mxu0 %v1222
    %3961 = vmatpush1.msra.mxu0 %v1221
    %3962 = vmatprep.subr.mxu0 %v1238
    %3963 = vmatpush1.msra.mxu0 %v1237
    %3964 = vmatprep.subr.mxu0 %v1254
    %3965 = vmatpush1.msra.mxu0 %v1253
    %3966 = vmatprep.mubr.f32.mxu0 %v2385
    %3967 = vmatmul.mubr.f32.gmra.mrb[0].mxu0 %v2383
    %v3968 = vpop.f32.mrb[0].mxu0
    %v3969 = vadd.f32 %v3898, %v3968
    %v3970 = vpop.f32.mrb[0].mxu0
    %v3971 = vadd.f32 %v3900, %v3970
    %3972 = vdwg.mxu0
    %3973 = vmatprep.subr.mxu0 %v1270
    %3974 = vmatpush1.msra.mxu0 %v1269
    %3975 = vmatprep.subr.mxu0 %v1286
    %3976 = vmatpush1.msra.mxu0 %v1285
    %3977 = vmatprep.subr.mxu0 %v1302
    %3978 = vmatpush1.msra.mxu0 %v1301
    %3979 = vmatprep.subr.mxu0 %v1318
    %3980 = vmatpush1.msra.mxu0 %v1317
    %3981 = vmatprep.subr.mxu0 %v1334
    %3982 = vmatpush1.msra.mxu0 %v1333
    %3983 = vmatprep.subr.mxu0 %v1350
    %3984 = vmatpush1.msra.mxu0 %v1349
    %3985 = vmatprep.subr.mxu0 %v1366
    %3986 = vmatpush1.msra.mxu0 %v1365
    %3987 = vmatprep.subr.mxu0 %v1382
    %3988 = vmatpush1.msra.mxu0 %v1381
    %3989 = vmatprep.subr.mxu0 %v1398
    %3990 = vmatpush1.msra.mxu0 %v1397
    %3991 = vmatprep.subr.mxu0 %v1414
    %3992 = vmatpush1.msra.mxu0 %v1413
    %3993 = vmatprep.subr.mxu0 %v1430
    %3994 = vmatpush1.msra.mxu0 %v1429
    %3995 = vmatprep.subr.mxu0 %v1446
    %3996 = vmatpush1.msra.mxu0 %v1445
    %3997 = vmatprep.subr.mxu0 %v1462
    %3998 = vmatpush1.msra.mxu0 %v1461
    %3999 = vmatprep.subr.mxu0 %v1478
    %4000 = vmatpush1.msra.mxu0 %v1477
    %4001 = vmatprep.subr.mxu0 %v1494
    %4002 = vmatpush1.msra.mxu0 %v1493
    %4003 = vmatprep.subr.mxu0 %v1510
    %4004 = vmatpush1.msra.mxu0 %v1509
    %4005 = vmatprep.subr.mxu0 %v1526
    %4006 = vmatpush1.msra.mxu0 %v1525
    %4007 = vmatprep.subr.mxu0 %v1542
    %4008 = vmatpush1.msra.mxu0 %v1541
    %4009 = vmatprep.subr.mxu0 %v1558
    %4010 = vmatpush1.msra.mxu0 %v1557
    %4011 = vmatprep.subr.mxu0 %v1574
    %4012 = vmatpush1.msra.mxu0 %v1573
    %4013 = vmatprep.subr.mxu0 %v1590
    %4014 = vmatpush1.msra.mxu0 %v1589
    %4015 = vmatprep.subr.mxu0 %v1606
    %4016 = vmatpush1.msra.mxu0 %v1605
    %4017 = vmatprep.subr.mxu0 %v1622
    %4018 = vmatpush1.msra.mxu0 %v1621
    %4019 = vmatprep.subr.mxu0 %v1638
    %4020 = vmatpush1.msra.mxu0 %v1637
    %4021 = vmatprep.subr.mxu0 %v1654
    %4022 = vmatpush1.msra.mxu0 %v1653
    %4023 = vmatprep.subr.mxu0 %v1670
    %4024 = vmatpush1.msra.mxu0 %v1669
    %4025 = vmatprep.subr.mxu0 %v1686
    %4026 = vmatpush1.msra.mxu0 %v1685
    %4027 = vmatprep.subr.mxu0 %v1702
    %4028 = vmatpush1.msra.mxu0 %v1701
    %4029 = vmatprep.subr.mxu0 %v1718
    %4030 = vmatpush1.msra.mxu0 %v1717
    %4031 = vmatprep.subr.mxu0 %v1734
    %4032 = vmatpush1.msra.mxu0 %v1733
    %4033 = vmatprep.subr.mxu0 %v1750
    %4034 = vmatpush1.msra.mxu0 %v1749
    %4035 = vmatprep.subr.mxu0 %v1766
    %4036 = vmatpush1.msra.mxu0 %v1765
    %4037 = vmatprep.mubr.f32.mxu0 %v2401
    %4038 = vmatmul.mubr.f32.gmra.mrb[0].mxu0 %v2393
    %v4039 = vpop.f32.mrb[0].mxu0
    %v4040 = vadd.f32 %v3969, %v4039
    %v4041 = vpop.f32.mrb[0].mxu0
    %v4042 = vadd.f32 %v3971, %v4041
    %4043 = vdwg.mxu0
    %4044 = vmatprep.subr.mxu0 %v1782
    %4045 = vmatpush1.msra.mxu0 %v1781
    %4046 = vmatprep.subr.mxu0 %v1798
    %4047 = vmatpush1.msra.mxu0 %v1797
    %4048 = vmatprep.subr.mxu0 %v1814
    %4049 = vmatpush1.msra.mxu0 %v1813
    %4050 = vmatprep.subr.mxu0 %v1830
    %4051 = vmatpush1.msra.mxu0 %v1829
    %4052 = vmatprep.subr.mxu0 %v1846
    %4053 = vmatpush1.msra.mxu0 %v1845
    %4054 = vmatprep.subr.mxu0 %v1862
    %4055 = vmatpush1.msra.mxu0 %v1861
    %4056 = vmatprep.subr.mxu0 %v1878
    %4057 = vmatpush1.msra.mxu0 %v1877
    %4058 = vmatprep.subr.mxu0 %v1894
    %4059 = vmatpush1.msra.mxu0 %v1893
    %4060 = vmatprep.subr.mxu0 %v1910
    %4061 = vmatpush1.msra.mxu0 %v1909
    %4062 = vmatprep.subr.mxu0 %v1926
    %4063 = vmatpush1.msra.mxu0 %v1925
    %4064 = vmatprep.subr.mxu0 %v1942
    %4065 = vmatpush1.msra.mxu0 %v1941
    %4066 = vmatprep.subr.mxu0 %v1958
    %4067 = vmatpush1.msra.mxu0 %v1957
    %4068 = vmatprep.subr.mxu0 %v1974
    %4069 = vmatpush1.msra.mxu0 %v1973
    %4070 = vmatprep.subr.mxu0 %v1990
    %4071 = vmatpush1.msra.mxu0 %v1989
    %4072 = vmatprep.subr.mxu0 %v2006
    %4073 = vmatpush1.msra.mxu0 %v2005
    %4074 = vmatprep.subr.mxu0 %v2022
    %4075 = vmatpush1.msra.mxu0 %v2021
    %4076 = vmatprep.subr.mxu0 %v2038
    %4077 = vmatpush1.msra.mxu0 %v2037
    %4078 = vmatprep.subr.mxu0 %v2054
    %4079 = vmatpush1.msra.mxu0 %v2053
    %4080 = vmatprep.subr.mxu0 %v2070
    %4081 = vmatpush1.msra.mxu0 %v2069
    %4082 = vmatprep.subr.mxu0 %v2086
    %4083 = vmatpush1.msra.mxu0 %v2085
    %4084 = vmatprep.subr.mxu0 %v2102
    %4085 = vmatpush1.msra.mxu0 %v2101
    %4086 = vmatprep.subr.mxu0 %v2118
    %4087 = vmatpush1.msra.mxu0 %v2117
    %4088 = vmatprep.subr.mxu0 %v2134
    %4089 = vmatpush1.msra.mxu0 %v2133
    %4090 = vmatprep.subr.mxu0 %v2150
    %4091 = vmatpush1.msra.mxu0 %v2149
    %4092 = vmatprep.subr.mxu0 %v2166
    %4093 = vmatpush1.msra.mxu0 %v2165
    %4094 = vmatprep.subr.mxu0 %v2182
    %4095 = vmatpush1.msra.mxu0 %v2181
    %4096 = vmatprep.subr.mxu0 %v2198
    %4097 = vmatpush1.msra.mxu0 %v2197
    %4098 = vmatprep.subr.mxu0 %v2214
    %4099 = vmatpush1.msra.mxu0 %v2213
    %4100 = vmatprep.subr.mxu0 %v2230
    %4101 = vmatpush1.msra.mxu0 %v2229
    %4102 = vmatprep.subr.mxu0 %v2246
    %4103 = vmatpush1.msra.mxu0 %v2245
    %4104 = vmatprep.subr.mxu0 %v2262
    %4105 = vmatpush1.msra.mxu0 %v2261
    %4106 = vmatprep.subr.mxu0 %v2278
    %4107 = vmatpush1.msra.mxu0 %v2277
    %4108 = vmatprep.mubr.f32.mxu0 %v2402
    %4109 = vmatmul.mubr.f32.gmra.mrb[0].mxu0 %v2400
    %v4110 = vpop.f32.mrb[0].mxu0
    %v4111 = vadd.f32 %v4040, %v4110
    %v4112 = vpop.f32.mrb[0].mxu0
    %v4113 = vadd.f32 %v4042, %v4112
    %4114 = vdwg.mxu0
    %4115 = vmatprep.subr.mxu0 %v248
    %4116 = vmatpush1.msra.mxu0 %v247
    %4117 = vmatprep.subr.mxu0 %v264
    %4118 = vmatpush1.msra.mxu0 %v263
    %4119 = vmatprep.subr.mxu0 %v280
    %4120 = vmatpush1.msra.mxu0 %v279
    %4121 = vmatprep.subr.mxu0 %v296
    %4122 = vmatpush1.msra.mxu0 %v295
    %4123 = vmatprep.subr.mxu0 %v312
    %4124 = vmatpush1.msra.mxu0 %v311
    %4125 = vmatprep.subr.mxu0 %v328
    %4126 = vmatpush1.msra.mxu0 %v327
    %4127 = vmatprep.subr.mxu0 %v344
    %4128 = vmatpush1.msra.mxu0 %v343
    %4129 = vmatprep.subr.mxu0 %v360
    %4130 = vmatpush1.msra.mxu0 %v359
    %4131 = vmatprep.subr.mxu0 %v376
    %4132 = vmatpush1.msra.mxu0 %v375
    %4133 = vmatprep.subr.mxu0 %v392
    %4134 = vmatpush1.msra.mxu0 %v391
    %4135 = vmatprep.subr.mxu0 %v408
    %4136 = vmatpush1.msra.mxu0 %v407
    %4137 = vmatprep.subr.mxu0 %v424
    %4138 = vmatpush1.msra.mxu0 %v423
    %4139 = vmatprep.subr.mxu0 %v440
    %4140 = vmatpush1.msra.mxu0 %v439
    %4141 = vmatprep.subr.mxu0 %v456
    %4142 = vmatpush1.msra.mxu0 %v455
    %4143 = vmatprep.subr.mxu0 %v472
    %4144 = vmatpush1.msra.mxu0 %v471
    %4145 = vmatprep.subr.mxu0 %v488
    %4146 = vmatpush1.msra.mxu0 %v487
    %4147 = vmatprep.subr.mxu0 %v504
    %4148 = vmatpush1.msra.mxu0 %v503
    %4149 = vmatprep.subr.mxu0 %v520
    %4150 = vmatpush1.msra.mxu0 %v519
    %4151 = vmatprep.subr.mxu0 %v536
    %4152 = vmatpush1.msra.mxu0 %v535
    %4153 = vmatprep.subr.mxu0 %v552
    %4154 = vmatpush1.msra.mxu0 %v551
    %4155 = vmatprep.subr.mxu0 %v568
    %4156 = vmatpush1.msra.mxu0 %v567
    %4157 = vmatprep.subr.mxu0 %v584
    %4158 = vmatpush1.msra.mxu0 %v583
    %4159 = vmatprep.subr.mxu0 %v600
    %4160 = vmatpush1.msra.mxu0 %v599
    %4161 = vmatprep.subr.mxu0 %v616
    %4162 = vmatpush1.msra.mxu0 %v615
    %4163 = vmatprep.subr.mxu0 %v632
    %4164 = vmatpush1.msra.mxu0 %v631
    %4165 = vmatprep.subr.mxu0 %v648
    %4166 = vmatpush1.msra.mxu0 %v647
    %4167 = vmatprep.subr.mxu0 %v664
    %4168 = vmatpush1.msra.mxu0 %v663
    %4169 = vmatprep.subr.mxu0 %v680
    %4170 = vmatpush1.msra.mxu0 %v679
    %4171 = vmatprep.subr.mxu0 %v696
    %4172 = vmatpush1.msra.mxu0 %v695
    %4173 = vmatprep.subr.mxu0 %v712
    %4174 = vmatpush1.msra.mxu0 %v711
    %4175 = vmatprep.subr.mxu0 %v728
    %4176 = vmatpush1.msra.mxu0 %v727
    %4177 = vmatprep.subr.mxu0 %v744
    %4178 = vmatpush1.msra.mxu0 %v743
    %4179 = vmatprep.mubr.f32.mxu0 %v2384
    %4180 = vmatmul.mubr.f32.gmra.mrb[0].mxu0 %v2376
    %v4181 = vpop.f32.mrb[0].mxu0
    %v4182 = vadd.f32 %v2338, %v4181
    %v4183 = vpop.f32.mrb[0].mxu0
    %v4184 = vadd.f32 %v2342, %v4183
    %4185 = vdwg.mxu0
    %4186 = vmatprep.subr.mxu0 %v760
    %4187 = vmatpush1.msra.mxu0 %v759
    %4188 = vmatprep.subr.mxu0 %v776
    %4189 = vmatpush1.msra.mxu0 %v775
    %4190 = vmatprep.subr.mxu0 %v792
    %4191 = vmatpush1.msra.mxu0 %v791
    %4192 = vmatprep.subr.mxu0 %v808
    %4193 = vmatpush1.msra.mxu0 %v807
    %4194 = vmatprep.subr.mxu0 %v824
    %4195 = vmatpush1.msra.mxu0 %v823
    %4196 = vmatprep.subr.mxu0 %v840
    %4197 = vmatpush1.msra.mxu0 %v839
    %4198 = vmatprep.subr.mxu0 %v856
    %4199 = vmatpush1.msra.mxu0 %v855
    %4200 = vmatprep.subr.mxu0 %v872
    %4201 = vmatpush1.msra.mxu0 %v871
    %4202 = vmatprep.subr.mxu0 %v888
    %4203 = vmatpush1.msra.mxu0 %v887
    %4204 = vmatprep.subr.mxu0 %v904
    %4205 = vmatpush1.msra.mxu0 %v903
    %4206 = vmatprep.subr.mxu0 %v920
    %4207 = vmatpush1.msra.mxu0 %v919
    %4208 = vmatprep.subr.mxu0 %v936
    %4209 = vmatpush1.msra.mxu0 %v935
    %4210 = vmatprep.subr.mxu0 %v952
    %4211 = vmatpush1.msra.mxu0 %v951
    %4212 = vmatprep.subr.mxu0 %v968
    %4213 = vmatpush1.msra.mxu0 %v967
    %4214 = vmatprep.subr.mxu0 %v984
    %4215 = vmatpush1.msra.mxu0 %v983
    %4216 = vmatprep.subr.mxu0 %v1000
    %4217 = vmatpush1.msra.mxu0 %v999
    %4218 = vmatprep.subr.mxu0 %v1016
    %4219 = vmatpush1.msra.mxu0 %v1015
    %4220 = vmatprep.subr.mxu0 %v1032
    %4221 = vmatpush1.msra.mxu0 %v1031
    %4222 = vmatprep.subr.mxu0 %v1048
    %4223 = vmatpush1.msra.mxu0 %v1047
    %4224 = vmatprep.subr.mxu0 %v1064
    %4225 = vmatpush1.msra.mxu0 %v1063
    %4226 = vmatprep.subr.mxu0 %v1080
    %4227 = vmatpush1.msra.mxu0 %v1079
    %4228 = vmatprep.subr.mxu0 %v1096
    %4229 = vmatpush1.msra.mxu0 %v1095
    %4230 = vmatprep.subr.mxu0 %v1112
    %4231 = vmatpush1.msra.mxu0 %v1111
    %4232 = vmatprep.subr.mxu0 %v1128
    %4233 = vmatpush1.msra.mxu0 %v1127
    %4234 = vmatprep.subr.mxu0 %v1144
    %4235 = vmatpush1.msra.mxu0 %v1143
    %4236 = vmatprep.subr.mxu0 %v1160
    %4237 = vmatpush1.msra.mxu0 %v1159
    %4238 = vmatprep.subr.mxu0 %v1176
    %4239 = vmatpush1.msra.mxu0 %v1175
    %4240 = vmatprep.subr.mxu0 %v1192
    %4241 = vmatpush1.msra.mxu0 %v1191
    %4242 = vmatprep.subr.mxu0 %v1208
    %4243 = vmatpush1.msra.mxu0 %v1207
    %4244 = vmatprep.subr.mxu0 %v1224
    %4245 = vmatpush1.msra.mxu0 %v1223
    %4246 = vmatprep.subr.mxu0 %v1240
    %4247 = vmatpush1.msra.mxu0 %v1239
    %4248 = vmatprep.subr.mxu0 %v1256
    %4249 = vmatpush1.msra.mxu0 %v1255
    %4250 = vmatprep.mubr.f32.mxu0 %v2385
    %4251 = vmatmul.mubr.f32.gmra.mrb[0].mxu0 %v2383
    %v4252 = vpop.f32.mrb[0].mxu0
    %v4253 = vadd.f32 %v4182, %v4252
    %v4254 = vpop.f32.mrb[0].mxu0
    %v4255 = vadd.f32 %v4184, %v4254
    %4256 = vdwg.mxu0
    %4257 = vmatprep.subr.mxu0 %v1272
    %4258 = vmatpush1.msra.mxu0 %v1271
    %4259 = vmatprep.subr.mxu0 %v1288
    %4260 = vmatpush1.msra.mxu0 %v1287
    %4261 = vmatprep.subr.mxu0 %v1304
    %4262 = vmatpush1.msra.mxu0 %v1303
    %4263 = vmatprep.subr.mxu0 %v1320
    %4264 = vmatpush1.msra.mxu0 %v1319
    %4265 = vmatprep.subr.mxu0 %v1336
    %4266 = vmatpush1.msra.mxu0 %v1335
    %4267 = vmatprep.subr.mxu0 %v1352
    %4268 = vmatpush1.msra.mxu0 %v1351
    %4269 = vmatprep.subr.mxu0 %v1368
    %4270 = vmatpush1.msra.mxu0 %v1367
    %4271 = vmatprep.subr.mxu0 %v1384
    %4272 = vmatpush1.msra.mxu0 %v1383
    %4273 = vmatprep.subr.mxu0 %v1400
    %4274 = vmatpush1.msra.mxu0 %v1399
    %4275 = vmatprep.subr.mxu0 %v1416
    %4276 = vmatpush1.msra.mxu0 %v1415
    %4277 = vmatprep.subr.mxu0 %v1432
    %4278 = vmatpush1.msra.mxu0 %v1431
    %4279 = vmatprep.subr.mxu0 %v1448
    %4280 = vmatpush1.msra.mxu0 %v1447
    %4281 = vmatprep.subr.mxu0 %v1464
    %4282 = vmatpush1.msra.mxu0 %v1463
    %4283 = vmatprep.subr.mxu0 %v1480
    %4284 = vmatpush1.msra.mxu0 %v1479
    %4285 = vmatprep.subr.mxu0 %v1496
    %4286 = vmatpush1.msra.mxu0 %v1495
    %4287 = vmatprep.subr.mxu0 %v1512
    %4288 = vmatpush1.msra.mxu0 %v1511
    %4289 = vmatprep.subr.mxu0 %v1528
    %4290 = vmatpush1.msra.mxu0 %v1527
    %4291 = vmatprep.subr.mxu0 %v1544
    %4292 = vmatpush1.msra.mxu0 %v1543
    %4293 = vmatprep.subr.mxu0 %v1560
    %4294 = vmatpush1.msra.mxu0 %v1559
    %4295 = vmatprep.subr.mxu0 %v1576
    %4296 = vmatpush1.msra.mxu0 %v1575
    %4297 = vmatprep.subr.mxu0 %v1592
    %4298 = vmatpush1.msra.mxu0 %v1591
    %4299 = vmatprep.subr.mxu0 %v1608
    %4300 = vmatpush1.msra.mxu0 %v1607
    %4301 = vmatprep.subr.mxu0 %v1624
    %4302 = vmatpush1.msra.mxu0 %v1623
    %4303 = vmatprep.subr.mxu0 %v1640
    %4304 = vmatpush1.msra.mxu0 %v1639
    %4305 = vmatprep.subr.mxu0 %v1656
    %4306 = vmatpush1.msra.mxu0 %v1655
    %4307 = vmatprep.subr.mxu0 %v1672
    %4308 = vmatpush1.msra.mxu0 %v1671
    %4309 = vmatprep.subr.mxu0 %v1688
    %4310 = vmatpush1.msra.mxu0 %v1687
    %4311 = vmatprep.subr.mxu0 %v1704
    %4312 = vmatpush1.msra.mxu0 %v1703
    %4313 = vmatprep.subr.mxu0 %v1720
    %4314 = vmatpush1.msra.mxu0 %v1719
    %4315 = vmatprep.subr.mxu0 %v1736
    %4316 = vmatpush1.msra.mxu0 %v1735
    %4317 = vmatprep.subr.mxu0 %v1752
    %4318 = vmatpush1.msra.mxu0 %v1751
    %4319 = vmatprep.subr.mxu0 %v1768
    %4320 = vmatpush1.msra.mxu0 %v1767
    %4321 = vmatprep.mubr.f32.mxu0 %v2401
    %4322 = vmatmul.mubr.f32.gmra.mrb[0].mxu0 %v2393
    %v4323 = vpop.f32.mrb[0].mxu0
    %v4324 = vadd.f32 %v4253, %v4323
    %v4325 = vpop.f32.mrb[0].mxu0
    %v4326 = vadd.f32 %v4255, %v4325
    %4327 = vdwg.mxu0
    %4328 = vmatprep.subr.mxu0 %v1784
    %4329 = vmatpush1.msra.mxu0 %v1783
    %4330 = vmatprep.subr.mxu0 %v1800
    %4331 = vmatpush1.msra.mxu0 %v1799
    %4332 = vmatprep.subr.mxu0 %v1816
    %4333 = vmatpush1.msra.mxu0 %v1815
    %4334 = vmatprep.subr.mxu0 %v1832
    %4335 = vmatpush1.msra.mxu0 %v1831
    %4336 = vmatprep.subr.mxu0 %v1848
    %4337 = vmatpush1.msra.mxu0 %v1847
    %4338 = vmatprep.subr.mxu0 %v1864
    %4339 = vmatpush1.msra.mxu0 %v1863
    %4340 = vmatprep.subr.mxu0 %v1880
    %4341 = vmatpush1.msra.mxu0 %v1879
    %4342 = vmatprep.subr.mxu0 %v1896
    %4343 = vmatpush1.msra.mxu0 %v1895
    %4344 = vmatprep.subr.mxu0 %v1912
    %4345 = vmatpush1.msra.mxu0 %v1911
    %4346 = vmatprep.subr.mxu0 %v1928
    %4347 = vmatpush1.msra.mxu0 %v1927
    %4348 = vmatprep.subr.mxu0 %v1944
    %4349 = vmatpush1.msra.mxu0 %v1943
    %4350 = vmatprep.subr.mxu0 %v1960
    %4351 = vmatpush1.msra.mxu0 %v1959
    %4352 = vmatprep.subr.mxu0 %v1976
    %4353 = vmatpush1.msra.mxu0 %v1975
    %4354 = vmatprep.subr.mxu0 %v1992
    %4355 = vmatpush1.msra.mxu0 %v1991
    %4356 = vmatprep.subr.mxu0 %v2008
    %4357 = vmatpush1.msra.mxu0 %v2007
    %4358 = vmatprep.subr.mxu0 %v2024
    %4359 = vmatpush1.msra.mxu0 %v2023
    %4360 = vmatprep.subr.mxu0 %v2040
    %4361 = vmatpush1.msra.mxu0 %v2039
    %4362 = vmatprep.subr.mxu0 %v2056
    %4363 = vmatpush1.msra.mxu0 %v2055
    %4364 = vmatprep.subr.mxu0 %v2072
    %4365 = vmatpush1.msra.mxu0 %v2071
    %4366 = vmatprep.subr.mxu0 %v2088
    %4367 = vmatpush1.msra.mxu0 %v2087
    %4368 = vmatprep.subr.mxu0 %v2104
    %4369 = vmatpush1.msra.mxu0 %v2103
    %4370 = vmatprep.subr.mxu0 %v2120
    %4371 = vmatpush1.msra.mxu0 %v2119
    %4372 = vmatprep.subr.mxu0 %v2136
    %4373 = vmatpush1.msra.mxu0 %v2135
    %4374 = vmatprep.subr.mxu0 %v2152
    %4375 = vmatpush1.msra.mxu0 %v2151
    %4376 = vmatprep.subr.mxu0 %v2168
    %4377 = vmatpush1.msra.mxu0 %v2167
    %4378 = vmatprep.subr.mxu0 %v2184
    %4379 = vmatpush1.msra.mxu0 %v2183
    %4380 = vmatprep.subr.mxu0 %v2200
    %4381 = vmatpush1.msra.mxu0 %v2199
    %4382 = vmatprep.subr.mxu0 %v2216
    %4383 = vmatpush1.msra.mxu0 %v2215
    %4384 = vmatprep.subr.mxu0 %v2232
    %4385 = vmatpush1.msra.mxu0 %v2231
    %4386 = vmatprep.subr.mxu0 %v2248
    %4387 = vmatpush1.msra.mxu0 %v2247
    %4388 = vmatprep.subr.mxu0 %v2264
    %4389 = vmatpush1.msra.mxu0 %v2263
    %4390 = vmatprep.subr.mxu0 %v2280
    %4391 = vmatpush1.msra.mxu0 %v2279
    %4392 = vmatprep.mubr.f32.mxu0 %v2402
    %4393 = vmatmul.mubr.f32.gmra.mrb[0].mxu0 %v2400
    %v4394 = vpop.f32.mrb[0].mxu0
    %v4395 = vadd.f32 %v4324, %v4394
    %v4396 = vpop.f32.mrb[0].mxu0
    %v4397 = vadd.f32 %v4326, %v4396
    %4398 = vdwg.mxu0
    %4399 = vmatprep.subr.mxu0 %v250
    %4400 = vmatpush1.msra.mxu0 %v249
    %4401 = vmatprep.subr.mxu0 %v266
    %4402 = vmatpush1.msra.mxu0 %v265
    %4403 = vmatprep.subr.mxu0 %v282
    %4404 = vmatpush1.msra.mxu0 %v281
    %4405 = vmatprep.subr.mxu0 %v298
    %4406 = vmatpush1.msra.mxu0 %v297
    %4407 = vmatprep.subr.mxu0 %v314
    %4408 = vmatpush1.msra.mxu0 %v313
    %4409 = vmatprep.subr.mxu0 %v330
    %4410 = vmatpush1.msra.mxu0 %v329
    %4411 = vmatprep.subr.mxu0 %v346
    %4412 = vmatpush1.msra.mxu0 %v345
    %4413 = vmatprep.subr.mxu0 %v362
    %4414 = vmatpush1.msra.mxu0 %v361
    %4415 = vmatprep.subr.mxu0 %v378
    %4416 = vmatpush1.msra.mxu0 %v377
    %4417 = vmatprep.subr.mxu0 %v394
    %4418 = vmatpush1.msra.mxu0 %v393
    %4419 = vmatprep.subr.mxu0 %v410
    %4420 = vmatpush1.msra.mxu0 %v409
    %4421 = vmatprep.subr.mxu0 %v426
    %4422 = vmatpush1.msra.mxu0 %v425
    %4423 = vmatprep.subr.mxu0 %v442
    %4424 = vmatpush1.msra.mxu0 %v441
    %4425 = vmatprep.subr.mxu0 %v458
    %4426 = vmatpush1.msra.mxu0 %v457
    %4427 = vmatprep.subr.mxu0 %v474
    %4428 = vmatpush1.msra.mxu0 %v473
    %4429 = vmatprep.subr.mxu0 %v490
    %4430 = vmatpush1.msra.mxu0 %v489
    %4431 = vmatprep.subr.mxu0 %v506
    %4432 = vmatpush1.msra.mxu0 %v505
    %4433 = vmatprep.subr.mxu0 %v522
    %4434 = vmatpush1.msra.mxu0 %v521
    %4435 = vmatprep.subr.mxu0 %v538
    %4436 = vmatpush1.msra.mxu0 %v537
    %4437 = vmatprep.subr.mxu0 %v554
    %4438 = vmatpush1.msra.mxu0 %v553
    %4439 = vmatprep.subr.mxu0 %v570
    %4440 = vmatpush1.msra.mxu0 %v569
    %4441 = vmatprep.subr.mxu0 %v586
    %4442 = vmatpush1.msra.mxu0 %v585
    %4443 = vmatprep.subr.mxu0 %v602
    %4444 = vmatpush1.msra.mxu0 %v601
    %4445 = vmatprep.subr.mxu0 %v618
    %4446 = vmatpush1.msra.mxu0 %v617
    %4447 = vmatprep.subr.mxu0 %v634
    %4448 = vmatpush1.msra.mxu0 %v633
    %4449 = vmatprep.subr.mxu0 %v650
    %4450 = vmatpush1.msra.mxu0 %v649
    %4451 = vmatprep.subr.mxu0 %v666
    %4452 = vmatpush1.msra.mxu0 %v665
    %4453 = vmatprep.subr.mxu0 %v682
    %4454 = vmatpush1.msra.mxu0 %v681
    %4455 = vmatprep.subr.mxu0 %v698
    %4456 = vmatpush1.msra.mxu0 %v697
    %4457 = vmatprep.subr.mxu0 %v714
    %4458 = vmatpush1.msra.mxu0 %v713
    %4459 = vmatprep.subr.mxu0 %v730
    %4460 = vmatpush1.msra.mxu0 %v729
    %4461 = vmatprep.subr.mxu0 %v746
    %4462 = vmatpush1.msra.mxu0 %v745
    %4463 = vmatprep.mubr.f32.mxu0 %v2384
    %4464 = vmatmul.mubr.f32.gmra.mrb[0].mxu0 %v2376
    %v4465 = vpop.f32.mrb[0].mxu0
    %v4466 = vadd.f32 %v2346, %v4465
    %v4467 = vpop.f32.mrb[0].mxu0
    %v4468 = vadd.f32 %v2350, %v4467
    %4469 = vdwg.mxu0
    %4470 = vmatprep.subr.mxu0 %v762
    %4471 = vmatpush1.msra.mxu0 %v761
    %4472 = vmatprep.subr.mxu0 %v778
    %4473 = vmatpush1.msra.mxu0 %v777
    %4474 = vmatprep.subr.mxu0 %v794
    %4475 = vmatpush1.msra.mxu0 %v793
    %4476 = vmatprep.subr.mxu0 %v810
    %4477 = vmatpush1.msra.mxu0 %v809
    %4478 = vmatprep.subr.mxu0 %v826
    %4479 = vmatpush1.msra.mxu0 %v825
    %4480 = vmatprep.subr.mxu0 %v842
    %4481 = vmatpush1.msra.mxu0 %v841
    %4482 = vmatprep.subr.mxu0 %v858
    %4483 = vmatpush1.msra.mxu0 %v857
    %4484 = vmatprep.subr.mxu0 %v874
    %4485 = vmatpush1.msra.mxu0 %v873
    %4486 = vmatprep.subr.mxu0 %v890
    %4487 = vmatpush1.msra.mxu0 %v889
    %4488 = vmatprep.subr.mxu0 %v906
    %4489 = vmatpush1.msra.mxu0 %v905
    %4490 = vmatprep.subr.mxu0 %v922
    %4491 = vmatpush1.msra.mxu0 %v921
    %4492 = vmatprep.subr.mxu0 %v938
    %4493 = vmatpush1.msra.mxu0 %v937
    %4494 = vmatprep.subr.mxu0 %v954
    %4495 = vmatpush1.msra.mxu0 %v953
    %4496 = vmatprep.subr.mxu0 %v970
    %4497 = vmatpush1.msra.mxu0 %v969
    %4498 = vmatprep.subr.mxu0 %v986
    %4499 = vmatpush1.msra.mxu0 %v985
    %4500 = vmatprep.subr.mxu0 %v1002
    %4501 = vmatpush1.msra.mxu0 %v1001
    %4502 = vmatprep.subr.mxu0 %v1018
    %4503 = vmatpush1.msra.mxu0 %v1017
    %4504 = vmatprep.subr.mxu0 %v1034
    %4505 = vmatpush1.msra.mxu0 %v1033
    %4506 = vmatprep.subr.mxu0 %v1050
    %4507 = vmatpush1.msra.mxu0 %v1049
    %4508 = vmatprep.subr.mxu0 %v1066
    %4509 = vmatpush1.msra.mxu0 %v1065
    %4510 = vmatprep.subr.mxu0 %v1082
    %4511 = vmatpush1.msra.mxu0 %v1081
    %4512 = vmatprep.subr.mxu0 %v1098
    %4513 = vmatpush1.msra.mxu0 %v1097
    %4514 = vmatprep.subr.mxu0 %v1114
    %4515 = vmatpush1.msra.mxu0 %v1113
    %4516 = vmatprep.subr.mxu0 %v1130
    %4517 = vmatpush1.msra.mxu0 %v1129
    %4518 = vmatprep.subr.mxu0 %v1146
    %4519 = vmatpush1.msra.mxu0 %v1145
    %4520 = vmatprep.subr.mxu0 %v1162
    %4521 = vmatpush1.msra.mxu0 %v1161
    %4522 = vmatprep.subr.mxu0 %v1178
    %4523 = vmatpush1.msra.mxu0 %v1177
    %4524 = vmatprep.subr.mxu0 %v1194
    %4525 = vmatpush1.msra.mxu0 %v1193
    %4526 = vmatprep.subr.mxu0 %v1210
    %4527 = vmatpush1.msra.mxu0 %v1209
    %4528 = vmatprep.subr.mxu0 %v1226
    %4529 = vmatpush1.msra.mxu0 %v1225
    %4530 = vmatprep.subr.mxu0 %v1242
    %4531 = vmatpush1.msra.mxu0 %v1241
    %4532 = vmatprep.subr.mxu0 %v1258
    %4533 = vmatpush1.msra.mxu0 %v1257
    %4534 = vmatprep.mubr.f32.mxu0 %v2385
    %4535 = vmatmul.mubr.f32.gmra.mrb[0].mxu0 %v2383
    %v4536 = vpop.f32.mrb[0].mxu0
    %v4537 = vadd.f32 %v4466, %v4536
    %v4538 = vpop.f32.mrb[0].mxu0
    %v4539 = vadd.f32 %v4468, %v4538
    %4540 = vdwg.mxu0
    %4541 = vmatprep.subr.mxu0 %v1274
    %4542 = vmatpush1.msra.mxu0 %v1273
    %4543 = vmatprep.subr.mxu0 %v1290
    %4544 = vmatpush1.msra.mxu0 %v1289
    %4545 = vmatprep.subr.mxu0 %v1306
    %4546 = vmatpush1.msra.mxu0 %v1305
    %4547 = vmatprep.subr.mxu0 %v1322
    %4548 = vmatpush1.msra.mxu0 %v1321
    %4549 = vmatprep.subr.mxu0 %v1338
    %4550 = vmatpush1.msra.mxu0 %v1337
    %4551 = vmatprep.subr.mxu0 %v1354
    %4552 = vmatpush1.msra.mxu0 %v1353
    %4553 = vmatprep.subr.mxu0 %v1370
    %4554 = vmatpush1.msra.mxu0 %v1369
    %4555 = vmatprep.subr.mxu0 %v1386
    %4556 = vmatpush1.msra.mxu0 %v1385
    %4557 = vmatprep.subr.mxu0 %v1402
    %4558 = vmatpush1.msra.mxu0 %v1401
    %4559 = vmatprep.subr.mxu0 %v1418
    %4560 = vmatpush1.msra.mxu0 %v1417
    %4561 = vmatprep.subr.mxu0 %v1434
    %4562 = vmatpush1.msra.mxu0 %v1433
    %4563 = vmatprep.subr.mxu0 %v1450
    %4564 = vmatpush1.msra.mxu0 %v1449
    %4565 = vmatprep.subr.mxu0 %v1466
    %4566 = vmatpush1.msra.mxu0 %v1465
    %4567 = vmatprep.subr.mxu0 %v1482
    %4568 = vmatpush1.msra.mxu0 %v1481
    %4569 = vmatprep.subr.mxu0 %v1498
    %4570 = vmatpush1.msra.mxu0 %v1497
    %4571 = vmatprep.subr.mxu0 %v1514
    %4572 = vmatpush1.msra.mxu0 %v1513
    %4573 = vmatprep.subr.mxu0 %v1530
    %4574 = vmatpush1.msra.mxu0 %v1529
    %4575 = vmatprep.subr.mxu0 %v1546
    %4576 = vmatpush1.msra.mxu0 %v1545
    %4577 = vmatprep.subr.mxu0 %v1562
    %4578 = vmatpush1.msra.mxu0 %v1561
    %4579 = vmatprep.subr.mxu0 %v1578
    %4580 = vmatpush1.msra.mxu0 %v1577
    %4581 = vmatprep.subr.mxu0 %v1594
    %4582 = vmatpush1.msra.mxu0 %v1593
    %4583 = vmatprep.subr.mxu0 %v1610
    %4584 = vmatpush1.msra.mxu0 %v1609
    %4585 = vmatprep.subr.mxu0 %v1626
    %4586 = vmatpush1.msra.mxu0 %v1625
    %4587 = vmatprep.subr.mxu0 %v1642
    %4588 = vmatpush1.msra.mxu0 %v1641
    %4589 = vmatprep.subr.mxu0 %v1658
    %4590 = vmatpush1.msra.mxu0 %v1657
    %4591 = vmatprep.subr.mxu0 %v1674
    %4592 = vmatpush1.msra.mxu0 %v1673
    %4593 = vmatprep.subr.mxu0 %v1690
    %4594 = vmatpush1.msra.mxu0 %v1689
    %4595 = vmatprep.subr.mxu0 %v1706
    %4596 = vmatpush1.msra.mxu0 %v1705
    %4597 = vmatprep.subr.mxu0 %v1722
    %4598 = vmatpush1.msra.mxu0 %v1721
    %4599 = vmatprep.subr.mxu0 %v1738
    %4600 = vmatpush1.msra.mxu0 %v1737
    %4601 = vmatprep.subr.mxu0 %v1754
    %4602 = vmatpush1.msra.mxu0 %v1753
    %4603 = vmatprep.subr.mxu0 %v1770
    %4604 = vmatpush1.msra.mxu0 %v1769
    %4605 = vmatprep.mubr.f32.mxu0 %v2401
    %4606 = vmatmul.mubr.f32.gmra.mrb[0].mxu0 %v2393
    %v4607 = vpop.f32.mrb[0].mxu0
    %v4608 = vadd.f32 %v4537, %v4607
    %v4609 = vpop.f32.mrb[0].mxu0
    %v4610 = vadd.f32 %v4539, %v4609
    %4611 = vdwg.mxu0
    %4612 = vmatprep.subr.mxu0 %v1786
    %4613 = vmatpush1.msra.mxu0 %v1785
    %4614 = vmatprep.subr.mxu0 %v1802
    %4615 = vmatpush1.msra.mxu0 %v1801
    %4616 = vmatprep.subr.mxu0 %v1818
    %4617 = vmatpush1.msra.mxu0 %v1817
    %4618 = vmatprep.subr.mxu0 %v1834
    %4619 = vmatpush1.msra.mxu0 %v1833
    %4620 = vmatprep.subr.mxu0 %v1850
    %4621 = vmatpush1.msra.mxu0 %v1849
    %4622 = vmatprep.subr.mxu0 %v1866
    %4623 = vmatpush1.msra.mxu0 %v1865
    %4624 = vmatprep.subr.mxu0 %v1882
    %4625 = vmatpush1.msra.mxu0 %v1881
    %4626 = vmatprep.subr.mxu0 %v1898
    %4627 = vmatpush1.msra.mxu0 %v1897
    %4628 = vmatprep.subr.mxu0 %v1914
    %4629 = vmatpush1.msra.mxu0 %v1913
    %4630 = vmatprep.subr.mxu0 %v1930
    %4631 = vmatpush1.msra.mxu0 %v1929
    %4632 = vmatprep.subr.mxu0 %v1946
    %4633 = vmatpush1.msra.mxu0 %v1945
    %4634 = vmatprep.subr.mxu0 %v1962
    %4635 = vmatpush1.msra.mxu0 %v1961
    %4636 = vmatprep.subr.mxu0 %v1978
    %4637 = vmatpush1.msra.mxu0 %v1977
    %4638 = vmatprep.subr.mxu0 %v1994
    %4639 = vmatpush1.msra.mxu0 %v1993
    %4640 = vmatprep.subr.mxu0 %v2010
    %4641 = vmatpush1.msra.mxu0 %v2009
    %4642 = vmatprep.subr.mxu0 %v2026
    %4643 = vmatpush1.msra.mxu0 %v2025
    %4644 = vmatprep.subr.mxu0 %v2042
    %4645 = vmatpush1.msra.mxu0 %v2041
    %4646 = vmatprep.subr.mxu0 %v2058
    %4647 = vmatpush1.msra.mxu0 %v2057
    %4648 = vmatprep.subr.mxu0 %v2074
    %4649 = vmatpush1.msra.mxu0 %v2073
    %4650 = vmatprep.subr.mxu0 %v2090
    %4651 = vmatpush1.msra.mxu0 %v2089
    %4652 = vmatprep.subr.mxu0 %v2106
    %4653 = vmatpush1.msra.mxu0 %v2105
    %4654 = vmatprep.subr.mxu0 %v2122
    %4655 = vmatpush1.msra.mxu0 %v2121
    %4656 = vmatprep.subr.mxu0 %v2138
    %4657 = vmatpush1.msra.mxu0 %v2137
    %4658 = vmatprep.subr.mxu0 %v2154
    %4659 = vmatpush1.msra.mxu0 %v2153
    %4660 = vmatprep.subr.mxu0 %v2170
    %4661 = vmatpush1.msra.mxu0 %v2169
    %4662 = vmatprep.subr.mxu0 %v2186
    %4663 = vmatpush1.msra.mxu0 %v2185
    %4664 = vmatprep.subr.mxu0 %v2202
    %4665 = vmatpush1.msra.mxu0 %v2201
    %4666 = vmatprep.subr.mxu0 %v2218
    %4667 = vmatpush1.msra.mxu0 %v2217
    %4668 = vmatprep.subr.mxu0 %v2234
    %4669 = vmatpush1.msra.mxu0 %v2233
    %4670 = vmatprep.subr.mxu0 %v2250
    %4671 = vmatpush1.msra.mxu0 %v2249
    %4672 = vmatprep.subr.mxu0 %v2266
    %4673 = vmatpush1.msra.mxu0 %v2265
    %4674 = vmatprep.subr.mxu0 %v2282
    %4675 = vmatpush1.msra.mxu0 %v2281
    %4676 = vmatprep.mubr.f32.mxu0 %v2402
    %4677 = vmatmul.mubr.f32.gmra.mrb[0].mxu0 %v2400
    %v4678 = vpop.f32.mrb[0].mxu0
    %v4679 = vadd.f32 %v4608, %v4678
    %v4680 = vpop.f32.mrb[0].mxu0
    %v4681 = vadd.f32 %v4610, %v4680
    %4682 = vdwg.mxu0
    %v4683 = vxor.u32 %v3827, 2147483648
    %v4684 = vxor.u32 %v3829, 2147483648
    %v4685 = vxor.u32 %v4111, 2147483648
    %v4686 = vxor.u32 %v4113, 2147483648
    %v4687 = vxor.u32 %v4395, 2147483648
    %v4688 = vxor.u32 %v4397, 2147483648
    %v4689 = vxor.u32 %v4679, 2147483648
    %v4690 = vxor.u32 %v4681, 2147483648
    %v4691 = vmul.f32 %v4683, 1.442695
    %v4692 = vpow.pop %v4691
    %v4693 = vmul.f32 %v4684, 1.442695
    %v4694 = vpow.pop %v4693
    %v4695 = vmul.f32 %v4685, 1.442695
    %v4696 = vpow.pop %v4695
    %v4697 = vmul.f32 %v4686, 1.442695
    %v4698 = vpow.pop %v4697
    %v4699 = vmul.f32 %v4687, 1.442695
    %v4700 = vpow.pop %v4699
    %v4701 = vmul.f32 %v4688, 1.442695
    %v4702 = vpow.pop %v4701
    %v4703 = vmul.f32 %v4689, 1.442695
    %v4704 = vpow.pop %v4703
    %v4705 = vmul.f32 %v4690, 1.442695
    %v4706 = vpow.pop %v4705
    %v4707 = vadd.f32 %v4692, 1.0
    %v4708 = vadd.f32 %v4694, 1.0
    %v4709 = vadd.f32 %v4696, 1.0
    %v4710 = vadd.f32 %v4698, 1.0
    %v4711 = vadd.f32 %v4700, 1.0
    %v4712 = vadd.f32 %v4702, 1.0
    %v4713 = vadd.f32 %v4704, 1.0
    %v4714 = vadd.f32 %v4706, 1.0
    %v4715 = vrcp.pop %v4707
    %v4716 = vmul.f32 1.0, %v4715
    %v4717 = vrcp.pop %v4708
    %v4718 = vmul.f32 1.0, %v4717
    %v4719 = vrcp.pop %v4709
    %v4720 = vmul.f32 1.0, %v4719
    %v4721 = vrcp.pop %v4710
    %v4722 = vmul.f32 1.0, %v4721
    %v4723 = vrcp.pop %v4711
    %v4724 = vmul.f32 1.0, %v4723
    %v4725 = vrcp.pop %v4712
    %v4726 = vmul.f32 1.0, %v4725
    %v4727 = vrcp.pop %v4713
    %v4728 = vmul.f32 1.0, %v4727
    %v4729 = vrcp.pop %v4714
    %v4730 = vmul.f32 1.0, %v4729
    %v4731 = vmul.f32 %v2691, %v4716
    %v4732 = vmul.f32 %v2693, %v4718
    %v4733 = vmul.f32 %v2975, %v4720
    %v4734 = vmul.f32 %v2977, %v4722
    %v4735 = vmul.f32 %v3259, %v4724
    %v4736 = vmul.f32 %v3261, %v4726
    %v4737 = vmul.f32 %v3543, %v4728
    %v4738 = vmul.f32 %v3545, %v4730
    %v4739 = vld [vmem:[#allocation6] sm:$0xff]
    %v4740 = vld [vmem:[#allocation6 + $0x8] sm:$0xff]
    %v4741 = vld [vmem:[#allocation6 + $0x10] sm:$0xff]
    %v4742 = vld [vmem:[#allocation6 + $0x18] sm:$0xff]
    %v4743 = vld [vmem:[#allocation6 + $0x20] sm:$0xff]
    %v4744 = vld [vmem:[#allocation6 + $0x28] sm:$0xff]
    %v4745 = vld [vmem:[#allocation6 + $0x30] sm:$0xff]
    %v4746 = vld [vmem:[#allocation6 + $0x38] sm:$0xff]
    %v4747 = vld [vmem:[#allocation6 + $0x40] sm:$0xff]
    %v4748 = vld [vmem:[#allocation6 + $0x48] sm:$0xff]
    %v4749 = vld [vmem:[#allocation6 + $0x50] sm:$0xff]
    %v4750 = vld [vmem:[#allocation6 + $0x58] sm:$0xff]
    %v4751 = vld [vmem:[#allocation6 + $0x60] sm:$0xff]
    %v4752 = vld [vmem:[#allocation6 + $0x68] sm:$0xff]
    %v4753 = vld [vmem:[#allocation6 + $0x70] sm:$0xff]
    %v4754 = vld [vmem:[#allocation6 + $0x78] sm:$0xff]
    %v4755 = vld [vmem:[#allocation6 + $0x80] sm:$0xff]
    %v4756 = vld [vmem:[#allocation6 + $0x88] sm:$0xff]
    %v4757 = vld [vmem:[#allocation6 + $0x90] sm:$0xff]
    %v4758 = vld [vmem:[#allocation6 + $0x98] sm:$0xff]
    %v4759 = vld [vmem:[#allocation6 + $0xa0] sm:$0xff]
    %v4760 = vld [vmem:[#allocation6 + $0xa8] sm:$0xff]
    %v4761 = vld [vmem:[#allocation6 + $0xb0] sm:$0xff]
    %v4762 = vld [vmem:[#allocation6 + $0xb8] sm:$0xff]
    %v4763 = vld [vmem:[#allocation6 + $0xc0] sm:$0xff]
    %v4764 = vld [vmem:[#allocation6 + $0xc8] sm:$0xff]
    %v4765 = vld [vmem:[#allocation6 + $0xd0] sm:$0xff]
    %v4766 = vld [vmem:[#allocation6 + $0xd8] sm:$0xff]
    %v4767 = vld [vmem:[#allocation6 + $0xe0] sm:$0xff]
    %v4768 = vld [vmem:[#allocation6 + $0xe8] sm:$0xff]
    %v4769 = vld [vmem:[#allocation6 + $0xf0] sm:$0xff]
    %v4770 = vld [vmem:[#allocation6 + $0xf8] sm:$0xff]
    %v4771 = vld [vmem:[#allocation6 + $0x100] sm:$0xff]
    %v4772 = vld [vmem:[#allocation6 + $0x108] sm:$0xff]
    %v4773 = vld [vmem:[#allocation6 + $0x110] sm:$0xff]
    %v4774 = vld [vmem:[#allocation6 + $0x118] sm:$0xff]
    %v4775 = vld [vmem:[#allocation6 + $0x120] sm:$0xff]
    %v4776 = vld [vmem:[#allocation6 + $0x128] sm:$0xff]
    %v4777 = vld [vmem:[#allocation6 + $0x130] sm:$0xff]
    %v4778 = vld [vmem:[#allocation6 + $0x138] sm:$0xff]
    %v4779 = vld [vmem:[#allocation6 + $0x140] sm:$0xff]
    %v4780 = vld [vmem:[#allocation6 + $0x148] sm:$0xff]
    %v4781 = vld [vmem:[#allocation6 + $0x150] sm:$0xff]
    %v4782 = vld [vmem:[#allocation6 + $0x158] sm:$0xff]
    %v4783 = vld [vmem:[#allocation6 + $0x160] sm:$0xff]
    %v4784 = vld [vmem:[#allocation6 + $0x168] sm:$0xff]
    %v4785 = vld [vmem:[#allocation6 + $0x170] sm:$0xff]
    %v4786 = vld [vmem:[#allocation6 + $0x178] sm:$0xff]
    %v4787 = vld [vmem:[#allocation6 + $0x180] sm:$0xff]
    %v4788 = vld [vmem:[#allocation6 + $0x188] sm:$0xff]
    %v4789 = vld [vmem:[#allocation6 + $0x190] sm:$0xff]
    %v4790 = vld [vmem:[#allocation6 + $0x198] sm:$0xff]
    %v4791 = vld [vmem:[#allocation6 + $0x1a0] sm:$0xff]
    %v4792 = vld [vmem:[#allocation6 + $0x1a8] sm:$0xff]
    %v4793 = vld [vmem:[#allocation6 + $0x1b0] sm:$0xff]
    %v4794 = vld [vmem:[#allocation6 + $0x1b8] sm:$0xff]
    %v4795 = vld [vmem:[#allocation6 + $0x1c0] sm:$0xff]
    %v4796 = vld [vmem:[#allocation6 + $0x1c8] sm:$0xff]
    %v4797 = vld [vmem:[#allocation6 + $0x1d0] sm:$0xff]
    %v4798 = vld [vmem:[#allocation6 + $0x1d8] sm:$0xff]
    %v4799 = vld [vmem:[#allocation6 + $0x1e0] sm:$0xff]
    %v4800 = vld [vmem:[#allocation6 + $0x1e8] sm:$0xff]
    %v4801 = vld [vmem:[#allocation6 + $0x1f0] sm:$0xff]
    %v4802 = vld [vmem:[#allocation6 + $0x1f8] sm:$0xff]
    %v4803 = vld [vmem:[#allocation6 + $0x200] sm:$0xff]
    %v4804 = vld [vmem:[#allocation6 + $0x208] sm:$0xff]
    %v4805 = vld [vmem:[#allocation6 + $0x210] sm:$0xff]
    %v4806 = vld [vmem:[#allocation6 + $0x218] sm:$0xff]
    %v4807 = vld [vmem:[#allocation6 + $0x220] sm:$0xff]
    %v4808 = vld [vmem:[#allocation6 + $0x228] sm:$0xff]
    %v4809 = vld [vmem:[#allocation6 + $0x230] sm:$0xff]
    %v4810 = vld [vmem:[#allocation6 + $0x238] sm:$0xff]
    %v4811 = vld [vmem:[#allocation6 + $0x240] sm:$0xff]
    %v4812 = vld [vmem:[#allocation6 + $0x248] sm:$0xff]
    %v4813 = vld [vmem:[#allocation6 + $0x250] sm:$0xff]
    %v4814 = vld [vmem:[#allocation6 + $0x258] sm:$0xff]
    %v4815 = vld [vmem:[#allocation6 + $0x260] sm:$0xff]
    %v4816 = vld [vmem:[#allocation6 + $0x268] sm:$0xff]
    %v4817 = vld [vmem:[#allocation6 + $0x270] sm:$0xff]
    %v4818 = vld [vmem:[#allocation6 + $0x278] sm:$0xff]
    %v4819 = vld [vmem:[#allocation6 + $0x280] sm:$0xff]
    %v4820 = vld [vmem:[#allocation6 + $0x288] sm:$0xff]
    %v4821 = vld [vmem:[#allocation6 + $0x290] sm:$0xff]
    %v4822 = vld [vmem:[#allocation6 + $0x298] sm:$0xff]
    %v4823 = vld [vmem:[#allocation6 + $0x2a0] sm:$0xff]
    %v4824 = vld [vmem:[#allocation6 + $0x2a8] sm:$0xff]
    %v4825 = vld [vmem:[#allocation6 + $0x2b0] sm:$0xff]
    %v4826 = vld [vmem:[#allocation6 + $0x2b8] sm:$0xff]
    %v4827 = vld [vmem:[#allocation6 + $0x2c0] sm:$0xff]
    %v4828 = vld [vmem:[#allocation6 + $0x2c8] sm:$0xff]
    %v4829 = vld [vmem:[#allocation6 + $0x2d0] sm:$0xff]
    %v4830 = vld [vmem:[#allocation6 + $0x2d8] sm:$0xff]
    %v4831 = vld [vmem:[#allocation6 + $0x2e0] sm:$0xff]
    %v4832 = vld [vmem:[#allocation6 + $0x2e8] sm:$0xff]
    %v4833 = vld [vmem:[#allocation6 + $0x2f0] sm:$0xff]
    %v4834 = vld [vmem:[#allocation6 + $0x2f8] sm:$0xff]
    %v4835 = vld [vmem:[#allocation6 + $0x300] sm:$0xff]
    %v4836 = vld [vmem:[#allocation6 + $0x308] sm:$0xff]
    %v4837 = vld [vmem:[#allocation6 + $0x310] sm:$0xff]
    %v4838 = vld [vmem:[#allocation6 + $0x318] sm:$0xff]
    %v4839 = vld [vmem:[#allocation6 + $0x320] sm:$0xff]
    %v4840 = vld [vmem:[#allocation6 + $0x328] sm:$0xff]
    %v4841 = vld [vmem:[#allocation6 + $0x330] sm:$0xff]
    %v4842 = vld [vmem:[#allocation6 + $0x338] sm:$0xff]
    %v4843 = vld [vmem:[#allocation6 + $0x340] sm:$0xff]
    %v4844 = vld [vmem:[#allocation6 + $0x348] sm:$0xff]
    %v4845 = vld [vmem:[#allocation6 + $0x350] sm:$0xff]
    %v4846 = vld [vmem:[#allocation6 + $0x358] sm:$0xff]
    %v4847 = vld [vmem:[#allocation6 + $0x360] sm:$0xff]
    %v4848 = vld [vmem:[#allocation6 + $0x368] sm:$0xff]
    %v4849 = vld [vmem:[#allocation6 + $0x370] sm:$0xff]
    %v4850 = vld [vmem:[#allocation6 + $0x378] sm:$0xff]
    %v4851 = vld [vmem:[#allocation6 + $0x380] sm:$0xff]
    %v4852 = vld [vmem:[#allocation6 + $0x388] sm:$0xff]
    %v4853 = vld [vmem:[#allocation6 + $0x390] sm:$0xff]
    %v4854 = vld [vmem:[#allocation6 + $0x398] sm:$0xff]
    %v4855 = vld [vmem:[#allocation6 + $0x3a0] sm:$0xff]
    %v4856 = vld [vmem:[#allocation6 + $0x3a8] sm:$0xff]
    %v4857 = vld [vmem:[#allocation6 + $0x3b0] sm:$0xff]
    %v4858 = vld [vmem:[#allocation6 + $0x3b8] sm:$0xff]
    %v4859 = vld [vmem:[#allocation6 + $0x3c0] sm:$0xff]
    %v4860 = vld [vmem:[#allocation6 + $0x3c8] sm:$0xff]
    %v4861 = vld [vmem:[#allocation6 + $0x3d0] sm:$0xff]
    %v4862 = vld [vmem:[#allocation6 + $0x3d8] sm:$0xff]
    %v4863 = vld [vmem:[#allocation6 + $0x3e0] sm:$0xff]
    %v4864 = vld [vmem:[#allocation6 + $0x3e8] sm:$0xff]
    %v4865 = vld [vmem:[#allocation6 + $0x3f0] sm:$0xff]
    %v4866 = vld [vmem:[#allocation6 + $0x3f8] sm:$0xff]
    %v4867 = vld [vmem:[#allocation6 + $0x400] sm:$0xff]
    %v4868 = vld [vmem:[#allocation6 + $0x408] sm:$0xff]
    %v4869 = vld [vmem:[#allocation6 + $0x410] sm:$0xff]
    %v4870 = vld [vmem:[#allocation6 + $0x418] sm:$0xff]
    %v4871 = vld [vmem:[#allocation6 + $0x420] sm:$0xff]
    %v4872 = vld [vmem:[#allocation6 + $0x428] sm:$0xff]
    %v4873 = vld [vmem:[#allocation6 + $0x430] sm:$0xff]
    %v4874 = vld [vmem:[#allocation6 + $0x438] sm:$0xff]
    %v4875 = vld [vmem:[#allocation6 + $0x440] sm:$0xff]
    %v4876 = vld [vmem:[#allocation6 + $0x448] sm:$0xff]
    %v4877 = vld [vmem:[#allocation6 + $0x450] sm:$0xff]
    %v4878 = vld [vmem:[#allocation6 + $0x458] sm:$0xff]
    %v4879 = vld [vmem:[#allocation6 + $0x460] sm:$0xff]
    %v4880 = vld [vmem:[#allocation6 + $0x468] sm:$0xff]
    %v4881 = vld [vmem:[#allocation6 + $0x470] sm:$0xff]
    %v4882 = vld [vmem:[#allocation6 + $0x478] sm:$0xff]
    %v4883 = vld [vmem:[#allocation6 + $0x480] sm:$0xff]
    %v4884 = vld [vmem:[#allocation6 + $0x488] sm:$0xff]
    %v4885 = vld [vmem:[#allocation6 + $0x490] sm:$0xff]
    %v4886 = vld [vmem:[#allocation6 + $0x498] sm:$0xff]
    %v4887 = vld [vmem:[#allocation6 + $0x4a0] sm:$0xff]
    %v4888 = vld [vmem:[#allocation6 + $0x4a8] sm:$0xff]
    %v4889 = vld [vmem:[#allocation6 + $0x4b0] sm:$0xff]
    %v4890 = vld [vmem:[#allocation6 + $0x4b8] sm:$0xff]
    %v4891 = vld [vmem:[#allocation6 + $0x4c0] sm:$0xff]
    %v4892 = vld [vmem:[#allocation6 + $0x4c8] sm:$0xff]
    %v4893 = vld [vmem:[#allocation6 + $0x4d0] sm:$0xff]
    %v4894 = vld [vmem:[#allocation6 + $0x4d8] sm:$0xff]
    %v4895 = vld [vmem:[#allocation6 + $0x4e0] sm:$0xff]
    %v4896 = vld [vmem:[#allocation6 + $0x4e8] sm:$0xff]
    %v4897 = vld [vmem:[#allocation6 + $0x4f0] sm:$0xff]
    %v4898 = vld [vmem:[#allocation6 + $0x4f8] sm:$0xff]
    %v4899 = vld [vmem:[#allocation6 + $0x500] sm:$0xff]
    %v4900 = vld [vmem:[#allocation6 + $0x508] sm:$0xff]
    %v4901 = vld [vmem:[#allocation6 + $0x510] sm:$0xff]
    %v4902 = vld [vmem:[#allocation6 + $0x518] sm:$0xff]
    %v4903 = vld [vmem:[#allocation6 + $0x520] sm:$0xff]
    %v4904 = vld [vmem:[#allocation6 + $0x528] sm:$0xff]
    %v4905 = vld [vmem:[#allocation6 + $0x530] sm:$0xff]
    %v4906 = vld [vmem:[#allocation6 + $0x538] sm:$0xff]
    %v4907 = vld [vmem:[#allocation6 + $0x540] sm:$0xff]
    %v4908 = vld [vmem:[#allocation6 + $0x548] sm:$0xff]
    %v4909 = vld [vmem:[#allocation6 + $0x550] sm:$0xff]
    %v4910 = vld [vmem:[#allocation6 + $0x558] sm:$0xff]
    %v4911 = vld [vmem:[#allocation6 + $0x560] sm:$0xff]
    %v4912 = vld [vmem:[#allocation6 + $0x568] sm:$0xff]
    %v4913 = vld [vmem:[#allocation6 + $0x570] sm:$0xff]
    %v4914 = vld [vmem:[#allocation6 + $0x578] sm:$0xff]
    %v4915 = vld [vmem:[#allocation6 + $0x580] sm:$0xff]
    %v4916 = vld [vmem:[#allocation6 + $0x588] sm:$0xff]
    %v4917 = vld [vmem:[#allocation6 + $0x590] sm:$0xff]
    %v4918 = vld [vmem:[#allocation6 + $0x598] sm:$0xff]
    %v4919 = vld [vmem:[#allocation6 + $0x5a0] sm:$0xff]
    %v4920 = vld [vmem:[#allocation6 + $0x5a8] sm:$0xff]
    %v4921 = vld [vmem:[#allocation6 + $0x5b0] sm:$0xff]
    %v4922 = vld [vmem:[#allocation6 + $0x5b8] sm:$0xff]
    %v4923 = vld [vmem:[#allocation6 + $0x5c0] sm:$0xff]
    %v4924 = vld [vmem:[#allocation6 + $0x5c8] sm:$0xff]
    %v4925 = vld [vmem:[#allocation6 + $0x5d0] sm:$0xff]
    %v4926 = vld [vmem:[#allocation6 + $0x5d8] sm:$0xff]
    %v4927 = vld [vmem:[#allocation6 + $0x5e0] sm:$0xff]
    %v4928 = vld [vmem:[#allocation6 + $0x5e8] sm:$0xff]
    %v4929 = vld [vmem:[#allocation6 + $0x5f0] sm:$0xff]
    %v4930 = vld [vmem:[#allocation6 + $0x5f8] sm:$0xff]
    %v4931 = vld [vmem:[#allocation6 + $0x600] sm:$0xff]
    %v4932 = vld [vmem:[#allocation6 + $0x608] sm:$0xff]
    %v4933 = vld [vmem:[#allocation6 + $0x610] sm:$0xff]
    %v4934 = vld [vmem:[#allocation6 + $0x618] sm:$0xff]
    %v4935 = vld [vmem:[#allocation6 + $0x620] sm:$0xff]
    %v4936 = vld [vmem:[#allocation6 + $0x628] sm:$0xff]
    %v4937 = vld [vmem:[#allocation6 + $0x630] sm:$0xff]
    %v4938 = vld [vmem:[#allocation6 + $0x638] sm:$0xff]
    %v4939 = vld [vmem:[#allocation6 + $0x640] sm:$0xff]
    %v4940 = vld [vmem:[#allocation6 + $0x648] sm:$0xff]
    %v4941 = vld [vmem:[#allocation6 + $0x650] sm:$0xff]
    %v4942 = vld [vmem:[#allocation6 + $0x658] sm:$0xff]
    %v4943 = vld [vmem:[#allocation6 + $0x660] sm:$0xff]
    %v4944 = vld [vmem:[#allocation6 + $0x668] sm:$0xff]
    %v4945 = vld [vmem:[#allocation6 + $0x670] sm:$0xff]
    %v4946 = vld [vmem:[#allocation6 + $0x678] sm:$0xff]
    %v4947 = vld [vmem:[#allocation6 + $0x680] sm:$0xff]
    %v4948 = vld [vmem:[#allocation6 + $0x688] sm:$0xff]
    %v4949 = vld [vmem:[#allocation6 + $0x690] sm:$0xff]
    %v4950 = vld [vmem:[#allocation6 + $0x698] sm:$0xff]
    %v4951 = vld [vmem:[#allocation6 + $0x6a0] sm:$0xff]
    %v4952 = vld [vmem:[#allocation6 + $0x6a8] sm:$0xff]
    %v4953 = vld [vmem:[#allocation6 + $0x6b0] sm:$0xff]
    %v4954 = vld [vmem:[#allocation6 + $0x6b8] sm:$0xff]
    %v4955 = vld [vmem:[#allocation6 + $0x6c0] sm:$0xff]
    %v4956 = vld [vmem:[#allocation6 + $0x6c8] sm:$0xff]
    %v4957 = vld [vmem:[#allocation6 + $0x6d0] sm:$0xff]
    %v4958 = vld [vmem:[#allocation6 + $0x6d8] sm:$0xff]
    %v4959 = vld [vmem:[#allocation6 + $0x6e0] sm:$0xff]
    %v4960 = vld [vmem:[#allocation6 + $0x6e8] sm:$0xff]
    %v4961 = vld [vmem:[#allocation6 + $0x6f0] sm:$0xff]
    %v4962 = vld [vmem:[#allocation6 + $0x6f8] sm:$0xff]
    %v4963 = vld [vmem:[#allocation6 + $0x700] sm:$0xff]
    %v4964 = vld [vmem:[#allocation6 + $0x708] sm:$0xff]
    %v4965 = vld [vmem:[#allocation6 + $0x710] sm:$0xff]
    %v4966 = vld [vmem:[#allocation6 + $0x718] sm:$0xff]
    %v4967 = vld [vmem:[#allocation6 + $0x720] sm:$0xff]
    %v4968 = vld [vmem:[#allocation6 + $0x728] sm:$0xff]
    %v4969 = vld [vmem:[#allocation6 + $0x730] sm:$0xff]
    %v4970 = vld [vmem:[#allocation6 + $0x738] sm:$0xff]
    %v4971 = vld [vmem:[#allocation6 + $0x740] sm:$0xff]
    %v4972 = vld [vmem:[#allocation6 + $0x748] sm:$0xff]
    %v4973 = vld [vmem:[#allocation6 + $0x750] sm:$0xff]
    %v4974 = vld [vmem:[#allocation6 + $0x758] sm:$0xff]
    %v4975 = vld [vmem:[#allocation6 + $0x760] sm:$0xff]
    %v4976 = vld [vmem:[#allocation6 + $0x768] sm:$0xff]
    %v4977 = vld [vmem:[#allocation6 + $0x770] sm:$0xff]
    %v4978 = vld [vmem:[#allocation6 + $0x778] sm:$0xff]
    %v4979 = vld [vmem:[#allocation6 + $0x780] sm:$0xff]
    %v4980 = vld [vmem:[#allocation6 + $0x788] sm:$0xff]
    %v4981 = vld [vmem:[#allocation6 + $0x790] sm:$0xff]
    %v4982 = vld [vmem:[#allocation6 + $0x798] sm:$0xff]
    %v4983 = vld [vmem:[#allocation6 + $0x7a0] sm:$0xff]
    %v4984 = vld [vmem:[#allocation6 + $0x7a8] sm:$0xff]
    %v4985 = vld [vmem:[#allocation6 + $0x7b0] sm:$0xff]
    %v4986 = vld [vmem:[#allocation6 + $0x7b8] sm:$0xff]
    %v4987 = vld [vmem:[#allocation6 + $0x7c0] sm:$0xff]
    %v4988 = vld [vmem:[#allocation6 + $0x7c8] sm:$0xff]
    %v4989 = vld [vmem:[#allocation6 + $0x7d0] sm:$0xff]
    %v4990 = vld [vmem:[#allocation6 + $0x7d8] sm:$0xff]
    %v4991 = vld [vmem:[#allocation6 + $0x7e0] sm:$0xff]
    %v4992 = vld [vmem:[#allocation6 + $0x7e8] sm:$0xff]
    %v4993 = vld [vmem:[#allocation6 + $0x7f0] sm:$0xff]
    %v4994 = vld [vmem:[#allocation6 + $0x7f8] sm:$0xff]
    %v4995 = vld [vmem:[#allocation6 + $0x800] sm:$0xff]
    %v4996 = vld [vmem:[#allocation6 + $0x808] sm:$0xff]
    %v4997 = vld [vmem:[#allocation6 + $0x810] sm:$0xff]
    %v4998 = vld [vmem:[#allocation6 + $0x818] sm:$0xff]
    %v4999 = vld [vmem:[#allocation6 + $0x820] sm:$0xff]
    %v5000 = vld [vmem:[#allocation6 + $0x828] sm:$0xff]
    %v5001 = vld [vmem:[#allocation6 + $0x830] sm:$0xff]
    %v5002 = vld [vmem:[#allocation6 + $0x838] sm:$0xff]
    %v5003 = vld [vmem:[#allocation6 + $0x840] sm:$0xff]
    %v5004 = vld [vmem:[#allocation6 + $0x848] sm:$0xff]
    %v5005 = vld [vmem:[#allocation6 + $0x850] sm:$0xff]
    %v5006 = vld [vmem:[#allocation6 + $0x858] sm:$0xff]
    %v5007 = vld [vmem:[#allocation6 + $0x860] sm:$0xff]
    %v5008 = vld [vmem:[#allocation6 + $0x868] sm:$0xff]
    %v5009 = vld [vmem:[#allocation6 + $0x870] sm:$0xff]
    %v5010 = vld [vmem:[#allocation6 + $0x878] sm:$0xff]
    %v5011 = vld [vmem:[#allocation6 + $0x880] sm:$0xff]
    %v5012 = vld [vmem:[#allocation6 + $0x888] sm:$0xff]
    %v5013 = vld [vmem:[#allocation6 + $0x890] sm:$0xff]
    %v5014 = vld [vmem:[#allocation6 + $0x898] sm:$0xff]
    %v5015 = vld [vmem:[#allocation6 + $0x8a0] sm:$0xff]
    %v5016 = vld [vmem:[#allocation6 + $0x8a8] sm:$0xff]
    %v5017 = vld [vmem:[#allocation6 + $0x8b0] sm:$0xff]
    %v5018 = vld [vmem:[#allocation6 + $0x8b8] sm:$0xff]
    %v5019 = vld [vmem:[#allocation6 + $0x8c0] sm:$0xff]
    %v5020 = vld [vmem:[#allocation6 + $0x8c8] sm:$0xff]
    %v5021 = vld [vmem:[#allocation6 + $0x8d0] sm:$0xff]
    %v5022 = vld [vmem:[#allocation6 + $0x8d8] sm:$0xff]
    %v5023 = vld [vmem:[#allocation6 + $0x8e0] sm:$0xff]
    %v5024 = vld [vmem:[#allocation6 + $0x8e8] sm:$0xff]
    %v5025 = vld [vmem:[#allocation6 + $0x8f0] sm:$0xff]
    %v5026 = vld [vmem:[#allocation6 + $0x8f8] sm:$0xff]
    %v5027 = vld [vmem:[#allocation6 + $0x900] sm:$0xff]
    %v5028 = vld [vmem:[#allocation6 + $0x908] sm:$0xff]
    %v5029 = vld [vmem:[#allocation6 + $0x910] sm:$0xff]
    %v5030 = vld [vmem:[#allocation6 + $0x918] sm:$0xff]
    %v5031 = vld [vmem:[#allocation6 + $0x920] sm:$0xff]
    %v5032 = vld [vmem:[#allocation6 + $0x928] sm:$0xff]
    %v5033 = vld [vmem:[#allocation6 + $0x930] sm:$0xff]
    %v5034 = vld [vmem:[#allocation6 + $0x938] sm:$0xff]
    %v5035 = vld [vmem:[#allocation6 + $0x940] sm:$0xff]
    %v5036 = vld [vmem:[#allocation6 + $0x948] sm:$0xff]
    %v5037 = vld [vmem:[#allocation6 + $0x950] sm:$0xff]
    %v5038 = vld [vmem:[#allocation6 + $0x958] sm:$0xff]
    %v5039 = vld [vmem:[#allocation6 + $0x960] sm:$0xff]
    %v5040 = vld [vmem:[#allocation6 + $0x968] sm:$0xff]
    %v5041 = vld [vmem:[#allocation6 + $0x970] sm:$0xff]
    %v5042 = vld [vmem:[#allocation6 + $0x978] sm:$0xff]
    %v5043 = vld [vmem:[#allocation6 + $0x980] sm:$0xff]
    %v5044 = vld [vmem:[#allocation6 + $0x988] sm:$0xff]
    %v5045 = vld [vmem:[#allocation6 + $0x990] sm:$0xff]
    %v5046 = vld [vmem:[#allocation6 + $0x998] sm:$0xff]
    %v5047 = vld [vmem:[#allocation6 + $0x9a0] sm:$0xff]
    %v5048 = vld [vmem:[#allocation6 + $0x9a8] sm:$0xff]
    %v5049 = vld [vmem:[#allocation6 + $0x9b0] sm:$0xff]
    %v5050 = vld [vmem:[#allocation6 + $0x9b8] sm:$0xff]
    %v5051 = vld [vmem:[#allocation6 + $0x9c0] sm:$0xff]
    %v5052 = vld [vmem:[#allocation6 + $0x9c8] sm:$0xff]
    %v5053 = vld [vmem:[#allocation6 + $0x9d0] sm:$0xff]
    %v5054 = vld [vmem:[#allocation6 + $0x9d8] sm:$0xff]
    %v5055 = vld [vmem:[#allocation6 + $0x9e0] sm:$0xff]
    %v5056 = vld [vmem:[#allocation6 + $0x9e8] sm:$0xff]
    %v5057 = vld [vmem:[#allocation6 + $0x9f0] sm:$0xff]
    %v5058 = vld [vmem:[#allocation6 + $0x9f8] sm:$0xff]
    %v5059 = vld [vmem:[#allocation6 + $0xa00] sm:$0xff]
    %v5060 = vld [vmem:[#allocation6 + $0xa08] sm:$0xff]
    %v5061 = vld [vmem:[#allocation6 + $0xa10] sm:$0xff]
    %v5062 = vld [vmem:[#allocation6 + $0xa18] sm:$0xff]
    %v5063 = vld [vmem:[#allocation6 + $0xa20] sm:$0xff]
    %v5064 = vld [vmem:[#allocation6 + $0xa28] sm:$0xff]
    %v5065 = vld [vmem:[#allocation6 + $0xa30] sm:$0xff]
    %v5066 = vld [vmem:[#allocation6 + $0xa38] sm:$0xff]
    %v5067 = vld [vmem:[#allocation6 + $0xa40] sm:$0xff]
    %v5068 = vld [vmem:[#allocation6 + $0xa48] sm:$0xff]
    %v5069 = vld [vmem:[#allocation6 + $0xa50] sm:$0xff]
    %v5070 = vld [vmem:[#allocation6 + $0xa58] sm:$0xff]
    %v5071 = vld [vmem:[#allocation6 + $0xa60] sm:$0xff]
    %v5072 = vld [vmem:[#allocation6 + $0xa68] sm:$0xff]
    %v5073 = vld [vmem:[#allocation6 + $0xa70] sm:$0xff]
    %v5074 = vld [vmem:[#allocation6 + $0xa78] sm:$0xff]
    %v5075 = vld [vmem:[#allocation6 + $0xa80] sm:$0xff]
    %v5076 = vld [vmem:[#allocation6 + $0xa88] sm:$0xff]
    %v5077 = vld [vmem:[#allocation6 + $0xa90] sm:$0xff]
    %v5078 = vld [vmem:[#allocation6 + $0xa98] sm:$0xff]
    %v5079 = vld [vmem:[#allocation6 + $0xaa0] sm:$0xff]
    %v5080 = vld [vmem:[#allocation6 + $0xaa8] sm:$0xff]
    %v5081 = vld [vmem:[#allocation6 + $0xab0] sm:$0xff]
    %v5082 = vld [vmem:[#allocation6 + $0xab8] sm:$0xff]
    %v5083 = vld [vmem:[#allocation6 + $0xac0] sm:$0xff]
    %v5084 = vld [vmem:[#allocation6 + $0xac8] sm:$0xff]
    %v5085 = vld [vmem:[#allocation6 + $0xad0] sm:$0xff]
    %v5086 = vld [vmem:[#allocation6 + $0xad8] sm:$0xff]
    %v5087 = vld [vmem:[#allocation6 + $0xae0] sm:$0xff]
    %v5088 = vld [vmem:[#allocation6 + $0xae8] sm:$0xff]
    %v5089 = vld [vmem:[#allocation6 + $0xaf0] sm:$0xff]
    %v5090 = vld [vmem:[#allocation6 + $0xaf8] sm:$0xff]
    %v5091 = vld [vmem:[#allocation6 + $0xb00] sm:$0xff]
    %v5092 = vld [vmem:[#allocation6 + $0xb08] sm:$0xff]
    %v5093 = vld [vmem:[#allocation6 + $0xb10] sm:$0xff]
    %v5094 = vld [vmem:[#allocation6 + $0xb18] sm:$0xff]
    %v5095 = vld [vmem:[#allocation6 + $0xb20] sm:$0xff]
    %v5096 = vld [vmem:[#allocation6 + $0xb28] sm:$0xff]
    %v5097 = vld [vmem:[#allocation6 + $0xb30] sm:$0xff]
    %v5098 = vld [vmem:[#allocation6 + $0xb38] sm:$0xff]
    %v5099 = vld [vmem:[#allocation6 + $0xb40] sm:$0xff]
    %v5100 = vld [vmem:[#allocation6 + $0xb48] sm:$0xff]
    %v5101 = vld [vmem:[#allocation6 + $0xb50] sm:$0xff]
    %v5102 = vld [vmem:[#allocation6 + $0xb58] sm:$0xff]
    %v5103 = vld [vmem:[#allocation6 + $0xb60] sm:$0xff]
    %v5104 = vld [vmem:[#allocation6 + $0xb68] sm:$0xff]
    %v5105 = vld [vmem:[#allocation6 + $0xb70] sm:$0xff]
    %v5106 = vld [vmem:[#allocation6 + $0xb78] sm:$0xff]
    %v5107 = vld [vmem:[#allocation6 + $0xb80] sm:$0xff]
    %v5108 = vld [vmem:[#allocation6 + $0xb88] sm:$0xff]
    %v5109 = vld [vmem:[#allocation6 + $0xb90] sm:$0xff]
    %v5110 = vld [vmem:[#allocation6 + $0xb98] sm:$0xff]
    %v5111 = vld [vmem:[#allocation6 + $0xba0] sm:$0xff]
    %v5112 = vld [vmem:[#allocation6 + $0xba8] sm:$0xff]
    %v5113 = vld [vmem:[#allocation6 + $0xbb0] sm:$0xff]
    %v5114 = vld [vmem:[#allocation6 + $0xbb8] sm:$0xff]
    %v5115 = vld [vmem:[#allocation6 + $0xbc0] sm:$0xff]
    %v5116 = vld [vmem:[#allocation6 + $0xbc8] sm:$0xff]
    %v5117 = vld [vmem:[#allocation6 + $0xbd0] sm:$0xff]
    %v5118 = vld [vmem:[#allocation6 + $0xbd8] sm:$0xff]
    %v5119 = vld [vmem:[#allocation6 + $0xbe0] sm:$0xff]
    %v5120 = vld [vmem:[#allocation6 + $0xbe8] sm:$0xff]
    %v5121 = vld [vmem:[#allocation6 + $0xbf0] sm:$0xff]
    %v5122 = vld [vmem:[#allocation6 + $0xbf8] sm:$0xff]
    %v5123 = vld [vmem:[#allocation6 + $0xc00] sm:$0xff]
    %v5124 = vld [vmem:[#allocation6 + $0xc08] sm:$0xff]
    %v5125 = vld [vmem:[#allocation6 + $0xc10] sm:$0xff]
    %v5126 = vld [vmem:[#allocation6 + $0xc18] sm:$0xff]
    %v5127 = vld [vmem:[#allocation6 + $0xc20] sm:$0xff]
    %v5128 = vld [vmem:[#allocation6 + $0xc28] sm:$0xff]
    %v5129 = vld [vmem:[#allocation6 + $0xc30] sm:$0xff]
    %v5130 = vld [vmem:[#allocation6 + $0xc38] sm:$0xff]
    %v5131 = vld [vmem:[#allocation6 + $0xc40] sm:$0xff]
    %v5132 = vld [vmem:[#allocation6 + $0xc48] sm:$0xff]
    %v5133 = vld [vmem:[#allocation6 + $0xc50] sm:$0xff]
    %v5134 = vld [vmem:[#allocation6 + $0xc58] sm:$0xff]
    %v5135 = vld [vmem:[#allocation6 + $0xc60] sm:$0xff]
    %v5136 = vld [vmem:[#allocation6 + $0xc68] sm:$0xff]
    %v5137 = vld [vmem:[#allocation6 + $0xc70] sm:$0xff]
    %v5138 = vld [vmem:[#allocation6 + $0xc78] sm:$0xff]
    %v5139 = vld [vmem:[#allocation6 + $0xc80] sm:$0xff]
    %v5140 = vld [vmem:[#allocation6 + $0xc88] sm:$0xff]
    %v5141 = vld [vmem:[#allocation6 + $0xc90] sm:$0xff]
    %v5142 = vld [vmem:[#allocation6 + $0xc98] sm:$0xff]
    %v5143 = vld [vmem:[#allocation6 + $0xca0] sm:$0xff]
    %v5144 = vld [vmem:[#allocation6 + $0xca8] sm:$0xff]
    %v5145 = vld [vmem:[#allocation6 + $0xcb0] sm:$0xff]
    %v5146 = vld [vmem:[#allocation6 + $0xcb8] sm:$0xff]
    %v5147 = vld [vmem:[#allocation6 + $0xcc0] sm:$0xff]
    %v5148 = vld [vmem:[#allocation6 + $0xcc8] sm:$0xff]
    %v5149 = vld [vmem:[#allocation6 + $0xcd0] sm:$0xff]
    %v5150 = vld [vmem:[#allocation6 + $0xcd8] sm:$0xff]
    %v5151 = vld [vmem:[#allocation6 + $0xce0] sm:$0xff]
    %v5152 = vld [vmem:[#allocation6 + $0xce8] sm:$0xff]
    %v5153 = vld [vmem:[#allocation6 + $0xcf0] sm:$0xff]
    %v5154 = vld [vmem:[#allocation6 + $0xcf8] sm:$0xff]
    %v5155 = vld [vmem:[#allocation6 + $0xd00] sm:$0xff]
    %v5156 = vld [vmem:[#allocation6 + $0xd08] sm:$0xff]
    %v5157 = vld [vmem:[#allocation6 + $0xd10] sm:$0xff]
    %v5158 = vld [vmem:[#allocation6 + $0xd18] sm:$0xff]
    %v5159 = vld [vmem:[#allocation6 + $0xd20] sm:$0xff]
    %v5160 = vld [vmem:[#allocation6 + $0xd28] sm:$0xff]
    %v5161 = vld [vmem:[#allocation6 + $0xd30] sm:$0xff]
    %v5162 = vld [vmem:[#allocation6 + $0xd38] sm:$0xff]
    %v5163 = vld [vmem:[#allocation6 + $0xd40] sm:$0xff]
    %v5164 = vld [vmem:[#allocation6 + $0xd48] sm:$0xff]
    %v5165 = vld [vmem:[#allocation6 + $0xd50] sm:$0xff]
    %v5166 = vld [vmem:[#allocation6 + $0xd58] sm:$0xff]
    %v5167 = vld [vmem:[#allocation6 + $0xd60] sm:$0xff]
    %v5168 = vld [vmem:[#allocation6 + $0xd68] sm:$0xff]
    %v5169 = vld [vmem:[#allocation6 + $0xd70] sm:$0xff]
    %v5170 = vld [vmem:[#allocation6 + $0xd78] sm:$0xff]
    %v5171 = vld [vmem:[#allocation6 + $0xd80] sm:$0xff]
    %v5172 = vld [vmem:[#allocation6 + $0xd88] sm:$0xff]
    %v5173 = vld [vmem:[#allocation6 + $0xd90] sm:$0xff]
    %v5174 = vld [vmem:[#allocation6 + $0xd98] sm:$0xff]
    %v5175 = vld [vmem:[#allocation6 + $0xda0] sm:$0xff]
    %v5176 = vld [vmem:[#allocation6 + $0xda8] sm:$0xff]
    %v5177 = vld [vmem:[#allocation6 + $0xdb0] sm:$0xff]
    %v5178 = vld [vmem:[#allocation6 + $0xdb8] sm:$0xff]
    %v5179 = vld [vmem:[#allocation6 + $0xdc0] sm:$0xff]
    %v5180 = vld [vmem:[#allocation6 + $0xdc8] sm:$0xff]
    %v5181 = vld [vmem:[#allocation6 + $0xdd0] sm:$0xff]
    %v5182 = vld [vmem:[#allocation6 + $0xdd8] sm:$0xff]
    %v5183 = vld [vmem:[#allocation6 + $0xde0] sm:$0xff]
    %v5184 = vld [vmem:[#allocation6 + $0xde8] sm:$0xff]
    %v5185 = vld [vmem:[#allocation6 + $0xdf0] sm:$0xff]
    %v5186 = vld [vmem:[#allocation6 + $0xdf8] sm:$0xff]
    %v5187 = vld [vmem:[#allocation6 + $0xe00] sm:$0xff]
    %v5188 = vld [vmem:[#allocation6 + $0xe08] sm:$0xff]
    %v5189 = vld [vmem:[#allocation6 + $0xe10] sm:$0xff]
    %v5190 = vld [vmem:[#allocation6 + $0xe18] sm:$0xff]
    %v5191 = vld [vmem:[#allocation6 + $0xe20] sm:$0xff]
    %v5192 = vld [vmem:[#allocation6 + $0xe28] sm:$0xff]
    %v5193 = vld [vmem:[#allocation6 + $0xe30] sm:$0xff]
    %v5194 = vld [vmem:[#allocation6 + $0xe38] sm:$0xff]
    %v5195 = vld [vmem:[#allocation6 + $0xe40] sm:$0xff]
    %v5196 = vld [vmem:[#allocation6 + $0xe48] sm:$0xff]
    %v5197 = vld [vmem:[#allocation6 + $0xe50] sm:$0xff]
    %v5198 = vld [vmem:[#allocation6 + $0xe58] sm:$0xff]
    %v5199 = vld [vmem:[#allocation6 + $0xe60] sm:$0xff]
    %v5200 = vld [vmem:[#allocation6 + $0xe68] sm:$0xff]
    %v5201 = vld [vmem:[#allocation6 + $0xe70] sm:$0xff]
    %v5202 = vld [vmem:[#allocation6 + $0xe78] sm:$0xff]
    %v5203 = vld [vmem:[#allocation6 + $0xe80] sm:$0xff]
    %v5204 = vld [vmem:[#allocation6 + $0xe88] sm:$0xff]
    %v5205 = vld [vmem:[#allocation6 + $0xe90] sm:$0xff]
    %v5206 = vld [vmem:[#allocation6 + $0xe98] sm:$0xff]
    %v5207 = vld [vmem:[#allocation6 + $0xea0] sm:$0xff]
    %v5208 = vld [vmem:[#allocation6 + $0xea8] sm:$0xff]
    %v5209 = vld [vmem:[#allocation6 + $0xeb0] sm:$0xff]
    %v5210 = vld [vmem:[#allocation6 + $0xeb8] sm:$0xff]
    %v5211 = vld [vmem:[#allocation6 + $0xec0] sm:$0xff]
    %v5212 = vld [vmem:[#allocation6 + $0xec8] sm:$0xff]
    %v5213 = vld [vmem:[#allocation6 + $0xed0] sm:$0xff]
    %v5214 = vld [vmem:[#allocation6 + $0xed8] sm:$0xff]
    %v5215 = vld [vmem:[#allocation6 + $0xee0] sm:$0xff]
    %v5216 = vld [vmem:[#allocation6 + $0xee8] sm:$0xff]
    %v5217 = vld [vmem:[#allocation6 + $0xef0] sm:$0xff]
    %v5218 = vld [vmem:[#allocation6 + $0xef8] sm:$0xff]
    %v5219 = vld [vmem:[#allocation6 + $0xf00] sm:$0xff]
    %v5220 = vld [vmem:[#allocation6 + $0xf08] sm:$0xff]
    %v5221 = vld [vmem:[#allocation6 + $0xf10] sm:$0xff]
    %v5222 = vld [vmem:[#allocation6 + $0xf18] sm:$0xff]
    %v5223 = vld [vmem:[#allocation6 + $0xf20] sm:$0xff]
    %v5224 = vld [vmem:[#allocation6 + $0xf28] sm:$0xff]
    %v5225 = vld [vmem:[#allocation6 + $0xf30] sm:$0xff]
    %v5226 = vld [vmem:[#allocation6 + $0xf38] sm:$0xff]
    %v5227 = vld [vmem:[#allocation6 + $0xf40] sm:$0xff]
    %v5228 = vld [vmem:[#allocation6 + $0xf48] sm:$0xff]
    %v5229 = vld [vmem:[#allocation6 + $0xf50] sm:$0xff]
    %v5230 = vld [vmem:[#allocation6 + $0xf58] sm:$0xff]
    %v5231 = vld [vmem:[#allocation6 + $0xf60] sm:$0xff]
    %v5232 = vld [vmem:[#allocation6 + $0xf68] sm:$0xff]
    %v5233 = vld [vmem:[#allocation6 + $0xf70] sm:$0xff]
    %v5234 = vld [vmem:[#allocation6 + $0xf78] sm:$0xff]
    %v5235 = vld [vmem:[#allocation6 + $0xf80] sm:$0xff]
    %v5236 = vld [vmem:[#allocation6 + $0xf88] sm:$0xff]
    %v5237 = vld [vmem:[#allocation6 + $0xf90] sm:$0xff]
    %v5238 = vld [vmem:[#allocation6 + $0xf98] sm:$0xff]
    %v5239 = vld [vmem:[#allocation6 + $0xfa0] sm:$0xff]
    %v5240 = vld [vmem:[#allocation6 + $0xfa8] sm:$0xff]
    %v5241 = vld [vmem:[#allocation6 + $0xfb0] sm:$0xff]
    %v5242 = vld [vmem:[#allocation6 + $0xfb8] sm:$0xff]
    %v5243 = vld [vmem:[#allocation6 + $0xfc0] sm:$0xff]
    %v5244 = vld [vmem:[#allocation6 + $0xfc8] sm:$0xff]
    %v5245 = vld [vmem:[#allocation6 + $0xfd0] sm:$0xff]
    %v5246 = vld [vmem:[#allocation6 + $0xfd8] sm:$0xff]
    %v5247 = vld [vmem:[#allocation6 + $0xfe0] sm:$0xff]
    %v5248 = vld [vmem:[#allocation6 + $0xfe8] sm:$0xff]
    %v5249 = vld [vmem:[#allocation6 + $0xff0] sm:$0xff]
    %v5250 = vld [vmem:[#allocation6 + $0xff8] sm:$0xff]
    %v5251 = vld [vmem:[#allocation6 + $0x1000] sm:$0xff]
    %v5252 = vld [vmem:[#allocation6 + $0x1008] sm:$0xff]
    %v5253 = vld [vmem:[#allocation6 + $0x1010] sm:$0xff]
    %v5254 = vld [vmem:[#allocation6 + $0x1018] sm:$0xff]
    %v5255 = vld [vmem:[#allocation6 + $0x1020] sm:$0xff]
    %v5256 = vld [vmem:[#allocation6 + $0x1028] sm:$0xff]
    %v5257 = vld [vmem:[#allocation6 + $0x1030] sm:$0xff]
    %v5258 = vld [vmem:[#allocation6 + $0x1038] sm:$0xff]
    %v5259 = vld [vmem:[#allocation6 + $0x1040] sm:$0xff]
    %v5260 = vld [vmem:[#allocation6 + $0x1048] sm:$0xff]
    %v5261 = vld [vmem:[#allocation6 + $0x1050] sm:$0xff]
    %v5262 = vld [vmem:[#allocation6 + $0x1058] sm:$0xff]
    %v5263 = vld [vmem:[#allocation6 + $0x1060] sm:$0xff]
    %v5264 = vld [vmem:[#allocation6 + $0x1068] sm:$0xff]
    %v5265 = vld [vmem:[#allocation6 + $0x1070] sm:$0xff]
    %v5266 = vld [vmem:[#allocation6 + $0x1078] sm:$0xff]
    %v5267 = vld [vmem:[#allocation6 + $0x1080] sm:$0xff]
    %v5268 = vld [vmem:[#allocation6 + $0x1088] sm:$0xff]
    %v5269 = vld [vmem:[#allocation6 + $0x1090] sm:$0xff]
    %v5270 = vld [vmem:[#allocation6 + $0x1098] sm:$0xff]
    %v5271 = vld [vmem:[#allocation6 + $0x10a0] sm:$0xff]
    %v5272 = vld [vmem:[#allocation6 + $0x10a8] sm:$0xff]
    %v5273 = vld [vmem:[#allocation6 + $0x10b0] sm:$0xff]
    %v5274 = vld [vmem:[#allocation6 + $0x10b8] sm:$0xff]
    %v5275 = vld [vmem:[#allocation6 + $0x10c0] sm:$0xff]
    %v5276 = vld [vmem:[#allocation6 + $0x10c8] sm:$0xff]
    %v5277 = vld [vmem:[#allocation6 + $0x10d0] sm:$0xff]
    %v5278 = vld [vmem:[#allocation6 + $0x10d8] sm:$0xff]
    %v5279 = vld [vmem:[#allocation6 + $0x10e0] sm:$0xff]
    %v5280 = vld [vmem:[#allocation6 + $0x10e8] sm:$0xff]
    %v5281 = vld [vmem:[#allocation6 + $0x10f0] sm:$0xff]
    %v5282 = vld [vmem:[#allocation6 + $0x10f8] sm:$0xff]
    %v5283 = vld [vmem:[#allocation6 + $0x1100] sm:$0xff]
    %v5284 = vld [vmem:[#allocation6 + $0x1108] sm:$0xff]
    %v5285 = vld [vmem:[#allocation6 + $0x1110] sm:$0xff]
    %v5286 = vld [vmem:[#allocation6 + $0x1118] sm:$0xff]
    %v5287 = vld [vmem:[#allocation6 + $0x1120] sm:$0xff]
    %v5288 = vld [vmem:[#allocation6 + $0x1128] sm:$0xff]
    %v5289 = vld [vmem:[#allocation6 + $0x1130] sm:$0xff]
    %v5290 = vld [vmem:[#allocation6 + $0x1138] sm:$0xff]
    %v5291 = vld [vmem:[#allocation6 + $0x1140] sm:$0xff]
    %v5292 = vld [vmem:[#allocation6 + $0x1148] sm:$0xff]
    %v5293 = vld [vmem:[#allocation6 + $0x1150] sm:$0xff]
    %v5294 = vld [vmem:[#allocation6 + $0x1158] sm:$0xff]
    %v5295 = vld [vmem:[#allocation6 + $0x1160] sm:$0xff]
    %v5296 = vld [vmem:[#allocation6 + $0x1168] sm:$0xff]
    %v5297 = vld [vmem:[#allocation6 + $0x1170] sm:$0xff]
    %v5298 = vld [vmem:[#allocation6 + $0x1178] sm:$0xff]
    %v5299 = vld [vmem:[#allocation6 + $0x1180] sm:$0xff]
    %v5300 = vld [vmem:[#allocation6 + $0x1188] sm:$0xff]
    %v5301 = vld [vmem:[#allocation6 + $0x1190] sm:$0xff]
    %v5302 = vld [vmem:[#allocation6 + $0x1198] sm:$0xff]
    %v5303 = vld [vmem:[#allocation6 + $0x11a0] sm:$0xff]
    %v5304 = vld [vmem:[#allocation6 + $0x11a8] sm:$0xff]
    %v5305 = vld [vmem:[#allocation6 + $0x11b0] sm:$0xff]
    %v5306 = vld [vmem:[#allocation6 + $0x11b8] sm:$0xff]
    %v5307 = vld [vmem:[#allocation6 + $0x11c0] sm:$0xff]
    %v5308 = vld [vmem:[#allocation6 + $0x11c8] sm:$0xff]
    %v5309 = vld [vmem:[#allocation6 + $0x11d0] sm:$0xff]
    %v5310 = vld [vmem:[#allocation6 + $0x11d8] sm:$0xff]
    %v5311 = vld [vmem:[#allocation6 + $0x11e0] sm:$0xff]
    %v5312 = vld [vmem:[#allocation6 + $0x11e8] sm:$0xff]
    %v5313 = vld [vmem:[#allocation6 + $0x11f0] sm:$0xff]
    %v5314 = vld [vmem:[#allocation6 + $0x11f8] sm:$0xff]
    %v5315 = vld [vmem:[#allocation6 + $0x1200] sm:$0xff]
    %v5316 = vld [vmem:[#allocation6 + $0x1208] sm:$0xff]
    %v5317 = vld [vmem:[#allocation6 + $0x1210] sm:$0xff]
    %v5318 = vld [vmem:[#allocation6 + $0x1218] sm:$0xff]
    %v5319 = vld [vmem:[#allocation6 + $0x1220] sm:$0xff]
    %v5320 = vld [vmem:[#allocation6 + $0x1228] sm:$0xff]
    %v5321 = vld [vmem:[#allocation6 + $0x1230] sm:$0xff]
    %v5322 = vld [vmem:[#allocation6 + $0x1238] sm:$0xff]
    %v5323 = vld [vmem:[#allocation6 + $0x1240] sm:$0xff]
    %v5324 = vld [vmem:[#allocation6 + $0x1248] sm:$0xff]
    %v5325 = vld [vmem:[#allocation6 + $0x1250] sm:$0xff]
    %v5326 = vld [vmem:[#allocation6 + $0x1258] sm:$0xff]
    %v5327 = vld [vmem:[#allocation6 + $0x1260] sm:$0xff]
    %v5328 = vld [vmem:[#allocation6 + $0x1268] sm:$0xff]
    %v5329 = vld [vmem:[#allocation6 + $0x1270] sm:$0xff]
    %v5330 = vld [vmem:[#allocation6 + $0x1278] sm:$0xff]
    %v5331 = vld [vmem:[#allocation6 + $0x1280] sm:$0xff]
    %v5332 = vld [vmem:[#allocation6 + $0x1288] sm:$0xff]
    %v5333 = vld [vmem:[#allocation6 + $0x1290] sm:$0xff]
    %v5334 = vld [vmem:[#allocation6 + $0x1298] sm:$0xff]
    %v5335 = vld [vmem:[#allocation6 + $0x12a0] sm:$0xff]
    %v5336 = vld [vmem:[#allocation6 + $0x12a8] sm:$0xff]
    %v5337 = vld [vmem:[#allocation6 + $0x12b0] sm:$0xff]
    %v5338 = vld [vmem:[#allocation6 + $0x12b8] sm:$0xff]
    %v5339 = vld [vmem:[#allocation6 + $0x12c0] sm:$0xff]
    %v5340 = vld [vmem:[#allocation6 + $0x12c8] sm:$0xff]
    %v5341 = vld [vmem:[#allocation6 + $0x12d0] sm:$0xff]
    %v5342 = vld [vmem:[#allocation6 + $0x12d8] sm:$0xff]
    %v5343 = vld [vmem:[#allocation6 + $0x12e0] sm:$0xff]
    %v5344 = vld [vmem:[#allocation6 + $0x12e8] sm:$0xff]
    %v5345 = vld [vmem:[#allocation6 + $0x12f0] sm:$0xff]
    %v5346 = vld [vmem:[#allocation6 + $0x12f8] sm:$0xff]
    %v5347 = vld [vmem:[#allocation6 + $0x1300] sm:$0xff]
    %v5348 = vld [vmem:[#allocation6 + $0x1308] sm:$0xff]
    %v5349 = vld [vmem:[#allocation6 + $0x1310] sm:$0xff]
    %v5350 = vld [vmem:[#allocation6 + $0x1318] sm:$0xff]
    %v5351 = vld [vmem:[#allocation6 + $0x1320] sm:$0xff]
    %v5352 = vld [vmem:[#allocation6 + $0x1328] sm:$0xff]
    %v5353 = vld [vmem:[#allocation6 + $0x1330] sm:$0xff]
    %v5354 = vld [vmem:[#allocation6 + $0x1338] sm:$0xff]
    %v5355 = vld [vmem:[#allocation6 + $0x1340] sm:$0xff]
    %v5356 = vld [vmem:[#allocation6 + $0x1348] sm:$0xff]
    %v5357 = vld [vmem:[#allocation6 + $0x1350] sm:$0xff]
    %v5358 = vld [vmem:[#allocation6 + $0x1358] sm:$0xff]
    %v5359 = vld [vmem:[#allocation6 + $0x1360] sm:$0xff]
    %v5360 = vld [vmem:[#allocation6 + $0x1368] sm:$0xff]
    %v5361 = vld [vmem:[#allocation6 + $0x1370] sm:$0xff]
    %v5362 = vld [vmem:[#allocation6 + $0x1378] sm:$0xff]
    %v5363 = vld [vmem:[#allocation6 + $0x1380] sm:$0xff]
    %v5364 = vld [vmem:[#allocation6 + $0x1388] sm:$0xff]
    %v5365 = vld [vmem:[#allocation6 + $0x1390] sm:$0xff]
    %v5366 = vld [vmem:[#allocation6 + $0x1398] sm:$0xff]
    %v5367 = vld [vmem:[#allocation6 + $0x13a0] sm:$0xff]
    %v5368 = vld [vmem:[#allocation6 + $0x13a8] sm:$0xff]
    %v5369 = vld [vmem:[#allocation6 + $0x13b0] sm:$0xff]
    %v5370 = vld [vmem:[#allocation6 + $0x13b8] sm:$0xff]
    %v5371 = vld [vmem:[#allocation6 + $0x13c0] sm:$0xff]
    %v5372 = vld [vmem:[#allocation6 + $0x13c8] sm:$0xff]
    %v5373 = vld [vmem:[#allocation6 + $0x13d0] sm:$0xff]
    %v5374 = vld [vmem:[#allocation6 + $0x13d8] sm:$0xff]
    %v5375 = vld [vmem:[#allocation6 + $0x13e0] sm:$0xff]
    %v5376 = vld [vmem:[#allocation6 + $0x13e8] sm:$0xff]
    %v5377 = vld [vmem:[#allocation6 + $0x13f0] sm:$0xff]
    %v5378 = vld [vmem:[#allocation6 + $0x13f8] sm:$0xff]
    %v5379 = vld [vmem:[#allocation6 + $0x1400] sm:$0xff]
    %v5380 = vld [vmem:[#allocation6 + $0x1408] sm:$0xff]
    %v5381 = vld [vmem:[#allocation6 + $0x1410] sm:$0xff]
    %v5382 = vld [vmem:[#allocation6 + $0x1418] sm:$0xff]
    %v5383 = vld [vmem:[#allocation6 + $0x1420] sm:$0xff]
    %v5384 = vld [vmem:[#allocation6 + $0x1428] sm:$0xff]
    %v5385 = vld [vmem:[#allocation6 + $0x1430] sm:$0xff]
    %v5386 = vld [vmem:[#allocation6 + $0x1438] sm:$0xff]
    %v5387 = vld [vmem:[#allocation6 + $0x1440] sm:$0xff]
    %v5388 = vld [vmem:[#allocation6 + $0x1448] sm:$0xff]
    %v5389 = vld [vmem:[#allocation6 + $0x1450] sm:$0xff]
    %v5390 = vld [vmem:[#allocation6 + $0x1458] sm:$0xff]
    %v5391 = vld [vmem:[#allocation6 + $0x1460] sm:$0xff]
    %v5392 = vld [vmem:[#allocation6 + $0x1468] sm:$0xff]
    %v5393 = vld [vmem:[#allocation6 + $0x1470] sm:$0xff]
    %v5394 = vld [vmem:[#allocation6 + $0x1478] sm:$0xff]
    %v5395 = vld [vmem:[#allocation6 + $0x1480] sm:$0xff]
    %v5396 = vld [vmem:[#allocation6 + $0x1488] sm:$0xff]
    %v5397 = vld [vmem:[#allocation6 + $0x1490] sm:$0xff]
    %v5398 = vld [vmem:[#allocation6 + $0x1498] sm:$0xff]
    %v5399 = vld [vmem:[#allocation6 + $0x14a0] sm:$0xff]
    %v5400 = vld [vmem:[#allocation6 + $0x14a8] sm:$0xff]
    %v5401 = vld [vmem:[#allocation6 + $0x14b0] sm:$0xff]
    %v5402 = vld [vmem:[#allocation6 + $0x14b8] sm:$0xff]
    %v5403 = vld [vmem:[#allocation6 + $0x14c0] sm:$0xff]
    %v5404 = vld [vmem:[#allocation6 + $0x14c8] sm:$0xff]
    %v5405 = vld [vmem:[#allocation6 + $0x14d0] sm:$0xff]
    %v5406 = vld [vmem:[#allocation6 + $0x14d8] sm:$0xff]
    %v5407 = vld [vmem:[#allocation6 + $0x14e0] sm:$0xff]
    %v5408 = vld [vmem:[#allocation6 + $0x14e8] sm:$0xff]
    %v5409 = vld [vmem:[#allocation6 + $0x14f0] sm:$0xff]
    %v5410 = vld [vmem:[#allocation6 + $0x14f8] sm:$0xff]
    %v5411 = vld [vmem:[#allocation6 + $0x1500] sm:$0xff]
    %v5412 = vld [vmem:[#allocation6 + $0x1508] sm:$0xff]
    %v5413 = vld [vmem:[#allocation6 + $0x1510] sm:$0xff]
    %v5414 = vld [vmem:[#allocation6 + $0x1518] sm:$0xff]
    %v5415 = vld [vmem:[#allocation6 + $0x1520] sm:$0xff]
    %v5416 = vld [vmem:[#allocation6 + $0x1528] sm:$0xff]
    %v5417 = vld [vmem:[#allocation6 + $0x1530] sm:$0xff]
    %v5418 = vld [vmem:[#allocation6 + $0x1538] sm:$0xff]
    %v5419 = vld [vmem:[#allocation6 + $0x1540] sm:$0xff]
    %v5420 = vld [vmem:[#allocation6 + $0x1548] sm:$0xff]
    %v5421 = vld [vmem:[#allocation6 + $0x1550] sm:$0xff]
    %v5422 = vld [vmem:[#allocation6 + $0x1558] sm:$0xff]
    %v5423 = vld [vmem:[#allocation6 + $0x1560] sm:$0xff]
    %v5424 = vld [vmem:[#allocation6 + $0x1568] sm:$0xff]
    %v5425 = vld [vmem:[#allocation6 + $0x1570] sm:$0xff]
    %v5426 = vld [vmem:[#allocation6 + $0x1578] sm:$0xff]
    %v5427 = vld [vmem:[#allocation6 + $0x1580] sm:$0xff]
    %v5428 = vld [vmem:[#allocation6 + $0x1588] sm:$0xff]
    %v5429 = vld [vmem:[#allocation6 + $0x1590] sm:$0xff]
    %v5430 = vld [vmem:[#allocation6 + $0x1598] sm:$0xff]
    %v5431 = vld [vmem:[#allocation6 + $0x15a0] sm:$0xff]
    %v5432 = vld [vmem:[#allocation6 + $0x15a8] sm:$0xff]
    %v5433 = vld [vmem:[#allocation6 + $0x15b0] sm:$0xff]
    %v5434 = vld [vmem:[#allocation6 + $0x15b8] sm:$0xff]
    %v5435 = vld [vmem:[#allocation6 + $0x15c0] sm:$0xff]
    %v5436 = vld [vmem:[#allocation6 + $0x15c8] sm:$0xff]
    %v5437 = vld [vmem:[#allocation6 + $0x15d0] sm:$0xff]
    %v5438 = vld [vmem:[#allocation6 + $0x15d8] sm:$0xff]
    %v5439 = vld [vmem:[#allocation6 + $0x15e0] sm:$0xff]
    %v5440 = vld [vmem:[#allocation6 + $0x15e8] sm:$0xff]
    %v5441 = vld [vmem:[#allocation6 + $0x15f0] sm:$0xff]
    %v5442 = vld [vmem:[#allocation6 + $0x15f8] sm:$0xff]
    %v5443 = vld [vmem:[#allocation6 + $0x1600] sm:$0xff]
    %v5444 = vld [vmem:[#allocation6 + $0x1608] sm:$0xff]
    %v5445 = vld [vmem:[#allocation6 + $0x1610] sm:$0xff]
    %v5446 = vld [vmem:[#allocation6 + $0x1618] sm:$0xff]
    %v5447 = vld [vmem:[#allocation6 + $0x1620] sm:$0xff]
    %v5448 = vld [vmem:[#allocation6 + $0x1628] sm:$0xff]
    %v5449 = vld [vmem:[#allocation6 + $0x1630] sm:$0xff]
    %v5450 = vld [vmem:[#allocation6 + $0x1638] sm:$0xff]
    %v5451 = vld [vmem:[#allocation6 + $0x1640] sm:$0xff]
    %v5452 = vld [vmem:[#allocation6 + $0x1648] sm:$0xff]
    %v5453 = vld [vmem:[#allocation6 + $0x1650] sm:$0xff]
    %v5454 = vld [vmem:[#allocation6 + $0x1658] sm:$0xff]
    %v5455 = vld [vmem:[#allocation6 + $0x1660] sm:$0xff]
    %v5456 = vld [vmem:[#allocation6 + $0x1668] sm:$0xff]
    %v5457 = vld [vmem:[#allocation6 + $0x1670] sm:$0xff]
    %v5458 = vld [vmem:[#allocation6 + $0x1678] sm:$0xff]
    %v5459 = vld [vmem:[#allocation6 + $0x1680] sm:$0xff]
    %v5460 = vld [vmem:[#allocation6 + $0x1688] sm:$0xff]
    %v5461 = vld [vmem:[#allocation6 + $0x1690] sm:$0xff]
    %v5462 = vld [vmem:[#allocation6 + $0x1698] sm:$0xff]
    %v5463 = vld [vmem:[#allocation6 + $0x16a0] sm:$0xff]
    %v5464 = vld [vmem:[#allocation6 + $0x16a8] sm:$0xff]
    %v5465 = vld [vmem:[#allocation6 + $0x16b0] sm:$0xff]
    %v5466 = vld [vmem:[#allocation6 + $0x16b8] sm:$0xff]
    %v5467 = vld [vmem:[#allocation6 + $0x16c0] sm:$0xff]
    %v5468 = vld [vmem:[#allocation6 + $0x16c8] sm:$0xff]
    %v5469 = vld [vmem:[#allocation6 + $0x16d0] sm:$0xff]
    %v5470 = vld [vmem:[#allocation6 + $0x16d8] sm:$0xff]
    %v5471 = vld [vmem:[#allocation6 + $0x16e0] sm:$0xff]
    %v5472 = vld [vmem:[#allocation6 + $0x16e8] sm:$0xff]
    %v5473 = vld [vmem:[#allocation6 + $0x16f0] sm:$0xff]
    %v5474 = vld [vmem:[#allocation6 + $0x16f8] sm:$0xff]
    %v5475 = vld [vmem:[#allocation6 + $0x1700] sm:$0xff]
    %v5476 = vld [vmem:[#allocation6 + $0x1708] sm:$0xff]
    %v5477 = vld [vmem:[#allocation6 + $0x1710] sm:$0xff]
    %v5478 = vld [vmem:[#allocation6 + $0x1718] sm:$0xff]
    %v5479 = vld [vmem:[#allocation6 + $0x1720] sm:$0xff]
    %v5480 = vld [vmem:[#allocation6 + $0x1728] sm:$0xff]
    %v5481 = vld [vmem:[#allocation6 + $0x1730] sm:$0xff]
    %v5482 = vld [vmem:[#allocation6 + $0x1738] sm:$0xff]
    %v5483 = vld [vmem:[#allocation6 + $0x1740] sm:$0xff]
    %v5484 = vld [vmem:[#allocation6 + $0x1748] sm:$0xff]
    %v5485 = vld [vmem:[#allocation6 + $0x1750] sm:$0xff]
    %v5486 = vld [vmem:[#allocation6 + $0x1758] sm:$0xff]
    %v5487 = vld [vmem:[#allocation6 + $0x1760] sm:$0xff]
    %v5488 = vld [vmem:[#allocation6 + $0x1768] sm:$0xff]
    %v5489 = vld [vmem:[#allocation6 + $0x1770] sm:$0xff]
    %v5490 = vld [vmem:[#allocation6 + $0x1778] sm:$0xff]
    %v5491 = vld [vmem:[#allocation6 + $0x1780] sm:$0xff]
    %v5492 = vld [vmem:[#allocation6 + $0x1788] sm:$0xff]
    %v5493 = vld [vmem:[#allocation6 + $0x1790] sm:$0xff]
    %v5494 = vld [vmem:[#allocation6 + $0x1798] sm:$0xff]
    %v5495 = vld [vmem:[#allocation6 + $0x17a0] sm:$0xff]
    %v5496 = vld [vmem:[#allocation6 + $0x17a8] sm:$0xff]
    %v5497 = vld [vmem:[#allocation6 + $0x17b0] sm:$0xff]
    %v5498 = vld [vmem:[#allocation6 + $0x17b8] sm:$0xff]
    %v5499 = vld [vmem:[#allocation6 + $0x17c0] sm:$0xff]
    %v5500 = vld [vmem:[#allocation6 + $0x17c8] sm:$0xff]
    %v5501 = vld [vmem:[#allocation6 + $0x17d0] sm:$0xff]
    %v5502 = vld [vmem:[#allocation6 + $0x17d8] sm:$0xff]
    %v5503 = vld [vmem:[#allocation6 + $0x17e0] sm:$0xff]
    %v5504 = vld [vmem:[#allocation6 + $0x17e8] sm:$0xff]
    %v5505 = vld [vmem:[#allocation6 + $0x17f0] sm:$0xff]
    %v5506 = vld [vmem:[#allocation6 + $0x17f8] sm:$0xff]
    %v5507 = vld [vmem:[#allocation6 + $0x1800] sm:$0xff]
    %v5508 = vld [vmem:[#allocation6 + $0x1808] sm:$0xff]
    %v5509 = vld [vmem:[#allocation6 + $0x1810] sm:$0xff]
    %v5510 = vld [vmem:[#allocation6 + $0x1818] sm:$0xff]
    %v5511 = vld [vmem:[#allocation6 + $0x1820] sm:$0xff]
    %v5512 = vld [vmem:[#allocation6 + $0x1828] sm:$0xff]
    %v5513 = vld [vmem:[#allocation6 + $0x1830] sm:$0xff]
    %v5514 = vld [vmem:[#allocation6 + $0x1838] sm:$0xff]
    %v5515 = vld [vmem:[#allocation6 + $0x1840] sm:$0xff]
    %v5516 = vld [vmem:[#allocation6 + $0x1848] sm:$0xff]
    %v5517 = vld [vmem:[#allocation6 + $0x1850] sm:$0xff]
    %v5518 = vld [vmem:[#allocation6 + $0x1858] sm:$0xff]
    %v5519 = vld [vmem:[#allocation6 + $0x1860] sm:$0xff]
    %v5520 = vld [vmem:[#allocation6 + $0x1868] sm:$0xff]
    %v5521 = vld [vmem:[#allocation6 + $0x1870] sm:$0xff]
    %v5522 = vld [vmem:[#allocation6 + $0x1878] sm:$0xff]
    %v5523 = vld [vmem:[#allocation6 + $0x1880] sm:$0xff]
    %v5524 = vld [vmem:[#allocation6 + $0x1888] sm:$0xff]
    %v5525 = vld [vmem:[#allocation6 + $0x1890] sm:$0xff]
    %v5526 = vld [vmem:[#allocation6 + $0x1898] sm:$0xff]
    %v5527 = vld [vmem:[#allocation6 + $0x18a0] sm:$0xff]
    %v5528 = vld [vmem:[#allocation6 + $0x18a8] sm:$0xff]
    %v5529 = vld [vmem:[#allocation6 + $0x18b0] sm:$0xff]
    %v5530 = vld [vmem:[#allocation6 + $0x18b8] sm:$0xff]
    %v5531 = vld [vmem:[#allocation6 + $0x18c0] sm:$0xff]
    %v5532 = vld [vmem:[#allocation6 + $0x18c8] sm:$0xff]
    %v5533 = vld [vmem:[#allocation6 + $0x18d0] sm:$0xff]
    %v5534 = vld [vmem:[#allocation6 + $0x18d8] sm:$0xff]
    %v5535 = vld [vmem:[#allocation6 + $0x18e0] sm:$0xff]
    %v5536 = vld [vmem:[#allocation6 + $0x18e8] sm:$0xff]
    %v5537 = vld [vmem:[#allocation6 + $0x18f0] sm:$0xff]
    %v5538 = vld [vmem:[#allocation6 + $0x18f8] sm:$0xff]
    %v5539 = vld [vmem:[#allocation6 + $0x1900] sm:$0xff]
    %v5540 = vld [vmem:[#allocation6 + $0x1908] sm:$0xff]
    %v5541 = vld [vmem:[#allocation6 + $0x1910] sm:$0xff]
    %v5542 = vld [vmem:[#allocation6 + $0x1918] sm:$0xff]
    %v5543 = vld [vmem:[#allocation6 + $0x1920] sm:$0xff]
    %v5544 = vld [vmem:[#allocation6 + $0x1928] sm:$0xff]
    %v5545 = vld [vmem:[#allocation6 + $0x1930] sm:$0xff]
    %v5546 = vld [vmem:[#allocation6 + $0x1938] sm:$0xff]
    %v5547 = vld [vmem:[#allocation6 + $0x1940] sm:$0xff]
    %v5548 = vld [vmem:[#allocation6 + $0x1948] sm:$0xff]
    %v5549 = vld [vmem:[#allocation6 + $0x1950] sm:$0xff]
    %v5550 = vld [vmem:[#allocation6 + $0x1958] sm:$0xff]
    %v5551 = vld [vmem:[#allocation6 + $0x1960] sm:$0xff]
    %v5552 = vld [vmem:[#allocation6 + $0x1968] sm:$0xff]
    %v5553 = vld [vmem:[#allocation6 + $0x1970] sm:$0xff]
    %v5554 = vld [vmem:[#allocation6 + $0x1978] sm:$0xff]
    %v5555 = vld [vmem:[#allocation6 + $0x1980] sm:$0xff]
    %v5556 = vld [vmem:[#allocation6 + $0x1988] sm:$0xff]
    %v5557 = vld [vmem:[#allocation6 + $0x1990] sm:$0xff]
    %v5558 = vld [vmem:[#allocation6 + $0x1998] sm:$0xff]
    %v5559 = vld [vmem:[#allocation6 + $0x19a0] sm:$0xff]
    %v5560 = vld [vmem:[#allocation6 + $0x19a8] sm:$0xff]
    %v5561 = vld [vmem:[#allocation6 + $0x19b0] sm:$0xff]
    %v5562 = vld [vmem:[#allocation6 + $0x19b8] sm:$0xff]
    %v5563 = vld [vmem:[#allocation6 + $0x19c0] sm:$0xff]
    %v5564 = vld [vmem:[#allocation6 + $0x19c8] sm:$0xff]
    %v5565 = vld [vmem:[#allocation6 + $0x19d0] sm:$0xff]
    %v5566 = vld [vmem:[#allocation6 + $0x19d8] sm:$0xff]
    %v5567 = vld [vmem:[#allocation6 + $0x19e0] sm:$0xff]
    %v5568 = vld [vmem:[#allocation6 + $0x19e8] sm:$0xff]
    %v5569 = vld [vmem:[#allocation6 + $0x19f0] sm:$0xff]
    %v5570 = vld [vmem:[#allocation6 + $0x19f8] sm:$0xff]
    %v5571 = vld [vmem:[#allocation6 + $0x1a00] sm:$0xff]
    %v5572 = vld [vmem:[#allocation6 + $0x1a08] sm:$0xff]
    %v5573 = vld [vmem:[#allocation6 + $0x1a10] sm:$0xff]
    %v5574 = vld [vmem:[#allocation6 + $0x1a18] sm:$0xff]
    %v5575 = vld [vmem:[#allocation6 + $0x1a20] sm:$0xff]
    %v5576 = vld [vmem:[#allocation6 + $0x1a28] sm:$0xff]
    %v5577 = vld [vmem:[#allocation6 + $0x1a30] sm:$0xff]
    %v5578 = vld [vmem:[#allocation6 + $0x1a38] sm:$0xff]
    %v5579 = vld [vmem:[#allocation6 + $0x1a40] sm:$0xff]
    %v5580 = vld [vmem:[#allocation6 + $0x1a48] sm:$0xff]
    %v5581 = vld [vmem:[#allocation6 + $0x1a50] sm:$0xff]
    %v5582 = vld [vmem:[#allocation6 + $0x1a58] sm:$0xff]
    %v5583 = vld [vmem:[#allocation6 + $0x1a60] sm:$0xff]
    %v5584 = vld [vmem:[#allocation6 + $0x1a68] sm:$0xff]
    %v5585 = vld [vmem:[#allocation6 + $0x1a70] sm:$0xff]
    %v5586 = vld [vmem:[#allocation6 + $0x1a78] sm:$0xff]
    %v5587 = vld [vmem:[#allocation6 + $0x1a80] sm:$0xff]
    %v5588 = vld [vmem:[#allocation6 + $0x1a88] sm:$0xff]
    %v5589 = vld [vmem:[#allocation6 + $0x1a90] sm:$0xff]
    %v5590 = vld [vmem:[#allocation6 + $0x1a98] sm:$0xff]
    %v5591 = vld [vmem:[#allocation6 + $0x1aa0] sm:$0xff]
    %v5592 = vld [vmem:[#allocation6 + $0x1aa8] sm:$0xff]
    %v5593 = vld [vmem:[#allocation6 + $0x1ab0] sm:$0xff]
    %v5594 = vld [vmem:[#allocation6 + $0x1ab8] sm:$0xff]
    %v5595 = vld [vmem:[#allocation6 + $0x1ac0] sm:$0xff]
    %v5596 = vld [vmem:[#allocation6 + $0x1ac8] sm:$0xff]
    %v5597 = vld [vmem:[#allocation6 + $0x1ad0] sm:$0xff]
    %v5598 = vld [vmem:[#allocation6 + $0x1ad8] sm:$0xff]
    %v5599 = vld [vmem:[#allocation6 + $0x1ae0] sm:$0xff]
    %v5600 = vld [vmem:[#allocation6 + $0x1ae8] sm:$0xff]
    %v5601 = vld [vmem:[#allocation6 + $0x1af0] sm:$0xff]
    %v5602 = vld [vmem:[#allocation6 + $0x1af8] sm:$0xff]
    %v5603 = vld [vmem:[#allocation6 + $0x1b00] sm:$0xff]
    %v5604 = vld [vmem:[#allocation6 + $0x1b08] sm:$0xff]
    %v5605 = vld [vmem:[#allocation6 + $0x1b10] sm:$0xff]
    %v5606 = vld [vmem:[#allocation6 + $0x1b18] sm:$0xff]
    %v5607 = vld [vmem:[#allocation6 + $0x1b20] sm:$0xff]
    %v5608 = vld [vmem:[#allocation6 + $0x1b28] sm:$0xff]
    %v5609 = vld [vmem:[#allocation6 + $0x1b30] sm:$0xff]
    %v5610 = vld [vmem:[#allocation6 + $0x1b38] sm:$0xff]
    %v5611 = vld [vmem:[#allocation6 + $0x1b40] sm:$0xff]
    %v5612 = vld [vmem:[#allocation6 + $0x1b48] sm:$0xff]
    %v5613 = vld [vmem:[#allocation6 + $0x1b50] sm:$0xff]
    %v5614 = vld [vmem:[#allocation6 + $0x1b58] sm:$0xff]
    %v5615 = vld [vmem:[#allocation6 + $0x1b60] sm:$0xff]
    %v5616 = vld [vmem:[#allocation6 + $0x1b68] sm:$0xff]
    %v5617 = vld [vmem:[#allocation6 + $0x1b70] sm:$0xff]
    %v5618 = vld [vmem:[#allocation6 + $0x1b78] sm:$0xff]
    %v5619 = vld [vmem:[#allocation6 + $0x1b80] sm:$0xff]
    %v5620 = vld [vmem:[#allocation6 + $0x1b88] sm:$0xff]
    %v5621 = vld [vmem:[#allocation6 + $0x1b90] sm:$0xff]
    %v5622 = vld [vmem:[#allocation6 + $0x1b98] sm:$0xff]
    %v5623 = vld [vmem:[#allocation6 + $0x1ba0] sm:$0xff]
    %v5624 = vld [vmem:[#allocation6 + $0x1ba8] sm:$0xff]
    %v5625 = vld [vmem:[#allocation6 + $0x1bb0] sm:$0xff]
    %v5626 = vld [vmem:[#allocation6 + $0x1bb8] sm:$0xff]
    %v5627 = vld [vmem:[#allocation6 + $0x1bc0] sm:$0xff]
    %v5628 = vld [vmem:[#allocation6 + $0x1bc8] sm:$0xff]
    %v5629 = vld [vmem:[#allocation6 + $0x1bd0] sm:$0xff]
    %v5630 = vld [vmem:[#allocation6 + $0x1bd8] sm:$0xff]
    %v5631 = vld [vmem:[#allocation6 + $0x1be0] sm:$0xff]
    %v5632 = vld [vmem:[#allocation6 + $0x1be8] sm:$0xff]
    %v5633 = vld [vmem:[#allocation6 + $0x1bf0] sm:$0xff]
    %v5634 = vld [vmem:[#allocation6 + $0x1bf8] sm:$0xff]
    %v5635 = vld [vmem:[#allocation6 + $0x1c00] sm:$0xff]
    %v5636 = vld [vmem:[#allocation6 + $0x1c08] sm:$0xff]
    %v5637 = vld [vmem:[#allocation6 + $0x1c10] sm:$0xff]
    %v5638 = vld [vmem:[#allocation6 + $0x1c18] sm:$0xff]
    %v5639 = vld [vmem:[#allocation6 + $0x1c20] sm:$0xff]
    %v5640 = vld [vmem:[#allocation6 + $0x1c28] sm:$0xff]
    %v5641 = vld [vmem:[#allocation6 + $0x1c30] sm:$0xff]
    %v5642 = vld [vmem:[#allocation6 + $0x1c38] sm:$0xff]
    %v5643 = vld [vmem:[#allocation6 + $0x1c40] sm:$0xff]
    %v5644 = vld [vmem:[#allocation6 + $0x1c48] sm:$0xff]
    %v5645 = vld [vmem:[#allocation6 + $0x1c50] sm:$0xff]
    %v5646 = vld [vmem:[#allocation6 + $0x1c58] sm:$0xff]
    %v5647 = vld [vmem:[#allocation6 + $0x1c60] sm:$0xff]
    %v5648 = vld [vmem:[#allocation6 + $0x1c68] sm:$0xff]
    %v5649 = vld [vmem:[#allocation6 + $0x1c70] sm:$0xff]
    %v5650 = vld [vmem:[#allocation6 + $0x1c78] sm:$0xff]
    %v5651 = vld [vmem:[#allocation6 + $0x1c80] sm:$0xff]
    %v5652 = vld [vmem:[#allocation6 + $0x1c88] sm:$0xff]
    %v5653 = vld [vmem:[#allocation6 + $0x1c90] sm:$0xff]
    %v5654 = vld [vmem:[#allocation6 + $0x1c98] sm:$0xff]
    %v5655 = vld [vmem:[#allocation6 + $0x1ca0] sm:$0xff]
    %v5656 = vld [vmem:[#allocation6 + $0x1ca8] sm:$0xff]
    %v5657 = vld [vmem:[#allocation6 + $0x1cb0] sm:$0xff]
    %v5658 = vld [vmem:[#allocation6 + $0x1cb8] sm:$0xff]
    %v5659 = vld [vmem:[#allocation6 + $0x1cc0] sm:$0xff]
    %v5660 = vld [vmem:[#allocation6 + $0x1cc8] sm:$0xff]
    %v5661 = vld [vmem:[#allocation6 + $0x1cd0] sm:$0xff]
    %v5662 = vld [vmem:[#allocation6 + $0x1cd8] sm:$0xff]
    %v5663 = vld [vmem:[#allocation6 + $0x1ce0] sm:$0xff]
    %v5664 = vld [vmem:[#allocation6 + $0x1ce8] sm:$0xff]
    %v5665 = vld [vmem:[#allocation6 + $0x1cf0] sm:$0xff]
    %v5666 = vld [vmem:[#allocation6 + $0x1cf8] sm:$0xff]
    %v5667 = vld [vmem:[#allocation6 + $0x1d00] sm:$0xff]
    %v5668 = vld [vmem:[#allocation6 + $0x1d08] sm:$0xff]
    %v5669 = vld [vmem:[#allocation6 + $0x1d10] sm:$0xff]
    %v5670 = vld [vmem:[#allocation6 + $0x1d18] sm:$0xff]
    %v5671 = vld [vmem:[#allocation6 + $0x1d20] sm:$0xff]
    %v5672 = vld [vmem:[#allocation6 + $0x1d28] sm:$0xff]
    %v5673 = vld [vmem:[#allocation6 + $0x1d30] sm:$0xff]
    %v5674 = vld [vmem:[#allocation6 + $0x1d38] sm:$0xff]
    %v5675 = vld [vmem:[#allocation6 + $0x1d40] sm:$0xff]
    %v5676 = vld [vmem:[#allocation6 + $0x1d48] sm:$0xff]
    %v5677 = vld [vmem:[#allocation6 + $0x1d50] sm:$0xff]
    %v5678 = vld [vmem:[#allocation6 + $0x1d58] sm:$0xff]
    %v5679 = vld [vmem:[#allocation6 + $0x1d60] sm:$0xff]
    %v5680 = vld [vmem:[#allocation6 + $0x1d68] sm:$0xff]
    %v5681 = vld [vmem:[#allocation6 + $0x1d70] sm:$0xff]
    %v5682 = vld [vmem:[#allocation6 + $0x1d78] sm:$0xff]
    %v5683 = vld [vmem:[#allocation6 + $0x1d80] sm:$0xff]
    %v5684 = vld [vmem:[#allocation6 + $0x1d88] sm:$0xff]
    %v5685 = vld [vmem:[#allocation6 + $0x1d90] sm:$0xff]
    %v5686 = vld [vmem:[#allocation6 + $0x1d98] sm:$0xff]
    %v5687 = vld [vmem:[#allocation6 + $0x1da0] sm:$0xff]
    %v5688 = vld [vmem:[#allocation6 + $0x1da8] sm:$0xff]
    %v5689 = vld [vmem:[#allocation6 + $0x1db0] sm:$0xff]
    %v5690 = vld [vmem:[#allocation6 + $0x1db8] sm:$0xff]
    %v5691 = vld [vmem:[#allocation6 + $0x1dc0] sm:$0xff]
    %v5692 = vld [vmem:[#allocation6 + $0x1dc8] sm:$0xff]
    %v5693 = vld [vmem:[#allocation6 + $0x1dd0] sm:$0xff]
    %v5694 = vld [vmem:[#allocation6 + $0x1dd8] sm:$0xff]
    %v5695 = vld [vmem:[#allocation6 + $0x1de0] sm:$0xff]
    %v5696 = vld [vmem:[#allocation6 + $0x1de8] sm:$0xff]
    %v5697 = vld [vmem:[#allocation6 + $0x1df0] sm:$0xff]
    %v5698 = vld [vmem:[#allocation6 + $0x1df8] sm:$0xff]
    %v5699 = vld [vmem:[#allocation6 + $0x1e00] sm:$0xff]
    %v5700 = vld [vmem:[#allocation6 + $0x1e08] sm:$0xff]
    %v5701 = vld [vmem:[#allocation6 + $0x1e10] sm:$0xff]
    %v5702 = vld [vmem:[#allocation6 + $0x1e18] sm:$0xff]
    %v5703 = vld [vmem:[#allocation6 + $0x1e20] sm:$0xff]
    %v5704 = vld [vmem:[#allocation6 + $0x1e28] sm:$0xff]
    %v5705 = vld [vmem:[#allocation6 + $0x1e30] sm:$0xff]
    %v5706 = vld [vmem:[#allocation6 + $0x1e38] sm:$0xff]
    %v5707 = vld [vmem:[#allocation6 + $0x1e40] sm:$0xff]
    %v5708 = vld [vmem:[#allocation6 + $0x1e48] sm:$0xff]
    %v5709 = vld [vmem:[#allocation6 + $0x1e50] sm:$0xff]
    %v5710 = vld [vmem:[#allocation6 + $0x1e58] sm:$0xff]
    %v5711 = vld [vmem:[#allocation6 + $0x1e60] sm:$0xff]
    %v5712 = vld [vmem:[#allocation6 + $0x1e68] sm:$0xff]
    %v5713 = vld [vmem:[#allocation6 + $0x1e70] sm:$0xff]
    %v5714 = vld [vmem:[#allocation6 + $0x1e78] sm:$0xff]
    %v5715 = vld [vmem:[#allocation6 + $0x1e80] sm:$0xff]
    %v5716 = vld [vmem:[#allocation6 + $0x1e88] sm:$0xff]
    %v5717 = vld [vmem:[#allocation6 + $0x1e90] sm:$0xff]
    %v5718 = vld [vmem:[#allocation6 + $0x1e98] sm:$0xff]
    %v5719 = vld [vmem:[#allocation6 + $0x1ea0] sm:$0xff]
    %v5720 = vld [vmem:[#allocation6 + $0x1ea8] sm:$0xff]
    %v5721 = vld [vmem:[#allocation6 + $0x1eb0] sm:$0xff]
    %v5722 = vld [vmem:[#allocation6 + $0x1eb8] sm:$0xff]
    %v5723 = vld [vmem:[#allocation6 + $0x1ec0] sm:$0xff]
    %v5724 = vld [vmem:[#allocation6 + $0x1ec8] sm:$0xff]
    %v5725 = vld [vmem:[#allocation6 + $0x1ed0] sm:$0xff]
    %v5726 = vld [vmem:[#allocation6 + $0x1ed8] sm:$0xff]
    %v5727 = vld [vmem:[#allocation6 + $0x1ee0] sm:$0xff]
    %v5728 = vld [vmem:[#allocation6 + $0x1ee8] sm:$0xff]
    %v5729 = vld [vmem:[#allocation6 + $0x1ef0] sm:$0xff]
    %v5730 = vld [vmem:[#allocation6 + $0x1ef8] sm:$0xff]
    %v5731 = vld [vmem:[#allocation6 + $0x1f00] sm:$0xff]
    %v5732 = vld [vmem:[#allocation6 + $0x1f08] sm:$0xff]
    %v5733 = vld [vmem:[#allocation6 + $0x1f10] sm:$0xff]
    %v5734 = vld [vmem:[#allocation6 + $0x1f18] sm:$0xff]
    %v5735 = vld [vmem:[#allocation6 + $0x1f20] sm:$0xff]
    %v5736 = vld [vmem:[#allocation6 + $0x1f28] sm:$0xff]
    %v5737 = vld [vmem:[#allocation6 + $0x1f30] sm:$0xff]
    %v5738 = vld [vmem:[#allocation6 + $0x1f38] sm:$0xff]
    %v5739 = vld [vmem:[#allocation6 + $0x1f40] sm:$0xff]
    %v5740 = vld [vmem:[#allocation6 + $0x1f48] sm:$0xff]
    %v5741 = vld [vmem:[#allocation6 + $0x1f50] sm:$0xff]
    %v5742 = vld [vmem:[#allocation6 + $0x1f58] sm:$0xff]
    %v5743 = vld [vmem:[#allocation6 + $0x1f60] sm:$0xff]
    %v5744 = vld [vmem:[#allocation6 + $0x1f68] sm:$0xff]
    %v5745 = vld [vmem:[#allocation6 + $0x1f70] sm:$0xff]
    %v5746 = vld [vmem:[#allocation6 + $0x1f78] sm:$0xff]
    %v5747 = vld [vmem:[#allocation6 + $0x1f80] sm:$0xff]
    %v5748 = vld [vmem:[#allocation6 + $0x1f88] sm:$0xff]
    %v5749 = vld [vmem:[#allocation6 + $0x1f90] sm:$0xff]
    %v5750 = vld [vmem:[#allocation6 + $0x1f98] sm:$0xff]
    %v5751 = vld [vmem:[#allocation6 + $0x1fa0] sm:$0xff]
    %v5752 = vld [vmem:[#allocation6 + $0x1fa8] sm:$0xff]
    %v5753 = vld [vmem:[#allocation6 + $0x1fb0] sm:$0xff]
    %v5754 = vld [vmem:[#allocation6 + $0x1fb8] sm:$0xff]
    %v5755 = vld [vmem:[#allocation6 + $0x1fc0] sm:$0xff]
    %v5756 = vld [vmem:[#allocation6 + $0x1fc8] sm:$0xff]
    %v5757 = vld [vmem:[#allocation6 + $0x1fd0] sm:$0xff]
    %v5758 = vld [vmem:[#allocation6 + $0x1fd8] sm:$0xff]
    %v5759 = vld [vmem:[#allocation6 + $0x1fe0] sm:$0xff]
    %v5760 = vld [vmem:[#allocation6 + $0x1fe8] sm:$0xff]
    %v5761 = vld [vmem:[#allocation6 + $0x1ff0] sm:$0xff]
    %v5762 = vld [vmem:[#allocation6 + $0x1ff8] sm:$0xff]
    %v5763 = vld [vmem:[#allocation7] sm:$0xff]
    %v5765 = vlaneseq
    %v5766 = vshrl.u32 %v5765, 7
    %v5767 = vsub.s32 0, %v5766
    %v5768 = vrot.slane %v5763, %v5767
    %v5769 = vlaneseq
    %v5770 = vshrl.u32 %v5769, 7
    %v5771 = vsub.s32 1, %v5770
    %v5772 = vrot.slane %v5763, %v5771
    %v5773 = vlaneseq
    %v5774 = vshrl.u32 %v5773, 7
    %v5775 = vsub.s32 2, %v5774
    %v5776 = vrot.slane %v5763, %v5775
    %v5777 = vlaneseq
    %v5778 = vshrl.u32 %v5777, 7
    %v5779 = vsub.s32 3, %v5778
    %v5780 = vrot.slane %v5763, %v5779
    %v5781 = vlaneseq
    %v5782 = vshrl.u32 %v5781, 7
    %v5783 = vsub.s32 4, %v5782
    %v5784 = vrot.slane %v5763, %v5783
    %v5785 = vlaneseq
    %v5786 = vshrl.u32 %v5785, 7
    %v5787 = vsub.s32 5, %v5786
    %v5788 = vrot.slane %v5763, %v5787
    %v5789 = vlaneseq
    %v5790 = vshrl.u32 %v5789, 7
    %v5791 = vsub.s32 6, %v5790
    %v5792 = vrot.slane %v5763, %v5791
    %v5793 = vlaneseq
    %v5794 = vshrl.u32 %v5793, 7
    %v5795 = vsub.s32 7, %v5794
    %v5796 = vrot.slane %v5763, %v5795
    %5805 = vmatprep.subr.mxu0 %v4740
    %5806 = vmatpush1.msra.mxu0 %v4739
    %5807 = vmatprep.subr.mxu0 %v4748
    %5808 = vmatpush1.msra.mxu0 %v4747
    %5809 = vmatprep.subr.mxu0 %v4756
    %5810 = vmatpush1.msra.mxu0 %v4755
    %5811 = vmatprep.subr.mxu0 %v4764
    %5812 = vmatpush1.msra.mxu0 %v4763
    %5813 = vmatprep.subr.mxu0 %v4772
    %5814 = vmatpush1.msra.mxu0 %v4771
    %5815 = vmatprep.subr.mxu0 %v4780
    %5816 = vmatpush1.msra.mxu0 %v4779
    %5817 = vmatprep.subr.mxu0 %v4788
    %5818 = vmatpush1.msra.mxu0 %v4787
    %5819 = vmatprep.subr.mxu0 %v4796
    %5820 = vmatpush1.msra.mxu0 %v4795
    %5821 = vmatprep.subr.mxu0 %v4804
    %5822 = vmatpush1.msra.mxu0 %v4803
    %5823 = vmatprep.subr.mxu0 %v4812
    %5824 = vmatpush1.msra.mxu0 %v4811
    %5825 = vmatprep.subr.mxu0 %v4820
    %5826 = vmatpush1.msra.mxu0 %v4819
    %5827 = vmatprep.subr.mxu0 %v4828
    %5828 = vmatpush1.msra.mxu0 %v4827
    %5829 = vmatprep.subr.mxu0 %v4836
    %5830 = vmatpush1.msra.mxu0 %v4835
    %5831 = vmatprep.subr.mxu0 %v4844
    %5832 = vmatpush1.msra.mxu0 %v4843
    %5833 = vmatprep.subr.mxu0 %v4852
    %5834 = vmatpush1.msra.mxu0 %v4851
    %5835 = vmatprep.subr.mxu0 %v4860
    %5836 = vmatpush1.msra.mxu0 %v4859
    %5837 = vmatprep.subr.mxu0 %v4868
    %5838 = vmatpush1.msra.mxu0 %v4867
    %5839 = vmatprep.subr.mxu0 %v4876
    %5840 = vmatpush1.msra.mxu0 %v4875
    %5841 = vmatprep.subr.mxu0 %v4884
    %5842 = vmatpush1.msra.mxu0 %v4883
    %5843 = vmatprep.subr.mxu0 %v4892
    %5844 = vmatpush1.msra.mxu0 %v4891
    %5845 = vmatprep.subr.mxu0 %v4900
    %5846 = vmatpush1.msra.mxu0 %v4899
    %5847 = vmatprep.subr.mxu0 %v4908
    %5848 = vmatpush1.msra.mxu0 %v4907
    %5849 = vmatprep.subr.mxu0 %v4916
    %5850 = vmatpush1.msra.mxu0 %v4915
    %5851 = vmatprep.subr.mxu0 %v4924
    %5852 = vmatpush1.msra.mxu0 %v4923
    %5853 = vmatprep.subr.mxu0 %v4932
    %5854 = vmatpush1.msra.mxu0 %v4931
    %5855 = vmatprep.subr.mxu0 %v4940
    %5856 = vmatpush1.msra.mxu0 %v4939
    %5857 = vmatprep.subr.mxu0 %v4948
    %5858 = vmatpush1.msra.mxu0 %v4947
    %5859 = vmatprep.subr.mxu0 %v4956
    %5860 = vmatpush1.msra.mxu0 %v4955
    %5861 = vmatprep.subr.mxu0 %v4964
    %5862 = vmatpush1.msra.mxu0 %v4963
    %5863 = vmatprep.subr.mxu0 %v4972
    %5864 = vmatpush1.msra.mxu0 %v4971
    %5865 = vmatprep.subr.mxu0 %v4980
    %5866 = vmatpush1.msra.mxu0 %v4979
    %5867 = vmatprep.subr.mxu0 %v4988
    %5868 = vmatpush1.msra.mxu0 %v4987
    %5869 = vmatprep.mubr.f32.mxu0 %v4732
    %5870 = vmatmul.mubr.f32.gmra.mrb[0].mxu0 %v4731
    %v5871 = vpop.f32.mrb[0].mxu0
    %v5872 = vadd.f32 %v5768, %v5871
    %v5873 = vpop.f32.mrb[0].mxu0
    %v5874 = vadd.f32 %v5772, %v5873
    %5875 = vdwg.mxu0
    %5876 = vmatprep.subr.mxu0 %v4996
    %5877 = vmatpush1.msra.mxu0 %v4995
    %5878 = vmatprep.subr.mxu0 %v5004
    %5879 = vmatpush1.msra.mxu0 %v5003
    %5880 = vmatprep.subr.mxu0 %v5012
    %5881 = vmatpush1.msra.mxu0 %v5011
    %5882 = vmatprep.subr.mxu0 %v5020
    %5883 = vmatpush1.msra.mxu0 %v5019
    %5884 = vmatprep.subr.mxu0 %v5028
    %5885 = vmatpush1.msra.mxu0 %v5027
    %5886 = vmatprep.subr.mxu0 %v5036
    %5887 = vmatpush1.msra.mxu0 %v5035
    %5888 = vmatprep.subr.mxu0 %v5044
    %5889 = vmatpush1.msra.mxu0 %v5043
    %5890 = vmatprep.subr.mxu0 %v5052
    %5891 = vmatpush1.msra.mxu0 %v5051
    %5892 = vmatprep.subr.mxu0 %v5060
    %5893 = vmatpush1.msra.mxu0 %v5059
    %5894 = vmatprep.subr.mxu0 %v5068
    %5895 = vmatpush1.msra.mxu0 %v5067
    %5896 = vmatprep.subr.mxu0 %v5076
    %5897 = vmatpush1.msra.mxu0 %v5075
    %5898 = vmatprep.subr.mxu0 %v5084
    %5899 = vmatpush1.msra.mxu0 %v5083
    %5900 = vmatprep.subr.mxu0 %v5092
    %5901 = vmatpush1.msra.mxu0 %v5091
    %5902 = vmatprep.subr.mxu0 %v5100
    %5903 = vmatpush1.msra.mxu0 %v5099
    %5904 = vmatprep.subr.mxu0 %v5108
    %5905 = vmatpush1.msra.mxu0 %v5107
    %5906 = vmatprep.subr.mxu0 %v5116
    %5907 = vmatpush1.msra.mxu0 %v5115
    %5908 = vmatprep.subr.mxu0 %v5124
    %5909 = vmatpush1.msra.mxu0 %v5123
    %5910 = vmatprep.subr.mxu0 %v5132
    %5911 = vmatpush1.msra.mxu0 %v5131
    %5912 = vmatprep.subr.mxu0 %v5140
    %5913 = vmatpush1.msra.mxu0 %v5139
    %5914 = vmatprep.subr.mxu0 %v5148
    %5915 = vmatpush1.msra.mxu0 %v5147
    %5916 = vmatprep.subr.mxu0 %v5156
    %5917 = vmatpush1.msra.mxu0 %v5155
    %5918 = vmatprep.subr.mxu0 %v5164
    %5919 = vmatpush1.msra.mxu0 %v5163
    %5920 = vmatprep.subr.mxu0 %v5172
    %5921 = vmatpush1.msra.mxu0 %v5171
    %5922 = vmatprep.subr.mxu0 %v5180
    %5923 = vmatpush1.msra.mxu0 %v5179
    %5924 = vmatprep.subr.mxu0 %v5188
    %5925 = vmatpush1.msra.mxu0 %v5187
    %5926 = vmatprep.subr.mxu0 %v5196
    %5927 = vmatpush1.msra.mxu0 %v5195
    %5928 = vmatprep.subr.mxu0 %v5204
    %5929 = vmatpush1.msra.mxu0 %v5203
    %5930 = vmatprep.subr.mxu0 %v5212
    %5931 = vmatpush1.msra.mxu0 %v5211
    %5932 = vmatprep.subr.mxu0 %v5220
    %5933 = vmatpush1.msra.mxu0 %v5219
    %5934 = vmatprep.subr.mxu0 %v5228
    %5935 = vmatpush1.msra.mxu0 %v5227
    %5936 = vmatprep.subr.mxu0 %v5236
    %5937 = vmatpush1.msra.mxu0 %v5235
    %5938 = vmatprep.subr.mxu0 %v5244
    %5939 = vmatpush1.msra.mxu0 %v5243
    %5940 = vmatprep.mubr.f32.mxu0 %v4734
    %5941 = vmatmul.mubr.f32.gmra.mrb[0].mxu0 %v4733
    %v5942 = vpop.f32.mrb[0].mxu0
    %v5943 = vadd.f32 %v5872, %v5942
    %v5944 = vpop.f32.mrb[0].mxu0
    %v5945 = vadd.f32 %v5874, %v5944
    %5946 = vdwg.mxu0
    %5947 = vmatprep.subr.mxu0 %v5252
    %5948 = vmatpush1.msra.mxu0 %v5251
    %5949 = vmatprep.subr.mxu0 %v5260
    %5950 = vmatpush1.msra.mxu0 %v5259
    %5951 = vmatprep.subr.mxu0 %v5268
    %5952 = vmatpush1.msra.mxu0 %v5267
    %5953 = vmatprep.subr.mxu0 %v5276
    %5954 = vmatpush1.msra.mxu0 %v5275
    %5955 = vmatprep.subr.mxu0 %v5284
    %5956 = vmatpush1.msra.mxu0 %v5283
    %5957 = vmatprep.subr.mxu0 %v5292
    %5958 = vmatpush1.msra.mxu0 %v5291
    %5959 = vmatprep.subr.mxu0 %v5300
    %5960 = vmatpush1.msra.mxu0 %v5299
    %5961 = vmatprep.subr.mxu0 %v5308
    %5962 = vmatpush1.msra.mxu0 %v5307
    %5963 = vmatprep.subr.mxu0 %v5316
    %5964 = vmatpush1.msra.mxu0 %v5315
    %5965 = vmatprep.subr.mxu0 %v5324
    %5966 = vmatpush1.msra.mxu0 %v5323
    %5967 = vmatprep.subr.mxu0 %v5332
    %5968 = vmatpush1.msra.mxu0 %v5331
    %5969 = vmatprep.subr.mxu0 %v5340
    %5970 = vmatpush1.msra.mxu0 %v5339
    %5971 = vmatprep.subr.mxu0 %v5348
    %5972 = vmatpush1.msra.mxu0 %v5347
    %5973 = vmatprep.subr.mxu0 %v5356
    %5974 = vmatpush1.msra.mxu0 %v5355
    %5975 = vmatprep.subr.mxu0 %v5364
    %5976 = vmatpush1.msra.mxu0 %v5363
    %5977 = vmatprep.subr.mxu0 %v5372
    %5978 = vmatpush1.msra.mxu0 %v5371
    %5979 = vmatprep.subr.mxu0 %v5380
    %5980 = vmatpush1.msra.mxu0 %v5379
    %5981 = vmatprep.subr.mxu0 %v5388
    %5982 = vmatpush1.msra.mxu0 %v5387
    %5983 = vmatprep.subr.mxu0 %v5396
    %5984 = vmatpush1.msra.mxu0 %v5395
    %5985 = vmatprep.subr.mxu0 %v5404
    %5986 = vmatpush1.msra.mxu0 %v5403
    %5987 = vmatprep.subr.mxu0 %v5412
    %5988 = vmatpush1.msra.mxu0 %v5411
    %5989 = vmatprep.subr.mxu0 %v5420
    %5990 = vmatpush1.msra.mxu0 %v5419
    %5991 = vmatprep.subr.mxu0 %v5428
    %5992 = vmatpush1.msra.mxu0 %v5427
    %5993 = vmatprep.subr.mxu0 %v5436
    %5994 = vmatpush1.msra.mxu0 %v5435
    %5995 = vmatprep.subr.mxu0 %v5444
    %5996 = vmatpush1.msra.mxu0 %v5443
    %5997 = vmatprep.subr.mxu0 %v5452
    %5998 = vmatpush1.msra.mxu0 %v5451
    %5999 = vmatprep.subr.mxu0 %v5460
    %6000 = vmatpush1.msra.mxu0 %v5459
    %6001 = vmatprep.subr.mxu0 %v5468
    %6002 = vmatpush1.msra.mxu0 %v5467
    %6003 = vmatprep.subr.mxu0 %v5476
    %6004 = vmatpush1.msra.mxu0 %v5475
    %6005 = vmatprep.subr.mxu0 %v5484
    %6006 = vmatpush1.msra.mxu0 %v5483
    %6007 = vmatprep.subr.mxu0 %v5492
    %6008 = vmatpush1.msra.mxu0 %v5491
    %6009 = vmatprep.subr.mxu0 %v5500
    %6010 = vmatpush1.msra.mxu0 %v5499
    %6011 = vmatprep.mubr.f32.mxu0 %v4736
    %6012 = vmatmul.mubr.f32.gmra.mrb[0].mxu0 %v4735
    %v6013 = vpop.f32.mrb[0].mxu0
    %v6014 = vadd.f32 %v5943, %v6013
    %v6015 = vpop.f32.mrb[0].mxu0
    %v6016 = vadd.f32 %v5945, %v6015
    %6017 = vdwg.mxu0
    %6018 = vmatprep.subr.mxu0 %v5508
    %6019 = vmatpush1.msra.mxu0 %v5507
    %6020 = vmatprep.subr.mxu0 %v5516
    %6021 = vmatpush1.msra.mxu0 %v5515
    %6022 = vmatprep.subr.mxu0 %v5524
    %6023 = vmatpush1.msra.mxu0 %v5523
    %6024 = vmatprep.subr.mxu0 %v5532
    %6025 = vmatpush1.msra.mxu0 %v5531
    %6026 = vmatprep.subr.mxu0 %v5540
    %6027 = vmatpush1.msra.mxu0 %v5539
    %6028 = vmatprep.subr.mxu0 %v5548
    %6029 = vmatpush1.msra.mxu0 %v5547
    %6030 = vmatprep.subr.mxu0 %v5556
    %6031 = vmatpush1.msra.mxu0 %v5555
    %6032 = vmatprep.subr.mxu0 %v5564
    %6033 = vmatpush1.msra.mxu0 %v5563
    %6034 = vmatprep.subr.mxu0 %v5572
    %6035 = vmatpush1.msra.mxu0 %v5571
    %6036 = vmatprep.subr.mxu0 %v5580
    %6037 = vmatpush1.msra.mxu0 %v5579
    %6038 = vmatprep.subr.mxu0 %v5588
    %6039 = vmatpush1.msra.mxu0 %v5587
    %6040 = vmatprep.subr.mxu0 %v5596
    %6041 = vmatpush1.msra.mxu0 %v5595
    %6042 = vmatprep.subr.mxu0 %v5604
    %6043 = vmatpush1.msra.mxu0 %v5603
    %6044 = vmatprep.subr.mxu0 %v5612
    %6045 = vmatpush1.msra.mxu0 %v5611
    %6046 = vmatprep.subr.mxu0 %v5620
    %6047 = vmatpush1.msra.mxu0 %v5619
    %6048 = vmatprep.subr.mxu0 %v5628
    %6049 = vmatpush1.msra.mxu0 %v5627
    %6050 = vmatprep.subr.mxu0 %v5636
    %6051 = vmatpush1.msra.mxu0 %v5635
    %6052 = vmatprep.subr.mxu0 %v5644
    %6053 = vmatpush1.msra.mxu0 %v5643
    %6054 = vmatprep.subr.mxu0 %v5652
    %6055 = vmatpush1.msra.mxu0 %v5651
    %6056 = vmatprep.subr.mxu0 %v5660
    %6057 = vmatpush1.msra.mxu0 %v5659
    %6058 = vmatprep.subr.mxu0 %v5668
    %6059 = vmatpush1.msra.mxu0 %v5667
    %6060 = vmatprep.subr.mxu0 %v5676
    %6061 = vmatpush1.msra.mxu0 %v5675
    %6062 = vmatprep.subr.mxu0 %v5684
    %6063 = vmatpush1.msra.mxu0 %v5683
    %6064 = vmatprep.subr.mxu0 %v5692
    %6065 = vmatpush1.msra.mxu0 %v5691
    %6066 = vmatprep.subr.mxu0 %v5700
    %6067 = vmatpush1.msra.mxu0 %v5699
    %6068 = vmatprep.subr.mxu0 %v5708
    %6069 = vmatpush1.msra.mxu0 %v5707
    %6070 = vmatprep.subr.mxu0 %v5716
    %6071 = vmatpush1.msra.mxu0 %v5715
    %6072 = vmatprep.subr.mxu0 %v5724
    %6073 = vmatpush1.msra.mxu0 %v5723
    %6074 = vmatprep.subr.mxu0 %v5732
    %6075 = vmatpush1.msra.mxu0 %v5731
    %6076 = vmatprep.subr.mxu0 %v5740
    %6077 = vmatpush1.msra.mxu0 %v5739
    %6078 = vmatprep.subr.mxu0 %v5748
    %6079 = vmatpush1.msra.mxu0 %v5747
    %6080 = vmatprep.subr.mxu0 %v5756
    %6081 = vmatpush1.msra.mxu0 %v5755
    %6082 = vmatprep.mubr.f32.mxu0 %v4738
    %6083 = vmatmul.mubr.f32.gmra.mrb[0].mxu0 %v4737
    %v6084 = vpop.f32.mrb[0].mxu0
    %v6085 = vadd.f32 %v6014, %v6084
    %v6086 = vpop.f32.mrb[0].mxu0
    %v6087 = vadd.f32 %v6016, %v6086
    %6088 = vdwg.mxu0
    %6089 = vmatprep.subr.mxu0 %v4742
    %6090 = vmatpush1.msra.mxu0 %v4741
    %6091 = vmatprep.subr.mxu0 %v4750
    %6092 = vmatpush1.msra.mxu0 %v4749
    %6093 = vmatprep.subr.mxu0 %v4758
    %6094 = vmatpush1.msra.mxu0 %v4757
    %6095 = vmatprep.subr.mxu0 %v4766
    %6096 = vmatpush1.msra.mxu0 %v4765
    %6097 = vmatprep.subr.mxu0 %v4774
    %6098 = vmatpush1.msra.mxu0 %v4773
    %6099 = vmatprep.subr.mxu0 %v4782
    %6100 = vmatpush1.msra.mxu0 %v4781
    %6101 = vmatprep.subr.mxu0 %v4790
    %6102 = vmatpush1.msra.mxu0 %v4789
    %6103 = vmatprep.subr.mxu0 %v4798
    %6104 = vmatpush1.msra.mxu0 %v4797
    %6105 = vmatprep.subr.mxu0 %v4806
    %6106 = vmatpush1.msra.mxu0 %v4805
    %6107 = vmatprep.subr.mxu0 %v4814
    %6108 = vmatpush1.msra.mxu0 %v4813
    %6109 = vmatprep.subr.mxu0 %v4822
    %6110 = vmatpush1.msra.mxu0 %v4821
    %6111 = vmatprep.subr.mxu0 %v4830
    %6112 = vmatpush1.msra.mxu0 %v4829
    %6113 = vmatprep.subr.mxu0 %v4838
    %6114 = vmatpush1.msra.mxu0 %v4837
    %6115 = vmatprep.subr.mxu0 %v4846
    %6116 = vmatpush1.msra.mxu0 %v4845
    %6117 = vmatprep.subr.mxu0 %v4854
    %6118 = vmatpush1.msra.mxu0 %v4853
    %6119 = vmatprep.subr.mxu0 %v4862
    %6120 = vmatpush1.msra.mxu0 %v4861
    %6121 = vmatprep.subr.mxu0 %v4870
    %6122 = vmatpush1.msra.mxu0 %v4869
    %6123 = vmatprep.subr.mxu0 %v4878
    %6124 = vmatpush1.msra.mxu0 %v4877
    %6125 = vmatprep.subr.mxu0 %v4886
    %6126 = vmatpush1.msra.mxu0 %v4885
    %6127 = vmatprep.subr.mxu0 %v4894
    %6128 = vmatpush1.msra.mxu0 %v4893
    %6129 = vmatprep.subr.mxu0 %v4902
    %6130 = vmatpush1.msra.mxu0 %v4901
    %6131 = vmatprep.subr.mxu0 %v4910
    %6132 = vmatpush1.msra.mxu0 %v4909
    %6133 = vmatprep.subr.mxu0 %v4918
    %6134 = vmatpush1.msra.mxu0 %v4917
    %6135 = vmatprep.subr.mxu0 %v4926
    %6136 = vmatpush1.msra.mxu0 %v4925
    %6137 = vmatprep.subr.mxu0 %v4934
    %6138 = vmatpush1.msra.mxu0 %v4933
    %6139 = vmatprep.subr.mxu0 %v4942
    %6140 = vmatpush1.msra.mxu0 %v4941
    %6141 = vmatprep.subr.mxu0 %v4950
    %6142 = vmatpush1.msra.mxu0 %v4949
    %6143 = vmatprep.subr.mxu0 %v4958
    %6144 = vmatpush1.msra.mxu0 %v4957
    %6145 = vmatprep.subr.mxu0 %v4966
    %6146 = vmatpush1.msra.mxu0 %v4965
    %6147 = vmatprep.subr.mxu0 %v4974
    %6148 = vmatpush1.msra.mxu0 %v4973
    %6149 = vmatprep.subr.mxu0 %v4982
    %6150 = vmatpush1.msra.mxu0 %v4981
    %6151 = vmatprep.subr.mxu0 %v4990
    %6152 = vmatpush1.msra.mxu0 %v4989
    %6153 = vmatprep.mubr.f32.mxu0 %v4732
    %6154 = vmatmul.mubr.f32.gmra.mrb[0].mxu0 %v4731
    %v6155 = vpop.f32.mrb[0].mxu0
    %v6156 = vadd.f32 %v5776, %v6155
    %v6157 = vpop.f32.mrb[0].mxu0
    %v6158 = vadd.f32 %v5780, %v6157
    %6159 = vdwg.mxu0
    %6160 = vmatprep.subr.mxu0 %v4998
    %6161 = vmatpush1.msra.mxu0 %v4997
    %6162 = vmatprep.subr.mxu0 %v5006
    %6163 = vmatpush1.msra.mxu0 %v5005
    %6164 = vmatprep.subr.mxu0 %v5014
    %6165 = vmatpush1.msra.mxu0 %v5013
    %6166 = vmatprep.subr.mxu0 %v5022
    %6167 = vmatpush1.msra.mxu0 %v5021
    %6168 = vmatprep.subr.mxu0 %v5030
    %6169 = vmatpush1.msra.mxu0 %v5029
    %6170 = vmatprep.subr.mxu0 %v5038
    %6171 = vmatpush1.msra.mxu0 %v5037
    %6172 = vmatprep.subr.mxu0 %v5046
    %6173 = vmatpush1.msra.mxu0 %v5045
    %6174 = vmatprep.subr.mxu0 %v5054
    %6175 = vmatpush1.msra.mxu0 %v5053
    %6176 = vmatprep.subr.mxu0 %v5062
    %6177 = vmatpush1.msra.mxu0 %v5061
    %6178 = vmatprep.subr.mxu0 %v5070
    %6179 = vmatpush1.msra.mxu0 %v5069
    %6180 = vmatprep.subr.mxu0 %v5078
    %6181 = vmatpush1.msra.mxu0 %v5077
    %6182 = vmatprep.subr.mxu0 %v5086
    %6183 = vmatpush1.msra.mxu0 %v5085
    %6184 = vmatprep.subr.mxu0 %v5094
    %6185 = vmatpush1.msra.mxu0 %v5093
    %6186 = vmatprep.subr.mxu0 %v5102
    %6187 = vmatpush1.msra.mxu0 %v5101
    %6188 = vmatprep.subr.mxu0 %v5110
    %6189 = vmatpush1.msra.mxu0 %v5109
    %6190 = vmatprep.subr.mxu0 %v5118
    %6191 = vmatpush1.msra.mxu0 %v5117
    %6192 = vmatprep.subr.mxu0 %v5126
    %6193 = vmatpush1.msra.mxu0 %v5125
    %6194 = vmatprep.subr.mxu0 %v5134
    %6195 = vmatpush1.msra.mxu0 %v5133
    %6196 = vmatprep.subr.mxu0 %v5142
    %6197 = vmatpush1.msra.mxu0 %v5141
    %6198 = vmatprep.subr.mxu0 %v5150
    %6199 = vmatpush1.msra.mxu0 %v5149
    %6200 = vmatprep.subr.mxu0 %v5158
    %6201 = vmatpush1.msra.mxu0 %v5157
    %6202 = vmatprep.subr.mxu0 %v5166
    %6203 = vmatpush1.msra.mxu0 %v5165
    %6204 = vmatprep.subr.mxu0 %v5174
    %6205 = vmatpush1.msra.mxu0 %v5173
    %6206 = vmatprep.subr.mxu0 %v5182
    %6207 = vmatpush1.msra.mxu0 %v5181
    %6208 = vmatprep.subr.mxu0 %v5190
    %6209 = vmatpush1.msra.mxu0 %v5189
    %6210 = vmatprep.subr.mxu0 %v5198
    %6211 = vmatpush1.msra.mxu0 %v5197
    %6212 = vmatprep.subr.mxu0 %v5206
    %6213 = vmatpush1.msra.mxu0 %v5205
    %6214 = vmatprep.subr.mxu0 %v5214
    %6215 = vmatpush1.msra.mxu0 %v5213
    %6216 = vmatprep.subr.mxu0 %v5222
    %6217 = vmatpush1.msra.mxu0 %v5221
    %6218 = vmatprep.subr.mxu0 %v5230
    %6219 = vmatpush1.msra.mxu0 %v5229
    %6220 = vmatprep.subr.mxu0 %v5238
    %6221 = vmatpush1.msra.mxu0 %v5237
    %6222 = vmatprep.subr.mxu0 %v5246
    %6223 = vmatpush1.msra.mxu0 %v5245
    %6224 = vmatprep.mubr.f32.mxu0 %v4734
    %6225 = vmatmul.mubr.f32.gmra.mrb[0].mxu0 %v4733
    %v6226 = vpop.f32.mrb[0].mxu0
    %v6227 = vadd.f32 %v6156, %v6226
    %v6228 = vpop.f32.mrb[0].mxu0
    %v6229 = vadd.f32 %v6158, %v6228
    %6230 = vdwg.mxu0
    %6231 = vmatprep.subr.mxu0 %v5254
    %6232 = vmatpush1.msra.mxu0 %v5253
    %6233 = vmatprep.subr.mxu0 %v5262
    %6234 = vmatpush1.msra.mxu0 %v5261
    %6235 = vmatprep.subr.mxu0 %v5270
    %6236 = vmatpush1.msra.mxu0 %v5269
    %6237 = vmatprep.subr.mxu0 %v5278
    %6238 = vmatpush1.msra.mxu0 %v5277
    %6239 = vmatprep.subr.mxu0 %v5286
    %6240 = vmatpush1.msra.mxu0 %v5285
    %6241 = vmatprep.subr.mxu0 %v5294
    %6242 = vmatpush1.msra.mxu0 %v5293
    %6243 = vmatprep.subr.mxu0 %v5302
    %6244 = vmatpush1.msra.mxu0 %v5301
    %6245 = vmatprep.subr.mxu0 %v5310
    %6246 = vmatpush1.msra.mxu0 %v5309
    %6247 = vmatprep.subr.mxu0 %v5318
    %6248 = vmatpush1.msra.mxu0 %v5317
    %6249 = vmatprep.subr.mxu0 %v5326
    %6250 = vmatpush1.msra.mxu0 %v5325
    %6251 = vmatprep.subr.mxu0 %v5334
    %6252 = vmatpush1.msra.mxu0 %v5333
    %6253 = vmatprep.subr.mxu0 %v5342
    %6254 = vmatpush1.msra.mxu0 %v5341
    %6255 = vmatprep.subr.mxu0 %v5350
    %6256 = vmatpush1.msra.mxu0 %v5349
    %6257 = vmatprep.subr.mxu0 %v5358
    %6258 = vmatpush1.msra.mxu0 %v5357
    %6259 = vmatprep.subr.mxu0 %v5366
    %6260 = vmatpush1.msra.mxu0 %v5365
    %6261 = vmatprep.subr.mxu0 %v5374
    %6262 = vmatpush1.msra.mxu0 %v5373
    %6263 = vmatprep.subr.mxu0 %v5382
    %6264 = vmatpush1.msra.mxu0 %v5381
    %6265 = vmatprep.subr.mxu0 %v5390
    %6266 = vmatpush1.msra.mxu0 %v5389
    %6267 = vmatprep.subr.mxu0 %v5398
    %6268 = vmatpush1.msra.mxu0 %v5397
    %6269 = vmatprep.subr.mxu0 %v5406
    %6270 = vmatpush1.msra.mxu0 %v5405
    %6271 = vmatprep.subr.mxu0 %v5414
    %6272 = vmatpush1.msra.mxu0 %v5413
    %6273 = vmatprep.subr.mxu0 %v5422
    %6274 = vmatpush1.msra.mxu0 %v5421
    %6275 = vmatprep.subr.mxu0 %v5430
    %6276 = vmatpush1.msra.mxu0 %v5429
    %6277 = vmatprep.subr.mxu0 %v5438
    %6278 = vmatpush1.msra.mxu0 %v5437
    %6279 = vmatprep.subr.mxu0 %v5446
    %6280 = vmatpush1.msra.mxu0 %v5445
    %6281 = vmatprep.subr.mxu0 %v5454
    %6282 = vmatpush1.msra.mxu0 %v5453
    %6283 = vmatprep.subr.mxu0 %v5462
    %6284 = vmatpush1.msra.mxu0 %v5461
    %6285 = vmatprep.subr.mxu0 %v5470
    %6286 = vmatpush1.msra.mxu0 %v5469
    %6287 = vmatprep.subr.mxu0 %v5478
    %6288 = vmatpush1.msra.mxu0 %v5477
    %6289 = vmatprep.subr.mxu0 %v5486
    %6290 = vmatpush1.msra.mxu0 %v5485
    %6291 = vmatprep.subr.mxu0 %v5494
    %6292 = vmatpush1.msra.mxu0 %v5493
    %6293 = vmatprep.subr.mxu0 %v5502
    %6294 = vmatpush1.msra.mxu0 %v5501
    %6295 = vmatprep.mubr.f32.mxu0 %v4736
    %6296 = vmatmul.mubr.f32.gmra.mrb[0].mxu0 %v4735
    %v6297 = vpop.f32.mrb[0].mxu0
    %v6298 = vadd.f32 %v6227, %v6297
    %v6299 = vpop.f32.mrb[0].mxu0
    %v6300 = vadd.f32 %v6229, %v6299
    %6301 = vdwg.mxu0
    %6302 = vmatprep.subr.mxu0 %v5510
    %6303 = vmatpush1.msra.mxu0 %v5509
    %6304 = vmatprep.subr.mxu0 %v5518
    %6305 = vmatpush1.msra.mxu0 %v5517
    %6306 = vmatprep.subr.mxu0 %v5526
    %6307 = vmatpush1.msra.mxu0 %v5525
    %6308 = vmatprep.subr.mxu0 %v5534
    %6309 = vmatpush1.msra.mxu0 %v5533
    %6310 = vmatprep.subr.mxu0 %v5542
    %6311 = vmatpush1.msra.mxu0 %v5541
    %6312 = vmatprep.subr.mxu0 %v5550
    %6313 = vmatpush1.msra.mxu0 %v5549
    %6314 = vmatprep.subr.mxu0 %v5558
    %6315 = vmatpush1.msra.mxu0 %v5557
    %6316 = vmatprep.subr.mxu0 %v5566
    %6317 = vmatpush1.msra.mxu0 %v5565
    %6318 = vmatprep.subr.mxu0 %v5574
    %6319 = vmatpush1.msra.mxu0 %v5573
    %6320 = vmatprep.subr.mxu0 %v5582
    %6321 = vmatpush1.msra.mxu0 %v5581
    %6322 = vmatprep.subr.mxu0 %v5590
    %6323 = vmatpush1.msra.mxu0 %v5589
    %6324 = vmatprep.subr.mxu0 %v5598
    %6325 = vmatpush1.msra.mxu0 %v5597
    %6326 = vmatprep.subr.mxu0 %v5606
    %6327 = vmatpush1.msra.mxu0 %v5605
    %6328 = vmatprep.subr.mxu0 %v5614
    %6329 = vmatpush1.msra.mxu0 %v5613
    %6330 = vmatprep.subr.mxu0 %v5622
    %6331 = vmatpush1.msra.mxu0 %v5621
    %6332 = vmatprep.subr.mxu0 %v5630
    %6333 = vmatpush1.msra.mxu0 %v5629
    %6334 = vmatprep.subr.mxu0 %v5638
    %6335 = vmatpush1.msra.mxu0 %v5637
    %6336 = vmatprep.subr.mxu0 %v5646
    %6337 = vmatpush1.msra.mxu0 %v5645
    %6338 = vmatprep.subr.mxu0 %v5654
    %6339 = vmatpush1.msra.mxu0 %v5653
    %6340 = vmatprep.subr.mxu0 %v5662
    %6341 = vmatpush1.msra.mxu0 %v5661
    %6342 = vmatprep.subr.mxu0 %v5670
    %6343 = vmatpush1.msra.mxu0 %v5669
    %6344 = vmatprep.subr.mxu0 %v5678
    %6345 = vmatpush1.msra.mxu0 %v5677
    %6346 = vmatprep.subr.mxu0 %v5686
    %6347 = vmatpush1.msra.mxu0 %v5685
    %6348 = vmatprep.subr.mxu0 %v5694
    %6349 = vmatpush1.msra.mxu0 %v5693
    %6350 = vmatprep.subr.mxu0 %v5702
    %6351 = vmatpush1.msra.mxu0 %v5701
    %6352 = vmatprep.subr.mxu0 %v5710
    %6353 = vmatpush1.msra.mxu0 %v5709
    %6354 = vmatprep.subr.mxu0 %v5718
    %6355 = vmatpush1.msra.mxu0 %v5717
    %6356 = vmatprep.subr.mxu0 %v5726
    %6357 = vmatpush1.msra.mxu0 %v5725
    %6358 = vmatprep.subr.mxu0 %v5734
    %6359 = vmatpush1.msra.mxu0 %v5733
    %6360 = vmatprep.subr.mxu0 %v5742
    %6361 = vmatpush1.msra.mxu0 %v5741
    %6362 = vmatprep.subr.mxu0 %v5750
    %6363 = vmatpush1.msra.mxu0 %v5749
    %6364 = vmatprep.subr.mxu0 %v5758
    %6365 = vmatpush1.msra.mxu0 %v5757
    %6366 = vmatprep.mubr.f32.mxu0 %v4738
    %6367 = vmatmul.mubr.f32.gmra.mrb[0].mxu0 %v4737
    %v6368 = vpop.f32.mrb[0].mxu0
    %v6369 = vadd.f32 %v6298, %v6368
    %v6370 = vpop.f32.mrb[0].mxu0
    %v6371 = vadd.f32 %v6300, %v6370
    %6372 = vdwg.mxu0
    %6373 = vmatprep.subr.mxu0 %v4744
    %6374 = vmatpush1.msra.mxu0 %v4743
    %6375 = vmatprep.subr.mxu0 %v4752
    %6376 = vmatpush1.msra.mxu0 %v4751
    %6377 = vmatprep.subr.mxu0 %v4760
    %6378 = vmatpush1.msra.mxu0 %v4759
    %6379 = vmatprep.subr.mxu0 %v4768
    %6380 = vmatpush1.msra.mxu0 %v4767
    %6381 = vmatprep.subr.mxu0 %v4776
    %6382 = vmatpush1.msra.mxu0 %v4775
    %6383 = vmatprep.subr.mxu0 %v4784
    %6384 = vmatpush1.msra.mxu0 %v4783
    %6385 = vmatprep.subr.mxu0 %v4792
    %6386 = vmatpush1.msra.mxu0 %v4791
    %6387 = vmatprep.subr.mxu0 %v4800
    %6388 = vmatpush1.msra.mxu0 %v4799
    %6389 = vmatprep.subr.mxu0 %v4808
    %6390 = vmatpush1.msra.mxu0 %v4807
    %6391 = vmatprep.subr.mxu0 %v4816
    %6392 = vmatpush1.msra.mxu0 %v4815
    %6393 = vmatprep.subr.mxu0 %v4824
    %6394 = vmatpush1.msra.mxu0 %v4823
    %6395 = vmatprep.subr.mxu0 %v4832
    %6396 = vmatpush1.msra.mxu0 %v4831
    %6397 = vmatprep.subr.mxu0 %v4840
    %6398 = vmatpush1.msra.mxu0 %v4839
    %6399 = vmatprep.subr.mxu0 %v4848
    %6400 = vmatpush1.msra.mxu0 %v4847
    %6401 = vmatprep.subr.mxu0 %v4856
    %6402 = vmatpush1.msra.mxu0 %v4855
    %6403 = vmatprep.subr.mxu0 %v4864
    %6404 = vmatpush1.msra.mxu0 %v4863
    %6405 = vmatprep.subr.mxu0 %v4872
    %6406 = vmatpush1.msra.mxu0 %v4871
    %6407 = vmatprep.subr.mxu0 %v4880
    %6408 = vmatpush1.msra.mxu0 %v4879
    %6409 = vmatprep.subr.mxu0 %v4888
    %6410 = vmatpush1.msra.mxu0 %v4887
    %6411 = vmatprep.subr.mxu0 %v4896
    %6412 = vmatpush1.msra.mxu0 %v4895
    %6413 = vmatprep.subr.mxu0 %v4904
    %6414 = vmatpush1.msra.mxu0 %v4903
    %6415 = vmatprep.subr.mxu0 %v4912
    %6416 = vmatpush1.msra.mxu0 %v4911
    %6417 = vmatprep.subr.mxu0 %v4920
    %6418 = vmatpush1.msra.mxu0 %v4919
    %6419 = vmatprep.subr.mxu0 %v4928
    %6420 = vmatpush1.msra.mxu0 %v4927
    %6421 = vmatprep.subr.mxu0 %v4936
    %6422 = vmatpush1.msra.mxu0 %v4935
    %6423 = vmatprep.subr.mxu0 %v4944
    %6424 = vmatpush1.msra.mxu0 %v4943
    %6425 = vmatprep.subr.mxu0 %v4952
    %6426 = vmatpush1.msra.mxu0 %v4951
    %6427 = vmatprep.subr.mxu0 %v4960
    %6428 = vmatpush1.msra.mxu0 %v4959
    %6429 = vmatprep.subr.mxu0 %v4968
    %6430 = vmatpush1.msra.mxu0 %v4967
    %6431 = vmatprep.subr.mxu0 %v4976
    %6432 = vmatpush1.msra.mxu0 %v4975
    %6433 = vmatprep.subr.mxu0 %v4984
    %6434 = vmatpush1.msra.mxu0 %v4983
    %6435 = vmatprep.subr.mxu0 %v4992
    %6436 = vmatpush1.msra.mxu0 %v4991
    %6437 = vmatprep.mubr.f32.mxu0 %v4732
    %6438 = vmatmul.mubr.f32.gmra.mrb[0].mxu0 %v4731
    %v6439 = vpop.f32.mrb[0].mxu0
    %v6440 = vadd.f32 %v5784, %v6439
    %v6441 = vpop.f32.mrb[0].mxu0
    %v6442 = vadd.f32 %v5788, %v6441
    %6443 = vdwg.mxu0
    %6444 = vmatprep.subr.mxu0 %v5000
    %6445 = vmatpush1.msra.mxu0 %v4999
    %6446 = vmatprep.subr.mxu0 %v5008
    %6447 = vmatpush1.msra.mxu0 %v5007
    %6448 = vmatprep.subr.mxu0 %v5016
    %6449 = vmatpush1.msra.mxu0 %v5015
    %6450 = vmatprep.subr.mxu0 %v5024
    %6451 = vmatpush1.msra.mxu0 %v5023
    %6452 = vmatprep.subr.mxu0 %v5032
    %6453 = vmatpush1.msra.mxu0 %v5031
    %6454 = vmatprep.subr.mxu0 %v5040
    %6455 = vmatpush1.msra.mxu0 %v5039
    %6456 = vmatprep.subr.mxu0 %v5048
    %6457 = vmatpush1.msra.mxu0 %v5047
    %6458 = vmatprep.subr.mxu0 %v5056
    %6459 = vmatpush1.msra.mxu0 %v5055
    %6460 = vmatprep.subr.mxu0 %v5064
    %6461 = vmatpush1.msra.mxu0 %v5063
    %6462 = vmatprep.subr.mxu0 %v5072
    %6463 = vmatpush1.msra.mxu0 %v5071
    %6464 = vmatprep.subr.mxu0 %v5080
    %6465 = vmatpush1.msra.mxu0 %v5079
    %6466 = vmatprep.subr.mxu0 %v5088
    %6467 = vmatpush1.msra.mxu0 %v5087
    %6468 = vmatprep.subr.mxu0 %v5096
    %6469 = vmatpush1.msra.mxu0 %v5095
    %6470 = vmatprep.subr.mxu0 %v5104
    %6471 = vmatpush1.msra.mxu0 %v5103
    %6472 = vmatprep.subr.mxu0 %v5112
    %6473 = vmatpush1.msra.mxu0 %v5111
    %6474 = vmatprep.subr.mxu0 %v5120
    %6475 = vmatpush1.msra.mxu0 %v5119
    %6476 = vmatprep.subr.mxu0 %v5128
    %6477 = vmatpush1.msra.mxu0 %v5127
    %6478 = vmatprep.subr.mxu0 %v5136
    %6479 = vmatpush1.msra.mxu0 %v5135
    %6480 = vmatprep.subr.mxu0 %v5144
    %6481 = vmatpush1.msra.mxu0 %v5143
    %6482 = vmatprep.subr.mxu0 %v5152
    %6483 = vmatpush1.msra.mxu0 %v5151
    %6484 = vmatprep.subr.mxu0 %v5160
    %6485 = vmatpush1.msra.mxu0 %v5159
    %6486 = vmatprep.subr.mxu0 %v5168
    %6487 = vmatpush1.msra.mxu0 %v5167
    %6488 = vmatprep.subr.mxu0 %v5176
    %6489 = vmatpush1.msra.mxu0 %v5175
    %6490 = vmatprep.subr.mxu0 %v5184
    %6491 = vmatpush1.msra.mxu0 %v5183
    %6492 = vmatprep.subr.mxu0 %v5192
    %6493 = vmatpush1.msra.mxu0 %v5191
    %6494 = vmatprep.subr.mxu0 %v5200
    %6495 = vmatpush1.msra.mxu0 %v5199
    %6496 = vmatprep.subr.mxu0 %v5208
    %6497 = vmatpush1.msra.mxu0 %v5207
    %6498 = vmatprep.subr.mxu0 %v5216
    %6499 = vmatpush1.msra.mxu0 %v5215
    %6500 = vmatprep.subr.mxu0 %v5224
    %6501 = vmatpush1.msra.mxu0 %v5223
    %6502 = vmatprep.subr.mxu0 %v5232
    %6503 = vmatpush1.msra.mxu0 %v5231
    %6504 = vmatprep.subr.mxu0 %v5240
    %6505 = vmatpush1.msra.mxu0 %v5239
    %6506 = vmatprep.subr.mxu0 %v5248
    %6507 = vmatpush1.msra.mxu0 %v5247
    %6508 = vmatprep.mubr.f32.mxu0 %v4734
    %6509 = vmatmul.mubr.f32.gmra.mrb[0].mxu0 %v4733
    %v6510 = vpop.f32.mrb[0].mxu0
    %v6511 = vadd.f32 %v6440, %v6510
    %v6512 = vpop.f32.mrb[0].mxu0
    %v6513 = vadd.f32 %v6442, %v6512
    %6514 = vdwg.mxu0
    %6515 = vmatprep.subr.mxu0 %v5256
    %6516 = vmatpush1.msra.mxu0 %v5255
    %6517 = vmatprep.subr.mxu0 %v5264
    %6518 = vmatpush1.msra.mxu0 %v5263
    %6519 = vmatprep.subr.mxu0 %v5272
    %6520 = vmatpush1.msra.mxu0 %v5271
    %6521 = vmatprep.subr.mxu0 %v5280
    %6522 = vmatpush1.msra.mxu0 %v5279
    %6523 = vmatprep.subr.mxu0 %v5288
    %6524 = vmatpush1.msra.mxu0 %v5287
    %6525 = vmatprep.subr.mxu0 %v5296
    %6526 = vmatpush1.msra.mxu0 %v5295
    %6527 = vmatprep.subr.mxu0 %v5304
    %6528 = vmatpush1.msra.mxu0 %v5303
    %6529 = vmatprep.subr.mxu0 %v5312
    %6530 = vmatpush1.msra.mxu0 %v5311
    %6531 = vmatprep.subr.mxu0 %v5320
    %6532 = vmatpush1.msra.mxu0 %v5319
    %6533 = vmatprep.subr.mxu0 %v5328
    %6534 = vmatpush1.msra.mxu0 %v5327
    %6535 = vmatprep.subr.mxu0 %v5336
    %6536 = vmatpush1.msra.mxu0 %v5335
    %6537 = vmatprep.subr.mxu0 %v5344
    %6538 = vmatpush1.msra.mxu0 %v5343
    %6539 = vmatprep.subr.mxu0 %v5352
    %6540 = vmatpush1.msra.mxu0 %v5351
    %6541 = vmatprep.subr.mxu0 %v5360
    %6542 = vmatpush1.msra.mxu0 %v5359
    %6543 = vmatprep.subr.mxu0 %v5368
    %6544 = vmatpush1.msra.mxu0 %v5367
    %6545 = vmatprep.subr.mxu0 %v5376
    %6546 = vmatpush1.msra.mxu0 %v5375
    %6547 = vmatprep.subr.mxu0 %v5384
    %6548 = vmatpush1.msra.mxu0 %v5383
    %6549 = vmatprep.subr.mxu0 %v5392
    %6550 = vmatpush1.msra.mxu0 %v5391
    %6551 = vmatprep.subr.mxu0 %v5400
    %6552 = vmatpush1.msra.mxu0 %v5399
    %6553 = vmatprep.subr.mxu0 %v5408
    %6554 = vmatpush1.msra.mxu0 %v5407
    %6555 = vmatprep.subr.mxu0 %v5416
    %6556 = vmatpush1.msra.mxu0 %v5415
    %6557 = vmatprep.subr.mxu0 %v5424
    %6558 = vmatpush1.msra.mxu0 %v5423
    %6559 = vmatprep.subr.mxu0 %v5432
    %6560 = vmatpush1.msra.mxu0 %v5431
    %6561 = vmatprep.subr.mxu0 %v5440
    %6562 = vmatpush1.msra.mxu0 %v5439
    %6563 = vmatprep.subr.mxu0 %v5448
    %6564 = vmatpush1.msra.mxu0 %v5447
    %6565 = vmatprep.subr.mxu0 %v5456
    %6566 = vmatpush1.msra.mxu0 %v5455
    %6567 = vmatprep.subr.mxu0 %v5464
    %6568 = vmatpush1.msra.mxu0 %v5463
    %6569 = vmatprep.subr.mxu0 %v5472
    %6570 = vmatpush1.msra.mxu0 %v5471
    %6571 = vmatprep.subr.mxu0 %v5480
    %6572 = vmatpush1.msra.mxu0 %v5479
    %6573 = vmatprep.subr.mxu0 %v5488
    %6574 = vmatpush1.msra.mxu0 %v5487
    %6575 = vmatprep.subr.mxu0 %v5496
    %6576 = vmatpush1.msra.mxu0 %v5495
    %6577 = vmatprep.subr.mxu0 %v5504
    %6578 = vmatpush1.msra.mxu0 %v5503
    %6579 = vmatprep.mubr.f32.mxu0 %v4736
    %6580 = vmatmul.mubr.f32.gmra.mrb[0].mxu0 %v4735
    %v6581 = vpop.f32.mrb[0].mxu0
    %v6582 = vadd.f32 %v6511, %v6581
    %v6583 = vpop.f32.mrb[0].mxu0
    %v6584 = vadd.f32 %v6513, %v6583
    %6585 = vdwg.mxu0
    %6586 = vmatprep.subr.mxu0 %v5512
    %6587 = vmatpush1.msra.mxu0 %v5511
    %6588 = vmatprep.subr.mxu0 %v5520
    %6589 = vmatpush1.msra.mxu0 %v5519
    %6590 = vmatprep.subr.mxu0 %v5528
    %6591 = vmatpush1.msra.mxu0 %v5527
    %6592 = vmatprep.subr.mxu0 %v5536
    %6593 = vmatpush1.msra.mxu0 %v5535
    %6594 = vmatprep.subr.mxu0 %v5544
    %6595 = vmatpush1.msra.mxu0 %v5543
    %6596 = vmatprep.subr.mxu0 %v5552
    %6597 = vmatpush1.msra.mxu0 %v5551
    %6598 = vmatprep.subr.mxu0 %v5560
    %6599 = vmatpush1.msra.mxu0 %v5559
    %6600 = vmatprep.subr.mxu0 %v5568
    %6601 = vmatpush1.msra.mxu0 %v5567
    %6602 = vmatprep.subr.mxu0 %v5576
    %6603 = vmatpush1.msra.mxu0 %v5575
    %6604 = vmatprep.subr.mxu0 %v5584
    %6605 = vmatpush1.msra.mxu0 %v5583
    %6606 = vmatprep.subr.mxu0 %v5592
    %6607 = vmatpush1.msra.mxu0 %v5591
    %6608 = vmatprep.subr.mxu0 %v5600
    %6609 = vmatpush1.msra.mxu0 %v5599
    %6610 = vmatprep.subr.mxu0 %v5608
    %6611 = vmatpush1.msra.mxu0 %v5607
    %6612 = vmatprep.subr.mxu0 %v5616
    %6613 = vmatpush1.msra.mxu0 %v5615
    %6614 = vmatprep.subr.mxu0 %v5624
    %6615 = vmatpush1.msra.mxu0 %v5623
    %6616 = vmatprep.subr.mxu0 %v5632
    %6617 = vmatpush1.msra.mxu0 %v5631
    %6618 = vmatprep.subr.mxu0 %v5640
    %6619 = vmatpush1.msra.mxu0 %v5639
    %6620 = vmatprep.subr.mxu0 %v5648
    %6621 = vmatpush1.msra.mxu0 %v5647
    %6622 = vmatprep.subr.mxu0 %v5656
    %6623 = vmatpush1.msra.mxu0 %v5655
    %6624 = vmatprep.subr.mxu0 %v5664
    %6625 = vmatpush1.msra.mxu0 %v5663
    %6626 = vmatprep.subr.mxu0 %v5672
    %6627 = vmatpush1.msra.mxu0 %v5671
    %6628 = vmatprep.subr.mxu0 %v5680
    %6629 = vmatpush1.msra.mxu0 %v5679
    %6630 = vmatprep.subr.mxu0 %v5688
    %6631 = vmatpush1.msra.mxu0 %v5687
    %6632 = vmatprep.subr.mxu0 %v5696
    %6633 = vmatpush1.msra.mxu0 %v5695
    %6634 = vmatprep.subr.mxu0 %v5704
    %6635 = vmatpush1.msra.mxu0 %v5703
    %6636 = vmatprep.subr.mxu0 %v5712
    %6637 = vmatpush1.msra.mxu0 %v5711
    %6638 = vmatprep.subr.mxu0 %v5720
    %6639 = vmatpush1.msra.mxu0 %v5719
    %6640 = vmatprep.subr.mxu0 %v5728
    %6641 = vmatpush1.msra.mxu0 %v5727
    %6642 = vmatprep.subr.mxu0 %v5736
    %6643 = vmatpush1.msra.mxu0 %v5735
    %6644 = vmatprep.subr.mxu0 %v5744
    %6645 = vmatpush1.msra.mxu0 %v5743
    %6646 = vmatprep.subr.mxu0 %v5752
    %6647 = vmatpush1.msra.mxu0 %v5751
    %6648 = vmatprep.subr.mxu0 %v5760
    %6649 = vmatpush1.msra.mxu0 %v5759
    %6650 = vmatprep.mubr.f32.mxu0 %v4738
    %6651 = vmatmul.mubr.f32.gmra.mrb[0].mxu0 %v4737
    %v6652 = vpop.f32.mrb[0].mxu0
    %v6653 = vadd.f32 %v6582, %v6652
    %v6654 = vpop.f32.mrb[0].mxu0
    %v6655 = vadd.f32 %v6584, %v6654
    %6656 = vdwg.mxu0
    %6657 = vmatprep.subr.mxu0 %v4746
    %6658 = vmatpush1.msra.mxu0 %v4745
    %6659 = vmatprep.subr.mxu0 %v4754
    %6660 = vmatpush1.msra.mxu0 %v4753
    %6661 = vmatprep.subr.mxu0 %v4762
    %6662 = vmatpush1.msra.mxu0 %v4761
    %6663 = vmatprep.subr.mxu0 %v4770
    %6664 = vmatpush1.msra.mxu0 %v4769
    %6665 = vmatprep.subr.mxu0 %v4778
    %6666 = vmatpush1.msra.mxu0 %v4777
    %6667 = vmatprep.subr.mxu0 %v4786
    %6668 = vmatpush1.msra.mxu0 %v4785
    %6669 = vmatprep.subr.mxu0 %v4794
    %6670 = vmatpush1.msra.mxu0 %v4793
    %6671 = vmatprep.subr.mxu0 %v4802
    %6672 = vmatpush1.msra.mxu0 %v4801
    %6673 = vmatprep.subr.mxu0 %v4810
    %6674 = vmatpush1.msra.mxu0 %v4809
    %6675 = vmatprep.subr.mxu0 %v4818
    %6676 = vmatpush1.msra.mxu0 %v4817
    %6677 = vmatprep.subr.mxu0 %v4826
    %6678 = vmatpush1.msra.mxu0 %v4825
    %6679 = vmatprep.subr.mxu0 %v4834
    %6680 = vmatpush1.msra.mxu0 %v4833
    %6681 = vmatprep.subr.mxu0 %v4842
    %6682 = vmatpush1.msra.mxu0 %v4841
    %6683 = vmatprep.subr.mxu0 %v4850
    %6684 = vmatpush1.msra.mxu0 %v4849
    %6685 = vmatprep.subr.mxu0 %v4858
    %6686 = vmatpush1.msra.mxu0 %v4857
    %6687 = vmatprep.subr.mxu0 %v4866
    %6688 = vmatpush1.msra.mxu0 %v4865
    %6689 = vmatprep.subr.mxu0 %v4874
    %6690 = vmatpush1.msra.mxu0 %v4873
    %6691 = vmatprep.subr.mxu0 %v4882
    %6692 = vmatpush1.msra.mxu0 %v4881
    %6693 = vmatprep.subr.mxu0 %v4890
    %6694 = vmatpush1.msra.mxu0 %v4889
    %6695 = vmatprep.subr.mxu0 %v4898
    %6696 = vmatpush1.msra.mxu0 %v4897
    %6697 = vmatprep.subr.mxu0 %v4906
    %6698 = vmatpush1.msra.mxu0 %v4905
    %6699 = vmatprep.subr.mxu0 %v4914
    %6700 = vmatpush1.msra.mxu0 %v4913
    %6701 = vmatprep.subr.mxu0 %v4922
    %6702 = vmatpush1.msra.mxu0 %v4921
    %6703 = vmatprep.subr.mxu0 %v4930
    %6704 = vmatpush1.msra.mxu0 %v4929
    %6705 = vmatprep.subr.mxu0 %v4938
    %6706 = vmatpush1.msra.mxu0 %v4937
    %6707 = vmatprep.subr.mxu0 %v4946
    %6708 = vmatpush1.msra.mxu0 %v4945
    %6709 = vmatprep.subr.mxu0 %v4954
    %6710 = vmatpush1.msra.mxu0 %v4953
    %6711 = vmatprep.subr.mxu0 %v4962
    %6712 = vmatpush1.msra.mxu0 %v4961
    %6713 = vmatprep.subr.mxu0 %v4970
    %6714 = vmatpush1.msra.mxu0 %v4969
    %6715 = vmatprep.subr.mxu0 %v4978
    %6716 = vmatpush1.msra.mxu0 %v4977
    %6717 = vmatprep.subr.mxu0 %v4986
    %6718 = vmatpush1.msra.mxu0 %v4985
    %6719 = vmatprep.subr.mxu0 %v4994
    %6720 = vmatpush1.msra.mxu0 %v4993
    %6721 = vmatprep.mubr.f32.mxu0 %v4732
    %6722 = vmatmul.mubr.f32.gmra.mrb[0].mxu0 %v4731
    %v6723 = vpop.f32.mrb[0].mxu0
    %v6724 = vadd.f32 %v5792, %v6723
    %v6725 = vpop.f32.mrb[0].mxu0
    %v6726 = vadd.f32 %v5796, %v6725
    %6727 = vdwg.mxu0
    %6728 = vmatprep.subr.mxu0 %v5002
    %6729 = vmatpush1.msra.mxu0 %v5001
    %6730 = vmatprep.subr.mxu0 %v5010
    %6731 = vmatpush1.msra.mxu0 %v5009
    %6732 = vmatprep.subr.mxu0 %v5018
    %6733 = vmatpush1.msra.mxu0 %v5017
    %6734 = vmatprep.subr.mxu0 %v5026
    %6735 = vmatpush1.msra.mxu0 %v5025
    %6736 = vmatprep.subr.mxu0 %v5034
    %6737 = vmatpush1.msra.mxu0 %v5033
    %6738 = vmatprep.subr.mxu0 %v5042
    %6739 = vmatpush1.msra.mxu0 %v5041
    %6740 = vmatprep.subr.mxu0 %v5050
    %6741 = vmatpush1.msra.mxu0 %v5049
    %6742 = vmatprep.subr.mxu0 %v5058
    %6743 = vmatpush1.msra.mxu0 %v5057
    %6744 = vmatprep.subr.mxu0 %v5066
    %6745 = vmatpush1.msra.mxu0 %v5065
    %6746 = vmatprep.subr.mxu0 %v5074
    %6747 = vmatpush1.msra.mxu0 %v5073
    %6748 = vmatprep.subr.mxu0 %v5082
    %6749 = vmatpush1.msra.mxu0 %v5081
    %6750 = vmatprep.subr.mxu0 %v5090
    %6751 = vmatpush1.msra.mxu0 %v5089
    %6752 = vmatprep.subr.mxu0 %v5098
    %6753 = vmatpush1.msra.mxu0 %v5097
    %6754 = vmatprep.subr.mxu0 %v5106
    %6755 = vmatpush1.msra.mxu0 %v5105
    %6756 = vmatprep.subr.mxu0 %v5114
    %6757 = vmatpush1.msra.mxu0 %v5113
    %6758 = vmatprep.subr.mxu0 %v5122
    %6759 = vmatpush1.msra.mxu0 %v5121
    %6760 = vmatprep.subr.mxu0 %v5130
    %6761 = vmatpush1.msra.mxu0 %v5129
    %6762 = vmatprep.subr.mxu0 %v5138
    %6763 = vmatpush1.msra.mxu0 %v5137
    %6764 = vmatprep.subr.mxu0 %v5146
    %6765 = vmatpush1.msra.mxu0 %v5145
    %6766 = vmatprep.subr.mxu0 %v5154
    %6767 = vmatpush1.msra.mxu0 %v5153
    %6768 = vmatprep.subr.mxu0 %v5162
    %6769 = vmatpush1.msra.mxu0 %v5161
    %6770 = vmatprep.subr.mxu0 %v5170
    %6771 = vmatpush1.msra.mxu0 %v5169
    %6772 = vmatprep.subr.mxu0 %v5178
    %6773 = vmatpush1.msra.mxu0 %v5177
    %6774 = vmatprep.subr.mxu0 %v5186
    %6775 = vmatpush1.msra.mxu0 %v5185
    %6776 = vmatprep.subr.mxu0 %v5194
    %6777 = vmatpush1.msra.mxu0 %v5193
    %6778 = vmatprep.subr.mxu0 %v5202
    %6779 = vmatpush1.msra.mxu0 %v5201
    %6780 = vmatprep.subr.mxu0 %v5210
    %6781 = vmatpush1.msra.mxu0 %v5209
    %6782 = vmatprep.subr.mxu0 %v5218
    %6783 = vmatpush1.msra.mxu0 %v5217
    %6784 = vmatprep.subr.mxu0 %v5226
    %6785 = vmatpush1.msra.mxu0 %v5225
    %6786 = vmatprep.subr.mxu0 %v5234
    %6787 = vmatpush1.msra.mxu0 %v5233
    %6788 = vmatprep.subr.mxu0 %v5242
    %6789 = vmatpush1.msra.mxu0 %v5241
    %6790 = vmatprep.subr.mxu0 %v5250
    %6791 = vmatpush1.msra.mxu0 %v5249
    %6792 = vmatprep.mubr.f32.mxu0 %v4734
    %6793 = vmatmul.mubr.f32.gmra.mrb[0].mxu0 %v4733
    %v6794 = vpop.f32.mrb[0].mxu0
    %v6795 = vadd.f32 %v6724, %v6794
    %v6796 = vpop.f32.mrb[0].mxu0
    %v6797 = vadd.f32 %v6726, %v6796
    %6798 = vdwg.mxu0
    %6799 = vmatprep.subr.mxu0 %v5258
    %6800 = vmatpush1.msra.mxu0 %v5257
    %6801 = vmatprep.subr.mxu0 %v5266
    %6802 = vmatpush1.msra.mxu0 %v5265
    %6803 = vmatprep.subr.mxu0 %v5274
    %6804 = vmatpush1.msra.mxu0 %v5273
    %6805 = vmatprep.subr.mxu0 %v5282
    %6806 = vmatpush1.msra.mxu0 %v5281
    %6807 = vmatprep.subr.mxu0 %v5290
    %6808 = vmatpush1.msra.mxu0 %v5289
    %6809 = vmatprep.subr.mxu0 %v5298
    %6810 = vmatpush1.msra.mxu0 %v5297
    %6811 = vmatprep.subr.mxu0 %v5306
    %6812 = vmatpush1.msra.mxu0 %v5305
    %6813 = vmatprep.subr.mxu0 %v5314
    %6814 = vmatpush1.msra.mxu0 %v5313
    %6815 = vmatprep.subr.mxu0 %v5322
    %6816 = vmatpush1.msra.mxu0 %v5321
    %6817 = vmatprep.subr.mxu0 %v5330
    %6818 = vmatpush1.msra.mxu0 %v5329
    %6819 = vmatprep.subr.mxu0 %v5338
    %6820 = vmatpush1.msra.mxu0 %v5337
    %6821 = vmatprep.subr.mxu0 %v5346
    %6822 = vmatpush1.msra.mxu0 %v5345
    %6823 = vmatprep.subr.mxu0 %v5354
    %6824 = vmatpush1.msra.mxu0 %v5353
    %6825 = vmatprep.subr.mxu0 %v5362
    %6826 = vmatpush1.msra.mxu0 %v5361
    %6827 = vmatprep.subr.mxu0 %v5370
    %6828 = vmatpush1.msra.mxu0 %v5369
    %6829 = vmatprep.subr.mxu0 %v5378
    %6830 = vmatpush1.msra.mxu0 %v5377
    %6831 = vmatprep.subr.mxu0 %v5386
    %6832 = vmatpush1.msra.mxu0 %v5385
    %6833 = vmatprep.subr.mxu0 %v5394
    %6834 = vmatpush1.msra.mxu0 %v5393
    %6835 = vmatprep.subr.mxu0 %v5402
    %6836 = vmatpush1.msra.mxu0 %v5401
    %6837 = vmatprep.subr.mxu0 %v5410
    %6838 = vmatpush1.msra.mxu0 %v5409
    %6839 = vmatprep.subr.mxu0 %v5418
    %6840 = vmatpush1.msra.mxu0 %v5417
    %6841 = vmatprep.subr.mxu0 %v5426
    %6842 = vmatpush1.msra.mxu0 %v5425
    %6843 = vmatprep.subr.mxu0 %v5434
    %6844 = vmatpush1.msra.mxu0 %v5433
    %6845 = vmatprep.subr.mxu0 %v5442
    %6846 = vmatpush1.msra.mxu0 %v5441
    %6847 = vmatprep.subr.mxu0 %v5450
    %6848 = vmatpush1.msra.mxu0 %v5449
    %6849 = vmatprep.subr.mxu0 %v5458
    %6850 = vmatpush1.msra.mxu0 %v5457
    %6851 = vmatprep.subr.mxu0 %v5466
    %6852 = vmatpush1.msra.mxu0 %v5465
    %6853 = vmatprep.subr.mxu0 %v5474
    %6854 = vmatpush1.msra.mxu0 %v5473
    %6855 = vmatprep.subr.mxu0 %v5482
    %6856 = vmatpush1.msra.mxu0 %v5481
    %6857 = vmatprep.subr.mxu0 %v5490
    %6858 = vmatpush1.msra.mxu0 %v5489
    %6859 = vmatprep.subr.mxu0 %v5498
    %6860 = vmatpush1.msra.mxu0 %v5497
    %6861 = vmatprep.subr.mxu0 %v5506
    %6862 = vmatpush1.msra.mxu0 %v5505
    %6863 = vmatprep.mubr.f32.mxu0 %v4736
    %6864 = vmatmul.mubr.f32.gmra.mrb[0].mxu0 %v4735
    %v6865 = vpop.f32.mrb[0].mxu0
    %v6866 = vadd.f32 %v6795, %v6865
    %v6867 = vpop.f32.mrb[0].mxu0
    %v6868 = vadd.f32 %v6797, %v6867
    %6869 = vdwg.mxu0
    %6870 = vmatprep.subr.mxu0 %v5514
    %6871 = vmatpush1.msra.mxu0 %v5513
    %6872 = vmatprep.subr.mxu0 %v5522
    %6873 = vmatpush1.msra.mxu0 %v5521
    %6874 = vmatprep.subr.mxu0 %v5530
    %6875 = vmatpush1.msra.mxu0 %v5529
    %6876 = vmatprep.subr.mxu0 %v5538
    %6877 = vmatpush1.msra.mxu0 %v5537
    %6878 = vmatprep.subr.mxu0 %v5546
    %6879 = vmatpush1.msra.mxu0 %v5545
    %6880 = vmatprep.subr.mxu0 %v5554
    %6881 = vmatpush1.msra.mxu0 %v5553
    %6882 = vmatprep.subr.mxu0 %v5562
    %6883 = vmatpush1.msra.mxu0 %v5561
    %6884 = vmatprep.subr.mxu0 %v5570
    %6885 = vmatpush1.msra.mxu0 %v5569
    %6886 = vmatprep.subr.mxu0 %v5578
    %6887 = vmatpush1.msra.mxu0 %v5577
    %6888 = vmatprep.subr.mxu0 %v5586
    %6889 = vmatpush1.msra.mxu0 %v5585
    %6890 = vmatprep.subr.mxu0 %v5594
    %6891 = vmatpush1.msra.mxu0 %v5593
    %6892 = vmatprep.subr.mxu0 %v5602
    %6893 = vmatpush1.msra.mxu0 %v5601
    %6894 = vmatprep.subr.mxu0 %v5610
    %6895 = vmatpush1.msra.mxu0 %v5609
    %6896 = vmatprep.subr.mxu0 %v5618
    %6897 = vmatpush1.msra.mxu0 %v5617
    %6898 = vmatprep.subr.mxu0 %v5626
    %6899 = vmatpush1.msra.mxu0 %v5625
    %6900 = vmatprep.subr.mxu0 %v5634
    %6901 = vmatpush1.msra.mxu0 %v5633
    %6902 = vmatprep.subr.mxu0 %v5642
    %6903 = vmatpush1.msra.mxu0 %v5641
    %6904 = vmatprep.subr.mxu0 %v5650
    %6905 = vmatpush1.msra.mxu0 %v5649
    %6906 = vmatprep.subr.mxu0 %v5658
    %6907 = vmatpush1.msra.mxu0 %v5657
    %6908 = vmatprep.subr.mxu0 %v5666
    %6909 = vmatpush1.msra.mxu0 %v5665
    %6910 = vmatprep.subr.mxu0 %v5674
    %6911 = vmatpush1.msra.mxu0 %v5673
    %6912 = vmatprep.subr.mxu0 %v5682
    %6913 = vmatpush1.msra.mxu0 %v5681
    %6914 = vmatprep.subr.mxu0 %v5690
    %6915 = vmatpush1.msra.mxu0 %v5689
    %6916 = vmatprep.subr.mxu0 %v5698
    %6917 = vmatpush1.msra.mxu0 %v5697
    %6918 = vmatprep.subr.mxu0 %v5706
    %6919 = vmatpush1.msra.mxu0 %v5705
    %6920 = vmatprep.subr.mxu0 %v5714
    %6921 = vmatpush1.msra.mxu0 %v5713
    %6922 = vmatprep.subr.mxu0 %v5722
    %6923 = vmatpush1.msra.mxu0 %v5721
    %6924 = vmatprep.subr.mxu0 %v5730
    %6925 = vmatpush1.msra.mxu0 %v5729
    %6926 = vmatprep.subr.mxu0 %v5738
    %6927 = vmatpush1.msra.mxu0 %v5737
    %6928 = vmatprep.subr.mxu0 %v5746
    %6929 = vmatpush1.msra.mxu0 %v5745
    %6930 = vmatprep.subr.mxu0 %v5754
    %6931 = vmatpush1.msra.mxu0 %v5753
    %6932 = vmatprep.subr.mxu0 %v5762
    %6933 = vmatpush1.msra.mxu0 %v5761
    %6934 = vmatprep.mubr.f32.mxu0 %v4738
    %6935 = vmatmul.mubr.f32.gmra.mrb[0].mxu0 %v4737
    %v6936 = vpop.f32.mrb[0].mxu0
    %v6937 = vadd.f32 %v6866, %v6936
    %v6938 = vpop.f32.mrb[0].mxu0
    %v6939 = vadd.f32 %v6868, %v6938
    %6940 = vdwg.mxu0
    %v6941 = vxor.u32 %v6653, 2147483648
    %v6942 = vxor.u32 %v6655, 2147483648
    %v6943 = vxor.u32 %v6937, 2147483648
    %v6944 = vxor.u32 %v6939, 2147483648
    %v6945 = vmul.f32 %v6941, 1.442695
    %v6946 = vpow.pop %v6945
    %v6947 = vmul.f32 %v6942, 1.442695
    %v6948 = vpow.pop %v6947
    %v6949 = vmul.f32 %v6943, 1.442695
    %v6950 = vpow.pop %v6949
    %v6951 = vmul.f32 %v6944, 1.442695
    %v6952 = vpow.pop %v6951
    %v6953 = vadd.f32 %v6946, 1.0
    %v6954 = vadd.f32 %v6948, 1.0
    %v6955 = vadd.f32 %v6950, 1.0
    %v6956 = vadd.f32 %v6952, 1.0
    %v6957 = vrcp.pop %v6953
    %v6958 = vmul.f32 1.0, %v6957
    %v6959 = vrcp.pop %v6954
    %v6960 = vmul.f32 1.0, %v6959
    %v6961 = vrcp.pop %v6955
    %v6962 = vmul.f32 1.0, %v6961
    %v6963 = vrcp.pop %v6956
    %v6964 = vmul.f32 1.0, %v6963
    %v6965 = vmul.f32 %v6085, %v6958
    %v6966 = vmul.f32 %v6087, %v6960
    %v6967 = vmul.f32 %v6369, %v6962
    %v6968 = vmul.f32 %v6371, %v6964
    %v6969 = vld [vmem:[%s5] sm:$0xff]
    %v6970 = vld [vmem:[%s5 + $0x8] sm:$0xff]
    %v6971 = vld [vmem:[%s5 + $0x10] sm:$0xff]
    %v6972 = vld [vmem:[%s5 + $0x18] sm:$0xff]
    %v6973 = vld [vmem:[%s5 + $0x20] sm:$0xff]
    %v6974 = vld [vmem:[%s5 + $0x28] sm:$0xff]
    %v6975 = vld [vmem:[%s5 + $0x30] sm:$0xff]
    %v6976 = vld [vmem:[%s5 + $0x38] sm:$0xff]
    %v6977 = vld [vmem:[%s5 + $0x40] sm:$0xff]
    %v6978 = vld [vmem:[%s5 + $0x48] sm:$0xff]
    %v6979 = vld [vmem:[%s5 + $0x50] sm:$0xff]
    %v6980 = vld [vmem:[%s5 + $0x58] sm:$0xff]
    %v6981 = vld [vmem:[%s5 + $0x60] sm:$0xff]
    %v6982 = vld [vmem:[%s5 + $0x68] sm:$0xff]
    %v6983 = vld [vmem:[%s5 + $0x70] sm:$0xff]
    %v6984 = vld [vmem:[%s5 + $0x78] sm:$0xff]
    %v6985 = vld [vmem:[%s5 + $0x80] sm:$0xff]
    %v6986 = vld [vmem:[%s5 + $0x88] sm:$0xff]
    %v6987 = vld [vmem:[%s5 + $0x90] sm:$0xff]
    %v6988 = vld [vmem:[%s5 + $0x98] sm:$0xff]
    %v6989 = vld [vmem:[%s5 + $0xa0] sm:$0xff]
    %v6990 = vld [vmem:[%s5 + $0xa8] sm:$0xff]
    %v6991 = vld [vmem:[%s5 + $0xb0] sm:$0xff]
    %v6992 = vld [vmem:[%s5 + $0xb8] sm:$0xff]
    %v6993 = vld [vmem:[%s5 + $0xc0] sm:$0xff]
    %v6994 = vld [vmem:[%s5 + $0xc8] sm:$0xff]
    %v6995 = vld [vmem:[%s5 + $0xd0] sm:$0xff]
    %v6996 = vld [vmem:[%s5 + $0xd8] sm:$0xff]
    %v6997 = vld [vmem:[%s5 + $0xe0] sm:$0xff]
    %v6998 = vld [vmem:[%s5 + $0xe8] sm:$0xff]
    %v6999 = vld [vmem:[%s5 + $0xf0] sm:$0xff]
    %v7000 = vld [vmem:[%s5 + $0xf8] sm:$0xff]
    %v7001 = vld [vmem:[%s5 + $0x100] sm:$0xff]
    %v7002 = vld [vmem:[%s5 + $0x108] sm:$0xff]
    %v7003 = vld [vmem:[%s5 + $0x110] sm:$0xff]
    %v7004 = vld [vmem:[%s5 + $0x118] sm:$0xff]
    %v7005 = vld [vmem:[%s5 + $0x120] sm:$0xff]
    %v7006 = vld [vmem:[%s5 + $0x128] sm:$0xff]
    %v7007 = vld [vmem:[%s5 + $0x130] sm:$0xff]
    %v7008 = vld [vmem:[%s5 + $0x138] sm:$0xff]
    %v7009 = vld [vmem:[%s5 + $0x140] sm:$0xff]
    %v7010 = vld [vmem:[%s5 + $0x148] sm:$0xff]
    %v7011 = vld [vmem:[%s5 + $0x150] sm:$0xff]
    %v7012 = vld [vmem:[%s5 + $0x158] sm:$0xff]
    %v7013 = vld [vmem:[%s5 + $0x160] sm:$0xff]
    %v7014 = vld [vmem:[%s5 + $0x168] sm:$0xff]
    %v7015 = vld [vmem:[%s5 + $0x170] sm:$0xff]
    %v7016 = vld [vmem:[%s5 + $0x178] sm:$0xff]
    %v7017 = vld [vmem:[%s5 + $0x180] sm:$0xff]
    %v7018 = vld [vmem:[%s5 + $0x188] sm:$0xff]
    %v7019 = vld [vmem:[%s5 + $0x190] sm:$0xff]
    %v7020 = vld [vmem:[%s5 + $0x198] sm:$0xff]
    %v7021 = vld [vmem:[%s5 + $0x1a0] sm:$0xff]
    %v7022 = vld [vmem:[%s5 + $0x1a8] sm:$0xff]
    %v7023 = vld [vmem:[%s5 + $0x1b0] sm:$0xff]
    %v7024 = vld [vmem:[%s5 + $0x1b8] sm:$0xff]
    %v7025 = vld [vmem:[%s5 + $0x1c0] sm:$0xff]
    %v7026 = vld [vmem:[%s5 + $0x1c8] sm:$0xff]
    %v7027 = vld [vmem:[%s5 + $0x1d0] sm:$0xff]
    %v7028 = vld [vmem:[%s5 + $0x1d8] sm:$0xff]
    %v7029 = vld [vmem:[%s5 + $0x1e0] sm:$0xff]
    %v7030 = vld [vmem:[%s5 + $0x1e8] sm:$0xff]
    %v7031 = vld [vmem:[%s5 + $0x1f0] sm:$0xff]
    %v7032 = vld [vmem:[%s5 + $0x1f8] sm:$0xff]
    %v7033 = vld [vmem:[#allocation9] sm:$0x1]
    %v7035 = vlaneseq
    %v7036 = vshrl.u32 %v7035, 7
    %v7037 = vsub.s32 0, %v7036
    %v7038 = vrot.slane %v7033, %v7037
    %7040 = vmatprep.subr.mxu0 0.0
    %7041 = vmatpush1.msra.mxu0 %v6969
    %7042 = vmatprep.subr.mxu0 0.0
    %7043 = vmatpush1.msra.mxu0 %v6970
    %7044 = vmatprep.subr.mxu0 0.0
    %7045 = vmatpush1.msra.mxu0 %v6971
    %7046 = vmatprep.subr.mxu0 0.0
    %7047 = vmatpush1.msra.mxu0 %v6972
    %7048 = vmatprep.subr.mxu0 0.0
    %7049 = vmatpush1.msra.mxu0 %v6973
    %7050 = vmatprep.subr.mxu0 0.0
    %7051 = vmatpush1.msra.mxu0 %v6974
    %7052 = vmatprep.subr.mxu0 0.0
    %7053 = vmatpush1.msra.mxu0 %v6975
    %7054 = vmatprep.subr.mxu0 0.0
    %7055 = vmatpush1.msra.mxu0 %v6976
    %7056 = vmatprep.subr.mxu0 0.0
    %7057 = vmatpush1.msra.mxu0 %v6977
    %7058 = vmatprep.subr.mxu0 0.0
    %7059 = vmatpush1.msra.mxu0 %v6978
    %7060 = vmatprep.subr.mxu0 0.0
    %7061 = vmatpush1.msra.mxu0 %v6979
    %7062 = vmatprep.subr.mxu0 0.0
    %7063 = vmatpush1.msra.mxu0 %v6980
    %7064 = vmatprep.subr.mxu0 0.0
    %7065 = vmatpush1.msra.mxu0 %v6981
    %7066 = vmatprep.subr.mxu0 0.0
    %7067 = vmatpush1.msra.mxu0 %v6982
    %7068 = vmatprep.subr.mxu0 0.0
    %7069 = vmatpush1.msra.mxu0 %v6983
    %7070 = vmatprep.subr.mxu0 0.0
    %7071 = vmatpush1.msra.mxu0 %v6984
    %7072 = vmatprep.subr.mxu0 0.0
    %7073 = vmatpush1.msra.mxu0 %v6985
    %7074 = vmatprep.subr.mxu0 0.0
    %7075 = vmatpush1.msra.mxu0 %v6986
    %7076 = vmatprep.subr.mxu0 0.0
    %7077 = vmatpush1.msra.mxu0 %v6987
    %7078 = vmatprep.subr.mxu0 0.0
    %7079 = vmatpush1.msra.mxu0 %v6988
    %7080 = vmatprep.subr.mxu0 0.0
    %7081 = vmatpush1.msra.mxu0 %v6989
    %7082 = vmatprep.subr.mxu0 0.0
    %7083 = vmatpush1.msra.mxu0 %v6990
    %7084 = vmatprep.subr.mxu0 0.0
    %7085 = vmatpush1.msra.mxu0 %v6991
    %7086 = vmatprep.subr.mxu0 0.0
    %7087 = vmatpush1.msra.mxu0 %v6992
    %7088 = vmatprep.subr.mxu0 0.0
    %7089 = vmatpush1.msra.mxu0 %v6993
    %7090 = vmatprep.subr.mxu0 0.0
    %7091 = vmatpush1.msra.mxu0 %v6994
    %7092 = vmatprep.subr.mxu0 0.0
    %7093 = vmatpush1.msra.mxu0 %v6995
    %7094 = vmatprep.subr.mxu0 0.0
    %7095 = vmatpush1.msra.mxu0 %v6996
    %7096 = vmatprep.subr.mxu0 0.0
    %7097 = vmatpush1.msra.mxu0 %v6997
    %7098 = vmatprep.subr.mxu0 0.0
    %7099 = vmatpush1.msra.mxu0 %v6998
    %7100 = vmatprep.subr.mxu0 0.0
    %7101 = vmatpush1.msra.mxu0 %v6999
    %7102 = vmatprep.subr.mxu0 0.0
    %7103 = vmatpush1.msra.mxu0 %v7000
    %7104 = vmatprep.mubr.f32.mxu0 %v6966
    %7105 = vmatmul.mubr.f32.gmra.mrb[0].mxu0 %v6965
    %v7106 = vpop.f32.mrb[0].mxu0
    %v7107 = vadd.f32 %v7038, %v7106
    %v7108 = vpop.f32.mrb[0].mxu0
    %7109 = vdwg.mxu0
    %7110 = vmatprep.subr.mxu0 0.0
    %7111 = vmatpush1.msra.mxu0 %v7001
    %7112 = vmatprep.subr.mxu0 0.0
    %7113 = vmatpush1.msra.mxu0 %v7002
    %7114 = vmatprep.subr.mxu0 0.0
    %7115 = vmatpush1.msra.mxu0 %v7003
    %7116 = vmatprep.subr.mxu0 0.0
    %7117 = vmatpush1.msra.mxu0 %v7004
    %7118 = vmatprep.subr.mxu0 0.0
    %7119 = vmatpush1.msra.mxu0 %v7005
    %7120 = vmatprep.subr.mxu0 0.0
    %7121 = vmatpush1.msra.mxu0 %v7006
    %7122 = vmatprep.subr.mxu0 0.0
    %7123 = vmatpush1.msra.mxu0 %v7007
    %7124 = vmatprep.subr.mxu0 0.0
    %7125 = vmatpush1.msra.mxu0 %v7008
    %7126 = vmatprep.subr.mxu0 0.0
    %7127 = vmatpush1.msra.mxu0 %v7009
    %7128 = vmatprep.subr.mxu0 0.0
    %7129 = vmatpush1.msra.mxu0 %v7010
    %7130 = vmatprep.subr.mxu0 0.0
    %7131 = vmatpush1.msra.mxu0 %v7011
    %7132 = vmatprep.subr.mxu0 0.0
    %7133 = vmatpush1.msra.mxu0 %v7012
    %7134 = vmatprep.subr.mxu0 0.0
    %7135 = vmatpush1.msra.mxu0 %v7013
    %7136 = vmatprep.subr.mxu0 0.0
    %7137 = vmatpush1.msra.mxu0 %v7014
    %7138 = vmatprep.subr.mxu0 0.0
    %7139 = vmatpush1.msra.mxu0 %v7015
    %7140 = vmatprep.subr.mxu0 0.0
    %7141 = vmatpush1.msra.mxu0 %v7016
    %7142 = vmatprep.subr.mxu0 0.0
    %7143 = vmatpush1.msra.mxu0 %v7017
    %7144 = vmatprep.subr.mxu0 0.0
    %7145 = vmatpush1.msra.mxu0 %v7018
    %7146 = vmatprep.subr.mxu0 0.0
    %7147 = vmatpush1.msra.mxu0 %v7019
    %7148 = vmatprep.subr.mxu0 0.0
    %7149 = vmatpush1.msra.mxu0 %v7020
    %7150 = vmatprep.subr.mxu0 0.0
    %7151 = vmatpush1.msra.mxu0 %v7021
    %7152 = vmatprep.subr.mxu0 0.0
    %7153 = vmatpush1.msra.mxu0 %v7022
    %7154 = vmatprep.subr.mxu0 0.0
    %7155 = vmatpush1.msra.mxu0 %v7023
    %7156 = vmatprep.subr.mxu0 0.0
    %7157 = vmatpush1.msra.mxu0 %v7024
    %7158 = vmatprep.subr.mxu0 0.0
    %7159 = vmatpush1.msra.mxu0 %v7025
    %7160 = vmatprep.subr.mxu0 0.0
    %7161 = vmatpush1.msra.mxu0 %v7026
    %7162 = vmatprep.subr.mxu0 0.0
    %7163 = vmatpush1.msra.mxu0 %v7027
    %7164 = vmatprep.subr.mxu0 0.0
    %7165 = vmatpush1.msra.mxu0 %v7028
    %7166 = vmatprep.subr.mxu0 0.0
    %7167 = vmatpush1.msra.mxu0 %v7029
    %7168 = vmatprep.subr.mxu0 0.0
    %7169 = vmatpush1.msra.mxu0 %v7030
    %7170 = vmatprep.subr.mxu0 0.0
    %7171 = vmatpush1.msra.mxu0 %v7031
    %7172 = vmatprep.subr.mxu0 0.0
    %7173 = vmatpush1.msra.mxu0 %v7032
    %7174 = vmatprep.mubr.f32.mxu0 %v6968
    %7175 = vmatmul.mubr.f32.gmra.mrb[0].mxu0 %v6967
    %v7176 = vpop.f32.mrb[0].mxu0
    %v7177 = vadd.f32 %v7107, %v7176
    %v7178 = vpop.f32.mrb[0].mxu0
    %7179 = vdwg.mxu0
    %v7180 = vxor.u32 %v7177, 2147483648
    %v7181 = vmul.f32 %v7180, 1.442695
    %v7182 = vpow.pop %v7181
    %v7183 = vadd.f32 %v7182, 1.0
    %v7184 = vrcp.pop %v7183
    %v7185 = vmul.f32 1.0, %v7184
    %7187 = vrot.lane.b32.xlu0 %v7185, 96
    %v7188 = vpop.permute.xlu0 %7187
    %v7190 = vmul.f32 %v7177, %v7188
    %vm7191 = vcmask 261120
    %v7192 = vsel %vm7191, %v7190, 0.0
    %vm7193 = vcmask 523264
    %v7194 = vsel %vm7193, %v7192, 0.0
    %v7195 = vld [vmem:[%s7] sm:$0xff]
    %v7196 = vld [vmem:[%s7 + $0x8] sm:$0xff]
    %v7197 = vld [vmem:[%s7 + $0x10] sm:$0xff]
    %v7198 = vld [vmem:[%s7 + $0x18] sm:$0xff]
    %v7199 = vld [vmem:[%s7 + $0x20] sm:$0xff]
    %v7200 = vld [vmem:[%s7 + $0x28] sm:$0xff]
    %v7201 = vld [vmem:[%s7 + $0x30] sm:$0xff]
    %v7202 = vld [vmem:[%s7 + $0x38] sm:$0xff]
    %v7203 = vld [vmem:[%s7 + $0x40] sm:$0xff]
    %v7204 = vld [vmem:[%s7 + $0x48] sm:$0xff]
    %v7205 = vld [vmem:[%s7 + $0x50] sm:$0xff]
    %v7206 = vld [vmem:[%s7 + $0x58] sm:$0xff]
    %v7207 = vld [vmem:[%s7 + $0x60] sm:$0xff]
    %v7208 = vld [vmem:[%s7 + $0x68] sm:$0xff]
    %v7209 = vld [vmem:[%s7 + $0x70] sm:$0xff]
    %v7210 = vld [vmem:[%s7 + $0x78] sm:$0xff]
    %v7211 = vld [vmem:[%s7 + $0x80] sm:$0xff]
    %v7212 = vld [vmem:[%s7 + $0x88] sm:$0xff]
    %v7213 = vld [vmem:[%s7 + $0x90] sm:$0xff]
    %v7214 = vld [vmem:[%s7 + $0x98] sm:$0xff]
    %v7215 = vld [vmem:[%s7 + $0xa0] sm:$0xff]
    %v7216 = vld [vmem:[%s7 + $0xa8] sm:$0xff]
    %v7217 = vld [vmem:[%s7 + $0xb0] sm:$0xff]
    %v7218 = vld [vmem:[%s7 + $0xb8] sm:$0xff]
    %v7219 = vld [vmem:[#allocation10] sm:$0x3]
    %v7221 = vlaneseq
    %v7222 = vshrl.u32 %v7221, 7
    %v7223 = vsub.s32 0, %v7222
    %v7224 = vrot.slane %v7219, %v7223
    %v7225 = vlaneseq
    %v7226 = vshrl.u32 %v7225, 7
    %v7227 = vsub.s32 1, %v7226
    %v7228 = vrot.slane %v7219, %v7227
    %vm7231 = vcmask 785408
    %v7233 = vsel %vm7231, %v7194, 0
    %7235 = vmatprep.subr.mxu0 %v7196
    %7236 = vmatpush1.msra.mxu0 %v7195
    %7237 = vmatprep.subr.mxu0 %v7198
    %7238 = vmatpush1.msra.mxu0 %v7197
    %7239 = vmatprep.subr.mxu0 %v7200
    %7240 = vmatpush1.msra.mxu0 %v7199
    %7241 = vmatprep.subr.mxu0 %v7202
    %7242 = vmatpush1.msra.mxu0 %v7201
    %7243 = vmatprep.subr.mxu0 %v7204
    %7244 = vmatpush1.msra.mxu0 %v7203
    %7245 = vmatprep.subr.mxu0 %v7206
    %7246 = vmatpush1.msra.mxu0 %v7205
    %7247 = vmatprep.subr.mxu0 %v7208
    %7248 = vmatpush1.msra.mxu0 %v7207
    %7249 = vmatprep.subr.mxu0 %v7210
    %7250 = vmatpush1.msra.mxu0 %v7209
    %7251 = vmatprep.subr.mxu0 %v7212
    %7252 = vmatpush1.msra.mxu0 %v7211
    %7253 = vmatprep.subr.mxu0 %v7214
    %7254 = vmatpush1.msra.mxu0 %v7213
    %7255 = vmatprep.subr.mxu0 %v7216
    %7256 = vmatpush1.msra.mxu0 %v7215
    %7257 = vmatprep.subr.mxu0 %v7218
    %7258 = vmatpush1.msra.mxu0 %v7217
    %7259 = vmatprep.subr.mxu0 0.0
    %7260 = vmatpush1.msra.mxu0 0.0
    %7261 = vmatprep.subr.mxu0 0.0
    %7262 = vmatpush1.msra.mxu0 0.0
    %7263 = vmatprep.subr.mxu0 0.0
    %7264 = vmatpush1.msra.mxu0 0.0
    %7265 = vmatprep.subr.mxu0 0.0
    %7266 = vmatpush1.msra.mxu0 0.0
    %7267 = vmatprep.subr.mxu0 0.0
    %7268 = vmatpush1.msra.mxu0 0.0
    %7269 = vmatprep.subr.mxu0 0.0
    %7270 = vmatpush1.msra.mxu0 0.0
    %7271 = vmatprep.subr.mxu0 0.0
    %7272 = vmatpush1.msra.mxu0 0.0
    %7273 = vmatprep.subr.mxu0 0.0
    %7274 = vmatpush1.msra.mxu0 0.0
    %7275 = vmatprep.subr.mxu0 0.0
    %7276 = vmatpush1.msra.mxu0 0.0
    %7277 = vmatprep.subr.mxu0 0.0
    %7278 = vmatpush1.msra.mxu0 0.0
    %7279 = vmatprep.subr.mxu0 0.0
    %7280 = vmatpush1.msra.mxu0 0.0
    %7281 = vmatprep.subr.mxu0 0.0
    %7282 = vmatpush1.msra.mxu0 0.0
    %7283 = vmatprep.subr.mxu0 0.0
    %7284 = vmatpush1.msra.mxu0 0.0
    %7285 = vmatprep.subr.mxu0 0.0
    %7286 = vmatpush1.msra.mxu0 0.0
    %7287 = vmatprep.subr.mxu0 0.0
    %7288 = vmatpush1.msra.mxu0 0.0
    %7289 = vmatprep.subr.mxu0 0.0
    %7290 = vmatpush1.msra.mxu0 0.0
    %7291 = vmatprep.subr.mxu0 0.0
    %7292 = vmatpush1.msra.mxu0 0.0
    %7293 = vmatprep.subr.mxu0 0.0
    %7294 = vmatpush1.msra.mxu0 0.0
    %7295 = vmatprep.subr.mxu0 0.0
    %7296 = vmatpush1.msra.mxu0 0.0
    %7297 = vmatprep.subr.mxu0 0.0
    %7298 = vmatpush1.msra.mxu0 0.0
    %7299 = vmatprep.mubr.f32.mxu0 0.0
    %7300 = vmatmul.mubr.f32.gmra.mrb[0].mxu0 %v7233
    %v7301 = vpop.f32.mrb[0].mxu0
    %v7302 = vadd.f32 %v7224, %v7301
    %v7303 = vpop.f32.mrb[0].mxu0
    %v7304 = vadd.f32 %v7228, %v7303
    %7305 = vdwg.mxu0
    %v7306 = vxor.u32 %v7304, 2147483648
    %v7307 = vmul.f32 %v7306, 1.442695
    %v7308 = vpow.pop %v7307
    %v7309 = vadd.f32 %v7308, 1.0
    %v7310 = vrcp.pop %v7309
    %v7311 = vmul.f32 1.0, %v7310
    %v7312 = vmul.f32 %v7311, 0.99
    %v7313 = vadd.f32 %v7312, 0.01
    %v7314 = vxor.u32 %v7302, 2147483648
    %v7315 = vmul.f32 %v7314, 1.442695
    %v7316 = vpow.pop %v7315
    %v7317 = vadd.f32 %v7316, 1.0
    %v7318 = vrcp.pop %v7317
    %v7319 = vmul.f32 1.0, %v7318
    %v7320 = vtanh.pop %v7302
    %v7321 = vmul.f32 %v7319, 0.0
    %7323 = vrot.lane.b32.xlu0 %v7320, 64
    %v7324 = vpop.permute.xlu0 %7323
    %v7326 = vmul.f32 %v7319, %v7324
    %7328 = vrot.lane.b32.xlu0 %v7326, 32
    %v7329 = vpop.permute.xlu0 %7328
    %v7331 = vadd.f32 %v7321, %v7329
    %v7332 = vtanh.pop %v7331
    %7334 = vrot.lane.b32.xlu0 %v7332, 64
    %v7335 = vpop.permute.xlu0 %7334
    %v7337 = vmul.f32 %v7319, %v7335
    %v7338 = vld [vmem:[%s9] sm:$0xff]
    %v7339 = vld [vmem:[%s9 + $0x8] sm:$0xff]
    %v7340 = vld [vmem:[%s9 + $0x10] sm:$0xff]
    %v7341 = vld [vmem:[%s9 + $0x18] sm:$0xff]
    %v7342 = vld [vmem:[#allocation12] sm:$0x1]
    %v7344 = vlaneseq
    %v7345 = vshrl.u32 %v7344, 7
    %v7346 = vsub.s32 0, %v7345
    %v7347 = vrot.slane %v7342, %v7346
    %7350 = vrot.lane.b32.xlu0 %v7337, 32
    %v7351 = vpop.permute.xlu0 %7350
    %v7352 = vsel %vm7191, %v7351, 0
    %7354 = vmatprep.subr.mxu0 0.0
    %7355 = vmatpush1.msra.mxu0 %v7338
    %7356 = vmatprep.subr.mxu0 0.0
    %7357 = vmatpush1.msra.mxu0 %v7339
    %7358 = vmatprep.subr.mxu0 0.0
    %7359 = vmatpush1.msra.mxu0 %v7340
    %7360 = vmatprep.subr.mxu0 0.0
    %7361 = vmatpush1.msra.mxu0 %v7341
    %7362 = vmatprep.subr.mxu0 0.0
    %7363 = vmatpush1.msra.mxu0 0.0
    %7364 = vmatprep.subr.mxu0 0.0
    %7365 = vmatpush1.msra.mxu0 0.0
    %7366 = vmatprep.subr.mxu0 0.0
    %7367 = vmatpush1.msra.mxu0 0.0
    %7368 = vmatprep.subr.mxu0 0.0
    %7369 = vmatpush1.msra.mxu0 0.0
    %7370 = vmatprep.subr.mxu0 0.0
    %7371 = vmatpush1.msra.mxu0 0.0
    %7372 = vmatprep.subr.mxu0 0.0
    %7373 = vmatpush1.msra.mxu0 0.0
    %7374 = vmatprep.subr.mxu0 0.0
    %7375 = vmatpush1.msra.mxu0 0.0
    %7376 = vmatprep.subr.mxu0 0.0
    %7377 = vmatpush1.msra.mxu0 0.0
    %7378 = vmatprep.subr.mxu0 0.0
    %7379 = vmatpush1.msra.mxu0 0.0
    %7380 = vmatprep.subr.mxu0 0.0
    %7381 = vmatpush1.msra.mxu0 0.0
    %7382 = vmatprep.subr.mxu0 0.0
    %7383 = vmatpush1.msra.mxu0 0.0
    %7384 = vmatprep.subr.mxu0 0.0
    %7385 = vmatpush1.msra.mxu0 0.0
    %7386 = vmatprep.subr.mxu0 0.0
    %7387 = vmatpush1.msra.mxu0 0.0
    %7388 = vmatprep.subr.mxu0 0.0
    %7389 = vmatpush1.msra.mxu0 0.0
    %7390 = vmatprep.subr.mxu0 0.0
    %7391 = vmatpush1.msra.mxu0 0.0
    %7392 = vmatprep.subr.mxu0 0.0
    %7393 = vmatpush1.msra.mxu0 0.0
    %7394 = vmatprep.subr.mxu0 0.0
    %7395 = vmatpush1.msra.mxu0 0.0
    %7396 = vmatprep.subr.mxu0 0.0
    %7397 = vmatpush1.msra.mxu0 0.0
    %7398 = vmatprep.subr.mxu0 0.0
    %7399 = vmatpush1.msra.mxu0 0.0
    %7400 = vmatprep.subr.mxu0 0.0
    %7401 = vmatpush1.msra.mxu0 0.0
    %7402 = vmatprep.subr.mxu0 0.0
    %7403 = vmatpush1.msra.mxu0 0.0
    %7404 = vmatprep.subr.mxu0 0.0
    %7405 = vmatpush1.msra.mxu0 0.0
    %7406 = vmatprep.subr.mxu0 0.0
    %7407 = vmatpush1.msra.mxu0 0.0
    %7408 = vmatprep.subr.mxu0 0.0
    %7409 = vmatpush1.msra.mxu0 0.0
    %7410 = vmatprep.subr.mxu0 0.0
    %7411 = vmatpush1.msra.mxu0 0.0
    %7412 = vmatprep.subr.mxu0 0.0
    %7413 = vmatpush1.msra.mxu0 0.0
    %7414 = vmatprep.subr.mxu0 0.0
    %7415 = vmatpush1.msra.mxu0 0.0
    %7416 = vmatprep.subr.mxu0 0.0
    %7417 = vmatpush1.msra.mxu0 0.0
    %7418 = vmatprep.mubr.f32.mxu0 0.0
    %7419 = vmatmul.mubr.f32.gmra.mrb[0].mxu0 %v7352
    %v7420 = vpop.f32.mrb[0].mxu0
    %v7421 = vadd.f32 %v7347, %v7420
    %v7422 = vpop.f32.mrb[0].mxu0
    %7423 = vdwg.mxu0
    %v7424 = vxor.u32 %v7421, 2147483648
    %v7425 = vmul.f32 %v7424, 1.442695
    %v7426 = vpow.pop %v7425
    %v7427 = vadd.f32 %v7426, 1.0
    %v7428 = vrcp.pop %v7427
    %v7429 = vmul.f32 1.0, %v7428
    %v7430 = vmul.f32 %v7429, 0.99
    %v7431 = vadd.f32 %v7430, 0.01
    %v7432 = vld [vmem:[#allocation22] sm:$0x3]
    %7434 = vrot.lane.b32.xlu0 %v7432, 8
    %v7435 = vpop.permute.xlu0 %7434
    %v7437 = vmul.f32 %v7431, %v7435
    %7439 = vrot.lane.b32.xlu0 %v7437, 120
    %v7440 = vpop.permute.xlu0 %7439
    %v7442 = vadd.f32 %v7421, %v7440
    %vm7443 = vcmask 64512
    %v7444 = vsel %vm7443, %v7442, 0.0
    %v7445 = vld [vmem:[#allocation13] sm:$0xff]
    %v7446 = vld [vmem:[#allocation13 + $0x8] sm:$0xff]
    %v7447 = vld [vmem:[#allocation13 + $0x10] sm:$0xff]
    %v7448 = vld [vmem:[#allocation13 + $0x18] sm:$0xff]
    %v7449 = vld [vmem:[#allocation13 + $0x20] sm:$0xff]
    %v7450 = vld [vmem:[#allocation15] sm:$0x1]
    %v7452 = vlaneseq
    %v7453 = vshrl.u32 %v7452, 7
    %v7454 = vsub.s32 0, %v7453
    %v7455 = vrot.slane %v7450, %v7454
    %vm7457 = vcmask 326656
    %v7459 = vsel %vm7457, %v7444, 0
    %7461 = vmatprep.subr.mxu0 0.0
    %7462 = vmatpush1.msra.mxu0 %v7445
    %7463 = vmatprep.subr.mxu0 0.0
    %7464 = vmatpush1.msra.mxu0 %v7446
    %7465 = vmatprep.subr.mxu0 0.0
    %7466 = vmatpush1.msra.mxu0 %v7447
    %7467 = vmatprep.subr.mxu0 0.0
    %7468 = vmatpush1.msra.mxu0 %v7448
    %7469 = vmatprep.subr.mxu0 0.0
    %7470 = vmatpush1.msra.mxu0 %v7449
    %7471 = vmatprep.subr.mxu0 0.0
    %7472 = vmatpush1.msra.mxu0 0.0
    %7473 = vmatprep.subr.mxu0 0.0
    %7474 = vmatpush1.msra.mxu0 0.0
    %7475 = vmatprep.subr.mxu0 0.0
    %7476 = vmatpush1.msra.mxu0 0.0
    %7477 = vmatprep.subr.mxu0 0.0
    %7478 = vmatpush1.msra.mxu0 0.0
    %7479 = vmatprep.subr.mxu0 0.0
    %7480 = vmatpush1.msra.mxu0 0.0
    %7481 = vmatprep.subr.mxu0 0.0
    %7482 = vmatpush1.msra.mxu0 0.0
    %7483 = vmatprep.subr.mxu0 0.0
    %7484 = vmatpush1.msra.mxu0 0.0
    %7485 = vmatprep.subr.mxu0 0.0
    %7486 = vmatpush1.msra.mxu0 0.0
    %7487 = vmatprep.subr.mxu0 0.0
    %7488 = vmatpush1.msra.mxu0 0.0
    %7489 = vmatprep.subr.mxu0 0.0
    %7490 = vmatpush1.msra.mxu0 0.0
    %7491 = vmatprep.subr.mxu0 0.0
    %7492 = vmatpush1.msra.mxu0 0.0
    %7493 = vmatprep.subr.mxu0 0.0
    %7494 = vmatpush1.msra.mxu0 0.0
    %7495 = vmatprep.subr.mxu0 0.0
    %7496 = vmatpush1.msra.mxu0 0.0
    %7497 = vmatprep.subr.mxu0 0.0
    %7498 = vmatpush1.msra.mxu0 0.0
    %7499 = vmatprep.subr.mxu0 0.0
    %7500 = vmatpush1.msra.mxu0 0.0
    %7501 = vmatprep.subr.mxu0 0.0
    %7502 = vmatpush1.msra.mxu0 0.0
    %7503 = vmatprep.subr.mxu0 0.0
    %7504 = vmatpush1.msra.mxu0 0.0
    %7505 = vmatprep.subr.mxu0 0.0
    %7506 = vmatpush1.msra.mxu0 0.0
    %7507 = vmatprep.subr.mxu0 0.0
    %7508 = vmatpush1.msra.mxu0 0.0
    %7509 = vmatprep.subr.mxu0 0.0
    %7510 = vmatpush1.msra.mxu0 0.0
    %7511 = vmatprep.subr.mxu0 0.0
    %7512 = vmatpush1.msra.mxu0 0.0
    %7513 = vmatprep.subr.mxu0 0.0
    %7514 = vmatpush1.msra.mxu0 0.0
    %7515 = vmatprep.subr.mxu0 0.0
    %7516 = vmatpush1.msra.mxu0 0.0
    %7517 = vmatprep.subr.mxu0 0.0
    %7518 = vmatpush1.msra.mxu0 0.0
    %7519 = vmatprep.subr.mxu0 0.0
    %7520 = vmatpush1.msra.mxu0 0.0
    %7521 = vmatprep.subr.mxu0 0.0
    %7522 = vmatpush1.msra.mxu0 0.0
    %7523 = vmatprep.subr.mxu0 0.0
    %7524 = vmatpush1.msra.mxu0 0.0
    %7525 = vmatprep.mubr.f32.mxu0 0.0
    %7526 = vmatmul.mubr.f32.gmra.mrb[0].mxu0 %v7459
    %v7527 = vpop.f32.mrb[0].mxu0
    %v7528 = vadd.f32 %v7455, %v7527
    %v7529 = vpop.f32.mrb[0].mxu0
    %7530 = vdwg.mxu0
    %v7531 = vxor.u32 %v7528, 2147483648
    %v7532 = vmul.f32 %v7531, 1.442695
    %v7533 = vpow.pop %v7532
    %v7534 = vadd.f32 %v7533, 1.0
    %v7535 = vrcp.pop %v7534
    %v7536 = vmul.f32 1.0, %v7535
    %v7537 = vtanh.pop %v7528
    %v7538 = vmul.f32 %v7536, 0.0
    %7540 = vrot.lane.b32.xlu0 %v7537, 64
    %v7541 = vpop.permute.xlu0 %7540
    %v7543 = vmul.f32 %v7536, %v7541
    %7545 = vrot.lane.b32.xlu0 %v7543, 32
    %v7546 = vpop.permute.xlu0 %7545
    %v7548 = vadd.f32 %v7538, %v7546
    %v7549 = vtanh.pop %v7548
    %7551 = vrot.lane.b32.xlu0 %v7549, 64
    %v7552 = vpop.permute.xlu0 %7551
    %v7554 = vmul.f32 %v7536, %v7552
    %v7555 = vrcp.pop %v7431
    %v7556 = vrcp.pop %v7313
    %v7557 = vsub.f32 %v7421, %v7304
    %v7558 = vmul.f32 %v7313, %v7555
    %v7559 = vlog2.pop %v7558
    %v7560 = vmul.f32 %v7559, 0.6931472
    %v7561 = vmul.f32 %v7431, %v7431
    %v7562 = vmul.f32 %v7557, %v7557
    %7564 = vrot.lane.b32.xlu0 %v7562, 8
    %v7565 = vpop.permute.xlu0 %7564
    %v7567 = vadd.f32 %v7561, %v7565
    %v7568 = vmul.f32 %v7567, 0.5
    %v7569 = vmul.f32 %v7556, %v7556
    %v7570 = vmul.f32 %v7568, %v7569
    %v7571 = vadd.f32 %v7560, %v7570
    %v7572 = vsub.f32 %v7571, 0.5
    %7574 = vrot.lane.b32.xlu0 %v7554, 64
    %v7575 = vpop.permute.xlu0 %7574
    %7577 = vrot.lane.b32.xlu0 %v7337, 96
    %v7578 = vpop.permute.xlu0 %7577
    %v7580 = vsel %vm7191, %v7190, %v7575
    %v7581 = vsel %vm7193, %v7580, %v7578
    %v7583 = vsel %vm7231, %v7581, 0
    %7585 = vmatprep.subr.mxu0 %v7196
    %7586 = vmatpush1.msra.mxu0 %v7195
    %7587 = vmatprep.subr.mxu0 %v7198
    %7588 = vmatpush1.msra.mxu0 %v7197
    %7589 = vmatprep.subr.mxu0 %v7200
    %7590 = vmatpush1.msra.mxu0 %v7199
    %7591 = vmatprep.subr.mxu0 %v7202
    %7592 = vmatpush1.msra.mxu0 %v7201
    %7593 = vmatprep.subr.mxu0 %v7204
    %7594 = vmatpush1.msra.mxu0 %v7203
    %7595 = vmatprep.subr.mxu0 %v7206
    %7596 = vmatpush1.msra.mxu0 %v7205
    %7597 = vmatprep.subr.mxu0 %v7208
    %7598 = vmatpush1.msra.mxu0 %v7207
    %7599 = vmatprep.subr.mxu0 %v7210
    %7600 = vmatpush1.msra.mxu0 %v7209
    %7601 = vmatprep.subr.mxu0 %v7212
    %7602 = vmatpush1.msra.mxu0 %v7211
    %7603 = vmatprep.subr.mxu0 %v7214
    %7604 = vmatpush1.msra.mxu0 %v7213
    %7605 = vmatprep.subr.mxu0 %v7216
    %7606 = vmatpush1.msra.mxu0 %v7215
    %7607 = vmatprep.subr.mxu0 %v7218
    %7608 = vmatpush1.msra.mxu0 %v7217
    %7609 = vmatprep.subr.mxu0 0.0
    %7610 = vmatpush1.msra.mxu0 0.0
    %7611 = vmatprep.subr.mxu0 0.0
    %7612 = vmatpush1.msra.mxu0 0.0
    %7613 = vmatprep.subr.mxu0 0.0
    %7614 = vmatpush1.msra.mxu0 0.0
    %7615 = vmatprep.subr.mxu0 0.0
    %7616 = vmatpush1.msra.mxu0 0.0
    %7617 = vmatprep.subr.mxu0 0.0
    %7618 = vmatpush1.msra.mxu0 0.0
    %7619 = vmatprep.subr.mxu0 0.0
    %7620 = vmatpush1.msra.mxu0 0.0
    %7621 = vmatprep.subr.mxu0 0.0
    %7622 = vmatpush1.msra.mxu0 0.0
    %7623 = vmatprep.subr.mxu0 0.0
    %7624 = vmatpush1.msra.mxu0 0.0
    %7625 = vmatprep.subr.mxu0 0.0
    %7626 = vmatpush1.msra.mxu0 0.0
    %7627 = vmatprep.subr.mxu0 0.0
    %7628 = vmatpush1.msra.mxu0 0.0
    %7629 = vmatprep.subr.mxu0 0.0
    %7630 = vmatpush1.msra.mxu0 0.0
    %7631 = vmatprep.subr.mxu0 0.0
    %7632 = vmatpush1.msra.mxu0 0.0
    %7633 = vmatprep.subr.mxu0 0.0
    %7634 = vmatpush1.msra.mxu0 0.0
    %7635 = vmatprep.subr.mxu0 0.0
    %7636 = vmatpush1.msra.mxu0 0.0
    %7637 = vmatprep.subr.mxu0 0.0
    %7638 = vmatpush1.msra.mxu0 0.0
    %7639 = vmatprep.subr.mxu0 0.0
    %7640 = vmatpush1.msra.mxu0 0.0
    %7641 = vmatprep.subr.mxu0 0.0
    %7642 = vmatpush1.msra.mxu0 0.0
    %7643 = vmatprep.subr.mxu0 0.0
    %7644 = vmatpush1.msra.mxu0 0.0
    %7645 = vmatprep.subr.mxu0 0.0
    %7646 = vmatpush1.msra.mxu0 0.0
    %7647 = vmatprep.subr.mxu0 0.0
    %7648 = vmatpush1.msra.mxu0 0.0
    %7649 = vmatprep.mubr.f32.mxu0 0.0
    %7650 = vmatmul.mubr.f32.gmra.mrb[0].mxu0 %v7583
    %v7651 = vpop.f32.mrb[0].mxu0
    %v7652 = vadd.f32 %v7224, %v7651
    %v7653 = vpop.f32.mrb[0].mxu0
    %v7654 = vadd.f32 %v7228, %v7653
    %7655 = vdwg.mxu0
    %v7656 = vxor.u32 %v7654, 2147483648
    %v7657 = vmul.f32 %v7656, 1.442695
    %v7658 = vpow.pop %v7657
    %v7659 = vadd.f32 %v7658, 1.0
    %v7660 = vrcp.pop %v7659
    %v7661 = vmul.f32 1.0, %v7660
    %v7662 = vmul.f32 %v7661, 0.99
    %v7663 = vadd.f32 %v7662, 0.01
    %v7664 = vxor.u32 %v7652, 2147483648
    %v7665 = vmul.f32 %v7664, 1.442695
    %v7666 = vpow.pop %v7665
    %v7667 = vadd.f32 %v7666, 1.0
    %v7668 = vrcp.pop %v7667
    %v7669 = vmul.f32 1.0, %v7668
    %v7670 = vtanh.pop %v7652
    %v7671 = vmul.f32 %v7669, %v7331
    %7673 = vrot.lane.b32.xlu0 %v7670, 64
    %v7674 = vpop.permute.xlu0 %7673
    %v7676 = vmul.f32 %v7669, %v7674
    %7678 = vrot.lane.b32.xlu0 %v7676, 32
    %v7679 = vpop.permute.xlu0 %7678
    %v7681 = vadd.f32 %v7671, %v7679
    %v7682 = vtanh.pop %v7681
    %7684 = vrot.lane.b32.xlu0 %v7682, 64
    %v7685 = vpop.permute.xlu0 %7684
    %v7687 = vmul.f32 %v7669, %v7685
    %7689 = vrot.lane.b32.xlu0 %v7687, 32
    %v7690 = vpop.permute.xlu0 %7689
    %v7691 = vsel %vm7191, %v7690, 0
    %7693 = vmatprep.subr.mxu0 0.0
    %7694 = vmatpush1.msra.mxu0 %v7338
    %7695 = vmatprep.subr.mxu0 0.0
    %7696 = vmatpush1.msra.mxu0 %v7339
    %7697 = vmatprep.subr.mxu0 0.0
    %7698 = vmatpush1.msra.mxu0 %v7340
    %7699 = vmatprep.subr.mxu0 0.0
    %7700 = vmatpush1.msra.mxu0 %v7341
    %7701 = vmatprep.subr.mxu0 0.0
    %7702 = vmatpush1.msra.mxu0 0.0
    %7703 = vmatprep.subr.mxu0 0.0
    %7704 = vmatpush1.msra.mxu0 0.0
    %7705 = vmatprep.subr.mxu0 0.0
    %7706 = vmatpush1.msra.mxu0 0.0
    %7707 = vmatprep.subr.mxu0 0.0
    %7708 = vmatpush1.msra.mxu0 0.0
    %7709 = vmatprep.subr.mxu0 0.0
    %7710 = vmatpush1.msra.mxu0 0.0
    %7711 = vmatprep.subr.mxu0 0.0
    %7712 = vmatpush1.msra.mxu0 0.0
    %7713 = vmatprep.subr.mxu0 0.0
    %7714 = vmatpush1.msra.mxu0 0.0
    %7715 = vmatprep.subr.mxu0 0.0
    %7716 = vmatpush1.msra.mxu0 0.0
    %7717 = vmatprep.subr.mxu0 0.0
    %7718 = vmatpush1.msra.mxu0 0.0
    %7719 = vmatprep.subr.mxu0 0.0
    %7720 = vmatpush1.msra.mxu0 0.0
    %7721 = vmatprep.subr.mxu0 0.0
    %7722 = vmatpush1.msra.mxu0 0.0
    %7723 = vmatprep.subr.mxu0 0.0
    %7724 = vmatpush1.msra.mxu0 0.0
    %7725 = vmatprep.subr.mxu0 0.0
    %7726 = vmatpush1.msra.mxu0 0.0
    %7727 = vmatprep.subr.mxu0 0.0
    %7728 = vmatpush1.msra.mxu0 0.0
    %7729 = vmatprep.subr.mxu0 0.0
    %7730 = vmatpush1.msra.mxu0 0.0
    %7731 = vmatprep.subr.mxu0 0.0
    %7732 = vmatpush1.msra.mxu0 0.0
    %7733 = vmatprep.subr.mxu0 0.0
    %7734 = vmatpush1.msra.mxu0 0.0
    %7735 = vmatprep.subr.mxu0 0.0
    %7736 = vmatpush1.msra.mxu0 0.0
    %7737 = vmatprep.subr.mxu0 0.0
    %7738 = vmatpush1.msra.mxu0 0.0
    %7739 = vmatprep.subr.mxu0 0.0
    %7740 = vmatpush1.msra.mxu0 0.0
    %7741 = vmatprep.subr.mxu0 0.0
    %7742 = vmatpush1.msra.mxu0 0.0
    %7743 = vmatprep.subr.mxu0 0.0
    %7744 = vmatpush1.msra.mxu0 0.0
    %7745 = vmatprep.subr.mxu0 0.0
    %7746 = vmatpush1.msra.mxu0 0.0
    %7747 = vmatprep.subr.mxu0 0.0
    %7748 = vmatpush1.msra.mxu0 0.0
    %7749 = vmatprep.subr.mxu0 0.0
    %7750 = vmatpush1.msra.mxu0 0.0
    %7751 = vmatprep.subr.mxu0 0.0
    %7752 = vmatpush1.msra.mxu0 0.0
    %7753 = vmatprep.subr.mxu0 0.0
    %7754 = vmatpush1.msra.mxu0 0.0
    %7755 = vmatprep.subr.mxu0 0.0
    %7756 = vmatpush1.msra.mxu0 0.0
    %7757 = vmatprep.mubr.f32.mxu0 0.0
    %7758 = vmatmul.mubr.f32.gmra.mrb[0].mxu0 %v7691
    %v7759 = vpop.f32.mrb[0].mxu0
    %v7760 = vadd.f32 %v7347, %v7759
    %v7761 = vpop.f32.mrb[0].mxu0
    %7762 = vdwg.mxu0
    %v7763 = vxor.u32 %v7760, 2147483648
    %v7764 = vmul.f32 %v7763, 1.442695
    %v7765 = vpow.pop %v7764
    %v7766 = vadd.f32 %v7765, 1.0
    %v7767 = vrcp.pop %v7766
    %v7768 = vmul.f32 1.0, %v7767
    %v7769 = vmul.f32 %v7768, 0.99
    %v7770 = vadd.f32 %v7769, 0.01
    %s7771 = scalar_lea.vmem [#allocation22], 2
    %v7772 = vld [vmem:[%s7771] sm:$0x3]
    %7774 = vrot.lane.b32.xlu0 %v7772, 8
    %v7775 = vpop.permute.xlu0 %7774
    %v7777 = vmul.f32 %v7770, %v7775
    %7779 = vrot.lane.b32.xlu0 %v7777, 120
    %v7780 = vpop.permute.xlu0 %7779
    %v7782 = vadd.f32 %v7760, %v7780
    %7783 = vrot.lane.b32.xlu0 %v7554, 40
    %v7784 = vpop.permute.xlu0 %7783
    %v7786 = vsel %vm7443, %v7782, %v7784
    %v7788 = vsel %vm7457, %v7786, 0
    %7790 = vmatprep.subr.mxu0 0.0
    %7791 = vmatpush1.msra.mxu0 %v7445
    %7792 = vmatprep.subr.mxu0 0.0
    %7793 = vmatpush1.msra.mxu0 %v7446
    %7794 = vmatprep.subr.mxu0 0.0
    %7795 = vmatpush1.msra.mxu0 %v7447
    %7796 = vmatprep.subr.mxu0 0.0
    %7797 = vmatpush1.msra.mxu0 %v7448
    %7798 = vmatprep.subr.mxu0 0.0
    %7799 = vmatpush1.msra.mxu0 %v7449
    %7800 = vmatprep.subr.mxu0 0.0
    %7801 = vmatpush1.msra.mxu0 0.0
    %7802 = vmatprep.subr.mxu0 0.0
    %7803 = vmatpush1.msra.mxu0 0.0
    %7804 = vmatprep.subr.mxu0 0.0
    %7805 = vmatpush1.msra.mxu0 0.0
    %7806 = vmatprep.subr.mxu0 0.0
    %7807 = vmatpush1.msra.mxu0 0.0
    %7808 = vmatprep.subr.mxu0 0.0
    %7809 = vmatpush1.msra.mxu0 0.0
    %7810 = vmatprep.subr.mxu0 0.0
    %7811 = vmatpush1.msra.mxu0 0.0
    %7812 = vmatprep.subr.mxu0 0.0
    %7813 = vmatpush1.msra.mxu0 0.0
    %7814 = vmatprep.subr.mxu0 0.0
    %7815 = vmatpush1.msra.mxu0 0.0
    %7816 = vmatprep.subr.mxu0 0.0
    %7817 = vmatpush1.msra.mxu0 0.0
    %7818 = vmatprep.subr.mxu0 0.0
    %7819 = vmatpush1.msra.mxu0 0.0
    %7820 = vmatprep.subr.mxu0 0.0
    %7821 = vmatpush1.msra.mxu0 0.0
    %7822 = vmatprep.subr.mxu0 0.0
    %7823 = vmatpush1.msra.mxu0 0.0
    %7824 = vmatprep.subr.mxu0 0.0
    %7825 = vmatpush1.msra.mxu0 0.0
    %7826 = vmatprep.subr.mxu0 0.0
    %7827 = vmatpush1.msra.mxu0 0.0
    %7828 = vmatprep.subr.mxu0 0.0
    %7829 = vmatpush1.msra.mxu0 0.0
    %7830 = vmatprep.subr.mxu0 0.0
    %7831 = vmatpush1.msra.mxu0 0.0
    %7832 = vmatprep.subr.mxu0 0.0
    %7833 = vmatpush1.msra.mxu0 0.0
    %7834 = vmatprep.subr.mxu0 0.0
    %7835 = vmatpush1.msra.mxu0 0.0
    %7836 = vmatprep.subr.mxu0 0.0
    %7837 = vmatpush1.msra.mxu0 0.0
    %7838 = vmatprep.subr.mxu0 0.0
    %7839 = vmatpush1.msra.mxu0 0.0
    %7840 = vmatprep.subr.mxu0 0.0
    %7841 = vmatpush1.msra.mxu0 0.0
    %7842 = vmatprep.subr.mxu0 0.0
    %7843 = vmatpush1.msra.mxu0 0.0
    %7844 = vmatprep.subr.mxu0 0.0
    %7845 = vmatpush1.msra.mxu0 0.0
    %7846 = vmatprep.subr.mxu0 0.0
    %7847 = vmatpush1.msra.mxu0 0.0
    %7848 = vmatprep.subr.mxu0 0.0
    %7849 = vmatpush1.msra.mxu0 0.0
    %7850 = vmatprep.subr.mxu0 0.0
    %7851 = vmatpush1.msra.mxu0 0.0
    %7852 = vmatprep.subr.mxu0 0.0
    %7853 = vmatpush1.msra.mxu0 0.0
    %7854 = vmatprep.mubr.f32.mxu0 0.0
    %7855 = vmatmul.mubr.f32.gmra.mrb[0].mxu0 %v7788
    %v7856 = vpop.f32.mrb[0].mxu0
    %v7857 = vadd.f32 %v7455, %v7856
    %v7858 = vpop.f32.mrb[0].mxu0
    %7859 = vdwg.mxu0
    %v7860 = vxor.u32 %v7857, 2147483648
    %v7861 = vmul.f32 %v7860, 1.442695
    %v7862 = vpow.pop %v7861
    %v7863 = vadd.f32 %v7862, 1.0
    %v7864 = vrcp.pop %v7863
    %v7865 = vmul.f32 1.0, %v7864
    %v7866 = vtanh.pop %v7857
    %v7867 = vmul.f32 %v7865, %v7548
    %7869 = vrot.lane.b32.xlu0 %v7866, 64
    %v7870 = vpop.permute.xlu0 %7869
    %v7872 = vmul.f32 %v7865, %v7870
    %7874 = vrot.lane.b32.xlu0 %v7872, 32
    %v7875 = vpop.permute.xlu0 %7874
    %v7877 = vadd.f32 %v7867, %v7875
    %v7878 = vtanh.pop %v7877
    %7880 = vrot.lane.b32.xlu0 %v7878, 64
    %v7881 = vpop.permute.xlu0 %7880
    %v7883 = vmul.f32 %v7865, %v7881
    %v7884 = vrcp.pop %v7770
    %v7885 = vrcp.pop %v7663
    %v7886 = vsub.f32 %v7760, %v7654
    %v7887 = vmul.f32 %v7663, %v7884
    %v7888 = vlog2.pop %v7887
    %v7889 = vmul.f32 %v7888, 0.6931472
    %v7890 = vmul.f32 %v7770, %v7770
    %v7891 = vmul.f32 %v7886, %v7886
    %7893 = vrot.lane.b32.xlu0 %v7891, 8
    %v7894 = vpop.permute.xlu0 %7893
    %v7896 = vadd.f32 %v7890, %v7894
    %v7897 = vmul.f32 %v7896, 0.5
    %v7898 = vmul.f32 %v7885, %v7885
    %v7899 = vmul.f32 %v7897, %v7898
    %v7900 = vadd.f32 %v7889, %v7899
    %v7901 = vsub.f32 %v7900, 0.5
    %7903 = vrot.lane.b32.xlu0 %v7883, 64
    %v7904 = vpop.permute.xlu0 %7903
    %7906 = vrot.lane.b32.xlu0 %v7687, 96
    %v7907 = vpop.permute.xlu0 %7906
    %v7909 = vsel %vm7191, %v7190, %v7904
    %v7910 = vsel %vm7193, %v7909, %v7907
    %v7912 = vsel %vm7231, %v7910, 0
    %7914 = vmatprep.subr.mxu0 %v7196
    %7915 = vmatpush1.msra.mxu0 %v7195
    %7916 = vmatprep.subr.mxu0 %v7198
    %7917 = vmatpush1.msra.mxu0 %v7197
    %7918 = vmatprep.subr.mxu0 %v7200
    %7919 = vmatpush1.msra.mxu0 %v7199
    %7920 = vmatprep.subr.mxu0 %v7202
    %7921 = vmatpush1.msra.mxu0 %v7201
    %7922 = vmatprep.subr.mxu0 %v7204
    %7923 = vmatpush1.msra.mxu0 %v7203
    %7924 = vmatprep.subr.mxu0 %v7206
    %7925 = vmatpush1.msra.mxu0 %v7205
    %7926 = vmatprep.subr.mxu0 %v7208
    %7927 = vmatpush1.msra.mxu0 %v7207
    %7928 = vmatprep.subr.mxu0 %v7210
    %7929 = vmatpush1.msra.mxu0 %v7209
    %7930 = vmatprep.subr.mxu0 %v7212
    %7931 = vmatpush1.msra.mxu0 %v7211
    %7932 = vmatprep.subr.mxu0 %v7214
    %7933 = vmatpush1.msra.mxu0 %v7213
    %7934 = vmatprep.subr.mxu0 %v7216
    %7935 = vmatpush1.msra.mxu0 %v7215
    %7936 = vmatprep.subr.mxu0 %v7218
    %7937 = vmatpush1.msra.mxu0 %v7217
    %7938 = vmatprep.subr.mxu0 0.0
    %7939 = vmatpush1.msra.mxu0 0.0
    %7940 = vmatprep.subr.mxu0 0.0
    %7941 = vmatpush1.msra.mxu0 0.0
    %7942 = vmatprep.subr.mxu0 0.0
    %7943 = vmatpush1.msra.mxu0 0.0
    %7944 = vmatprep.subr.mxu0 0.0
    %7945 = vmatpush1.msra.mxu0 0.0
    %7946 = vmatprep.subr.mxu0 0.0
    %7947 = vmatpush1.msra.mxu0 0.0
    %7948 = vmatprep.subr.mxu0 0.0
    %7949 = vmatpush1.msra.mxu0 0.0
    %7950 = vmatprep.subr.mxu0 0.0
    %7951 = vmatpush1.msra.mxu0 0.0
    %7952 = vmatprep.subr.mxu0 0.0
    %7953 = vmatpush1.msra.mxu0 0.0
    %7954 = vmatprep.subr.mxu0 0.0
    %7955 = vmatpush1.msra.mxu0 0.0
    %7956 = vmatprep.subr.mxu0 0.0
    %7957 = vmatpush1.msra.mxu0 0.0
    %7958 = vmatprep.subr.mxu0 0.0
    %7959 = vmatpush1.msra.mxu0 0.0
    %7960 = vmatprep.subr.mxu0 0.0
    %7961 = vmatpush1.msra.mxu0 0.0
    %7962 = vmatprep.subr.mxu0 0.0
    %7963 = vmatpush1.msra.mxu0 0.0
    %7964 = vmatprep.subr.mxu0 0.0
    %7965 = vmatpush1.msra.mxu0 0.0
    %7966 = vmatprep.subr.mxu0 0.0
    %7967 = vmatpush1.msra.mxu0 0.0
    %7968 = vmatprep.subr.mxu0 0.0
    %7969 = vmatpush1.msra.mxu0 0.0
    %7970 = vmatprep.subr.mxu0 0.0
    %7971 = vmatpush1.msra.mxu0 0.0
    %7972 = vmatprep.subr.mxu0 0.0
    %7973 = vmatpush1.msra.mxu0 0.0
    %7974 = vmatprep.subr.mxu0 0.0
    %7975 = vmatpush1.msra.mxu0 0.0
    %7976 = vmatprep.subr.mxu0 0.0
    %7977 = vmatpush1.msra.mxu0 0.0
    %7978 = vmatprep.mubr.f32.mxu0 0.0
    %7979 = vmatmul.mubr.f32.gmra.mrb[0].mxu0 %v7912
    %v7980 = vpop.f32.mrb[0].mxu0
    %v7981 = vadd.f32 %v7224, %v7980
    %v7982 = vpop.f32.mrb[0].mxu0
    %v7983 = vadd.f32 %v7228, %v7982
    %7984 = vdwg.mxu0
    %v7985 = vxor.u32 %v7983, 2147483648
    %v7986 = vmul.f32 %v7985, 1.442695
    %v7987 = vpow.pop %v7986
    %v7988 = vadd.f32 %v7987, 1.0
    %v7989 = vrcp.pop %v7988
    %v7990 = vmul.f32 1.0, %v7989
    %v7991 = vmul.f32 %v7990, 0.99
    %v7992 = vadd.f32 %v7991, 0.01
    %v7993 = vxor.u32 %v7981, 2147483648
    %v7994 = vmul.f32 %v7993, 1.442695
    %v7995 = vpow.pop %v7994
    %v7996 = vadd.f32 %v7995, 1.0
    %v7997 = vrcp.pop %v7996
    %v7998 = vmul.f32 1.0, %v7997
    %v7999 = vtanh.pop %v7981
    %v8000 = vmul.f32 %v7998, %v7681
    %8002 = vrot.lane.b32.xlu0 %v7999, 64
    %v8003 = vpop.permute.xlu0 %8002
    %v8005 = vmul.f32 %v7998, %v8003
    %8007 = vrot.lane.b32.xlu0 %v8005, 32
    %v8008 = vpop.permute.xlu0 %8007
    %v8010 = vadd.f32 %v8000, %v8008
    %v8011 = vtanh.pop %v8010
    %8013 = vrot.lane.b32.xlu0 %v8011, 64
    %v8014 = vpop.permute.xlu0 %8013
    %v8016 = vmul.f32 %v7998, %v8014
    %8018 = vrot.lane.b32.xlu0 %v8016, 32
    %v8019 = vpop.permute.xlu0 %8018
    %v8020 = vsel %vm7191, %v8019, 0
    %8022 = vmatprep.subr.mxu0 0.0
    %8023 = vmatpush1.msra.mxu0 %v7338
    %8024 = vmatprep.subr.mxu0 0.0
    %8025 = vmatpush1.msra.mxu0 %v7339
    %8026 = vmatprep.subr.mxu0 0.0
    %8027 = vmatpush1.msra.mxu0 %v7340
    %8028 = vmatprep.subr.mxu0 0.0
    %8029 = vmatpush1.msra.mxu0 %v7341
    %8030 = vmatprep.subr.mxu0 0.0
    %8031 = vmatpush1.msra.mxu0 0.0
    %8032 = vmatprep.subr.mxu0 0.0
    %8033 = vmatpush1.msra.mxu0 0.0
    %8034 = vmatprep.subr.mxu0 0.0
    %8035 = vmatpush1.msra.mxu0 0.0
    %8036 = vmatprep.subr.mxu0 0.0
    %8037 = vmatpush1.msra.mxu0 0.0
    %8038 = vmatprep.subr.mxu0 0.0
    %8039 = vmatpush1.msra.mxu0 0.0
    %8040 = vmatprep.subr.mxu0 0.0
    %8041 = vmatpush1.msra.mxu0 0.0
    %8042 = vmatprep.subr.mxu0 0.0
    %8043 = vmatpush1.msra.mxu0 0.0
    %8044 = vmatprep.subr.mxu0 0.0
    %8045 = vmatpush1.msra.mxu0 0.0
    %8046 = vmatprep.subr.mxu0 0.0
    %8047 = vmatpush1.msra.mxu0 0.0
    %8048 = vmatprep.subr.mxu0 0.0
    %8049 = vmatpush1.msra.mxu0 0.0
    %8050 = vmatprep.subr.mxu0 0.0
    %8051 = vmatpush1.msra.mxu0 0.0
    %8052 = vmatprep.subr.mxu0 0.0
    %8053 = vmatpush1.msra.mxu0 0.0
    %8054 = vmatprep.subr.mxu0 0.0
    %8055 = vmatpush1.msra.mxu0 0.0
    %8056 = vmatprep.subr.mxu0 0.0
    %8057 = vmatpush1.msra.mxu0 0.0
    %8058 = vmatprep.subr.mxu0 0.0
    %8059 = vmatpush1.msra.mxu0 0.0
    %8060 = vmatprep.subr.mxu0 0.0
    %8061 = vmatpush1.msra.mxu0 0.0
    %8062 = vmatprep.subr.mxu0 0.0
    %8063 = vmatpush1.msra.mxu0 0.0
    %8064 = vmatprep.subr.mxu0 0.0
    %8065 = vmatpush1.msra.mxu0 0.0
    %8066 = vmatprep.subr.mxu0 0.0
    %8067 = vmatpush1.msra.mxu0 0.0
    %8068 = vmatprep.subr.mxu0 0.0
    %8069 = vmatpush1.msra.mxu0 0.0
    %8070 = vmatprep.subr.mxu0 0.0
    %8071 = vmatpush1.msra.mxu0 0.0
    %8072 = vmatprep.subr.mxu0 0.0
    %8073 = vmatpush1.msra.mxu0 0.0
    %8074 = vmatprep.subr.mxu0 0.0
    %8075 = vmatpush1.msra.mxu0 0.0
    %8076 = vmatprep.subr.mxu0 0.0
    %8077 = vmatpush1.msra.mxu0 0.0
    %8078 = vmatprep.subr.mxu0 0.0
    %8079 = vmatpush1.msra.mxu0 0.0
    %8080 = vmatprep.subr.mxu0 0.0
    %8081 = vmatpush1.msra.mxu0 0.0
    %8082 = vmatprep.subr.mxu0 0.0
    %8083 = vmatpush1.msra.mxu0 0.0
    %8084 = vmatprep.subr.mxu0 0.0
    %8085 = vmatpush1.msra.mxu0 0.0
    %8086 = vmatprep.mubr.f32.mxu0 0.0
    %8087 = vmatmul.mubr.f32.gmra.mrb[0].mxu0 %v8020
    %v8088 = vpop.f32.mrb[0].mxu0
    %v8089 = vadd.f32 %v7347, %v8088
    %v8090 = vpop.f32.mrb[0].mxu0
    %8091 = vdwg.mxu0
    %v8092 = vxor.u32 %v8089, 2147483648
    %v8093 = vmul.f32 %v8092, 1.442695
    %v8094 = vpow.pop %v8093
    %v8095 = vadd.f32 %v8094, 1.0
    %v8096 = vrcp.pop %v8095
    %v8097 = vmul.f32 1.0, %v8096
    %v8098 = vmul.f32 %v8097, 0.99
    %v8099 = vadd.f32 %v8098, 0.01
    %s8100 = scalar_lea.vmem [#allocation22], 4
    %v8101 = vld [vmem:[%s8100] sm:$0x3]
    %8103 = vrot.lane.b32.xlu0 %v8101, 8
    %v8104 = vpop.permute.xlu0 %8103
    %v8106 = vmul.f32 %v8099, %v8104
    %8108 = vrot.lane.b32.xlu0 %v8106, 120
    %v8109 = vpop.permute.xlu0 %8108
    %v8111 = vadd.f32 %v8089, %v8109
    %v8112 = vrcp.pop %v8099
    %v8113 = vrcp.pop %v7992
    %v8114 = vsub.f32 %v8089, %v7983
    %v8115 = vmul.f32 %v7992, %v8112
    %v8116 = vlog2.pop %v8115
    %v8117 = vmul.f32 %v8116, 0.6931472
    %v8118 = vmul.f32 %v8099, %v8099
    %v8119 = vmul.f32 %v8114, %v8114
    %8121 = vrot.lane.b32.xlu0 %v8119, 8
    %v8122 = vpop.permute.xlu0 %8121
    %v8124 = vadd.f32 %v8118, %v8122
    %v8125 = vmul.f32 %v8124, 0.5
    %v8126 = vmul.f32 %v8113, %v8113
    %v8127 = vmul.f32 %v8125, %v8126
    %v8128 = vadd.f32 %v8117, %v8127
    %v8129 = vsub.f32 %v8128, 0.5
    %8131 = vrot.lane.b32.xlu0 %v7572, 120
    %v8132 = vpop.permute.xlu0 %8131
    %8135 = vrot.lane.b32.xlu0 %v8129, 8
    %v8136 = vpop.permute.xlu0 %8135
    %v8138 = vsel %vm7443, %v8132, %v7901
    %vm8139 = vcmask 130048
    %v8140 = vsel %vm8139, %v8138, %v8136
    %vm8141 = vcmask 189440
    %8142 = vst.msk [vmem:[%s19] sm:$0x3] %vm8141, %v8140
    %v8144 = vrot.slane %v7782, 6
    %v8147 = vrot.slane %v8111, 4
    %vm8149 = vcmask 1041408
    %v8150 = vsel %vm8149, %v7442, %v8144
    %vm8151 = vcmask 1043456
    %v8152 = vsel %vm8151, %v8150, %v8147
    %v8153 = vld [vmem:[#allocation16] sm:$0xff]
    %v8154 = vld [vmem:[#allocation18] sm:$0x1]
    %v8156 = vlaneseq
    %v8157 = vshrl.u32 %v8156, 7
    %v8158 = vsub.s32 0, %v8157
    %v8159 = vrot.slane %v8154, %v8158
    %v8162 = vsel %vm7443, %v8152, 0
    %8164 = vmatprep.subr.mxu0 0.0
    %8165 = vmatpush1.msra.mxu0 %v8153
    %8166 = vmatprep.subr.mxu0 0.0
    %8167 = vmatpush1.msra.mxu0 0.0
    %8168 = vmatprep.subr.mxu0 0.0
    %8169 = vmatpush1.msra.mxu0 0.0
    %8170 = vmatprep.subr.mxu0 0.0
    %8171 = vmatpush1.msra.mxu0 0.0
    %8172 = vmatprep.subr.mxu0 0.0
    %8173 = vmatpush1.msra.mxu0 0.0
    %8174 = vmatprep.subr.mxu0 0.0
    %8175 = vmatpush1.msra.mxu0 0.0
    %8176 = vmatprep.subr.mxu0 0.0
    %8177 = vmatpush1.msra.mxu0 0.0
    %8178 = vmatprep.subr.mxu0 0.0
    %8179 = vmatpush1.msra.mxu0 0.0
    %8180 = vmatprep.subr.mxu0 0.0
    %8181 = vmatpush1.msra.mxu0 0.0
    %8182 = vmatprep.subr.mxu0 0.0
    %8183 = vmatpush1.msra.mxu0 0.0
    %8184 = vmatprep.subr.mxu0 0.0
    %8185 = vmatpush1.msra.mxu0 0.0
    %8186 = vmatprep.subr.mxu0 0.0
    %8187 = vmatpush1.msra.mxu0 0.0
    %8188 = vmatprep.subr.mxu0 0.0
    %8189 = vmatpush1.msra.mxu0 0.0
    %8190 = vmatprep.subr.mxu0 0.0
    %8191 = vmatpush1.msra.mxu0 0.0
    %8192 = vmatprep.subr.mxu0 0.0
    %8193 = vmatpush1.msra.mxu0 0.0
    %8194 = vmatprep.subr.mxu0 0.0
    %8195 = vmatpush1.msra.mxu0 0.0
    %8196 = vmatprep.subr.mxu0 0.0
    %8197 = vmatpush1.msra.mxu0 0.0
    %8198 = vmatprep.subr.mxu0 0.0
    %8199 = vmatpush1.msra.mxu0 0.0
    %8200 = vmatprep.subr.mxu0 0.0
    %8201 = vmatpush1.msra.mxu0 0.0
    %8202 = vmatprep.subr.mxu0 0.0
    %8203 = vmatpush1.msra.mxu0 0.0
    %8204 = vmatprep.subr.mxu0 0.0
    %8205 = vmatpush1.msra.mxu0 0.0
    %8206 = vmatprep.subr.mxu0 0.0
    %8207 = vmatpush1.msra.mxu0 0.0
    %8208 = vmatprep.subr.mxu0 0.0
    %8209 = vmatpush1.msra.mxu0 0.0
    %8210 = vmatprep.subr.mxu0 0.0
    %8211 = vmatpush1.msra.mxu0 0.0
    %8212 = vmatprep.subr.mxu0 0.0
    %8213 = vmatpush1.msra.mxu0 0.0
    %8214 = vmatprep.subr.mxu0 0.0
    %8215 = vmatpush1.msra.mxu0 0.0
    %8216 = vmatprep.subr.mxu0 0.0
    %8217 = vmatpush1.msra.mxu0 0.0
    %8218 = vmatprep.subr.mxu0 0.0
    %8219 = vmatpush1.msra.mxu0 0.0
    %8220 = vmatprep.subr.mxu0 0.0
    %8221 = vmatpush1.msra.mxu0 0.0
    %8222 = vmatprep.subr.mxu0 0.0
    %8223 = vmatpush1.msra.mxu0 0.0
    %8224 = vmatprep.subr.mxu0 0.0
    %8225 = vmatpush1.msra.mxu0 0.0
    %8226 = vmatprep.subr.mxu0 0.0
    %8227 = vmatpush1.msra.mxu0 0.0
    %8228 = vmatprep.mubr.f32.mxu0 0.0
    %8229 = vmatmul.mubr.f32.gmra.mrb[0].mxu0 %v8162
    %v8230 = vpop.f32.mrb[0].mxu0
    %v8231 = vadd.f32 %v8159, %v8230
    %v8232 = vpop.f32.mrb[0].mxu0
    %8233 = vdwg.mxu0
    %v8234 = vmax.f32 %v8231, 0.0
    %v8235 = vld [vmem:[#allocation19] sm:$0xff]
    %v8236 = vld [vmem:[#allocation19 + $0x8] sm:$0xff]
    %v8237 = vld [vmem:[#allocation19 + $0x10] sm:$0xff]
    %v8238 = vld [vmem:[#allocation19 + $0x18] sm:$0xff]
    %v8239 = vld [vmem:[#allocation19 + $0x20] sm:$0xff]
    %v8240 = vld [vmem:[#allocation19 + $0x28] sm:$0xff]
    %v8241 = vld [vmem:[#allocation19 + $0x30] sm:$0xff]
    %v8242 = vld [vmem:[#allocation19 + $0x38] sm:$0xff]
    %v8243 = vld [vmem:[#allocation21] sm:$0x3]
    %v8245 = vlaneseq
    %v8246 = vshrl.u32 %v8245, 7
    %v8247 = vsub.s32 0, %v8246
    %v8248 = vrot.slane %v8243, %v8247
    %v8249 = vlaneseq
    %v8250 = vshrl.u32 %v8249, 7
    %v8251 = vsub.s32 1, %v8250
    %v8252 = vrot.slane %v8243, %v8251
    %v8256 = vsel %vm7191, %v8234, 0
    %8258 = vmatprep.subr.mxu0 %v8236
    %8259 = vmatpush1.msra.mxu0 %v8235
    %8260 = vmatprep.subr.mxu0 %v8238
    %8261 = vmatpush1.msra.mxu0 %v8237
    %8262 = vmatprep.subr.mxu0 %v8240
    %8263 = vmatpush1.msra.mxu0 %v8239
    %8264 = vmatprep.subr.mxu0 %v8242
    %8265 = vmatpush1.msra.mxu0 %v8241
    %8266 = vmatprep.subr.mxu0 0.0
    %8267 = vmatpush1.msra.mxu0 0.0
    %8268 = vmatprep.subr.mxu0 0.0
    %8269 = vmatpush1.msra.mxu0 0.0
    %8270 = vmatprep.subr.mxu0 0.0
    %8271 = vmatpush1.msra.mxu0 0.0
    %8272 = vmatprep.subr.mxu0 0.0
    %8273 = vmatpush1.msra.mxu0 0.0
    %8274 = vmatprep.subr.mxu0 0.0
    %8275 = vmatpush1.msra.mxu0 0.0
    %8276 = vmatprep.subr.mxu0 0.0
    %8277 = vmatpush1.msra.mxu0 0.0
    %8278 = vmatprep.subr.mxu0 0.0
    %8279 = vmatpush1.msra.mxu0 0.0
    %8280 = vmatprep.subr.mxu0 0.0
    %8281 = vmatpush1.msra.mxu0 0.0
    %8282 = vmatprep.subr.mxu0 0.0
    %8283 = vmatpush1.msra.mxu0 0.0
    %8284 = vmatprep.subr.mxu0 0.0
    %8285 = vmatpush1.msra.mxu0 0.0
    %8286 = vmatprep.subr.mxu0 0.0
    %8287 = vmatpush1.msra.mxu0 0.0
    %8288 = vmatprep.subr.mxu0 0.0
    %8289 = vmatpush1.msra.mxu0 0.0
    %8290 = vmatprep.subr.mxu0 0.0
    %8291 = vmatpush1.msra.mxu0 0.0
    %8292 = vmatprep.subr.mxu0 0.0
    %8293 = vmatpush1.msra.mxu0 0.0
    %8294 = vmatprep.subr.mxu0 0.0
    %8295 = vmatpush1.msra.mxu0 0.0
    %8296 = vmatprep.subr.mxu0 0.0
    %8297 = vmatpush1.msra.mxu0 0.0
    %8298 = vmatprep.subr.mxu0 0.0
    %8299 = vmatpush1.msra.mxu0 0.0
    %8300 = vmatprep.subr.mxu0 0.0
    %8301 = vmatpush1.msra.mxu0 0.0
    %8302 = vmatprep.subr.mxu0 0.0
    %8303 = vmatpush1.msra.mxu0 0.0
    %8304 = vmatprep.subr.mxu0 0.0
    %8305 = vmatpush1.msra.mxu0 0.0
    %8306 = vmatprep.subr.mxu0 0.0
    %8307 = vmatpush1.msra.mxu0 0.0
    %8308 = vmatprep.subr.mxu0 0.0
    %8309 = vmatpush1.msra.mxu0 0.0
    %8310 = vmatprep.subr.mxu0 0.0
    %8311 = vmatpush1.msra.mxu0 0.0
    %8312 = vmatprep.subr.mxu0 0.0
    %8313 = vmatpush1.msra.mxu0 0.0
    %8314 = vmatprep.subr.mxu0 0.0
    %8315 = vmatpush1.msra.mxu0 0.0
    %8316 = vmatprep.subr.mxu0 0.0
    %8317 = vmatpush1.msra.mxu0 0.0
    %8318 = vmatprep.subr.mxu0 0.0
    %8319 = vmatpush1.msra.mxu0 0.0
    %8320 = vmatprep.subr.mxu0 0.0
    %8321 = vmatpush1.msra.mxu0 0.0
    %8322 = vmatprep.mubr.f32.mxu0 0.0
    %8323 = vmatmul.mubr.f32.gmra.mrb[0].mxu0 %v8256
    %v8324 = vpop.f32.mrb[0].mxu0
    %v8325 = vadd.f32 %v8248, %v8324
    %v8326 = vpop.f32.mrb[0].mxu0
    %v8327 = vadd.f32 %v8252, %v8326
    %8328 = vdwg.mxu0
    %v8329 = vand.u32 2147483647, %v8325
    %v8330 = vand.u32 2147483647, %v8327
    %v8331 = vsub.f32 0.0, %v8329
    %v8332 = vsub.f32 0.0, %v8330
    %v8333 = vmul.f32 %v8331, 1.442695
    %v8334 = vpow.pop %v8333
    %v8335 = vmul.f32 %v8332, 1.442695
    %v8336 = vpow.pop %v8335
    %v8337 = vadd.f32 %v8334, 1.0
    %v8338 = vadd.f32 %v8336, 1.0
    %v8339 = vlog2.pop %v8337
    %v8340 = vmul.f32 %v8339, 0.6931472
    %v8341 = vlog2.pop %v8338
    %v8342 = vmul.f32 %v8341, 0.6931472
    %v8343 = vmin.f32 %v8325, 0.0
    %v8344 = vmin.f32 %v8327, 0.0
    %v8345 = vadd.f32 %v8343, 0.0
    %v8346 = vadd.f32 %v8344, 0.0
    %v8347 = vsub.f32 %v8345, %v8340
    %v8348 = vsub.f32 %v8346, %v8342
    %v8351 = vcombine.low %v8347, %v8348
    %v8353 = vunpack.c.l.s4 1983009808
    %v8354 = vunpack.c.0.s8 %v8353
    %v8355 = vlaneseq
    %v8356 = vshrl.u32 %v8355, 7
    %v8357 = vsub.s32 %v8354, %v8356
    %v8358 = vrot.slane %v8351, %v8357
    %8360 = vst [vmem:[%s18] sm:$0xf] %v8358
    %v8361 = vsub.f32 0.0, %v8325
    %v8362 = vsub.f32 0.0, %v8327
    %v8363 = vmin.f32 %v8361, 0.0
    %v8364 = vmin.f32 %v8362, 0.0
    %v8365 = vadd.f32 %v8363, 0.0
    %v8366 = vadd.f32 %v8364, 0.0
    %v8367 = vsub.f32 %v8365, %v8340
    %v8368 = vsub.f32 %v8366, %v8342
    %v8371 = vrot.slane %v8343, 2
    %v8372 = vrot.slane %v8344, 2
    %v8375 = vadd.f32 %v8367, %v8371
    %v8376 = vadd.f32 %v8368, %v8372
    %v8379 = vrot.slane %v8340, 2
    %v8380 = vrot.slane %v8342, 2
    %v8383 = vsub.f32 %v8375, %v8379
    %v8384 = vsub.f32 %v8376, %v8380
    %v8387 = vcombine.low %v8383, %v8384
    %v8389 = vunpack.c.l.s4 1983009808
    %v8390 = vunpack.c.0.s8 %v8389
    %v8391 = vlaneseq
    %v8392 = vshrl.u32 %v8391, 7
    %v8393 = vsub.s32 %v8390, %v8392
    %v8394 = vrot.slane %v8387, %v8393
    %s8396 = scalar_lea.vmem %s18, 4
    %8397 = vst [vmem:[%s8396] sm:$0xf] %v8394
    %v8400 = vrot.slane %v8363, 2
    %v8401 = vrot.slane %v8364, 2
    %v8404 = vadd.f32 %v8367, %v8400
    %v8405 = vadd.f32 %v8368, %v8401
    %v8406 = vsub.f32 %v8404, %v8379
    %v8407 = vsub.f32 %v8405, %v8380
    %v8410 = vcombine.low %v8406, %v8407
    %v8412 = vunpack.c.l.s4 1983009808
    %v8413 = vunpack.c.0.s8 %v8412
    %v8414 = vlaneseq
    %v8415 = vshrl.u32 %v8414, 7
    %v8416 = vsub.s32 %v8413, %v8415
    %v8417 = vrot.slane %v8410, %v8416
    %s8419 = scalar_lea.vmem %s18, 8
    %8420 = vst [vmem:[%s8419] sm:$0xf] %v8417
    // Predicated region
    $region130: #{gated_recurrent_sbp_forward.1} parent=1 // pred_check
      _
    $region131: #{gated_recurrent_sbp_forward.1} parent=1 // pred_check_branch
      %8422 = sbr.rel (0) target = $region133
    $region132: #{gated_recurrent_sbp_forward.1} parent=1 // pred_region
      _
    $region133: #{gated_recurrent_sbp_forward.1} parent=1 // pred_fallthru
      _
    // Predicated region
    $region134: #{gated_recurrent_sbp_forward.1} parent=1 // pred_check
      _
    $region135: #{gated_recurrent_sbp_forward.1} parent=1 // pred_check_branch
      %8424 = sbr.rel (0) target = $region137
    $region136: #{gated_recurrent_sbp_forward.1} parent=1 // pred_region
      _
    $region137: #{gated_recurrent_sbp_forward.1} parent=1 // pred_fallthru
      _
    // Predicated region
    $region138: #{gated_recurrent_sbp_forward.1} parent=1 // pred_check
      _
    $region139: #{gated_recurrent_sbp_forward.1} parent=1 // pred_check_branch
      %8426 = sbr.rel (0) target = $region141
    $region140: #{gated_recurrent_sbp_forward.1} parent=1 // pred_region
      _
    $region141: #{gated_recurrent_sbp_forward.1} parent=1 // pred_fallthru
      _
    // Predicated region
    $region142: #{gated_recurrent_sbp_forward.1} parent=1 // pred_check
      _
    $region143: #{gated_recurrent_sbp_forward.1} parent=1 // pred_check_branch
      %8428 = sbr.rel (0) target = $region145
    $region144: #{gated_recurrent_sbp_forward.1} parent=1 // pred_region
      _
    $region145: #{gated_recurrent_sbp_forward.1} parent=1 // pred_fallthru
      _
    %8429 = vsyncpa [#allocation3], 1
    %8430 = vsyncpa [#allocation5], 1
    %8431 = vsyncpa [#allocation8], 1
    %8432 = vsyncpa [#allocation11], 1
    %8433 = vsyncpa [#allocation14], 1
    %8434 = vsyncpa [#allocation17], 1
    %8435 = vsyncpa [#allocation20], 1
    %8436 = vsyncpa [#allocation23], 1

</llo_original>
